<compile_context>
chip_gen: v7x
topology: tpu7x:2x2x1
jax: 0.10.0
libtpu: 0.0.40
codegen_flags: <defaults>
</compile_context>

<pallas_src>
import functools

import jax
import jax.numpy as jnp
from jax.experimental import pallas as pl
from jax.experimental.pallas import tpu as pltpu


# ----------------------------- small helpers --------------------------------


def _round_up(x, m):
    return ((x + m - 1) // m) * m


def _choose_tiling(n_rows, tm):
    """Pick a row-tile size (multiple of 8) and the padded row count."""
    tm = min(tm, _round_up(n_rows, 8))
    return tm, _round_up(n_rows, tm)


def _pad_rows(x2d, n_rows_padded):
    pad = n_rows_padded - x2d.shape[0]
    if pad:
        x2d = jnp.pad(x2d, ((0, pad), (0, 0)))
    return x2d


def _im2col(x, k, dilation):
    """x: (N,H,W,C) -> (N*H*W, k*k*C) 'same'-padded patch matrix."""
    n, h, w, c = x.shape
    if k == 1:
        return x.reshape(n * h * w, c)
    pad = dilation * (k // 2)
    xp = jnp.pad(x, ((0, 0), (pad, pad), (pad, pad), (0, 0)))
    cols = []
    for ky in range(k):
        for kx in range(k):
            cols.append(xp[:, ky * dilation:ky * dilation + h,
                           kx * dilation:kx * dilation + w, :])
    return jnp.concatenate(cols, axis=-1).reshape(n * h * w, k * k * c)


def _mosaic_params(tile_bytes):
    # Scoped-VMEM ceiling sized from the tile (double-buffered) with headroom,
    # kept <= 48 MiB so it is valid on v7x's 64 MiB physical VMEM as well.
    vmem = int(min(max(4 * tile_bytes + (4 << 20), 16 << 20), 48 << 20))
    return pltpu.CompilerParams(dimension_semantics=("parallel",),
                                vmem_limit_bytes=vmem)


def _row_spec(tm, c):
    return pl.BlockSpec((tm, c), lambda i: (i, 0))


def _resident_spec(shape):
    return pl.BlockSpec(shape, lambda i: (0, 0))


def _sigmoid(x):
    # exp and approximate reciprocal both ride the EUP slot (idle next to MXU).
    return pl.reciprocal(1.0 + jnp.exp(-x), approx=True)


# ----------------------------- Pallas kernels -------------------------------


def _conv_kernel(x_ref, w_ref, b_ref, o_ref, *, act, out_scale):
    """One fused im2col-matmul conv:  o = act((x @ w + b) * out_scale)."""
    acc = jnp.dot(x_ref[...], w_ref[...], preferred_element_type=jnp.float32)
    acc = (acc + b_ref[...]) * out_scale
    if act == "relu":
        acc = jnp.maximum(acc, 0.0)
    elif act == "sigmoid":
        acc = _sigmoid(acc)
    elif act == "tanh":
        acc = jnp.tanh(acc)
    o_ref[...] = acc.astype(o_ref.dtype)


def _gru_zr_kernel(x_ref, wz_ref, bz_ref, wr_ref, br_ref, h_ref,
                   z_ref, rh_ref):
    """Fused convz + convr on the same hx patches; also emits r*h."""
    x = x_ref[...]
    z = _sigmoid(jnp.dot(x, wz_ref[...], preferred_element_type=jnp.float32)
                 + bz_ref[...])
    r = _sigmoid(jnp.dot(x, wr_ref[...], preferred_element_type=jnp.float32)
                 + br_ref[...])
    z_ref[...] = z.astype(z_ref.dtype)
    rh_ref[...] = (r * h_ref[...]).astype(rh_ref.dtype)


def _gru_q_kernel(x_ref, wq_ref, bq_ref, z_ref, h_ref, o_ref):
    """Fused convq + GRU gate:  h_new = (1-z)*h + z*tanh(conv(hq))."""
    q = jnp.tanh(jnp.dot(x_ref[...], wq_ref[...],
                         preferred_element_type=jnp.float32) + bq_ref[...])
    z = z_ref[...]
    o_ref[...] = ((1.0 - z) * h_ref[...] + z * q).astype(o_ref.dtype)


def _head_kernel(x_ref, w1_ref, b1_ref, w2_ref, b2_ref, o_ref, *, out_scale):
    """3x3 conv + relu + fused 1x1 conv (FlowHead / mask head)."""
    t = jnp.dot(x_ref[...], w1_ref[...], preferred_element_type=jnp.float32)
    t = jnp.maximum(t + b1_ref[...], 0.0)
    acc = jnp.dot(t.astype(w2_ref.dtype), w2_ref[...],
                  preferred_element_type=jnp.float32)
    o_ref[...] = ((acc + b2_ref[...]) * out_scale).astype(o_ref.dtype)


# ------------------------------ JAX wrappers ---------------------------------


def conv2d_pallas(x, w, b, *, dilation=1, act=None, out_scale=1.0, tm=256):
    """'Same'-padded odd-kernel conv as a single tiled matmul Pallas kernel."""
    n, h, wd, cin = x.shape
    k = w.shape[0]
    cout = w.shape[-1]
    m = n * h * wd
    tm, mp = _choose_tiling(m, tm)

    patches = _pad_rows(_im2col(x, k, dilation), mp).astype(jnp.bfloat16)
    kdim = patches.shape[1]
    wm = w.reshape(kdim, cout).astype(jnp.bfloat16)
    b2 = b.reshape(1, cout).astype(jnp.float32)

    tile_bytes = tm * kdim * 2 + tm * cout * 4 + wm.size * 2
    out = pl.pallas_call(
        functools.partial(_conv_kernel, act=act, out_scale=float(out_scale)),
        grid=(mp // tm,),
        in_specs=[_row_spec(tm, kdim),
                  _resident_spec(wm.shape),
                  _resident_spec(b2.shape)],
        out_specs=_row_spec(tm, cout),
        out_shape=jax.ShapeDtypeStruct((mp, cout), jnp.float32),
        compiler_params=_mosaic_params(tile_bytes),
        cost_estimate=pl.CostEstimate(
            flops=2 * mp * kdim * cout,
            transcendentals=mp * cout if act in ("sigmoid", "tanh") else 0,
            bytes_accessed=patches.size * 2 + wm.size * 2
            + 4 * (b2.size + mp * cout)),
    )(patches, wm, b2)
    return out[:m].reshape(n, h, wd, cout)


def conv_gru_pallas(net0, motion_features, inp, params, *, tm=256):
    """ConvGRU (k=3, dilation=2): fused z/r conv kernel + fused q/gate kernel."""
    n, h, wd, hidden = net0.shape
    m = n * h * wd
    tm, mp = _choose_tiling(m, tm)

    hx = jnp.concatenate([net0, motion_features, inp], axis=-1)
    hx_p = _pad_rows(_im2col(hx, 3, 2), mp).astype(jnp.bfloat16)
    kdim = hx_p.shape[1]
    h2d = _pad_rows(net0.reshape(m, hidden), mp)

    wz = params["convz"]["w"].reshape(kdim, hidden).astype(jnp.bfloat16)
    bz = params["convz"]["b"].reshape(1, hidden).astype(jnp.float32)
    wr = params["convr"]["w"].reshape(kdim, hidden).astype(jnp.bfloat16)
    br = params["convr"]["b"].reshape(1, hidden).astype(jnp.float32)
    wq = params["convq"]["w"].reshape(kdim, hidden).astype(jnp.bfloat16)
    bq = params["convq"]["b"].reshape(1, hidden).astype(jnp.float32)

    tile_bytes = tm * kdim * 2 + 3 * tm * hidden * 4 + 2 * wz.size * 2
    z2d, rh2d = pl.pallas_call(
        _gru_zr_kernel,
        grid=(mp // tm,),
        in_specs=[_row_spec(tm, kdim),
                  _resident_spec(wz.shape), _resident_spec(bz.shape),
                  _resident_spec(wr.shape), _resident_spec(br.shape),
                  _row_spec(tm, hidden)],
        out_specs=(_row_spec(tm, hidden), _row_spec(tm, hidden)),
        out_shape=(jax.ShapeDtypeStruct((mp, hidden), jnp.float32),
                   jax.ShapeDtypeStruct((mp, hidden), jnp.float32)),
        compiler_params=_mosaic_params(tile_bytes),
        cost_estimate=pl.CostEstimate(
            flops=4 * mp * kdim * hidden,
            transcendentals=2 * mp * hidden,
            bytes_accessed=hx_p.size * 2 + (wz.size + wr.size) * 2
            + 4 * (bz.size + br.size + 3 * mp * hidden)),
    )(hx_p, wz, bz, wr, br, h2d)

    rh = rh2d[:m].reshape(n, h, wd, hidden)
    hq = jnp.concatenate([rh, motion_features, inp], axis=-1)
    hq_p = _pad_rows(_im2col(hq, 3, 2), mp).astype(jnp.bfloat16)

    h_new = pl.pallas_call(
        _gru_q_kernel,
        grid=(mp // tm,),
        in_specs=[_row_spec(tm, kdim),
                  _resident_spec(wq.shape), _resident_spec(bq.shape),
                  _row_spec(tm, hidden), _row_spec(tm, hidden)],
        out_specs=_row_spec(tm, hidden),
        out_shape=jax.ShapeDtypeStruct((mp, hidden), jnp.float32),
        compiler_params=_mosaic_params(tile_bytes),
        cost_estimate=pl.CostEstimate(
            flops=2 * mp * kdim * hidden,
            transcendentals=mp * hidden,
            bytes_accessed=hq_p.size * 2 + wq.size * 2
            + 4 * (bq.size + 3 * mp * hidden)),
    )(hq_p, wq, bq, z2d, h2d)

    return h_new[:m].reshape(n, h, wd, hidden)


def head_pallas(x, w1, b1, w2, b2, *, dilation, out_scale=1.0, tm=256):
    """Fused KxK conv (+bias) + relu + 1x1 conv (+bias) * out_scale."""
    n, h, wd, cin = x.shape
    k = w1.shape[0]
    mid = w1.shape[-1]
    cout = w2.shape[-1]
    m = n * h * wd
    tm, mp = _choose_tiling(m, tm)

    patches = _pad_rows(_im2col(x, k, dilation), mp).astype(jnp.bfloat16)
    kdim = patches.shape[1]
    w1m = w1.reshape(kdim, mid).astype(jnp.bfloat16)
    b1m = b1.reshape(1, mid).astype(jnp.float32)
    w2m = w2.reshape(mid, cout).astype(jnp.bfloat16)
    b2m = b2.reshape(1, cout).astype(jnp.float32)

    tile_bytes = tm * kdim * 2 + tm * mid * 4 + tm * cout * 4 + w1m.size * 2
    out = pl.pallas_call(
        functools.partial(_head_kernel, out_scale=float(out_scale)),
        grid=(mp // tm,),
        in_specs=[_row_spec(tm, kdim),
                  _resident_spec(w1m.shape), _resident_spec(b1m.shape),
                  _resident_spec(w2m.shape), _resident_spec(b2m.shape)],
        out_specs=_row_spec(tm, cout),
        out_shape=jax.ShapeDtypeStruct((mp, cout), jnp.float32),
        compiler_params=_mosaic_params(tile_bytes),
        cost_estimate=pl.CostEstimate(
            flops=2 * mp * (kdim * mid + mid * cout),
            transcendentals=0,
            bytes_accessed=patches.size * 2 + (w1m.size + w2m.size) * 2
            + 4 * (b1m.size + b2m.size + mp * cout)),
    )(patches, w1m, b1m, w2m, b2m)
    return out[:m].reshape(n, h, wd, cout)


# ------------------------------ parameters -----------------------------------


def _conv_init(key, k, cin, cout, bias=True):
    kw, kb = jax.random.split(key)
    fan_in = k * k * cin
    w = jax.random.normal(kw, (k, k, cin, cout), jnp.float32) / jnp.sqrt(
        jnp.float32(fan_in))
    if bias:
        b = jax.random.normal(kb, (cout,), jnp.float32) * 0.01
    else:
        b = jnp.zeros((cout,), jnp.float32)
    return {"w": w, "b": b}


def init_params(key, *, corr_levels, corr_radius, motion_dim, hidden,
                n_downsample):
    cor_planes = corr_levels * (2 * corr_radius + 1)
    mid = motion_dim // 2
    gru_cin = hidden + (motion_dim + hidden)        # hidden_dim + input_dim
    factor = 2 ** n_downsample
    keys = jax.random.split(key, 12)
    return {
        # BasicMotionEncoder
        "convc1": _conv_init(keys[0], 1, cor_planes, mid),
        "convc2": _conv_init(keys[1], 3, mid, mid),
        "convf1": _conv_init(keys[2], 7, 1, mid),
        "convf2": _conv_init(keys[3], 3, mid, mid),
        "enc_conv": _conv_init(keys[4], 3, 2 * mid, motion_dim - 1),
        # ConvGRU (kernel 3, dilation 2, padding 2)
        "convz": _conv_init(keys[5], 3, gru_cin, hidden),
        "convr": _conv_init(keys[6], 3, gru_cin, hidden),
        "convq": _conv_init(keys[7], 3, gru_cin, hidden),
        # FlowHead
        "fh_conv1": _conv_init(keys[8], 3, hidden, 128, bias=False),
        "fh_conv2": _conv_init(keys[9], 1, 128, 1),
        # mask head
        "mask_conv1": _conv_init(keys[10], 3, hidden, 128),
        "mask_conv2": _conv_init(keys[11], 1, 128, factor * factor * 9),
    }


# ------------------------------- forward -------------------------------------


def basic_multi_update_block(params, net0, inp, corr, flow, *, need_mask=True,
                             tm=256):
    """net0/inp: (N,H,W,hidden); corr: (N,H,W,cor_planes); flow: (N,H,W,1)."""
    p = params

    # ---- BasicMotionEncoder ----
    cor = conv2d_pallas(corr, p["convc1"]["w"], p["convc1"]["b"], act="relu",
                        tm=tm)
    cor = conv2d_pallas(cor, p["convc2"]["w"], p["convc2"]["b"], act="relu",
                        tm=tm)
    flo = conv2d_pallas(flow, p["convf1"]["w"], p["convf1"]["b"], act="relu",
                        tm=tm)
    flo = conv2d_pallas(flo, p["convf2"]["w"], p["convf2"]["b"], act="relu",
                        tm=tm)
    cor_flo = jnp.concatenate([cor, flo], axis=-1)
    enc = conv2d_pallas(cor_flo, p["enc_conv"]["w"], p["enc_conv"]["b"],
                        act="relu", tm=tm)
    motion_features = jnp.concatenate([enc, flow], axis=-1)

    # ---- ConvGRU (k=3, dilation=2): fused z/r conv + fused q/gate conv ----
    net0_new = conv_gru_pallas(net0, motion_features, inp, p, tm=tm)

    # ---- FlowHead: 3x3 (dil=2, no bias) + relu + 1x1, all in one kernel ----
    delta_flow = head_pallas(net0_new, p["fh_conv1"]["w"], p["fh_conv1"]["b"],
                             p["fh_conv2"]["w"], p["fh_conv2"]["b"],
                             dilation=2, tm=tm)

    # ---- mask head: 0.25 * (3x3 + relu + 1x1), all in one kernel ----
    mask = None
    if need_mask:
        mask = head_pallas(net0_new, p["mask_conv1"]["w"], p["mask_conv1"]["b"],
                           p["mask_conv2"]["w"], p["mask_conv2"]["b"],
                           dilation=1, out_scale=0.25, tm=tm)

    return [net0_new], mask, delta_flow


# --------------------------- pure-JAX reference -------------------------------


def _ref_conv(x, w, b, dilation=1, act=None, out_scale=1.0):
    pad = dilation * (w.shape[0] // 2)
    y = jax.lax.conv_general_dilated(
        x, w, window_strides=(1, 1), padding=((pad, pad), (pad, pad)),
        rhs_dilation=(dilation, dilation),
        dimension_numbers=("NHWC", "HWIO", "NHWC"))
    y = (y + b) * out_scale
    if act == "relu":
        y = jnp.maximum(y, 0.0)
    elif act == "sigmoid":
        y = jax.nn.sigmoid(y)
    elif act == "tanh":
        y = jnp.tanh(y)
    return y


def _ref_forward(p, net0, inp, corr, flow):
    cor = _ref_conv(corr, p["convc1"]["w"], p["convc1"]["b"], act="relu")
    cor = _ref_conv(cor, p["convc2"]["w"], p["convc2"]["b"], act="relu")
    flo = _ref_conv(flow, p["convf1"]["w"], p["convf1"]["b"], act="relu")
    flo = _ref_conv(flo, p["convf2"]["w"], p["convf2"]["b"], act="relu")
    enc = _ref_conv(jnp.concatenate([cor, flo], -1), p["enc_conv"]["w"],
                    p["enc_conv"]["b"], act="relu")
    mf = jnp.concatenate([enc, flow], -1)
    hx = jnp.concatenate([net0, mf, inp], -1)
    z = _ref_conv(hx, p["convz"]["w"], p["convz"]["b"], 2, act="sigmoid")
    r = _ref_conv(hx, p["convr"]["w"], p["convr"]["b"], 2, act="sigmoid")
    q = _ref_conv(jnp.concatenate([r * net0, mf, inp], -1), p["convq"]["w"],
                  p["convq"]["b"], 2, act="tanh")
    h = (1 - z) * net0 + z * q
    fh = _ref_conv(h, p["fh_conv1"]["w"], p["fh_conv1"]["b"], 2, act="relu")
    dflow = _ref_conv(fh, p["fh_conv2"]["w"], p["fh_conv2"]["b"])
    m = _ref_conv(h, p["mask_conv1"]["w"], p["mask_conv1"]["b"], act="relu")
    mask = _ref_conv(m, p["mask_conv2"]["w"], p["mask_conv2"]["b"],
                     out_scale=0.25)
    return h, mask, dflow


# --------------------------------- main ---------------------------------------


if __name__ == "__main__":
    # Small config consistent with the module:
    N, H, W = 2, 16, 16
    corr_levels, corr_radius = 2, 2            # cor_planes = 10
    motion_dim = 16                            # encoder output channels
    hidden = 16                                # hidden_dims[0]
    n_downsample = 1                           # mask channels = 4 * 9 = 36

    key = jax.random.PRNGKey(0)
    kp, k1, k2, k3, k4 = jax.random.split(key, 5)
    params = init_params(kp, corr_levels=corr_levels, corr_radius=corr_radius,
                         motion_dim=motion_dim, hidden=hidden,
                         n_downsample=n_downsample)

    cor_planes = corr_levels * (2 * corr_radius + 1)
    net0 = jax.random.normal(k1, (N, H, W, hidden), jnp.float32)
    inp = jax.random.normal(k2, (N, H, W, hidden), jnp.float32)
    corr = jax.random.normal(k3, (N, H, W, cor_planes), jnp.float32)
    flow = jax.random.normal(k4, (N, H, W, 1), jnp.float32)

    fwd = jax.jit(functools.partial(basic_multi_update_block, need_mask=True))
    net, mask, delta_flow = fwd(params, net0, inp, corr, flow)
    jax.block_until_ready((net[0], mask, delta_flow))

    # Sanity-check against a pure-f32 JAX reference of the same math
    # (Pallas path uses bf16 matmul operands, hence the looser tolerance).
    h_ref, mask_ref, dflow_ref = _ref_forward(params, net0, inp, corr, flow)
    assert jnp.allclose(net[0], h_ref, atol=5e-2, rtol=5e-2)
    assert jnp.allclose(mask, mask_ref, atol=5e-2, rtol=5e-2)
    assert jnp.allclose(delta_flow, dflow_ref, atol=5e-2, rtol=5e-2)

    assert net[0].shape == (N, H, W, hidden)
    assert mask.shape == (N, H, W, (2 ** n_downsample) ** 2 * 9)
    assert delta_flow.shape == (N, H, W, 1)

    print("KERNEL_OK")
</pallas_src>

<mosaic_0001>
module attributes {stable_mosaic.version = 11 : i64} {
  func.func @_conv_kernel(%arg0: i32, %arg1: memref<256x49xbf16, #tpu.memory_space<vmem>>, %arg2: memref<49x8xbf16, #tpu.memory_space<vmem>>, %arg3: memref<1x8xf32, #tpu.memory_space<vmem>>, %arg4: memref<256x8xf32, #tpu.memory_space<vmem>>) attributes {dimension_semantics = [#tpu.dimension_semantics<parallel>], iteration_bounds = array<i64: 2>, scalar_prefetch = 0 : i64, scratch_operands = 0 : i64, tpu.core_type = #tpu.core_type<tc>, window_params = [{transform_indices = @transform_0, window_bounds = array<i64: 256, 49>}, {pipeline_mode = #tpu.pipeline_mode<synchronous>, transform_indices = @transform_1, window_bounds = array<i64: 49, 8>}, {pipeline_mode = #tpu.pipeline_mode<synchronous>, transform_indices = @transform_2, window_bounds = array<i64: 1, 8>}, {transform_indices = @transform_3, window_bounds = array<i64: 256, 8>}]} {
    %c0 = arith.constant 0 : index
    %c0_0 = arith.constant 0 : index
    %0 = vector.load %arg1[%c0, %c0_0] : memref<256x49xbf16, #tpu.memory_space<vmem>>, vector<256x49xbf16>
    %c0_1 = arith.constant 0 : index
    %c0_2 = arith.constant 0 : index
    %1 = vector.load %arg2[%c0_1, %c0_2] : memref<49x8xbf16, #tpu.memory_space<vmem>>, vector<49x8xbf16>
    %cst = arith.constant dense<0.000000e+00> : vector<256x8xf32>
    %2 = tpu.matmul %0, %1, %cst {dimension_numbers = #tpu.dot_dimension_numbers<[1], [0], [0], [1], [0, 0, 1, 1], [], []>} : vector<256x49xbf16>, vector<49x8xbf16>, vector<256x8xf32> -> vector<256x8xf32>
    %c0_3 = arith.constant 0 : index
    %c0_4 = arith.constant 0 : index
    %3 = vector.load %arg3[%c0_3, %c0_4] : memref<1x8xf32, #tpu.memory_space<vmem>>, vector<1x8xf32>
    %4 = vector.broadcast %3 : vector<1x8xf32> to vector<256x8xf32>
    %5 = arith.addf %2, %4 : vector<256x8xf32>
    %cst_5 = arith.constant 1.000000e+00 : f32
    %6 = vector.broadcast %cst_5 : f32 to vector<256x8xf32>
    %7 = arith.mulf %5, %6 : vector<256x8xf32>
    %cst_6 = arith.constant 0.000000e+00 : f32
    %8 = vector.broadcast %cst_6 : f32 to vector<256x8xf32>
    %9 = arith.maximumf %7, %8 : vector<256x8xf32>
    %c0_7 = arith.constant 0 : index
    %c0_8 = arith.constant 0 : index
    %10 = vector.load %arg4[%c0_7, %c0_8] : memref<256x8xf32, #tpu.memory_space<vmem>>, vector<256x8xf32>
    tpu.vector_store %arg4[%c0_7, %c0_8], %9 {strides = array<i32>} : memref<256x8xf32, #tpu.memory_space<vmem>>, vector<256x8xf32>,
    return
  }
  func.func @transform_0(%arg0: i32) -> (i32, i32) {
    %c0_i32 = arith.constant 0 : i32
    %c0_i32_0 = arith.constant 0 : i32
    return %arg0, %c0_i32 : i32, i32
  }
  func.func @transform_1(%arg0: i32) -> (i32, i32) {
    %c0_i32 = arith.constant 0 : i32
    %c0_i32_0 = arith.constant 0 : i32
    %c0_i32_1 = arith.constant 0 : i32
    return %c0_i32, %c0_i32_0 : i32, i32
  }
  func.func @transform_2(%arg0: i32) -> (i32, i32) {
    %c0_i32 = arith.constant 0 : i32
    %c0_i32_0 = arith.constant 0 : i32
    %c0_i32_1 = arith.constant 0 : i32
    return %c0_i32, %c0_i32_0 : i32, i32
  }
  func.func @transform_3(%arg0: i32) -> (i32, i32) {
    %c0_i32 = arith.constant 0 : i32
    %c0_i32_0 = arith.constant 0 : i32
    return %arg0, %c0_i32 : i32, i32
  }
}

module attributes {stable_mosaic.version = 11 : i64} {
  func.func @_conv_kernel(%arg0: i32, %arg1: memref<256x72xbf16, #tpu.memory_space<vmem>>, %arg2: memref<72x8xbf16, #tpu.memory_space<vmem>>, %arg3: memref<1x8xf32, #tpu.memory_space<vmem>>, %arg4: memref<256x8xf32, #tpu.memory_space<vmem>>) attributes {dimension_semantics = [#tpu.dimension_semantics<parallel>], iteration_bounds = array<i64: 2>, scalar_prefetch = 0 : i64, scratch_operands = 0 : i64, tpu.core_type = #tpu.core_type<tc>, window_params = [{transform_indices = @transform_0, window_bounds = array<i64: 256, 72>}, {pipeline_mode = #tpu.pipeline_mode<synchronous>, transform_indices = @transform_1, window_bounds = array<i64: 72, 8>}, {pipeline_mode = #tpu.pipeline_mode<synchronous>, transform_indices = @transform_2, window_bounds = array<i64: 1, 8>}, {transform_indices = @transform_3, window_bounds = array<i64: 256, 8>}]} {
    %c0 = arith.constant 0 : index
    %c0_0 = arith.constant 0 : index
    %0 = vector.load %arg1[%c0, %c0_0] : memref<256x72xbf16, #tpu.memory_space<vmem>>, vector<256x72xbf16>
    %c0_1 = arith.constant 0 : index
    %c0_2 = arith.constant 0 : index
    %1 = vector.load %arg2[%c0_1, %c0_2] : memref<72x8xbf16, #tpu.memory_space<vmem>>, vector<72x8xbf16>
    %cst = arith.constant dense<0.000000e+00> : vector<256x8xf32>
    %2 = tpu.matmul %0, %1, %cst {dimension_numbers = #tpu.dot_dimension_numbers<[1], [0], [0], [1], [0, 0, 1, 1], [], []>} : vector<256x72xbf16>, vector<72x8xbf16>, vector<256x8xf32> -> vector<256x8xf32>
    %c0_3 = arith.constant 0 : index
    %c0_4 = arith.constant 0 : index
    %3 = vector.load %arg3[%c0_3, %c0_4] : memref<1x8xf32, #tpu.memory_space<vmem>>, vector<1x8xf32>
    %4 = vector.broadcast %3 : vector<1x8xf32> to vector<256x8xf32>
    %5 = arith.addf %2, %4 : vector<256x8xf32>
    %cst_5 = arith.constant 1.000000e+00 : f32
    %6 = vector.broadcast %cst_5 : f32 to vector<256x8xf32>
    %7 = arith.mulf %5, %6 : vector<256x8xf32>
    %cst_6 = arith.constant 0.000000e+00 : f32
    %8 = vector.broadcast %cst_6 : f32 to vector<256x8xf32>
    %9 = arith.maximumf %7, %8 : vector<256x8xf32>
    %c0_7 = arith.constant 0 : index
    %c0_8 = arith.constant 0 : index
    %10 = vector.load %arg4[%c0_7, %c0_8] : memref<256x8xf32, #tpu.memory_space<vmem>>, vector<256x8xf32>
    tpu.vector_store %arg4[%c0_7, %c0_8], %9 {strides = array<i32>} : memref<256x8xf32, #tpu.memory_space<vmem>>, vector<256x8xf32>,
    return
  }
  func.func @transform_0(%arg0: i32) -> (i32, i32) {
    %c0_i32 = arith.constant 0 : i32
    %c0_i32_0 = arith.constant 0 : i32
    return %arg0, %c0_i32 : i32, i32
  }
  func.func @transform_1(%arg0: i32) -> (i32, i32) {
    %c0_i32 = arith.constant 0 : i32
    %c0_i32_0 = arith.constant 0 : i32
    %c0_i32_1 = arith.constant 0 : i32
    return %c0_i32, %c0_i32_0 : i32, i32
  }
  func.func @transform_2(%arg0: i32) -> (i32, i32) {
    %c0_i32 = arith.constant 0 : i32
    %c0_i32_0 = arith.constant 0 : i32
    %c0_i32_1 = arith.constant 0 : i32
    return %c0_i32, %c0_i32_0 : i32, i32
  }
  func.func @transform_3(%arg0: i32) -> (i32, i32) {
    %c0_i32 = arith.constant 0 : i32
    %c0_i32_0 = arith.constant 0 : i32
    return %arg0, %c0_i32 : i32, i32
  }
}

module attributes {stable_mosaic.version = 11 : i64} {
  func.func @_conv_kernel(%arg0: i32, %arg1: memref<256x10xbf16, #tpu.memory_space<vmem>>, %arg2: memref<10x8xbf16, #tpu.memory_space<vmem>>, %arg3: memref<1x8xf32, #tpu.memory_space<vmem>>, %arg4: memref<256x8xf32, #tpu.memory_space<vmem>>) attributes {dimension_semantics = [#tpu.dimension_semantics<parallel>], iteration_bounds = array<i64: 2>, scalar_prefetch = 0 : i64, scratch_operands = 0 : i64, tpu.core_type = #tpu.core_type<tc>, window_params = [{transform_indices = @transform_0, window_bounds = array<i64: 256, 10>}, {pipeline_mode = #tpu.pipeline_mode<synchronous>, transform_indices = @transform_1, window_bounds = array<i64: 10, 8>}, {pipeline_mode = #tpu.pipeline_mode<synchronous>, transform_indices = @transform_2, window_bounds = array<i64: 1, 8>}, {transform_indices = @transform_3, window_bounds = array<i64: 256, 8>}]} {
    %c0 = arith.constant 0 : index
    %c0_0 = arith.constant 0 : index
    %0 = vector.load %arg1[%c0, %c0_0] : memref<256x10xbf16, #tpu.memory_space<vmem>>, vector<256x10xbf16>
    %c0_1 = arith.constant 0 : index
    %c0_2 = arith.constant 0 : index
    %1 = vector.load %arg2[%c0_1, %c0_2] : memref<10x8xbf16, #tpu.memory_space<vmem>>, vector<10x8xbf16>
    %cst = arith.constant dense<0.000000e+00> : vector<256x8xf32>
    %2 = tpu.matmul %0, %1, %cst {dimension_numbers = #tpu.dot_dimension_numbers<[1], [0], [0], [1], [0, 0, 1, 1], [], []>} : vector<256x10xbf16>, vector<10x8xbf16>, vector<256x8xf32> -> vector<256x8xf32>
    %c0_3 = arith.constant 0 : index
    %c0_4 = arith.constant 0 : index
    %3 = vector.load %arg3[%c0_3, %c0_4] : memref<1x8xf32, #tpu.memory_space<vmem>>, vector<1x8xf32>
    %4 = vector.broadcast %3 : vector<1x8xf32> to vector<256x8xf32>
    %5 = arith.addf %2, %4 : vector<256x8xf32>
    %cst_5 = arith.constant 1.000000e+00 : f32
    %6 = vector.broadcast %cst_5 : f32 to vector<256x8xf32>
    %7 = arith.mulf %5, %6 : vector<256x8xf32>
    %cst_6 = arith.constant 0.000000e+00 : f32
    %8 = vector.broadcast %cst_6 : f32 to vector<256x8xf32>
    %9 = arith.maximumf %7, %8 : vector<256x8xf32>
    %c0_7 = arith.constant 0 : index
    %c0_8 = arith.constant 0 : index
    %10 = vector.load %arg4[%c0_7, %c0_8] : memref<256x8xf32, #tpu.memory_space<vmem>>, vector<256x8xf32>
    tpu.vector_store %arg4[%c0_7, %c0_8], %9 {strides = array<i32>} : memref<256x8xf32, #tpu.memory_space<vmem>>, vector<256x8xf32>,
    return
  }
  func.func @transform_0(%arg0: i32) -> (i32, i32) {
    %c0_i32 = arith.constant 0 : i32
    %c0_i32_0 = arith.constant 0 : i32
    return %arg0, %c0_i32 : i32, i32
  }
  func.func @transform_1(%arg0: i32) -> (i32, i32) {
    %c0_i32 = arith.constant 0 : i32
    %c0_i32_0 = arith.constant 0 : i32
    %c0_i32_1 = arith.constant 0 : i32
    return %c0_i32, %c0_i32_0 : i32, i32
  }
  func.func @transform_2(%arg0: i32) -> (i32, i32) {
    %c0_i32 = arith.constant 0 : i32
    %c0_i32_0 = arith.constant 0 : i32
    %c0_i32_1 = arith.constant 0 : i32
    return %c0_i32, %c0_i32_0 : i32, i32
  }
  func.func @transform_3(%arg0: i32) -> (i32, i32) {
    %c0_i32 = arith.constant 0 : i32
    %c0_i32_0 = arith.constant 0 : i32
    return %arg0, %c0_i32 : i32, i32
  }
}

module attributes {stable_mosaic.version = 11 : i64} {
  func.func @_conv_kernel(%arg0: i32, %arg1: memref<256x144xbf16, #tpu.memory_space<vmem>>, %arg2: memref<144x15xbf16, #tpu.memory_space<vmem>>, %arg3: memref<1x15xf32, #tpu.memory_space<vmem>>, %arg4: memref<256x15xf32, #tpu.memory_space<vmem>>) attributes {dimension_semantics = [#tpu.dimension_semantics<parallel>], iteration_bounds = array<i64: 2>, scalar_prefetch = 0 : i64, scratch_operands = 0 : i64, tpu.core_type = #tpu.core_type<tc>, window_params = [{transform_indices = @transform_0, window_bounds = array<i64: 256, 144>}, {pipeline_mode = #tpu.pipeline_mode<synchronous>, transform_indices = @transform_1, window_bounds = array<i64: 144, 15>}, {pipeline_mode = #tpu.pipeline_mode<synchronous>, transform_indices = @transform_2, window_bounds = array<i64: 1, 15>}, {transform_indices = @transform_3, window_bounds = array<i64: 256, 15>}]} {
    %c0 = arith.constant 0 : index
    %c0_0 = arith.constant 0 : index
    %0 = vector.load %arg1[%c0, %c0_0] : memref<256x144xbf16, #tpu.memory_space<vmem>>, vector<256x144xbf16>
    %c0_1 = arith.constant 0 : index
    %c0_2 = arith.constant 0 : index
    %1 = vector.load %arg2[%c0_1, %c0_2] : memref<144x15xbf16, #tpu.memory_space<vmem>>, vector<144x15xbf16>
    %cst = arith.constant dense<0.000000e+00> : vector<256x15xf32>
    %2 = tpu.matmul %0, %1, %cst {dimension_numbers = #tpu.dot_dimension_numbers<[1], [0], [0], [1], [0, 0, 1, 1], [], []>} : vector<256x144xbf16>, vector<144x15xbf16>, vector<256x15xf32> -> vector<256x15xf32>
    %c0_3 = arith.constant 0 : index
    %c0_4 = arith.constant 0 : index
    %3 = vector.load %arg3[%c0_3, %c0_4] : memref<1x15xf32, #tpu.memory_space<vmem>>, vector<1x15xf32>
    %4 = vector.broadcast %3 : vector<1x15xf32> to vector<256x15xf32>
    %5 = arith.addf %2, %4 : vector<256x15xf32>
    %cst_5 = arith.constant 1.000000e+00 : f32
    %6 = vector.broadcast %cst_5 : f32 to vector<256x15xf32>
    %7 = arith.mulf %5, %6 : vector<256x15xf32>
    %cst_6 = arith.constant 0.000000e+00 : f32
    %8 = vector.broadcast %cst_6 : f32 to vector<256x15xf32>
    %9 = arith.maximumf %7, %8 : vector<256x15xf32>
    %c0_7 = arith.constant 0 : index
    %c0_8 = arith.constant 0 : index
    %10 = vector.load %arg4[%c0_7, %c0_8] : memref<256x15xf32, #tpu.memory_space<vmem>>, vector<256x15xf32>
    tpu.vector_store %arg4[%c0_7, %c0_8], %9 {strides = array<i32>} : memref<256x15xf32, #tpu.memory_space<vmem>>, vector<256x15xf32>,
    return
  }
  func.func @transform_0(%arg0: i32) -> (i32, i32) {
    %c0_i32 = arith.constant 0 : i32
    %c0_i32_0 = arith.constant 0 : i32
    return %arg0, %c0_i32 : i32, i32
  }
  func.func @transform_1(%arg0: i32) -> (i32, i32) {
    %c0_i32 = arith.constant 0 : i32
    %c0_i32_0 = arith.constant 0 : i32
    %c0_i32_1 = arith.constant 0 : i32
    return %c0_i32, %c0_i32_0 : i32, i32
  }
  func.func @transform_2(%arg0: i32) -> (i32, i32) {
    %c0_i32 = arith.constant 0 : i32
    %c0_i32_0 = arith.constant 0 : i32
    %c0_i32_1 = arith.constant 0 : i32
    return %c0_i32, %c0_i32_0 : i32, i32
  }
  func.func @transform_3(%arg0: i32) -> (i32, i32) {
    %c0_i32 = arith.constant 0 : i32
    %c0_i32_0 = arith.constant 0 : i32
    return %arg0, %c0_i32 : i32, i32
  }
}

module attributes {stable_mosaic.version = 11 : i64} {
  func.func @_gru_zr_kernel(%arg0: i32, %arg1: memref<256x432xbf16, #tpu.memory_space<vmem>>, %arg2: memref<432x16xbf16, #tpu.memory_space<vmem>>, %arg3: memref<1x16xf32, #tpu.memory_space<vmem>>, %arg4: memref<432x16xbf16, #tpu.memory_space<vmem>>, %arg5: memref<1x16xf32, #tpu.memory_space<vmem>>, %arg6: memref<256x16xf32, #tpu.memory_space<vmem>>, %arg7: memref<256x16xf32, #tpu.memory_space<vmem>>, %arg8: memref<256x16xf32, #tpu.memory_space<vmem>>) attributes {dimension_semantics = [#tpu.dimension_semantics<parallel>], iteration_bounds = array<i64: 2>, scalar_prefetch = 0 : i64, scratch_operands = 0 : i64, tpu.core_type = #tpu.core_type<tc>, window_params = [{transform_indices = @transform_0, window_bounds = array<i64: 256, 432>}, {pipeline_mode = #tpu.pipeline_mode<synchronous>, transform_indices = @transform_1, window_bounds = array<i64: 432, 16>}, {pipeline_mode = #tpu.pipeline_mode<synchronous>, transform_indices = @transform_2, window_bounds = array<i64: 1, 16>}, {pipeline_mode = #tpu.pipeline_mode<synchronous>, transform_indices = @transform_3, window_bounds = array<i64: 432, 16>}, {pipeline_mode = #tpu.pipeline_mode<synchronous>, transform_indices = @transform_4, window_bounds = array<i64: 1, 16>}, {transform_indices = @transform_5, window_bounds = array<i64: 256, 16>}, {transform_indices = @transform_6, window_bounds = array<i64: 256, 16>}, {transform_indices = @transform_7, window_bounds = array<i64: 256, 16>}]} {
    %c0 = arith.constant 0 : index
    %c0_0 = arith.constant 0 : index
    %0 = vector.load %arg1[%c0, %c0_0] : memref<256x432xbf16, #tpu.memory_space<vmem>>, vector<256x432xbf16>
    %c0_1 = arith.constant 0 : index
    %c0_2 = arith.constant 0 : index
    %1 = vector.load %arg2[%c0_1, %c0_2] : memref<432x16xbf16, #tpu.memory_space<vmem>>, vector<432x16xbf16>
    %cst = arith.constant dense<0.000000e+00> : vector<256x16xf32>
    %2 = tpu.matmul %0, %1, %cst {dimension_numbers = #tpu.dot_dimension_numbers<[1], [0], [0], [1], [0, 0, 1, 1], [], []>} : vector<256x432xbf16>, vector<432x16xbf16>, vector<256x16xf32> -> vector<256x16xf32>
    %c0_3 = arith.constant 0 : index
    %c0_4 = arith.constant 0 : index
    %3 = vector.load %arg3[%c0_3, %c0_4] : memref<1x16xf32, #tpu.memory_space<vmem>>, vector<1x16xf32>
    %4 = vector.broadcast %3 : vector<1x16xf32> to vector<256x16xf32>
    %5 = arith.addf %2, %4 : vector<256x16xf32>
    %cst_5 = arith.constant 0.000000e+00 : f32
    %6 = vector.broadcast %cst_5 : f32 to vector<256x16xf32>
    %7 = arith.subf %6, %5 : vector<256x16xf32>
    %8 = math.exp %7 : vector<256x16xf32>
    %cst_6 = arith.constant 1.000000e+00 : f32
    %9 = vector.broadcast %cst_6 : f32 to vector<256x16xf32>
    %10 = arith.addf %9, %8 : vector<256x16xf32>
    %11 = tpu.reciprocal %10 {approx = true} : vector<256x16xf32> -> vector<256x16xf32>
    %c0_7 = arith.constant 0 : index
    %c0_8 = arith.constant 0 : index
    %12 = vector.load %arg4[%c0_7, %c0_8] : memref<432x16xbf16, #tpu.memory_space<vmem>>, vector<432x16xbf16>
    %cst_9 = arith.constant dense<0.000000e+00> : vector<256x16xf32>
    %13 = tpu.matmul %0, %12, %cst_9 {dimension_numbers = #tpu.dot_dimension_numbers<[1], [0], [0], [1], [0, 0, 1, 1], [], []>} : vector<256x432xbf16>, vector<432x16xbf16>, vector<256x16xf32> -> vector<256x16xf32>
    %c0_10 = arith.constant 0 : index
    %c0_11 = arith.constant 0 : index
    %14 = vector.load %arg5[%c0_10, %c0_11] : memref<1x16xf32, #tpu.memory_space<vmem>>, vector<1x16xf32>
    %15 = vector.broadcast %14 : vector<1x16xf32> to vector<256x16xf32>
    %16 = arith.addf %13, %15 : vector<256x16xf32>
    %cst_12 = arith.constant 0.000000e+00 : f32
    %17 = vector.broadcast %cst_12 : f32 to vector<256x16xf32>
    %18 = arith.subf %17, %16 : vector<256x16xf32>
    %19 = math.exp %18 : vector<256x16xf32>
    %cst_13 = arith.constant 1.000000e+00 : f32
    %20 = vector.broadcast %cst_13 : f32 to vector<256x16xf32>
    %21 = arith.addf %20, %19 : vector<256x16xf32>
    %22 = tpu.reciprocal %21 {approx = true} : vector<256x16xf32> -> vector<256x16xf32>
    %c0_14 = arith.constant 0 : index
    %c0_15 = arith.constant 0 : index
    %23 = vector.load %arg7[%c0_14, %c0_15] : memref<256x16xf32, #tpu.memory_space<vmem>>, vector<256x16xf32>
    tpu.vector_store %arg7[%c0_14, %c0_15], %11 {strides = array<i32>} : memref<256x16xf32, #tpu.memory_space<vmem>>, vector<256x16xf32>,
    %c0_16 = arith.constant 0 : index
    %c0_17 = arith.constant 0 : index
    %24 = vector.load %arg6[%c0_16, %c0_17] : memref<256x16xf32, #tpu.memory_space<vmem>>, vector<256x16xf32>
    %25 = arith.mulf %22, %24 : vector<256x16xf32>
    %c0_18 = arith.constant 0 : index
    %c0_19 = arith.constant 0 : index
    %26 = vector.load %arg8[%c0_18, %c0_19] : memref<256x16xf32, #tpu.memory_space<vmem>>, vector<256x16xf32>
    tpu.vector_store %arg8[%c0_18, %c0_19], %25 {strides = array<i32>} : memref<256x16xf32, #tpu.memory_space<vmem>>, vector<256x16xf32>,
    return
  }
  func.func @transform_0(%arg0: i32) -> (i32, i32) {
    %c0_i32 = arith.constant 0 : i32
    %c0_i32_0 = arith.constant 0 : i32
    return %arg0, %c0_i32 : i32, i32
  }
  func.func @transform_1(%arg0: i32) -> (i32, i32) {
    %c0_i32 = arith.constant 0 : i32
    %c0_i32_0 = arith.constant 0 : i32
    %c0_i32_1 = arith.constant 0 : i32
    return %c0_i32, %c0_i32_0 : i32, i32
  }
  func.func @transform_2(%arg0: i32) -> (i32, i32) {
    %c0_i32 = arith.constant 0 : i32
    %c0_i32_0 = arith.constant 0 : i32
    %c0_i32_1 = arith.constant 0 : i32
    return %c0_i32, %c0_i32_0 : i32, i32
  }
  func.func @transform_3(%arg0: i32) -> (i32, i32) {
    %c0_i32 = arith.constant 0 : i32
    %c0_i32_0 = arith.constant 0 : i32
    %c0_i32_1 = arith.constant 0 : i32
    return %c0_i32, %c0_i32_0 : i32, i32
  }
  func.func @transform_4(%arg0: i32) -> (i32, i32) {
    %c0_i32 = arith.constant 0 : i32
    %c0_i32_0 = arith.constant 0 : i32
    %c0_i32_1 = arith.constant 0 : i32
    return %c0_i32, %c0_i32_0 : i32, i32
  }
  func.func @transform_5(%arg0: i32) -> (i32, i32) {
    %c0_i32 = arith.constant 0 : i32
    %c0_i32_0 = arith.constant 0 : i32
    return %arg0, %c0_i32 : i32, i32
  }
  func.func @transform_6(%arg0: i32) -> (i32, i32) {
    %c0_i32 = arith.constant 0 : i32
    %c0_i32_0 = arith.constant 0 : i32
    return %arg0, %c0_i32 : i32, i32
  }
  func.func @transform_7(%arg0: i32) -> (i32, i32) {
    %c0_i32 = arith.constant 0 : i32
    %c0_i32_0 = arith.constant 0 : i32
    return %arg0, %c0_i32 : i32, i32
  }
}

module attributes {stable_mosaic.version = 11 : i64} {
  func.func @_gru_q_kernel(%arg0: i32, %arg1: memref<256x432xbf16, #tpu.memory_space<vmem>>, %arg2: memref<432x16xbf16, #tpu.memory_space<vmem>>, %arg3: memref<1x16xf32, #tpu.memory_space<vmem>>, %arg4: memref<256x16xf32, #tpu.memory_space<vmem>>, %arg5: memref<256x16xf32, #tpu.memory_space<vmem>>, %arg6: memref<256x16xf32, #tpu.memory_space<vmem>>) attributes {dimension_semantics = [#tpu.dimension_semantics<parallel>], iteration_bounds = array<i64: 2>, scalar_prefetch = 0 : i64, scratch_operands = 0 : i64, tpu.core_type = #tpu.core_type<tc>, window_params = [{transform_indices = @transform_0, window_bounds = array<i64: 256, 432>}, {pipeline_mode = #tpu.pipeline_mode<synchronous>, transform_indices = @transform_1, window_bounds = array<i64: 432, 16>}, {pipeline_mode = #tpu.pipeline_mode<synchronous>, transform_indices = @transform_2, window_bounds = array<i64: 1, 16>}, {transform_indices = @transform_3, window_bounds = array<i64: 256, 16>}, {transform_indices = @transform_4, window_bounds = array<i64: 256, 16>}, {transform_indices = @transform_5, window_bounds = array<i64: 256, 16>}]} {
    %c0 = arith.constant 0 : index
    %c0_0 = arith.constant 0 : index
    %0 = vector.load %arg1[%c0, %c0_0] : memref<256x432xbf16, #tpu.memory_space<vmem>>, vector<256x432xbf16>
    %c0_1 = arith.constant 0 : index
    %c0_2 = arith.constant 0 : index
    %1 = vector.load %arg2[%c0_1, %c0_2] : memref<432x16xbf16, #tpu.memory_space<vmem>>, vector<432x16xbf16>
    %cst = arith.constant dense<0.000000e+00> : vector<256x16xf32>
    %2 = tpu.matmul %0, %1, %cst {dimension_numbers = #tpu.dot_dimension_numbers<[1], [0], [0], [1], [0, 0, 1, 1], [], []>} : vector<256x432xbf16>, vector<432x16xbf16>, vector<256x16xf32> -> vector<256x16xf32>
    %c0_3 = arith.constant 0 : index
    %c0_4 = arith.constant 0 : index
    %3 = vector.load %arg3[%c0_3, %c0_4] : memref<1x16xf32, #tpu.memory_space<vmem>>, vector<1x16xf32>
    %4 = vector.broadcast %3 : vector<1x16xf32> to vector<256x16xf32>
    %5 = arith.addf %2, %4 : vector<256x16xf32>
    %6 = math.tanh %5 : vector<256x16xf32>
    %c0_5 = arith.constant 0 : index
    %c0_6 = arith.constant 0 : index
    %7 = vector.load %arg4[%c0_5, %c0_6] : memref<256x16xf32, #tpu.memory_space<vmem>>, vector<256x16xf32>
    %cst_7 = arith.constant 1.000000e+00 : f32
    %8 = vector.broadcast %cst_7 : f32 to vector<256x16xf32>
    %9 = arith.subf %8, %7 : vector<256x16xf32>
    %c0_8 = arith.constant 0 : index
    %c0_9 = arith.constant 0 : index
    %10 = vector.load %arg5[%c0_8, %c0_9] : memref<256x16xf32, #tpu.memory_space<vmem>>, vector<256x16xf32>
    %11 = arith.mulf %9, %10 : vector<256x16xf32>
    %12 = arith.mulf %7, %6 : vector<256x16xf32>
    %13 = arith.addf %11, %12 : vector<256x16xf32>
    %c0_10 = arith.constant 0 : index
    %c0_11 = arith.constant 0 : index
    %14 = vector.load %arg6[%c0_10, %c0_11] : memref<256x16xf32, #tpu.memory_space<vmem>>, vector<256x16xf32>
    tpu.vector_store %arg6[%c0_10, %c0_11], %13 {strides = array<i32>} : memref<256x16xf32, #tpu.memory_space<vmem>>, vector<256x16xf32>,
    return
  }
  func.func @transform_0(%arg0: i32) -> (i32, i32) {
    %c0_i32 = arith.constant 0 : i32
    %c0_i32_0 = arith.constant 0 : i32
    return %arg0, %c0_i32 : i32, i32
  }
  func.func @transform_1(%arg0: i32) -> (i32, i32) {
    %c0_i32 = arith.constant 0 : i32
    %c0_i32_0 = arith.constant 0 : i32
    %c0_i32_1 = arith.constant 0 : i32
    return %c0_i32, %c0_i32_0 : i32, i32
  }
  func.func @transform_2(%arg0: i32) -> (i32, i32) {
    %c0_i32 = arith.constant 0 : i32
    %c0_i32_0 = arith.constant 0 : i32
    %c0_i32_1 = arith.constant 0 : i32
    return %c0_i32, %c0_i32_0 : i32, i32
  }
  func.func @transform_3(%arg0: i32) -> (i32, i32) {
    %c0_i32 = arith.constant 0 : i32
    %c0_i32_0 = arith.constant 0 : i32
    return %arg0, %c0_i32 : i32, i32
  }
  func.func @transform_4(%arg0: i32) -> (i32, i32) {
    %c0_i32 = arith.constant 0 : i32
    %c0_i32_0 = arith.constant 0 : i32
    return %arg0, %c0_i32 : i32, i32
  }
  func.func @transform_5(%arg0: i32) -> (i32, i32) {
    %c0_i32 = arith.constant 0 : i32
    %c0_i32_0 = arith.constant 0 : i32
    return %arg0, %c0_i32 : i32, i32
  }
}

module attributes {stable_mosaic.version = 11 : i64} {
  func.func @_head_kernel(%arg0: i32, %arg1: memref<256x144xbf16, #tpu.memory_space<vmem>>, %arg2: memref<144x128xbf16, #tpu.memory_space<vmem>>, %arg3: memref<1x128xf32, #tpu.memory_space<vmem>>, %arg4: memref<128x1xbf16, #tpu.memory_space<vmem>>, %arg5: memref<1x1xf32, #tpu.memory_space<vmem>>, %arg6: memref<256x1xf32, #tpu.memory_space<vmem>>) attributes {dimension_semantics = [#tpu.dimension_semantics<parallel>], iteration_bounds = array<i64: 2>, scalar_prefetch = 0 : i64, scratch_operands = 0 : i64, tpu.core_type = #tpu.core_type<tc>, window_params = [{transform_indices = @transform_0, window_bounds = array<i64: 256, 144>}, {pipeline_mode = #tpu.pipeline_mode<synchronous>, transform_indices = @transform_1, window_bounds = array<i64: 144, 128>}, {pipeline_mode = #tpu.pipeline_mode<synchronous>, transform_indices = @transform_2, window_bounds = array<i64: 1, 128>}, {pipeline_mode = #tpu.pipeline_mode<synchronous>, transform_indices = @transform_3, window_bounds = array<i64: 128, 1>}, {pipeline_mode = #tpu.pipeline_mode<synchronous>, transform_indices = @transform_4, window_bounds = array<i64: 1, 1>}, {transform_indices = @transform_5, window_bounds = array<i64: 256, 1>}]} {
    %c0 = arith.constant 0 : index
    %c0_0 = arith.constant 0 : index
    %0 = vector.load %arg1[%c0, %c0_0] : memref<256x144xbf16, #tpu.memory_space<vmem>>, vector<256x144xbf16>
    %c0_1 = arith.constant 0 : index
    %c0_2 = arith.constant 0 : index
    %1 = vector.load %arg2[%c0_1, %c0_2] : memref<144x128xbf16, #tpu.memory_space<vmem>>, vector<144x128xbf16>
    %cst = arith.constant dense<0.000000e+00> : vector<256x128xf32>
    %2 = tpu.matmul %0, %1, %cst {dimension_numbers = #tpu.dot_dimension_numbers<[1], [0], [0], [1], [0, 0, 1, 1], [], []>} : vector<256x144xbf16>, vector<144x128xbf16>, vector<256x128xf32> -> vector<256x128xf32>
    %c0_3 = arith.constant 0 : index
    %c0_4 = arith.constant 0 : index
    %3 = vector.load %arg3[%c0_3, %c0_4] : memref<1x128xf32, #tpu.memory_space<vmem>>, vector<1x128xf32>
    %4 = vector.broadcast %3 : vector<1x128xf32> to vector<256x128xf32>
    %5 = arith.addf %2, %4 : vector<256x128xf32>
    %cst_5 = arith.constant 0.000000e+00 : f32
    %6 = vector.broadcast %cst_5 : f32 to vector<256x128xf32>
    %7 = arith.maximumf %5, %6 : vector<256x128xf32>
    %8 = arith.truncf %7 : vector<256x128xf32> to vector<256x128xbf16>
    %c0_6 = arith.constant 0 : index
    %c0_7 = arith.constant 0 : index
    %9 = vector.load %arg4[%c0_6, %c0_7] : memref<128x1xbf16, #tpu.memory_space<vmem>>, vector<128x1xbf16>
    %cst_8 = arith.constant dense<0.000000e+00> : vector<256x1xf32>
    %10 = tpu.matmul %8, %9, %cst_8 {dimension_numbers = #tpu.dot_dimension_numbers<[1], [0], [0], [1], [0, 0, 1, 1], [], []>} : vector<256x128xbf16>, vector<128x1xbf16>, vector<256x1xf32> -> vector<256x1xf32>
    %c0_9 = arith.constant 0 : index
    %c0_10 = arith.constant 0 : index
    %11 = vector.load %arg5[%c0_9, %c0_10] : memref<1x1xf32, #tpu.memory_space<vmem>>, vector<1x1xf32>
    %12 = vector.broadcast %11 : vector<1x1xf32> to vector<256x1xf32>
    %13 = arith.addf %10, %12 : vector<256x1xf32>
    %cst_11 = arith.constant 1.000000e+00 : f32
    %14 = vector.broadcast %cst_11 : f32 to vector<256x1xf32>
    %15 = arith.mulf %13, %14 : vector<256x1xf32>
    %c0_12 = arith.constant 0 : index
    %c0_13 = arith.constant 0 : index
    %16 = vector.load %arg6[%c0_12, %c0_13] : memref<256x1xf32, #tpu.memory_space<vmem>>, vector<256x1xf32>
    tpu.vector_store %arg6[%c0_12, %c0_13], %15 {strides = array<i32>} : memref<256x1xf32, #tpu.memory_space<vmem>>, vector<256x1xf32>,
    return
  }
  func.func @transform_0(%arg0: i32) -> (i32, i32) {
    %c0_i32 = arith.constant 0 : i32
    %c0_i32_0 = arith.constant 0 : i32
    return %arg0, %c0_i32 : i32, i32
  }
  func.func @transform_1(%arg0: i32) -> (i32, i32) {
    %c0_i32 = arith.constant 0 : i32
    %c0_i32_0 = arith.constant 0 : i32
    %c0_i32_1 = arith.constant 0 : i32
    return %c0_i32, %c0_i32_0 : i32, i32
  }
  func.func @transform_2(%arg0: i32) -> (i32, i32) {
    %c0_i32 = arith.constant 0 : i32
    %c0_i32_0 = arith.constant 0 : i32
    %c0_i32_1 = arith.constant 0 : i32
    return %c0_i32, %c0_i32_0 : i32, i32
  }
  func.func @transform_3(%arg0: i32) -> (i32, i32) {
    %c0_i32 = arith.constant 0 : i32
    %c0_i32_0 = arith.constant 0 : i32
    %c0_i32_1 = arith.constant 0 : i32
    return %c0_i32, %c0_i32_0 : i32, i32
  }
  func.func @transform_4(%arg0: i32) -> (i32, i32) {
    %c0_i32 = arith.constant 0 : i32
    %c0_i32_0 = arith.constant 0 : i32
    %c0_i32_1 = arith.constant 0 : i32
    return %c0_i32, %c0_i32_0 : i32, i32
  }
  func.func @transform_5(%arg0: i32) -> (i32, i32) {
    %c0_i32 = arith.constant 0 : i32
    %c0_i32_0 = arith.constant 0 : i32
    return %arg0, %c0_i32 : i32, i32
  }
}

module attributes {stable_mosaic.version = 11 : i64} {
  func.func @_head_kernel(%arg0: i32, %arg1: memref<256x144xbf16, #tpu.memory_space<vmem>>, %arg2: memref<144x128xbf16, #tpu.memory_space<vmem>>, %arg3: memref<1x128xf32, #tpu.memory_space<vmem>>, %arg4: memref<128x36xbf16, #tpu.memory_space<vmem>>, %arg5: memref<1x36xf32, #tpu.memory_space<vmem>>, %arg6: memref<256x36xf32, #tpu.memory_space<vmem>>) attributes {dimension_semantics = [#tpu.dimension_semantics<parallel>], iteration_bounds = array<i64: 2>, scalar_prefetch = 0 : i64, scratch_operands = 0 : i64, tpu.core_type = #tpu.core_type<tc>, window_params = [{transform_indices = @transform_0, window_bounds = array<i64: 256, 144>}, {pipeline_mode = #tpu.pipeline_mode<synchronous>, transform_indices = @transform_1, window_bounds = array<i64: 144, 128>}, {pipeline_mode = #tpu.pipeline_mode<synchronous>, transform_indices = @transform_2, window_bounds = array<i64: 1, 128>}, {pipeline_mode = #tpu.pipeline_mode<synchronous>, transform_indices = @transform_3, window_bounds = array<i64: 128, 36>}, {pipeline_mode = #tpu.pipeline_mode<synchronous>, transform_indices = @transform_4, window_bounds = array<i64: 1, 36>}, {transform_indices = @transform_5, window_bounds = array<i64: 256, 36>}]} {
    %c0 = arith.constant 0 : index
    %c0_0 = arith.constant 0 : index
    %0 = vector.load %arg1[%c0, %c0_0] : memref<256x144xbf16, #tpu.memory_space<vmem>>, vector<256x144xbf16>
    %c0_1 = arith.constant 0 : index
    %c0_2 = arith.constant 0 : index
    %1 = vector.load %arg2[%c0_1, %c0_2] : memref<144x128xbf16, #tpu.memory_space<vmem>>, vector<144x128xbf16>
    %cst = arith.constant dense<0.000000e+00> : vector<256x128xf32>
    %2 = tpu.matmul %0, %1, %cst {dimension_numbers = #tpu.dot_dimension_numbers<[1], [0], [0], [1], [0, 0, 1, 1], [], []>} : vector<256x144xbf16>, vector<144x128xbf16>, vector<256x128xf32> -> vector<256x128xf32>
    %c0_3 = arith.constant 0 : index
    %c0_4 = arith.constant 0 : index
    %3 = vector.load %arg3[%c0_3, %c0_4] : memref<1x128xf32, #tpu.memory_space<vmem>>, vector<1x128xf32>
    %4 = vector.broadcast %3 : vector<1x128xf32> to vector<256x128xf32>
    %5 = arith.addf %2, %4 : vector<256x128xf32>
    %cst_5 = arith.constant 0.000000e+00 : f32
    %6 = vector.broadcast %cst_5 : f32 to vector<256x128xf32>
    %7 = arith.maximumf %5, %6 : vector<256x128xf32>
    %8 = arith.truncf %7 : vector<256x128xf32> to vector<256x128xbf16>
    %c0_6 = arith.constant 0 : index
    %c0_7 = arith.constant 0 : index
    %9 = vector.load %arg4[%c0_6, %c0_7] : memref<128x36xbf16, #tpu.memory_space<vmem>>, vector<128x36xbf16>
    %cst_8 = arith.constant dense<0.000000e+00> : vector<256x36xf32>
    %10 = tpu.matmul %8, %9, %cst_8 {dimension_numbers = #tpu.dot_dimension_numbers<[1], [0], [0], [1], [0, 0, 1, 1], [], []>} : vector<256x128xbf16>, vector<128x36xbf16>, vector<256x36xf32> -> vector<256x36xf32>
    %c0_9 = arith.constant 0 : index
    %c0_10 = arith.constant 0 : index
    %11 = vector.load %arg5[%c0_9, %c0_10] : memref<1x36xf32, #tpu.memory_space<vmem>>, vector<1x36xf32>
    %12 = vector.broadcast %11 : vector<1x36xf32> to vector<256x36xf32>
    %13 = arith.addf %10, %12 : vector<256x36xf32>
    %cst_11 = arith.constant 2.500000e-01 : f32
    %14 = vector.broadcast %cst_11 : f32 to vector<256x36xf32>
    %15 = arith.mulf %13, %14 : vector<256x36xf32>
    %c0_12 = arith.constant 0 : index
    %c0_13 = arith.constant 0 : index
    %16 = vector.load %arg6[%c0_12, %c0_13] : memref<256x36xf32, #tpu.memory_space<vmem>>, vector<256x36xf32>
    tpu.vector_store %arg6[%c0_12, %c0_13], %15 {strides = array<i32>} : memref<256x36xf32, #tpu.memory_space<vmem>>, vector<256x36xf32>,
    return
  }
  func.func @transform_0(%arg0: i32) -> (i32, i32) {
    %c0_i32 = arith.constant 0 : i32
    %c0_i32_0 = arith.constant 0 : i32
    return %arg0, %c0_i32 : i32, i32
  }
  func.func @transform_1(%arg0: i32) -> (i32, i32) {
    %c0_i32 = arith.constant 0 : i32
    %c0_i32_0 = arith.constant 0 : i32
    %c0_i32_1 = arith.constant 0 : i32
    return %c0_i32, %c0_i32_0 : i32, i32
  }
  func.func @transform_2(%arg0: i32) -> (i32, i32) {
    %c0_i32 = arith.constant 0 : i32
    %c0_i32_0 = arith.constant 0 : i32
    %c0_i32_1 = arith.constant 0 : i32
    return %c0_i32, %c0_i32_0 : i32, i32
  }
  func.func @transform_3(%arg0: i32) -> (i32, i32) {
    %c0_i32 = arith.constant 0 : i32
    %c0_i32_0 = arith.constant 0 : i32
    %c0_i32_1 = arith.constant 0 : i32
    return %c0_i32, %c0_i32_0 : i32, i32
  }
  func.func @transform_4(%arg0: i32) -> (i32, i32) {
    %c0_i32 = arith.constant 0 : i32
    %c0_i32_0 = arith.constant 0 : i32
    %c0_i32_1 = arith.constant 0 : i32
    return %c0_i32, %c0_i32_0 : i32, i32
  }
  func.func @transform_5(%arg0: i32) -> (i32, i32) {
    %c0_i32 = arith.constant 0 : i32
    %c0_i32_0 = arith.constant 0 : i32
    return %arg0, %c0_i32 : i32, i32
  }
}

</mosaic_0001>

<llo_original>
// kernel: basic_multi_update_block.11
$region0: #{basic_multi_update_block.11}
  #allocation0 [shape = 'u32[]', space=smem, size = 0x4, offset = 0x4, fixed_abs, tag = 'smem constant byte address 0x4 - core index']
  #allocation1 [shape = 'u32[144,128]{1,0:T(1,128)}', space=vmem, size = 0x12000, scoped, tag = 'internal scratch']
  %s0 = inlined_call_operand.vmem [shape: bf16[512,49], index: 0, kind: input, shape index: {}]
  %s1 = inlined_call_operand.vmem [shape: bf16[49,8], index: 1, kind: input, shape index: {}]
  %s2 = inlined_call_operand.vmem [shape: f32[1,8], index: 2, kind: input, shape index: {}]
  %s3 = inlined_call_operand.vmem [shape: f32[512,8], index: 3, kind: output, shape index: {}]
  %s4 = sld [smem:[#allocation0]]
  $region45: #{basic_multi_update_block.11} parent=0
    _
  %s6 = ssub.s32 1, %s4
  %s7 = scalar_select 0, %s6, %s4
  loop: start=0, step=1, limit=4
  $region2: #{basic_multi_update_block.11} parent=0 // loop_pre_header
    _
  $region3: #{basic_multi_update_block.11} parent=0 // loop_header
    %s9 = sphi 0, %s13
    %p10 = scmp.ge.s32.totalorder %s9, 4
    %s19 = sphi 0, %s21
    %s22 = sphi 0, %s19
    %s23 = sphi 0, %s22
    %s39 = sphi 0, %s23
    %s43 = sphi 0, %s43
    %s45 = sphi 0, %s43
    %s46 = sphi 0, %s45
    %s60 = sphi 0, %s46
    %s64 = sphi 0, %s64
    %s66 = sphi 0, %s64
    %s67 = sphi 0, %s66
    %s81 = sphi 0, %s67
    %s87 = sphi 0, %s89
    %s90 = sphi 0, %s87
    %s91 = sphi 0, %s90
    %s107 = sphi 0, %s91
  $region4: #{basic_multi_update_block.11} parent=0 // loop_header_branch
    %12 = sbr.rel (%p10) target = $region8
  $region5: #{basic_multi_update_block.11} parent=0 // loop_body
    %s14 = ssub.s32 %s9, 1
    %s15 = ssub.s32 %s9, 2
    %s16 = sadd.s32 %s9, 1
    %s17 = ssub.s32 %s9, %s16
    %p18 = scmp.eq.s32.totalorder %s17, 0
    %s20 = sadd.s32 %s19, 1
    %s21 = scalar_select %p18, %s19, %s20
    %p24 = pneg %p18
    %p25 = scmp.eq.s32.totalorder %s9, 1
    %p26 = por %p24, %p25
    %p27 = scmp.ne.s32.totalorder %s19, %s22
    %p28 = scmp.eq.s32.totalorder %s9, 0
    %p29 = por %p27, %p28
    %p30 = scmp.ne.s32.totalorder %s19, %s22
    %p31 = scmp.eq.s32.totalorder %s14, 1
    %p32 = por %p30, %p31
    %p33 = scmp.ne.s32.totalorder %s22, %s23
    %p34 = scmp.eq.s32.totalorder %s14, 0
    %p35 = por %p33, %p34
    %p36 = scmp.ne.s32.totalorder %s22, %s23
    %p37 = scmp.eq.s32.totalorder %s15, 1
    %p38 = por %p36, %p37
    %p40 = scmp.ne.s32.totalorder %s23, %s39
    %p41 = scmp.eq.s32.totalorder %s15, 0
    %p42 = por %p40, %p41
    %s44 = sadd.s32 %s43, 1
    %p47 = scmp.eq.s32.totalorder %s9, 1
    %p48 = scmp.ne.s32.totalorder %s43, %s45
    %p49 = scmp.eq.s32.totalorder %s9, 0
    %p50 = por %p48, %p49
    %p51 = scmp.ne.s32.totalorder %s43, %s45
    %p52 = scmp.eq.s32.totalorder %s14, 1
    %p53 = por %p51, %p52
    %p54 = scmp.ne.s32.totalorder %s45, %s46
    %p55 = scmp.eq.s32.totalorder %s14, 0
    %p56 = por %p54, %p55
    %p57 = scmp.ne.s32.totalorder %s45, %s46
    %p58 = scmp.eq.s32.totalorder %s15, 1
    %p59 = por %p57, %p58
    %p61 = scmp.ne.s32.totalorder %s46, %s60
    %p62 = scmp.eq.s32.totalorder %s15, 0
    %p63 = por %p61, %p62
    %s65 = sadd.s32 %s64, 1
    %p68 = scmp.eq.s32.totalorder %s9, 1
    %p69 = scmp.ne.s32.totalorder %s64, %s66
    %p70 = scmp.eq.s32.totalorder %s9, 0
    %p71 = por %p69, %p70
    %p72 = scmp.ne.s32.totalorder %s64, %s66
    %p73 = scmp.eq.s32.totalorder %s14, 1
    %p74 = por %p72, %p73
    %p75 = scmp.ne.s32.totalorder %s66, %s67
    %p76 = scmp.eq.s32.totalorder %s14, 0
    %p77 = por %p75, %p76
    %p78 = scmp.ne.s32.totalorder %s66, %s67
    %p79 = scmp.eq.s32.totalorder %s15, 1
    %p80 = por %p78, %p79
    %p82 = scmp.ne.s32.totalorder %s67, %s81
    %p83 = scmp.eq.s32.totalorder %s15, 0
    %p84 = por %p82, %p83
    %s85 = ssub.s32 %s9, %s16
    %p86 = scmp.eq.s32.totalorder %s85, 0
    %s88 = sadd.s32 %s87, 1
    %s89 = scalar_select %p86, %s87, %s88
    %p92 = pneg %p86
    %p93 = scmp.eq.s32.totalorder %s9, 1
    %p94 = por %p92, %p93
    %p95 = scmp.ne.s32.totalorder %s87, %s90
    %p96 = scmp.eq.s32.totalorder %s9, 0
    %p97 = por %p95, %p96
    %p98 = scmp.ne.s32.totalorder %s87, %s90
    %p99 = scmp.eq.s32.totalorder %s14, 1
    %p100 = por %p98, %p99
    %p101 = scmp.ne.s32.totalorder %s90, %s91
    %p102 = scmp.eq.s32.totalorder %s14, 0
    %p103 = por %p101, %p102
    %p104 = scmp.ne.s32.totalorder %s90, %s91
    %p105 = scmp.eq.s32.totalorder %s15, 1
    %p106 = por %p104, %p105
    %p108 = scmp.ne.s32.totalorder %s91, %s107
    %p109 = scmp.eq.s32.totalorder %s15, 0
    %p110 = por %p108, %p109
    %p111 = scmp.le.s32.totalorder 1, %s9
    %p112 = scmp.lt.s32.totalorder %s9, 3
    %p113 = pnand %p111, %p112
    %p114 = pneg %p113
    // Predicated region
    $region9: #{basic_multi_update_block.11} parent=5 // pred_check
      _
    $region10: #{basic_multi_update_block.11} parent=5 // pred_check_branch
      %116 = sbr.rel (%p113) target = $region12
    $region11: #{basic_multi_update_block.11} parent=5 // pred_region
      %s117 = ssub.s32 %s9, 1
      // Predicated region
      $region13: #{basic_multi_update_block.11} parent=11 // pred_check
        %p118 = pneg %p56
      $region14: #{basic_multi_update_block.11} parent=11 // pred_check_branch
        %120 = sbr.rel (%p118) target = $region16
      $region15: #{basic_multi_update_block.11} parent=11 // pred_region
        _
      $region16: #{basic_multi_update_block.11} parent=11 // pred_fallthru
        _
      // Predicated region
      $region17: #{basic_multi_update_block.11} parent=11 // pred_check
        %p121 = pneg %p77
      $region18: #{basic_multi_update_block.11} parent=11 // pred_check_branch
        %123 = sbr.rel (%p121) target = $region20
      $region19: #{basic_multi_update_block.11} parent=11 // pred_region
        _
      $region20: #{basic_multi_update_block.11} parent=11 // pred_fallthru
        _
    $region12: #{basic_multi_update_block.11} parent=5 // pred_fallthru
      _
    %p124 = scmp.lt.s32.totalorder %s9, 2
    // Predicated region
    $region21: #{basic_multi_update_block.11} parent=5 // pred_check
      %p125 = pneg %p124
    $region22: #{basic_multi_update_block.11} parent=5 // pred_check_branch
      %127 = sbr.rel (%p125) target = $region24
    $region23: #{basic_multi_update_block.11} parent=5 // pred_region
      // Predicated region
      $region25: #{basic_multi_update_block.11} parent=23 // pred_check
        %p128 = pneg %p29
      $region26: #{basic_multi_update_block.11} parent=23 // pred_check_branch
        %130 = sbr.rel (%p128) target = $region28
      $region27: #{basic_multi_update_block.11} parent=23 // pred_region
        %s131 = smul.u32 32, %s9
        %p132 = scmp.lt.s32.totalorder %s131, 63
        %s133 = scalar_select %p132, %s131, 63
        %s134 = smul.addr %s133, 4
        %s135 = scalar_lea.vmem %s0, %s134
        %s136 = smul.u32 32, %s9
      $region28: #{basic_multi_update_block.11} parent=23 // pred_fallthru
        _
    $region24: #{basic_multi_update_block.11} parent=5 // pred_fallthru
      _
    %p137 = scmp.le.s32.totalorder 1, %s9
    %p138 = scmp.lt.s32.totalorder %s9, 3
    %p139 = pnand %p137, %p138
    %p140 = pneg %p139
    // Predicated region
    $region29: #{basic_multi_update_block.11} parent=5 // pred_check
      _
    $region30: #{basic_multi_update_block.11} parent=5 // pred_check_branch
      %142 = sbr.rel (%p139) target = $region32
    $region31: #{basic_multi_update_block.11} parent=5 // pred_region
      %s143 = ssub.s32 %s9, 1
      %s144 = smul.u32 32, %s14
      %p145 = scmp.lt.s32.totalorder %s144, 63
      %s146 = scalar_select %p145, %s144, 63
      %s147 = smul.addr %s146, 4
      %s148 = scalar_lea.vmem %s0, %s147
      %p149 = pneg %p35
      %p150 = pneg %p32
      %p151 = pneg %p56
      %p152 = pneg %p53
      %p153 = pneg %p77
      %p154 = pneg %p74
      %p155 = pneg %p103
      %p156 = pneg %p100
      %s157 = smul.u32 32, %s14
      %p158 = scmp.lt.s32.totalorder %s157, 63
      %s159 = scalar_select %p158, %s157, 63
      %s160 = smul.addr %s159, 8
      %s161 = scalar_lea.vmem %s3, %s160
      %s162 = smul.u32 32, %s14
      %p163 = scmp.lt.s32.totalorder %s162, 63
      %s164 = scalar_select %p163, %s162, 63
      %s165 = smul.addr %s164, 4
      %s166 = scalar_lea.vmem %s0, %s165
      %s167 = smul.u32 32, %s14
      %s168 = smul.u32 32, %s14
      %p169 = scmp.lt.s32.totalorder %s168, 63
      %s170 = scalar_select %p169, %s168, 63
      %s171 = smul.addr %s170, 8
      %s172 = scalar_lea.vmem %s3, %s171
      %s173 = smul.u32 32, %s14
      %v175 = vld [vmem:[%s166] sm:$0xf]
      %v176 = vld [vmem:[%s166 + $0x4] sm:$0xf]
      %v177 = vld [vmem:[%s166 + $0x8] sm:$0xf]
      %v178 = vld [vmem:[%s166 + $0xc] sm:$0xf]
      %v179 = vld [vmem:[%s166 + $0x10] sm:$0xf]
      %v180 = vld [vmem:[%s166 + $0x14] sm:$0xf]
      %v181 = vld [vmem:[%s166 + $0x18] sm:$0xf]
      %v182 = vld [vmem:[%s166 + $0x1c] sm:$0xf]
      %v183 = vld [vmem:[%s166 + $0x20] sm:$0xf]
      %v184 = vld [vmem:[%s166 + $0x24] sm:$0xf]
      %v185 = vld [vmem:[%s166 + $0x28] sm:$0xf]
      %v186 = vld [vmem:[%s166 + $0x2c] sm:$0xf]
      %v187 = vld [vmem:[%s166 + $0x30] sm:$0xf]
      %v188 = vld [vmem:[%s166 + $0x34] sm:$0xf]
      %v189 = vld [vmem:[%s166 + $0x38] sm:$0xf]
      %v190 = vld [vmem:[%s166 + $0x3c] sm:$0xf]
      %v191 = vld [vmem:[%s166 + $0x40] sm:$0xf]
      %v192 = vld [vmem:[%s166 + $0x44] sm:$0xf]
      %v193 = vld [vmem:[%s166 + $0x48] sm:$0xf]
      %v194 = vld [vmem:[%s166 + $0x4c] sm:$0xf]
      %v195 = vld [vmem:[%s166 + $0x50] sm:$0xf]
      %v196 = vld [vmem:[%s166 + $0x54] sm:$0xf]
      %v197 = vld [vmem:[%s166 + $0x58] sm:$0xf]
      %v198 = vld [vmem:[%s166 + $0x5c] sm:$0xf]
      %v199 = vld [vmem:[%s166 + $0x60] sm:$0xf]
      %v200 = vld [vmem:[%s166 + $0x64] sm:$0xf]
      %v201 = vld [vmem:[%s166 + $0x68] sm:$0xf]
      %v202 = vld [vmem:[%s166 + $0x6c] sm:$0xf]
      %v203 = vld [vmem:[%s166 + $0x70] sm:$0xf]
      %v204 = vld [vmem:[%s166 + $0x74] sm:$0xf]
      %v205 = vld [vmem:[%s166 + $0x78] sm:$0xf]
      %v206 = vld [vmem:[%s166 + $0x7c] sm:$0xf]
      %v207 = vld [vmem:[%s1] sm:$0xf]
      %v208 = vld [vmem:[%s1 + $0x4] sm:$0xf]
      %v209 = vld [vmem:[%s1 + $0x8] sm:$0xf]
      %v210 = vld [vmem:[%s1 + $0xc] sm:$0xf]
      %v211 = vld [vmem:[%s1 + $0x10] sm:$0xf]
      %v212 = vld [vmem:[%s1 + $0x14] sm:$0xf]
      %v213 = vld [vmem:[%s1 + $0x18] sm:$0x1]
      %v214 = vld [vmem:[%s2] sm:$0x1]
      %v216 = vlaneseq
      %v217 = vshrl.u32 %v216, 7
      %v218 = vsub.s32 0, %v217
      %v219 = vrot.slane %v214, %v218
      %v253 = vunpack.c.l.b16 %v175
      %v254 = vunpack.c.l.b16 %v176
      %v255 = vunpack.c.l.b16 %v177
      %v256 = vunpack.c.l.b16 %v178
      %v257 = vunpack.c.l.b16 %v179
      %v258 = vunpack.c.l.b16 %v180
      %v259 = vunpack.c.l.b16 %v181
      %v260 = vunpack.c.l.b16 %v182
      %v261 = vunpack.c.l.b16 %v183
      %v262 = vunpack.c.l.b16 %v184
      %v263 = vunpack.c.l.b16 %v185
      %v264 = vunpack.c.l.b16 %v186
      %v265 = vunpack.c.l.b16 %v187
      %v266 = vunpack.c.l.b16 %v188
      %v267 = vunpack.c.l.b16 %v189
      %v268 = vunpack.c.l.b16 %v190
      %v269 = vunpack.c.l.b16 %v191
      %v270 = vunpack.c.l.b16 %v192
      %v271 = vunpack.c.l.b16 %v193
      %v272 = vunpack.c.l.b16 %v194
      %v273 = vunpack.c.l.b16 %v195
      %v274 = vunpack.c.l.b16 %v196
      %v275 = vunpack.c.l.b16 %v197
      %v276 = vunpack.c.l.b16 %v198
      %v277 = vunpack.c.l.b16 %v199
      %v278 = vunpack.c.l.b16 %v200
      %v279 = vunpack.c.l.b16 %v201
      %v280 = vunpack.c.l.b16 %v202
      %v281 = vunpack.c.l.b16 %v203
      %v282 = vunpack.c.l.b16 %v204
      %v283 = vunpack.c.l.b16 %v205
      %v284 = vunpack.c.l.b16 %v206
      %v285 = vpack.c.b16 %v254, %v253
      %v286 = vpack.c.b16 %v256, %v255
      %v287 = vpack.c.b16 %v258, %v257
      %v288 = vpack.c.b16 %v260, %v259
      %v289 = vpack.c.b16 %v262, %v261
      %v290 = vpack.c.b16 %v264, %v263
      %v291 = vpack.c.b16 %v266, %v265
      %v292 = vpack.c.b16 %v268, %v267
      %v293 = vpack.c.b16 %v270, %v269
      %v294 = vpack.c.b16 %v272, %v271
      %v295 = vpack.c.b16 %v274, %v273
      %v296 = vpack.c.b16 %v276, %v275
      %v297 = vpack.c.b16 %v278, %v277
      %v298 = vpack.c.b16 %v280, %v279
      %v299 = vpack.c.b16 %v282, %v281
      %v300 = vpack.c.b16 %v284, %v283
      %v308 = vunpack.c.l.b16 %v207
      %v309 = vunpack.c.l.b16 %v208
      %v310 = vunpack.c.l.b16 %v209
      %v311 = vunpack.c.l.b16 %v210
      %v312 = vunpack.c.l.b16 %v211
      %v313 = vunpack.c.l.b16 %v212
      %v314 = vunpack.c.l.b16 %v213
      %v315 = vpack.c.b16 %v309, %v308
      %v316 = vpack.c.b16 %v311, %v310
      %v317 = vpack.c.b16 %v313, %v312
      %v318 = vpack.c.b16 %v314, %v314
      %vm322 = vcmask 400384
      %v324 = vsel %vm322, %v285, 0
      %v327 = vsel %vm322, %v286, 0
      %v330 = vsel %vm322, %v287, 0
      %v333 = vsel %vm322, %v288, 0
      %v336 = vsel %vm322, %v289, 0
      %v339 = vsel %vm322, %v290, 0
      %v342 = vsel %vm322, %v291, 0
      %v345 = vsel %vm322, %v292, 0
      %v348 = vsel %vm322, %v293, 0
      %v351 = vsel %vm322, %v294, 0
      %v354 = vsel %vm322, %v295, 0
      %v357 = vsel %vm322, %v296, 0
      %v360 = vsel %vm322, %v297, 0
      %v363 = vsel %vm322, %v298, 0
      %v366 = vsel %vm322, %v299, 0
      %v369 = vsel %vm322, %v300, 0
      %vm371 = vcmask 1040384
      %v372 = vsel 0, 4294967295, 65535
      %v373 = vsel %vm371, %v372, 0
      %v375 = vand.u32 %v318, %v373
      %377 = vmatprep.subr.bf16.mxu0 0
      %378 = vmatpush1.bf16.msra.mxu0 %v315
      %379 = vmatprep.subr.bf16.mxu0 0
      %380 = vmatpush1.bf16.msra.mxu0 %v316
      %381 = vmatprep.subr.bf16.mxu0 0
      %382 = vmatpush1.bf16.msra.mxu0 %v317
      %383 = vmatprep.subr.bf16.mxu0 0
      %384 = vmatpush1.bf16.msra.mxu0 %v375
      %385 = vmatprep.subr.bf16.mxu0 0
      %386 = vmatpush1.bf16.msra.mxu0 0
      %387 = vmatprep.subr.bf16.mxu0 0
      %388 = vmatpush1.bf16.msra.mxu0 0
      %389 = vmatprep.subr.bf16.mxu0 0
      %390 = vmatpush1.bf16.msra.mxu0 0
      %391 = vmatprep.subr.bf16.mxu0 0
      %392 = vmatpush1.bf16.msra.mxu0 0
      %393 = vmatprep.subr.bf16.mxu0 0
      %394 = vmatpush1.bf16.msra.mxu0 0
      %395 = vmatprep.subr.bf16.mxu0 0
      %396 = vmatpush1.bf16.msra.mxu0 0
      %397 = vmatprep.subr.bf16.mxu0 0
      %398 = vmatpush1.bf16.msra.mxu0 0
      %399 = vmatprep.subr.bf16.mxu0 0
      %400 = vmatpush1.bf16.msra.mxu0 0
      %401 = vmatprep.subr.bf16.mxu0 0
      %402 = vmatpush1.bf16.msra.mxu0 0
      %403 = vmatprep.subr.bf16.mxu0 0
      %404 = vmatpush1.bf16.msra.mxu0 0
      %405 = vmatprep.subr.bf16.mxu0 0
      %406 = vmatpush1.bf16.msra.mxu0 0
      %407 = vmatprep.subr.bf16.mxu0 0
      %408 = vmatpush1.bf16.msra.mxu0 0
      %409 = vmatprep.mubr.bf16.mxu0 0
      %410 = vmatmul.mubr.bf16.gmra.mrb[0].mxu0 %v324
      %v411 = vpop.f32.mrb[0].mxu0
      %v412 = vadd.f32 %v219, %v411
      %v413 = vpop.f32.mrb[0].mxu0
      %v414 = vpop.f32.mrb[0].mxu0
      %v415 = vadd.f32 %v219, %v414
      %v416 = vpop.f32.mrb[0].mxu0
      %417 = vmatprep.mubr.bf16.mxu0 0
      %418 = vmatmul.mubr.bf16.gmra.mrb[0].mxu0 %v327
      %v419 = vpop.f32.mrb[0].mxu0
      %v420 = vadd.f32 %v219, %v419
      %v421 = vpop.f32.mrb[0].mxu0
      %v422 = vpop.f32.mrb[0].mxu0
      %v423 = vadd.f32 %v219, %v422
      %v424 = vpop.f32.mrb[0].mxu0
      %425 = vmatprep.mubr.bf16.mxu0 0
      %426 = vmatmul.mubr.bf16.gmra.mrb[0].mxu0 %v330
      %v427 = vpop.f32.mrb[0].mxu0
      %v428 = vadd.f32 %v219, %v427
      %v429 = vpop.f32.mrb[0].mxu0
      %v430 = vpop.f32.mrb[0].mxu0
      %v431 = vadd.f32 %v219, %v430
      %v432 = vpop.f32.mrb[0].mxu0
      %433 = vmatprep.mubr.bf16.mxu0 0
      %434 = vmatmul.mubr.bf16.gmra.mrb[0].mxu0 %v333
      %v435 = vpop.f32.mrb[0].mxu0
      %v436 = vadd.f32 %v219, %v435
      %v437 = vpop.f32.mrb[0].mxu0
      %v438 = vpop.f32.mrb[0].mxu0
      %v439 = vadd.f32 %v219, %v438
      %v440 = vpop.f32.mrb[0].mxu0
      %441 = vmatprep.mubr.bf16.mxu0 0
      %442 = vmatmul.mubr.bf16.gmra.mrb[0].mxu0 %v336
      %v443 = vpop.f32.mrb[0].mxu0
      %v444 = vadd.f32 %v219, %v443
      %v445 = vpop.f32.mrb[0].mxu0
      %v446 = vpop.f32.mrb[0].mxu0
      %v447 = vadd.f32 %v219, %v446
      %v448 = vpop.f32.mrb[0].mxu0
      %449 = vmatprep.mubr.bf16.mxu0 0
      %450 = vmatmul.mubr.bf16.gmra.mrb[0].mxu0 %v339
      %v451 = vpop.f32.mrb[0].mxu0
      %v452 = vadd.f32 %v219, %v451
      %v453 = vpop.f32.mrb[0].mxu0
      %v454 = vpop.f32.mrb[0].mxu0
      %v455 = vadd.f32 %v219, %v454
      %v456 = vpop.f32.mrb[0].mxu0
      %457 = vmatprep.mubr.bf16.mxu0 0
      %458 = vmatmul.mubr.bf16.gmra.mrb[0].mxu0 %v342
      %v459 = vpop.f32.mrb[0].mxu0
      %v460 = vadd.f32 %v219, %v459
      %v461 = vpop.f32.mrb[0].mxu0
      %v462 = vpop.f32.mrb[0].mxu0
      %v463 = vadd.f32 %v219, %v462
      %v464 = vpop.f32.mrb[0].mxu0
      %465 = vmatprep.mubr.bf16.mxu0 0
      %466 = vmatmul.mubr.bf16.gmra.mrb[0].mxu0 %v345
      %v467 = vpop.f32.mrb[0].mxu0
      %v468 = vadd.f32 %v219, %v467
      %v469 = vpop.f32.mrb[0].mxu0
      %v470 = vpop.f32.mrb[0].mxu0
      %v471 = vadd.f32 %v219, %v470
      %v472 = vpop.f32.mrb[0].mxu0
      %473 = vmatprep.mubr.bf16.mxu0 0
      %474 = vmatmul.mubr.bf16.gmra.mrb[0].mxu0 %v348
      %v475 = vpop.f32.mrb[0].mxu0
      %v476 = vadd.f32 %v219, %v475
      %v477 = vpop.f32.mrb[0].mxu0
      %v478 = vpop.f32.mrb[0].mxu0
      %v479 = vadd.f32 %v219, %v478
      %v480 = vpop.f32.mrb[0].mxu0
      %481 = vmatprep.mubr.bf16.mxu0 0
      %482 = vmatmul.mubr.bf16.gmra.mrb[0].mxu0 %v351
      %v483 = vpop.f32.mrb[0].mxu0
      %v484 = vadd.f32 %v219, %v483
      %v485 = vpop.f32.mrb[0].mxu0
      %v486 = vpop.f32.mrb[0].mxu0
      %v487 = vadd.f32 %v219, %v486
      %v488 = vpop.f32.mrb[0].mxu0
      %489 = vmatprep.mubr.bf16.mxu0 0
      %490 = vmatmul.mubr.bf16.gmra.mrb[0].mxu0 %v354
      %v491 = vpop.f32.mrb[0].mxu0
      %v492 = vadd.f32 %v219, %v491
      %v493 = vpop.f32.mrb[0].mxu0
      %v494 = vpop.f32.mrb[0].mxu0
      %v495 = vadd.f32 %v219, %v494
      %v496 = vpop.f32.mrb[0].mxu0
      %497 = vmatprep.mubr.bf16.mxu0 0
      %498 = vmatmul.mubr.bf16.gmra.mrb[0].mxu0 %v357
      %v499 = vpop.f32.mrb[0].mxu0
      %v500 = vadd.f32 %v219, %v499
      %v501 = vpop.f32.mrb[0].mxu0
      %v502 = vpop.f32.mrb[0].mxu0
      %v503 = vadd.f32 %v219, %v502
      %v504 = vpop.f32.mrb[0].mxu0
      %505 = vmatprep.mubr.bf16.mxu0 0
      %506 = vmatmul.mubr.bf16.gmra.mrb[0].mxu0 %v360
      %v507 = vpop.f32.mrb[0].mxu0
      %v508 = vadd.f32 %v219, %v507
      %v509 = vpop.f32.mrb[0].mxu0
      %v510 = vpop.f32.mrb[0].mxu0
      %v511 = vadd.f32 %v219, %v510
      %v512 = vpop.f32.mrb[0].mxu0
      %513 = vmatprep.mubr.bf16.mxu0 0
      %514 = vmatmul.mubr.bf16.gmra.mrb[0].mxu0 %v363
      %v515 = vpop.f32.mrb[0].mxu0
      %v516 = vadd.f32 %v219, %v515
      %v517 = vpop.f32.mrb[0].mxu0
      %v518 = vpop.f32.mrb[0].mxu0
      %v519 = vadd.f32 %v219, %v518
      %v520 = vpop.f32.mrb[0].mxu0
      %521 = vmatprep.mubr.bf16.mxu0 0
      %522 = vmatmul.mubr.bf16.gmra.mrb[0].mxu0 %v366
      %v523 = vpop.f32.mrb[0].mxu0
      %v524 = vadd.f32 %v219, %v523
      %v525 = vpop.f32.mrb[0].mxu0
      %v526 = vpop.f32.mrb[0].mxu0
      %v527 = vadd.f32 %v219, %v526
      %v528 = vpop.f32.mrb[0].mxu0
      %529 = vmatprep.mubr.bf16.mxu0 0
      %530 = vmatmul.mubr.bf16.gmra.mrb[0].mxu0 %v369
      %v531 = vpop.f32.mrb[0].mxu0
      %v532 = vadd.f32 %v219, %v531
      %v533 = vpop.f32.mrb[0].mxu0
      %v534 = vpop.f32.mrb[0].mxu0
      %v535 = vadd.f32 %v219, %v534
      %v536 = vpop.f32.mrb[0].mxu0
      %537 = vdwg.mxu0
      %v538 = vmax.f32 %v412, 0.0
      %v539 = vmax.f32 %v415, 0.0
      %v540 = vmax.f32 %v420, 0.0
      %v541 = vmax.f32 %v423, 0.0
      %v542 = vmax.f32 %v428, 0.0
      %v543 = vmax.f32 %v431, 0.0
      %v544 = vmax.f32 %v436, 0.0
      %v545 = vmax.f32 %v439, 0.0
      %v546 = vmax.f32 %v444, 0.0
      %v547 = vmax.f32 %v447, 0.0
      %v548 = vmax.f32 %v452, 0.0
      %v549 = vmax.f32 %v455, 0.0
      %v550 = vmax.f32 %v460, 0.0
      %v551 = vmax.f32 %v463, 0.0
      %v552 = vmax.f32 %v468, 0.0
      %v553 = vmax.f32 %v471, 0.0
      %v554 = vmax.f32 %v476, 0.0
      %v555 = vmax.f32 %v479, 0.0
      %v556 = vmax.f32 %v484, 0.0
      %v557 = vmax.f32 %v487, 0.0
      %v558 = vmax.f32 %v492, 0.0
      %v559 = vmax.f32 %v495, 0.0
      %v560 = vmax.f32 %v500, 0.0
      %v561 = vmax.f32 %v503, 0.0
      %v562 = vmax.f32 %v508, 0.0
      %v563 = vmax.f32 %v511, 0.0
      %v564 = vmax.f32 %v516, 0.0
      %v565 = vmax.f32 %v519, 0.0
      %v566 = vmax.f32 %v524, 0.0
      %v567 = vmax.f32 %v527, 0.0
      %v568 = vmax.f32 %v532, 0.0
      %v569 = vmax.f32 %v535, 0.0
      %vm570 = vcmask 64512
      %571 = vst.msk [vmem:[%s172] sm:$0xff] %vm570, %v538
      %572 = vst.msk [vmem:[%s172 + $0x8] sm:$0xff] %vm570, %v539
      %573 = vst.msk [vmem:[%s172 + $0x10] sm:$0xff] %vm570, %v540
      %574 = vst.msk [vmem:[%s172 + $0x18] sm:$0xff] %vm570, %v541
      %575 = vst.msk [vmem:[%s172 + $0x20] sm:$0xff] %vm570, %v542
      %576 = vst.msk [vmem:[%s172 + $0x28] sm:$0xff] %vm570, %v543
      %577 = vst.msk [vmem:[%s172 + $0x30] sm:$0xff] %vm570, %v544
      %578 = vst.msk [vmem:[%s172 + $0x38] sm:$0xff] %vm570, %v545
      %579 = vst.msk [vmem:[%s172 + $0x40] sm:$0xff] %vm570, %v546
      %580 = vst.msk [vmem:[%s172 + $0x48] sm:$0xff] %vm570, %v547
      %581 = vst.msk [vmem:[%s172 + $0x50] sm:$0xff] %vm570, %v548
      %582 = vst.msk [vmem:[%s172 + $0x58] sm:$0xff] %vm570, %v549
      %583 = vst.msk [vmem:[%s172 + $0x60] sm:$0xff] %vm570, %v550
      %584 = vst.msk [vmem:[%s172 + $0x68] sm:$0xff] %vm570, %v551
      %585 = vst.msk [vmem:[%s172 + $0x70] sm:$0xff] %vm570, %v552
      %586 = vst.msk [vmem:[%s172 + $0x78] sm:$0xff] %vm570, %v553
      %587 = vst.msk [vmem:[%s172 + $0x80] sm:$0xff] %vm570, %v554
      %588 = vst.msk [vmem:[%s172 + $0x88] sm:$0xff] %vm570, %v555
      %589 = vst.msk [vmem:[%s172 + $0x90] sm:$0xff] %vm570, %v556
      %590 = vst.msk [vmem:[%s172 + $0x98] sm:$0xff] %vm570, %v557
      %591 = vst.msk [vmem:[%s172 + $0xa0] sm:$0xff] %vm570, %v558
      %592 = vst.msk [vmem:[%s172 + $0xa8] sm:$0xff] %vm570, %v559
      %593 = vst.msk [vmem:[%s172 + $0xb0] sm:$0xff] %vm570, %v560
      %594 = vst.msk [vmem:[%s172 + $0xb8] sm:$0xff] %vm570, %v561
      %595 = vst.msk [vmem:[%s172 + $0xc0] sm:$0xff] %vm570, %v562
      %596 = vst.msk [vmem:[%s172 + $0xc8] sm:$0xff] %vm570, %v563
      %597 = vst.msk [vmem:[%s172 + $0xd0] sm:$0xff] %vm570, %v564
      %598 = vst.msk [vmem:[%s172 + $0xd8] sm:$0xff] %vm570, %v565
      %599 = vst.msk [vmem:[%s172 + $0xe0] sm:$0xff] %vm570, %v566
      %600 = vst.msk [vmem:[%s172 + $0xe8] sm:$0xff] %vm570, %v567
      %601 = vst.msk [vmem:[%s172 + $0xf0] sm:$0xff] %vm570, %v568
      %602 = vst.msk [vmem:[%s172 + $0xf8] sm:$0xff] %vm570, %v569
      %s603 = smul.u32 32, %s14
      %p604 = scmp.lt.s32.totalorder %s603, 63
      %s605 = scalar_select %p604, %s603, 63
      %s606 = smul.addr %s605, 8
      %s607 = scalar_lea.vmem %s3, %s606
      // Predicated region
      $region33: #{basic_multi_update_block.11} parent=31 // pred_check
        %p608 = pneg %p100
      $region34: #{basic_multi_update_block.11} parent=31 // pred_check_branch
        %610 = sbr.rel (%p608) target = $region36
      $region35: #{basic_multi_update_block.11} parent=31 // pred_region
        %s611 = smul.u32 32, %s14
      $region36: #{basic_multi_update_block.11} parent=31 // pred_fallthru
        _
    $region32: #{basic_multi_update_block.11} parent=5 // pred_fallthru
      _
    %p612 = scmp.le.s32.totalorder 2, %s9
    // Predicated region
    $region37: #{basic_multi_update_block.11} parent=5 // pred_check
      %p613 = pneg %p612
    $region38: #{basic_multi_update_block.11} parent=5 // pred_check_branch
      %615 = sbr.rel (%p613) target = $region40
    $region39: #{basic_multi_update_block.11} parent=5 // pred_region
      %s616 = ssub.s32 %s9, 2
      // Predicated region
      $region41: #{basic_multi_update_block.11} parent=39 // pred_check
        %p617 = pneg %p106
      $region42: #{basic_multi_update_block.11} parent=39 // pred_check_branch
        %619 = sbr.rel (%p617) target = $region44
      $region43: #{basic_multi_update_block.11} parent=39 // pred_region
        %s620 = smul.u32 32, %s15
        %p621 = scmp.lt.s32.totalorder %s620, 63
        %s622 = scalar_select %p621, %s620, 63
        %s623 = smul.addr %s622, 8
        %s624 = scalar_lea.vmem %s3, %s623
      $region44: #{basic_multi_update_block.11} parent=39 // pred_fallthru
        _
    $region40: #{basic_multi_update_block.11} parent=5 // pred_fallthru
      _
  $region6: #{basic_multi_update_block.11} parent=0 // loop_footer
    %s13 = sadd.s32 1, %s9
  $region7: #{basic_multi_update_block.11} parent=0 // loop_footer_branch
    %8 = sbr.rel target = $region3
  $region8: #{basic_multi_update_block.11} parent=0 // loop_exit
    _

// kernel: basic_multi_update_block.12
$region0: #{basic_multi_update_block.12}
  #allocation0 [shape = 'u32[]', space=smem, size = 0x4, offset = 0x4, fixed_abs, tag = 'smem constant byte address 0x4 - core index']
  #allocation1 [shape = 'u32[144,128]{1,0:T(1,128)}', space=vmem, size = 0x12000, scoped, tag = 'internal scratch']
  %s0 = inlined_call_operand.vmem [shape: bf16[512,72], index: 0, kind: input, shape index: {}]
  %s1 = inlined_call_operand.vmem [shape: bf16[72,8], index: 1, kind: input, shape index: {}]
  %s2 = inlined_call_operand.vmem [shape: f32[1,8], index: 2, kind: input, shape index: {}]
  %s3 = inlined_call_operand.vmem [shape: f32[512,8], index: 3, kind: output, shape index: {}]
  %s4 = sld [smem:[#allocation0]]
  $region45: #{basic_multi_update_block.12} parent=0
    _
  %s6 = ssub.s32 1, %s4
  %s7 = scalar_select 0, %s6, %s4
  loop: start=0, step=1, limit=4
  $region2: #{basic_multi_update_block.12} parent=0 // loop_pre_header
    _
  $region3: #{basic_multi_update_block.12} parent=0 // loop_header
    %s9 = sphi 0, %s13
    %p10 = scmp.ge.s32.totalorder %s9, 4
    %s19 = sphi 0, %s21
    %s22 = sphi 0, %s19
    %s23 = sphi 0, %s22
    %s39 = sphi 0, %s23
    %s43 = sphi 0, %s43
    %s45 = sphi 0, %s43
    %s46 = sphi 0, %s45
    %s60 = sphi 0, %s46
    %s64 = sphi 0, %s64
    %s66 = sphi 0, %s64
    %s67 = sphi 0, %s66
    %s81 = sphi 0, %s67
    %s87 = sphi 0, %s89
    %s90 = sphi 0, %s87
    %s91 = sphi 0, %s90
    %s107 = sphi 0, %s91
  $region4: #{basic_multi_update_block.12} parent=0 // loop_header_branch
    %12 = sbr.rel (%p10) target = $region8
  $region5: #{basic_multi_update_block.12} parent=0 // loop_body
    %s14 = ssub.s32 %s9, 1
    %s15 = ssub.s32 %s9, 2
    %s16 = sadd.s32 %s9, 1
    %s17 = ssub.s32 %s9, %s16
    %p18 = scmp.eq.s32.totalorder %s17, 0
    %s20 = sadd.s32 %s19, 1
    %s21 = scalar_select %p18, %s19, %s20
    %p24 = pneg %p18
    %p25 = scmp.eq.s32.totalorder %s9, 1
    %p26 = por %p24, %p25
    %p27 = scmp.ne.s32.totalorder %s19, %s22
    %p28 = scmp.eq.s32.totalorder %s9, 0
    %p29 = por %p27, %p28
    %p30 = scmp.ne.s32.totalorder %s19, %s22
    %p31 = scmp.eq.s32.totalorder %s14, 1
    %p32 = por %p30, %p31
    %p33 = scmp.ne.s32.totalorder %s22, %s23
    %p34 = scmp.eq.s32.totalorder %s14, 0
    %p35 = por %p33, %p34
    %p36 = scmp.ne.s32.totalorder %s22, %s23
    %p37 = scmp.eq.s32.totalorder %s15, 1
    %p38 = por %p36, %p37
    %p40 = scmp.ne.s32.totalorder %s23, %s39
    %p41 = scmp.eq.s32.totalorder %s15, 0
    %p42 = por %p40, %p41
    %s44 = sadd.s32 %s43, 1
    %p47 = scmp.eq.s32.totalorder %s9, 1
    %p48 = scmp.ne.s32.totalorder %s43, %s45
    %p49 = scmp.eq.s32.totalorder %s9, 0
    %p50 = por %p48, %p49
    %p51 = scmp.ne.s32.totalorder %s43, %s45
    %p52 = scmp.eq.s32.totalorder %s14, 1
    %p53 = por %p51, %p52
    %p54 = scmp.ne.s32.totalorder %s45, %s46
    %p55 = scmp.eq.s32.totalorder %s14, 0
    %p56 = por %p54, %p55
    %p57 = scmp.ne.s32.totalorder %s45, %s46
    %p58 = scmp.eq.s32.totalorder %s15, 1
    %p59 = por %p57, %p58
    %p61 = scmp.ne.s32.totalorder %s46, %s60
    %p62 = scmp.eq.s32.totalorder %s15, 0
    %p63 = por %p61, %p62
    %s65 = sadd.s32 %s64, 1
    %p68 = scmp.eq.s32.totalorder %s9, 1
    %p69 = scmp.ne.s32.totalorder %s64, %s66
    %p70 = scmp.eq.s32.totalorder %s9, 0
    %p71 = por %p69, %p70
    %p72 = scmp.ne.s32.totalorder %s64, %s66
    %p73 = scmp.eq.s32.totalorder %s14, 1
    %p74 = por %p72, %p73
    %p75 = scmp.ne.s32.totalorder %s66, %s67
    %p76 = scmp.eq.s32.totalorder %s14, 0
    %p77 = por %p75, %p76
    %p78 = scmp.ne.s32.totalorder %s66, %s67
    %p79 = scmp.eq.s32.totalorder %s15, 1
    %p80 = por %p78, %p79
    %p82 = scmp.ne.s32.totalorder %s67, %s81
    %p83 = scmp.eq.s32.totalorder %s15, 0
    %p84 = por %p82, %p83
    %s85 = ssub.s32 %s9, %s16
    %p86 = scmp.eq.s32.totalorder %s85, 0
    %s88 = sadd.s32 %s87, 1
    %s89 = scalar_select %p86, %s87, %s88
    %p92 = pneg %p86
    %p93 = scmp.eq.s32.totalorder %s9, 1
    %p94 = por %p92, %p93
    %p95 = scmp.ne.s32.totalorder %s87, %s90
    %p96 = scmp.eq.s32.totalorder %s9, 0
    %p97 = por %p95, %p96
    %p98 = scmp.ne.s32.totalorder %s87, %s90
    %p99 = scmp.eq.s32.totalorder %s14, 1
    %p100 = por %p98, %p99
    %p101 = scmp.ne.s32.totalorder %s90, %s91
    %p102 = scmp.eq.s32.totalorder %s14, 0
    %p103 = por %p101, %p102
    %p104 = scmp.ne.s32.totalorder %s90, %s91
    %p105 = scmp.eq.s32.totalorder %s15, 1
    %p106 = por %p104, %p105
    %p108 = scmp.ne.s32.totalorder %s91, %s107
    %p109 = scmp.eq.s32.totalorder %s15, 0
    %p110 = por %p108, %p109
    %p111 = scmp.le.s32.totalorder 1, %s9
    %p112 = scmp.lt.s32.totalorder %s9, 3
    %p113 = pnand %p111, %p112
    %p114 = pneg %p113
    // Predicated region
    $region9: #{basic_multi_update_block.12} parent=5 // pred_check
      _
    $region10: #{basic_multi_update_block.12} parent=5 // pred_check_branch
      %116 = sbr.rel (%p113) target = $region12
    $region11: #{basic_multi_update_block.12} parent=5 // pred_region
      %s117 = ssub.s32 %s9, 1
      // Predicated region
      $region13: #{basic_multi_update_block.12} parent=11 // pred_check
        %p118 = pneg %p56
      $region14: #{basic_multi_update_block.12} parent=11 // pred_check_branch
        %120 = sbr.rel (%p118) target = $region16
      $region15: #{basic_multi_update_block.12} parent=11 // pred_region
        _
      $region16: #{basic_multi_update_block.12} parent=11 // pred_fallthru
        _
      // Predicated region
      $region17: #{basic_multi_update_block.12} parent=11 // pred_check
        %p121 = pneg %p77
      $region18: #{basic_multi_update_block.12} parent=11 // pred_check_branch
        %123 = sbr.rel (%p121) target = $region20
      $region19: #{basic_multi_update_block.12} parent=11 // pred_region
        _
      $region20: #{basic_multi_update_block.12} parent=11 // pred_fallthru
        _
    $region12: #{basic_multi_update_block.12} parent=5 // pred_fallthru
      _
    %p124 = scmp.lt.s32.totalorder %s9, 2
    // Predicated region
    $region21: #{basic_multi_update_block.12} parent=5 // pred_check
      %p125 = pneg %p124
    $region22: #{basic_multi_update_block.12} parent=5 // pred_check_branch
      %127 = sbr.rel (%p125) target = $region24
    $region23: #{basic_multi_update_block.12} parent=5 // pred_region
      // Predicated region
      $region25: #{basic_multi_update_block.12} parent=23 // pred_check
        %p128 = pneg %p29
      $region26: #{basic_multi_update_block.12} parent=23 // pred_check_branch
        %130 = sbr.rel (%p128) target = $region28
      $region27: #{basic_multi_update_block.12} parent=23 // pred_region
        %s131 = smul.u32 32, %s9
        %p132 = scmp.lt.s32.totalorder %s131, 63
        %s133 = scalar_select %p132, %s131, 63
        %s134 = smul.addr %s133, 4
        %s135 = scalar_lea.vmem %s0, %s134
        %s136 = smul.u32 32, %s9
      $region28: #{basic_multi_update_block.12} parent=23 // pred_fallthru
        _
    $region24: #{basic_multi_update_block.12} parent=5 // pred_fallthru
      _
    %p137 = scmp.le.s32.totalorder 1, %s9
    %p138 = scmp.lt.s32.totalorder %s9, 3
    %p139 = pnand %p137, %p138
    %p140 = pneg %p139
    // Predicated region
    $region29: #{basic_multi_update_block.12} parent=5 // pred_check
      _
    $region30: #{basic_multi_update_block.12} parent=5 // pred_check_branch
      %142 = sbr.rel (%p139) target = $region32
    $region31: #{basic_multi_update_block.12} parent=5 // pred_region
      %s143 = ssub.s32 %s9, 1
      %s144 = smul.u32 32, %s14
      %p145 = scmp.lt.s32.totalorder %s144, 63
      %s146 = scalar_select %p145, %s144, 63
      %s147 = smul.addr %s146, 4
      %s148 = scalar_lea.vmem %s0, %s147
      %p149 = pneg %p35
      %p150 = pneg %p32
      %p151 = pneg %p56
      %p152 = pneg %p53
      %p153 = pneg %p77
      %p154 = pneg %p74
      %p155 = pneg %p103
      %p156 = pneg %p100
      %s157 = smul.u32 32, %s14
      %p158 = scmp.lt.s32.totalorder %s157, 63
      %s159 = scalar_select %p158, %s157, 63
      %s160 = smul.addr %s159, 8
      %s161 = scalar_lea.vmem %s3, %s160
      %s162 = smul.u32 32, %s14
      %p163 = scmp.lt.s32.totalorder %s162, 63
      %s164 = scalar_select %p163, %s162, 63
      %s165 = smul.addr %s164, 4
      %s166 = scalar_lea.vmem %s0, %s165
      %s167 = smul.u32 32, %s14
      %s168 = smul.u32 32, %s14
      %p169 = scmp.lt.s32.totalorder %s168, 63
      %s170 = scalar_select %p169, %s168, 63
      %s171 = smul.addr %s170, 8
      %s172 = scalar_lea.vmem %s3, %s171
      %s173 = smul.u32 32, %s14
      %v175 = vld [vmem:[%s166] sm:$0xf]
      %v176 = vld [vmem:[%s166 + $0x4] sm:$0xf]
      %v177 = vld [vmem:[%s166 + $0x8] sm:$0xf]
      %v178 = vld [vmem:[%s166 + $0xc] sm:$0xf]
      %v179 = vld [vmem:[%s166 + $0x10] sm:$0xf]
      %v180 = vld [vmem:[%s166 + $0x14] sm:$0xf]
      %v181 = vld [vmem:[%s166 + $0x18] sm:$0xf]
      %v182 = vld [vmem:[%s166 + $0x1c] sm:$0xf]
      %v183 = vld [vmem:[%s166 + $0x20] sm:$0xf]
      %v184 = vld [vmem:[%s166 + $0x24] sm:$0xf]
      %v185 = vld [vmem:[%s166 + $0x28] sm:$0xf]
      %v186 = vld [vmem:[%s166 + $0x2c] sm:$0xf]
      %v187 = vld [vmem:[%s166 + $0x30] sm:$0xf]
      %v188 = vld [vmem:[%s166 + $0x34] sm:$0xf]
      %v189 = vld [vmem:[%s166 + $0x38] sm:$0xf]
      %v190 = vld [vmem:[%s166 + $0x3c] sm:$0xf]
      %v191 = vld [vmem:[%s166 + $0x40] sm:$0xf]
      %v192 = vld [vmem:[%s166 + $0x44] sm:$0xf]
      %v193 = vld [vmem:[%s166 + $0x48] sm:$0xf]
      %v194 = vld [vmem:[%s166 + $0x4c] sm:$0xf]
      %v195 = vld [vmem:[%s166 + $0x50] sm:$0xf]
      %v196 = vld [vmem:[%s166 + $0x54] sm:$0xf]
      %v197 = vld [vmem:[%s166 + $0x58] sm:$0xf]
      %v198 = vld [vmem:[%s166 + $0x5c] sm:$0xf]
      %v199 = vld [vmem:[%s166 + $0x60] sm:$0xf]
      %v200 = vld [vmem:[%s166 + $0x64] sm:$0xf]
      %v201 = vld [vmem:[%s166 + $0x68] sm:$0xf]
      %v202 = vld [vmem:[%s166 + $0x6c] sm:$0xf]
      %v203 = vld [vmem:[%s166 + $0x70] sm:$0xf]
      %v204 = vld [vmem:[%s166 + $0x74] sm:$0xf]
      %v205 = vld [vmem:[%s166 + $0x78] sm:$0xf]
      %v206 = vld [vmem:[%s166 + $0x7c] sm:$0xf]
      %v207 = vld [vmem:[%s1] sm:$0xf]
      %v208 = vld [vmem:[%s1 + $0x4] sm:$0xf]
      %v209 = vld [vmem:[%s1 + $0x8] sm:$0xf]
      %v210 = vld [vmem:[%s1 + $0xc] sm:$0xf]
      %v211 = vld [vmem:[%s1 + $0x10] sm:$0xf]
      %v212 = vld [vmem:[%s1 + $0x14] sm:$0xf]
      %v213 = vld [vmem:[%s1 + $0x18] sm:$0xf]
      %v214 = vld [vmem:[%s1 + $0x1c] sm:$0xf]
      %v215 = vld [vmem:[%s1 + $0x20] sm:$0xf]
      %v216 = vld [vmem:[%s2] sm:$0x1]
      %v218 = vlaneseq
      %v219 = vshrl.u32 %v218, 7
      %v220 = vsub.s32 0, %v219
      %v221 = vrot.slane %v216, %v220
      %v255 = vunpack.c.l.b16 %v175
      %v256 = vunpack.c.l.b16 %v176
      %v257 = vunpack.c.l.b16 %v177
      %v258 = vunpack.c.l.b16 %v178
      %v259 = vunpack.c.l.b16 %v179
      %v260 = vunpack.c.l.b16 %v180
      %v261 = vunpack.c.l.b16 %v181
      %v262 = vunpack.c.l.b16 %v182
      %v263 = vunpack.c.l.b16 %v183
      %v264 = vunpack.c.l.b16 %v184
      %v265 = vunpack.c.l.b16 %v185
      %v266 = vunpack.c.l.b16 %v186
      %v267 = vunpack.c.l.b16 %v187
      %v268 = vunpack.c.l.b16 %v188
      %v269 = vunpack.c.l.b16 %v189
      %v270 = vunpack.c.l.b16 %v190
      %v271 = vunpack.c.l.b16 %v191
      %v272 = vunpack.c.l.b16 %v192
      %v273 = vunpack.c.l.b16 %v193
      %v274 = vunpack.c.l.b16 %v194
      %v275 = vunpack.c.l.b16 %v195
      %v276 = vunpack.c.l.b16 %v196
      %v277 = vunpack.c.l.b16 %v197
      %v278 = vunpack.c.l.b16 %v198
      %v279 = vunpack.c.l.b16 %v199
      %v280 = vunpack.c.l.b16 %v200
      %v281 = vunpack.c.l.b16 %v201
      %v282 = vunpack.c.l.b16 %v202
      %v283 = vunpack.c.l.b16 %v203
      %v284 = vunpack.c.l.b16 %v204
      %v285 = vunpack.c.l.b16 %v205
      %v286 = vunpack.c.l.b16 %v206
      %v287 = vpack.c.b16 %v256, %v255
      %v288 = vpack.c.b16 %v258, %v257
      %v289 = vpack.c.b16 %v260, %v259
      %v290 = vpack.c.b16 %v262, %v261
      %v291 = vpack.c.b16 %v264, %v263
      %v292 = vpack.c.b16 %v266, %v265
      %v293 = vpack.c.b16 %v268, %v267
      %v294 = vpack.c.b16 %v270, %v269
      %v295 = vpack.c.b16 %v272, %v271
      %v296 = vpack.c.b16 %v274, %v273
      %v297 = vpack.c.b16 %v276, %v275
      %v298 = vpack.c.b16 %v278, %v277
      %v299 = vpack.c.b16 %v280, %v279
      %v300 = vpack.c.b16 %v282, %v281
      %v301 = vpack.c.b16 %v284, %v283
      %v302 = vpack.c.b16 %v286, %v285
      %v312 = vunpack.c.l.b16 %v207
      %v313 = vunpack.c.l.b16 %v208
      %v314 = vunpack.c.l.b16 %v209
      %v315 = vunpack.c.l.b16 %v210
      %v316 = vunpack.c.l.b16 %v211
      %v317 = vunpack.c.l.b16 %v212
      %v318 = vunpack.c.l.b16 %v213
      %v319 = vunpack.c.l.b16 %v214
      %v320 = vunpack.c.l.b16 %v215
      %v321 = vpack.c.b16 %v313, %v312
      %v322 = vpack.c.b16 %v315, %v314
      %v323 = vpack.c.b16 %v317, %v316
      %v324 = vpack.c.b16 %v319, %v318
      %v325 = vpack.c.b16 %v320, %v320
      %vm330 = vcmask 588800
      %v332 = vsel %vm330, %v287, 0
      %v335 = vsel %vm330, %v288, 0
      %v338 = vsel %vm330, %v289, 0
      %v341 = vsel %vm330, %v290, 0
      %v344 = vsel %vm330, %v291, 0
      %v347 = vsel %vm330, %v292, 0
      %v350 = vsel %vm330, %v293, 0
      %v353 = vsel %vm330, %v294, 0
      %v356 = vsel %vm330, %v295, 0
      %v359 = vsel %vm330, %v296, 0
      %v362 = vsel %vm330, %v297, 0
      %v365 = vsel %vm330, %v298, 0
      %v368 = vsel %vm330, %v299, 0
      %v371 = vsel %vm330, %v300, 0
      %v374 = vsel %vm330, %v301, 0
      %v377 = vsel %vm330, %v302, 0
      %vm379 = vcmask 1043456
      %v381 = vsel %vm379, %v325, 0
      %383 = vmatprep.subr.bf16.mxu0 0
      %384 = vmatpush1.bf16.msra.mxu0 %v321
      %385 = vmatprep.subr.bf16.mxu0 0
      %386 = vmatpush1.bf16.msra.mxu0 %v322
      %387 = vmatprep.subr.bf16.mxu0 0
      %388 = vmatpush1.bf16.msra.mxu0 %v323
      %389 = vmatprep.subr.bf16.mxu0 0
      %390 = vmatpush1.bf16.msra.mxu0 %v324
      %391 = vmatprep.subr.bf16.mxu0 0
      %392 = vmatpush1.bf16.msra.mxu0 %v381
      %393 = vmatprep.subr.bf16.mxu0 0
      %394 = vmatpush1.bf16.msra.mxu0 0
      %395 = vmatprep.subr.bf16.mxu0 0
      %396 = vmatpush1.bf16.msra.mxu0 0
      %397 = vmatprep.subr.bf16.mxu0 0
      %398 = vmatpush1.bf16.msra.mxu0 0
      %399 = vmatprep.subr.bf16.mxu0 0
      %400 = vmatpush1.bf16.msra.mxu0 0
      %401 = vmatprep.subr.bf16.mxu0 0
      %402 = vmatpush1.bf16.msra.mxu0 0
      %403 = vmatprep.subr.bf16.mxu0 0
      %404 = vmatpush1.bf16.msra.mxu0 0
      %405 = vmatprep.subr.bf16.mxu0 0
      %406 = vmatpush1.bf16.msra.mxu0 0
      %407 = vmatprep.subr.bf16.mxu0 0
      %408 = vmatpush1.bf16.msra.mxu0 0
      %409 = vmatprep.subr.bf16.mxu0 0
      %410 = vmatpush1.bf16.msra.mxu0 0
      %411 = vmatprep.subr.bf16.mxu0 0
      %412 = vmatpush1.bf16.msra.mxu0 0
      %413 = vmatprep.subr.bf16.mxu0 0
      %414 = vmatpush1.bf16.msra.mxu0 0
      %415 = vmatprep.mubr.bf16.mxu0 0
      %416 = vmatmul.mubr.bf16.gmra.mrb[0].mxu0 %v332
      %v417 = vpop.f32.mrb[0].mxu0
      %v418 = vadd.f32 %v221, %v417
      %v419 = vpop.f32.mrb[0].mxu0
      %v420 = vpop.f32.mrb[0].mxu0
      %v421 = vadd.f32 %v221, %v420
      %v422 = vpop.f32.mrb[0].mxu0
      %423 = vmatprep.mubr.bf16.mxu0 0
      %424 = vmatmul.mubr.bf16.gmra.mrb[0].mxu0 %v335
      %v425 = vpop.f32.mrb[0].mxu0
      %v426 = vadd.f32 %v221, %v425
      %v427 = vpop.f32.mrb[0].mxu0
      %v428 = vpop.f32.mrb[0].mxu0
      %v429 = vadd.f32 %v221, %v428
      %v430 = vpop.f32.mrb[0].mxu0
      %431 = vmatprep.mubr.bf16.mxu0 0
      %432 = vmatmul.mubr.bf16.gmra.mrb[0].mxu0 %v338
      %v433 = vpop.f32.mrb[0].mxu0
      %v434 = vadd.f32 %v221, %v433
      %v435 = vpop.f32.mrb[0].mxu0
      %v436 = vpop.f32.mrb[0].mxu0
      %v437 = vadd.f32 %v221, %v436
      %v438 = vpop.f32.mrb[0].mxu0
      %439 = vmatprep.mubr.bf16.mxu0 0
      %440 = vmatmul.mubr.bf16.gmra.mrb[0].mxu0 %v341
      %v441 = vpop.f32.mrb[0].mxu0
      %v442 = vadd.f32 %v221, %v441
      %v443 = vpop.f32.mrb[0].mxu0
      %v444 = vpop.f32.mrb[0].mxu0
      %v445 = vadd.f32 %v221, %v444
      %v446 = vpop.f32.mrb[0].mxu0
      %447 = vmatprep.mubr.bf16.mxu0 0
      %448 = vmatmul.mubr.bf16.gmra.mrb[0].mxu0 %v344
      %v449 = vpop.f32.mrb[0].mxu0
      %v450 = vadd.f32 %v221, %v449
      %v451 = vpop.f32.mrb[0].mxu0
      %v452 = vpop.f32.mrb[0].mxu0
      %v453 = vadd.f32 %v221, %v452
      %v454 = vpop.f32.mrb[0].mxu0
      %455 = vmatprep.mubr.bf16.mxu0 0
      %456 = vmatmul.mubr.bf16.gmra.mrb[0].mxu0 %v347
      %v457 = vpop.f32.mrb[0].mxu0
      %v458 = vadd.f32 %v221, %v457
      %v459 = vpop.f32.mrb[0].mxu0
      %v460 = vpop.f32.mrb[0].mxu0
      %v461 = vadd.f32 %v221, %v460
      %v462 = vpop.f32.mrb[0].mxu0
      %463 = vmatprep.mubr.bf16.mxu0 0
      %464 = vmatmul.mubr.bf16.gmra.mrb[0].mxu0 %v350
      %v465 = vpop.f32.mrb[0].mxu0
      %v466 = vadd.f32 %v221, %v465
      %v467 = vpop.f32.mrb[0].mxu0
      %v468 = vpop.f32.mrb[0].mxu0
      %v469 = vadd.f32 %v221, %v468
      %v470 = vpop.f32.mrb[0].mxu0
      %471 = vmatprep.mubr.bf16.mxu0 0
      %472 = vmatmul.mubr.bf16.gmra.mrb[0].mxu0 %v353
      %v473 = vpop.f32.mrb[0].mxu0
      %v474 = vadd.f32 %v221, %v473
      %v475 = vpop.f32.mrb[0].mxu0
      %v476 = vpop.f32.mrb[0].mxu0
      %v477 = vadd.f32 %v221, %v476
      %v478 = vpop.f32.mrb[0].mxu0
      %479 = vmatprep.mubr.bf16.mxu0 0
      %480 = vmatmul.mubr.bf16.gmra.mrb[0].mxu0 %v356
      %v481 = vpop.f32.mrb[0].mxu0
      %v482 = vadd.f32 %v221, %v481
      %v483 = vpop.f32.mrb[0].mxu0
      %v484 = vpop.f32.mrb[0].mxu0
      %v485 = vadd.f32 %v221, %v484
      %v486 = vpop.f32.mrb[0].mxu0
      %487 = vmatprep.mubr.bf16.mxu0 0
      %488 = vmatmul.mubr.bf16.gmra.mrb[0].mxu0 %v359
      %v489 = vpop.f32.mrb[0].mxu0
      %v490 = vadd.f32 %v221, %v489
      %v491 = vpop.f32.mrb[0].mxu0
      %v492 = vpop.f32.mrb[0].mxu0
      %v493 = vadd.f32 %v221, %v492
      %v494 = vpop.f32.mrb[0].mxu0
      %495 = vmatprep.mubr.bf16.mxu0 0
      %496 = vmatmul.mubr.bf16.gmra.mrb[0].mxu0 %v362
      %v497 = vpop.f32.mrb[0].mxu0
      %v498 = vadd.f32 %v221, %v497
      %v499 = vpop.f32.mrb[0].mxu0
      %v500 = vpop.f32.mrb[0].mxu0
      %v501 = vadd.f32 %v221, %v500
      %v502 = vpop.f32.mrb[0].mxu0
      %503 = vmatprep.mubr.bf16.mxu0 0
      %504 = vmatmul.mubr.bf16.gmra.mrb[0].mxu0 %v365
      %v505 = vpop.f32.mrb[0].mxu0
      %v506 = vadd.f32 %v221, %v505
      %v507 = vpop.f32.mrb[0].mxu0
      %v508 = vpop.f32.mrb[0].mxu0
      %v509 = vadd.f32 %v221, %v508
      %v510 = vpop.f32.mrb[0].mxu0
      %511 = vmatprep.mubr.bf16.mxu0 0
      %512 = vmatmul.mubr.bf16.gmra.mrb[0].mxu0 %v368
      %v513 = vpop.f32.mrb[0].mxu0
      %v514 = vadd.f32 %v221, %v513
      %v515 = vpop.f32.mrb[0].mxu0
      %v516 = vpop.f32.mrb[0].mxu0
      %v517 = vadd.f32 %v221, %v516
      %v518 = vpop.f32.mrb[0].mxu0
      %519 = vmatprep.mubr.bf16.mxu0 0
      %520 = vmatmul.mubr.bf16.gmra.mrb[0].mxu0 %v371
      %v521 = vpop.f32.mrb[0].mxu0
      %v522 = vadd.f32 %v221, %v521
      %v523 = vpop.f32.mrb[0].mxu0
      %v524 = vpop.f32.mrb[0].mxu0
      %v525 = vadd.f32 %v221, %v524
      %v526 = vpop.f32.mrb[0].mxu0
      %527 = vmatprep.mubr.bf16.mxu0 0
      %528 = vmatmul.mubr.bf16.gmra.mrb[0].mxu0 %v374
      %v529 = vpop.f32.mrb[0].mxu0
      %v530 = vadd.f32 %v221, %v529
      %v531 = vpop.f32.mrb[0].mxu0
      %v532 = vpop.f32.mrb[0].mxu0
      %v533 = vadd.f32 %v221, %v532
      %v534 = vpop.f32.mrb[0].mxu0
      %535 = vmatprep.mubr.bf16.mxu0 0
      %536 = vmatmul.mubr.bf16.gmra.mrb[0].mxu0 %v377
      %v537 = vpop.f32.mrb[0].mxu0
      %v538 = vadd.f32 %v221, %v537
      %v539 = vpop.f32.mrb[0].mxu0
      %v540 = vpop.f32.mrb[0].mxu0
      %v541 = vadd.f32 %v221, %v540
      %v542 = vpop.f32.mrb[0].mxu0
      %543 = vdwg.mxu0
      %v544 = vmax.f32 %v418, 0.0
      %v545 = vmax.f32 %v421, 0.0
      %v546 = vmax.f32 %v426, 0.0
      %v547 = vmax.f32 %v429, 0.0
      %v548 = vmax.f32 %v434, 0.0
      %v549 = vmax.f32 %v437, 0.0
      %v550 = vmax.f32 %v442, 0.0
      %v551 = vmax.f32 %v445, 0.0
      %v552 = vmax.f32 %v450, 0.0
      %v553 = vmax.f32 %v453, 0.0
      %v554 = vmax.f32 %v458, 0.0
      %v555 = vmax.f32 %v461, 0.0
      %v556 = vmax.f32 %v466, 0.0
      %v557 = vmax.f32 %v469, 0.0
      %v558 = vmax.f32 %v474, 0.0
      %v559 = vmax.f32 %v477, 0.0
      %v560 = vmax.f32 %v482, 0.0
      %v561 = vmax.f32 %v485, 0.0
      %v562 = vmax.f32 %v490, 0.0
      %v563 = vmax.f32 %v493, 0.0
      %v564 = vmax.f32 %v498, 0.0
      %v565 = vmax.f32 %v501, 0.0
      %v566 = vmax.f32 %v506, 0.0
      %v567 = vmax.f32 %v509, 0.0
      %v568 = vmax.f32 %v514, 0.0
      %v569 = vmax.f32 %v517, 0.0
      %v570 = vmax.f32 %v522, 0.0
      %v571 = vmax.f32 %v525, 0.0
      %v572 = vmax.f32 %v530, 0.0
      %v573 = vmax.f32 %v533, 0.0
      %v574 = vmax.f32 %v538, 0.0
      %v575 = vmax.f32 %v541, 0.0
      %vm576 = vcmask 64512
      %577 = vst.msk [vmem:[%s172] sm:$0xff] %vm576, %v544
      %578 = vst.msk [vmem:[%s172 + $0x8] sm:$0xff] %vm576, %v545
      %579 = vst.msk [vmem:[%s172 + $0x10] sm:$0xff] %vm576, %v546
      %580 = vst.msk [vmem:[%s172 + $0x18] sm:$0xff] %vm576, %v547
      %581 = vst.msk [vmem:[%s172 + $0x20] sm:$0xff] %vm576, %v548
      %582 = vst.msk [vmem:[%s172 + $0x28] sm:$0xff] %vm576, %v549
      %583 = vst.msk [vmem:[%s172 + $0x30] sm:$0xff] %vm576, %v550
      %584 = vst.msk [vmem:[%s172 + $0x38] sm:$0xff] %vm576, %v551
      %585 = vst.msk [vmem:[%s172 + $0x40] sm:$0xff] %vm576, %v552
      %586 = vst.msk [vmem:[%s172 + $0x48] sm:$0xff] %vm576, %v553
      %587 = vst.msk [vmem:[%s172 + $0x50] sm:$0xff] %vm576, %v554
      %588 = vst.msk [vmem:[%s172 + $0x58] sm:$0xff] %vm576, %v555
      %589 = vst.msk [vmem:[%s172 + $0x60] sm:$0xff] %vm576, %v556
      %590 = vst.msk [vmem:[%s172 + $0x68] sm:$0xff] %vm576, %v557
      %591 = vst.msk [vmem:[%s172 + $0x70] sm:$0xff] %vm576, %v558
      %592 = vst.msk [vmem:[%s172 + $0x78] sm:$0xff] %vm576, %v559
      %593 = vst.msk [vmem:[%s172 + $0x80] sm:$0xff] %vm576, %v560
      %594 = vst.msk [vmem:[%s172 + $0x88] sm:$0xff] %vm576, %v561
      %595 = vst.msk [vmem:[%s172 + $0x90] sm:$0xff] %vm576, %v562
      %596 = vst.msk [vmem:[%s172 + $0x98] sm:$0xff] %vm576, %v563
      %597 = vst.msk [vmem:[%s172 + $0xa0] sm:$0xff] %vm576, %v564
      %598 = vst.msk [vmem:[%s172 + $0xa8] sm:$0xff] %vm576, %v565
      %599 = vst.msk [vmem:[%s172 + $0xb0] sm:$0xff] %vm576, %v566
      %600 = vst.msk [vmem:[%s172 + $0xb8] sm:$0xff] %vm576, %v567
      %601 = vst.msk [vmem:[%s172 + $0xc0] sm:$0xff] %vm576, %v568
      %602 = vst.msk [vmem:[%s172 + $0xc8] sm:$0xff] %vm576, %v569
      %603 = vst.msk [vmem:[%s172 + $0xd0] sm:$0xff] %vm576, %v570
      %604 = vst.msk [vmem:[%s172 + $0xd8] sm:$0xff] %vm576, %v571
      %605 = vst.msk [vmem:[%s172 + $0xe0] sm:$0xff] %vm576, %v572
      %606 = vst.msk [vmem:[%s172 + $0xe8] sm:$0xff] %vm576, %v573
      %607 = vst.msk [vmem:[%s172 + $0xf0] sm:$0xff] %vm576, %v574
      %608 = vst.msk [vmem:[%s172 + $0xf8] sm:$0xff] %vm576, %v575
      %s609 = smul.u32 32, %s14
      %p610 = scmp.lt.s32.totalorder %s609, 63
      %s611 = scalar_select %p610, %s609, 63
      %s612 = smul.addr %s611, 8
      %s613 = scalar_lea.vmem %s3, %s612
      // Predicated region
      $region33: #{basic_multi_update_block.12} parent=31 // pred_check
        %p614 = pneg %p100
      $region34: #{basic_multi_update_block.12} parent=31 // pred_check_branch
        %616 = sbr.rel (%p614) target = $region36
      $region35: #{basic_multi_update_block.12} parent=31 // pred_region
        %s617 = smul.u32 32, %s14
      $region36: #{basic_multi_update_block.12} parent=31 // pred_fallthru
        _
    $region32: #{basic_multi_update_block.12} parent=5 // pred_fallthru
      _
    %p618 = scmp.le.s32.totalorder 2, %s9
    // Predicated region
    $region37: #{basic_multi_update_block.12} parent=5 // pred_check
      %p619 = pneg %p618
    $region38: #{basic_multi_update_block.12} parent=5 // pred_check_branch
      %621 = sbr.rel (%p619) target = $region40
    $region39: #{basic_multi_update_block.12} parent=5 // pred_region
      %s622 = ssub.s32 %s9, 2
      // Predicated region
      $region41: #{basic_multi_update_block.12} parent=39 // pred_check
        %p623 = pneg %p106
      $region42: #{basic_multi_update_block.12} parent=39 // pred_check_branch
        %625 = sbr.rel (%p623) target = $region44
      $region43: #{basic_multi_update_block.12} parent=39 // pred_region
        %s626 = smul.u32 32, %s15
        %p627 = scmp.lt.s32.totalorder %s626, 63
        %s628 = scalar_select %p627, %s626, 63
        %s629 = smul.addr %s628, 8
        %s630 = scalar_lea.vmem %s3, %s629
      $region44: #{basic_multi_update_block.12} parent=39 // pred_fallthru
        _
    $region40: #{basic_multi_update_block.12} parent=5 // pred_fallthru
      _
  $region6: #{basic_multi_update_block.12} parent=0 // loop_footer
    %s13 = sadd.s32 1, %s9
  $region7: #{basic_multi_update_block.12} parent=0 // loop_footer_branch
    %8 = sbr.rel target = $region3
  $region8: #{basic_multi_update_block.12} parent=0 // loop_exit
    _

// kernel: basic_multi_update_block.9
$region0: #{basic_multi_update_block.9}
  #allocation0 [shape = 'u32[]', space=smem, size = 0x4, offset = 0x4, fixed_abs, tag = 'smem constant byte address 0x4 - core index']
  #allocation1 [shape = 'u32[144,128]{1,0:T(1,128)}', space=vmem, size = 0x12000, scoped, tag = 'internal scratch']
  %s0 = inlined_call_operand.vmem [shape: bf16[512,10], index: 0, kind: input, shape index: {}]
  %s1 = inlined_call_operand.vmem [shape: bf16[10,8], index: 1, kind: input, shape index: {}]
  %s2 = inlined_call_operand.vmem [shape: f32[1,8], index: 2, kind: input, shape index: {}]
  %s3 = inlined_call_operand.vmem [shape: f32[512,8], index: 3, kind: output, shape index: {}]
  %s4 = sld [smem:[#allocation0]]
  $region45: #{basic_multi_update_block.9} parent=0
    _
  %s6 = ssub.s32 1, %s4
  %s7 = scalar_select 0, %s6, %s4
  loop: start=0, step=1, limit=4
  $region2: #{basic_multi_update_block.9} parent=0 // loop_pre_header
    _
  $region3: #{basic_multi_update_block.9} parent=0 // loop_header
    %s9 = sphi 0, %s13
    %p10 = scmp.ge.s32.totalorder %s9, 4
    %s19 = sphi 0, %s21
    %s22 = sphi 0, %s19
    %s23 = sphi 0, %s22
    %s39 = sphi 0, %s23
    %s43 = sphi 0, %s43
    %s45 = sphi 0, %s43
    %s46 = sphi 0, %s45
    %s60 = sphi 0, %s46
    %s64 = sphi 0, %s64
    %s66 = sphi 0, %s64
    %s67 = sphi 0, %s66
    %s81 = sphi 0, %s67
    %s87 = sphi 0, %s89
    %s90 = sphi 0, %s87
    %s91 = sphi 0, %s90
    %s107 = sphi 0, %s91
  $region4: #{basic_multi_update_block.9} parent=0 // loop_header_branch
    %12 = sbr.rel (%p10) target = $region8
  $region5: #{basic_multi_update_block.9} parent=0 // loop_body
    %s14 = ssub.s32 %s9, 1
    %s15 = ssub.s32 %s9, 2
    %s16 = sadd.s32 %s9, 1
    %s17 = ssub.s32 %s9, %s16
    %p18 = scmp.eq.s32.totalorder %s17, 0
    %s20 = sadd.s32 %s19, 1
    %s21 = scalar_select %p18, %s19, %s20
    %p24 = pneg %p18
    %p25 = scmp.eq.s32.totalorder %s9, 1
    %p26 = por %p24, %p25
    %p27 = scmp.ne.s32.totalorder %s19, %s22
    %p28 = scmp.eq.s32.totalorder %s9, 0
    %p29 = por %p27, %p28
    %p30 = scmp.ne.s32.totalorder %s19, %s22
    %p31 = scmp.eq.s32.totalorder %s14, 1
    %p32 = por %p30, %p31
    %p33 = scmp.ne.s32.totalorder %s22, %s23
    %p34 = scmp.eq.s32.totalorder %s14, 0
    %p35 = por %p33, %p34
    %p36 = scmp.ne.s32.totalorder %s22, %s23
    %p37 = scmp.eq.s32.totalorder %s15, 1
    %p38 = por %p36, %p37
    %p40 = scmp.ne.s32.totalorder %s23, %s39
    %p41 = scmp.eq.s32.totalorder %s15, 0
    %p42 = por %p40, %p41
    %s44 = sadd.s32 %s43, 1
    %p47 = scmp.eq.s32.totalorder %s9, 1
    %p48 = scmp.ne.s32.totalorder %s43, %s45
    %p49 = scmp.eq.s32.totalorder %s9, 0
    %p50 = por %p48, %p49
    %p51 = scmp.ne.s32.totalorder %s43, %s45
    %p52 = scmp.eq.s32.totalorder %s14, 1
    %p53 = por %p51, %p52
    %p54 = scmp.ne.s32.totalorder %s45, %s46
    %p55 = scmp.eq.s32.totalorder %s14, 0
    %p56 = por %p54, %p55
    %p57 = scmp.ne.s32.totalorder %s45, %s46
    %p58 = scmp.eq.s32.totalorder %s15, 1
    %p59 = por %p57, %p58
    %p61 = scmp.ne.s32.totalorder %s46, %s60
    %p62 = scmp.eq.s32.totalorder %s15, 0
    %p63 = por %p61, %p62
    %s65 = sadd.s32 %s64, 1
    %p68 = scmp.eq.s32.totalorder %s9, 1
    %p69 = scmp.ne.s32.totalorder %s64, %s66
    %p70 = scmp.eq.s32.totalorder %s9, 0
    %p71 = por %p69, %p70
    %p72 = scmp.ne.s32.totalorder %s64, %s66
    %p73 = scmp.eq.s32.totalorder %s14, 1
    %p74 = por %p72, %p73
    %p75 = scmp.ne.s32.totalorder %s66, %s67
    %p76 = scmp.eq.s32.totalorder %s14, 0
    %p77 = por %p75, %p76
    %p78 = scmp.ne.s32.totalorder %s66, %s67
    %p79 = scmp.eq.s32.totalorder %s15, 1
    %p80 = por %p78, %p79
    %p82 = scmp.ne.s32.totalorder %s67, %s81
    %p83 = scmp.eq.s32.totalorder %s15, 0
    %p84 = por %p82, %p83
    %s85 = ssub.s32 %s9, %s16
    %p86 = scmp.eq.s32.totalorder %s85, 0
    %s88 = sadd.s32 %s87, 1
    %s89 = scalar_select %p86, %s87, %s88
    %p92 = pneg %p86
    %p93 = scmp.eq.s32.totalorder %s9, 1
    %p94 = por %p92, %p93
    %p95 = scmp.ne.s32.totalorder %s87, %s90
    %p96 = scmp.eq.s32.totalorder %s9, 0
    %p97 = por %p95, %p96
    %p98 = scmp.ne.s32.totalorder %s87, %s90
    %p99 = scmp.eq.s32.totalorder %s14, 1
    %p100 = por %p98, %p99
    %p101 = scmp.ne.s32.totalorder %s90, %s91
    %p102 = scmp.eq.s32.totalorder %s14, 0
    %p103 = por %p101, %p102
    %p104 = scmp.ne.s32.totalorder %s90, %s91
    %p105 = scmp.eq.s32.totalorder %s15, 1
    %p106 = por %p104, %p105
    %p108 = scmp.ne.s32.totalorder %s91, %s107
    %p109 = scmp.eq.s32.totalorder %s15, 0
    %p110 = por %p108, %p109
    %p111 = scmp.le.s32.totalorder 1, %s9
    %p112 = scmp.lt.s32.totalorder %s9, 3
    %p113 = pnand %p111, %p112
    %p114 = pneg %p113
    // Predicated region
    $region9: #{basic_multi_update_block.9} parent=5 // pred_check
      _
    $region10: #{basic_multi_update_block.9} parent=5 // pred_check_branch
      %116 = sbr.rel (%p113) target = $region12
    $region11: #{basic_multi_update_block.9} parent=5 // pred_region
      %s117 = ssub.s32 %s9, 1
      // Predicated region
      $region13: #{basic_multi_update_block.9} parent=11 // pred_check
        %p118 = pneg %p56
      $region14: #{basic_multi_update_block.9} parent=11 // pred_check_branch
        %120 = sbr.rel (%p118) target = $region16
      $region15: #{basic_multi_update_block.9} parent=11 // pred_region
        _
      $region16: #{basic_multi_update_block.9} parent=11 // pred_fallthru
        _
      // Predicated region
      $region17: #{basic_multi_update_block.9} parent=11 // pred_check
        %p121 = pneg %p77
      $region18: #{basic_multi_update_block.9} parent=11 // pred_check_branch
        %123 = sbr.rel (%p121) target = $region20
      $region19: #{basic_multi_update_block.9} parent=11 // pred_region
        _
      $region20: #{basic_multi_update_block.9} parent=11 // pred_fallthru
        _
    $region12: #{basic_multi_update_block.9} parent=5 // pred_fallthru
      _
    %p124 = scmp.lt.s32.totalorder %s9, 2
    // Predicated region
    $region21: #{basic_multi_update_block.9} parent=5 // pred_check
      %p125 = pneg %p124
    $region22: #{basic_multi_update_block.9} parent=5 // pred_check_branch
      %127 = sbr.rel (%p125) target = $region24
    $region23: #{basic_multi_update_block.9} parent=5 // pred_region
      // Predicated region
      $region25: #{basic_multi_update_block.9} parent=23 // pred_check
        %p128 = pneg %p29
      $region26: #{basic_multi_update_block.9} parent=23 // pred_check_branch
        %130 = sbr.rel (%p128) target = $region28
      $region27: #{basic_multi_update_block.9} parent=23 // pred_region
        %s131 = smul.u32 32, %s9
        %p132 = scmp.lt.s32.totalorder %s131, 63
        %s133 = scalar_select %p132, %s131, 63
        %s134 = smul.addr %s133, 4
        %s135 = scalar_lea.vmem %s0, %s134
        %s136 = smul.u32 32, %s9
      $region28: #{basic_multi_update_block.9} parent=23 // pred_fallthru
        _
    $region24: #{basic_multi_update_block.9} parent=5 // pred_fallthru
      _
    %p137 = scmp.le.s32.totalorder 1, %s9
    %p138 = scmp.lt.s32.totalorder %s9, 3
    %p139 = pnand %p137, %p138
    %p140 = pneg %p139
    // Predicated region
    $region29: #{basic_multi_update_block.9} parent=5 // pred_check
      _
    $region30: #{basic_multi_update_block.9} parent=5 // pred_check_branch
      %142 = sbr.rel (%p139) target = $region32
    $region31: #{basic_multi_update_block.9} parent=5 // pred_region
      %s143 = ssub.s32 %s9, 1
      %s144 = smul.u32 32, %s14
      %p145 = scmp.lt.s32.totalorder %s144, 63
      %s146 = scalar_select %p145, %s144, 63
      %s147 = smul.addr %s146, 4
      %s148 = scalar_lea.vmem %s0, %s147
      %p149 = pneg %p35
      %p150 = pneg %p32
      %p151 = pneg %p56
      %p152 = pneg %p53
      %p153 = pneg %p77
      %p154 = pneg %p74
      %p155 = pneg %p103
      %p156 = pneg %p100
      %s157 = smul.u32 32, %s14
      %p158 = scmp.lt.s32.totalorder %s157, 63
      %s159 = scalar_select %p158, %s157, 63
      %s160 = smul.addr %s159, 8
      %s161 = scalar_lea.vmem %s3, %s160
      %s162 = smul.u32 32, %s14
      %p163 = scmp.lt.s32.totalorder %s162, 63
      %s164 = scalar_select %p163, %s162, 63
      %s165 = smul.addr %s164, 4
      %s166 = scalar_lea.vmem %s0, %s165
      %s167 = smul.u32 32, %s14
      %s168 = smul.u32 32, %s14
      %p169 = scmp.lt.s32.totalorder %s168, 63
      %s170 = scalar_select %p169, %s168, 63
      %s171 = smul.addr %s170, 8
      %s172 = scalar_lea.vmem %s3, %s171
      %s173 = smul.u32 32, %s14
      %v175 = vld [vmem:[%s166] sm:$0xf]
      %v176 = vld [vmem:[%s166 + $0x4] sm:$0xf]
      %v177 = vld [vmem:[%s166 + $0x8] sm:$0xf]
      %v178 = vld [vmem:[%s166 + $0xc] sm:$0xf]
      %v179 = vld [vmem:[%s166 + $0x10] sm:$0xf]
      %v180 = vld [vmem:[%s166 + $0x14] sm:$0xf]
      %v181 = vld [vmem:[%s166 + $0x18] sm:$0xf]
      %v182 = vld [vmem:[%s166 + $0x1c] sm:$0xf]
      %v183 = vld [vmem:[%s166 + $0x20] sm:$0xf]
      %v184 = vld [vmem:[%s166 + $0x24] sm:$0xf]
      %v185 = vld [vmem:[%s166 + $0x28] sm:$0xf]
      %v186 = vld [vmem:[%s166 + $0x2c] sm:$0xf]
      %v187 = vld [vmem:[%s166 + $0x30] sm:$0xf]
      %v188 = vld [vmem:[%s166 + $0x34] sm:$0xf]
      %v189 = vld [vmem:[%s166 + $0x38] sm:$0xf]
      %v190 = vld [vmem:[%s166 + $0x3c] sm:$0xf]
      %v191 = vld [vmem:[%s166 + $0x40] sm:$0xf]
      %v192 = vld [vmem:[%s166 + $0x44] sm:$0xf]
      %v193 = vld [vmem:[%s166 + $0x48] sm:$0xf]
      %v194 = vld [vmem:[%s166 + $0x4c] sm:$0xf]
      %v195 = vld [vmem:[%s166 + $0x50] sm:$0xf]
      %v196 = vld [vmem:[%s166 + $0x54] sm:$0xf]
      %v197 = vld [vmem:[%s166 + $0x58] sm:$0xf]
      %v198 = vld [vmem:[%s166 + $0x5c] sm:$0xf]
      %v199 = vld [vmem:[%s166 + $0x60] sm:$0xf]
      %v200 = vld [vmem:[%s166 + $0x64] sm:$0xf]
      %v201 = vld [vmem:[%s166 + $0x68] sm:$0xf]
      %v202 = vld [vmem:[%s166 + $0x6c] sm:$0xf]
      %v203 = vld [vmem:[%s166 + $0x70] sm:$0xf]
      %v204 = vld [vmem:[%s166 + $0x74] sm:$0xf]
      %v205 = vld [vmem:[%s166 + $0x78] sm:$0xf]
      %v206 = vld [vmem:[%s166 + $0x7c] sm:$0xf]
      %v207 = vld [vmem:[%s1] sm:$0xf]
      %v208 = vld [vmem:[%s1 + $0x4] sm:$0x1]
      %v209 = vld [vmem:[%s2] sm:$0x1]
      %v211 = vlaneseq
      %v212 = vshrl.u32 %v211, 7
      %v213 = vsub.s32 0, %v212
      %v214 = vrot.slane %v209, %v213
      %v248 = vunpack.c.l.b16 %v175
      %v249 = vunpack.c.l.b16 %v176
      %v250 = vunpack.c.l.b16 %v177
      %v251 = vunpack.c.l.b16 %v178
      %v252 = vunpack.c.l.b16 %v179
      %v253 = vunpack.c.l.b16 %v180
      %v254 = vunpack.c.l.b16 %v181
      %v255 = vunpack.c.l.b16 %v182
      %v256 = vunpack.c.l.b16 %v183
      %v257 = vunpack.c.l.b16 %v184
      %v258 = vunpack.c.l.b16 %v185
      %v259 = vunpack.c.l.b16 %v186
      %v260 = vunpack.c.l.b16 %v187
      %v261 = vunpack.c.l.b16 %v188
      %v262 = vunpack.c.l.b16 %v189
      %v263 = vunpack.c.l.b16 %v190
      %v264 = vunpack.c.l.b16 %v191
      %v265 = vunpack.c.l.b16 %v192
      %v266 = vunpack.c.l.b16 %v193
      %v267 = vunpack.c.l.b16 %v194
      %v268 = vunpack.c.l.b16 %v195
      %v269 = vunpack.c.l.b16 %v196
      %v270 = vunpack.c.l.b16 %v197
      %v271 = vunpack.c.l.b16 %v198
      %v272 = vunpack.c.l.b16 %v199
      %v273 = vunpack.c.l.b16 %v200
      %v274 = vunpack.c.l.b16 %v201
      %v275 = vunpack.c.l.b16 %v202
      %v276 = vunpack.c.l.b16 %v203
      %v277 = vunpack.c.l.b16 %v204
      %v278 = vunpack.c.l.b16 %v205
      %v279 = vunpack.c.l.b16 %v206
      %v280 = vpack.c.b16 %v249, %v248
      %v281 = vpack.c.b16 %v251, %v250
      %v282 = vpack.c.b16 %v253, %v252
      %v283 = vpack.c.b16 %v255, %v254
      %v284 = vpack.c.b16 %v257, %v256
      %v285 = vpack.c.b16 %v259, %v258
      %v286 = vpack.c.b16 %v261, %v260
      %v287 = vpack.c.b16 %v263, %v262
      %v288 = vpack.c.b16 %v265, %v264
      %v289 = vpack.c.b16 %v267, %v266
      %v290 = vpack.c.b16 %v269, %v268
      %v291 = vpack.c.b16 %v271, %v270
      %v292 = vpack.c.b16 %v273, %v272
      %v293 = vpack.c.b16 %v275, %v274
      %v294 = vpack.c.b16 %v277, %v276
      %v295 = vpack.c.b16 %v279, %v278
      %v298 = vunpack.c.l.b16 %v207
      %v299 = vunpack.c.l.b16 %v208
      %v300 = vpack.c.b16 %v299, %v298
      %vm301 = vcmask 80896
      %v303 = vsel %vm301, %v280, 0
      %v306 = vsel %vm301, %v281, 0
      %v309 = vsel %vm301, %v282, 0
      %v312 = vsel %vm301, %v283, 0
      %v315 = vsel %vm301, %v284, 0
      %v318 = vsel %vm301, %v285, 0
      %v321 = vsel %vm301, %v286, 0
      %v324 = vsel %vm301, %v287, 0
      %v327 = vsel %vm301, %v288, 0
      %v330 = vsel %vm301, %v289, 0
      %v333 = vsel %vm301, %v290, 0
      %v336 = vsel %vm301, %v291, 0
      %v339 = vsel %vm301, %v292, 0
      %v342 = vsel %vm301, %v293, 0
      %v345 = vsel %vm301, %v294, 0
      %v348 = vsel %vm301, %v295, 0
      %vm350 = vcmask 1044480
      %v352 = vsel %vm350, %v300, 0
      %354 = vmatprep.subr.bf16.mxu0 0
      %355 = vmatpush1.bf16.msra.mxu0 %v352
      %356 = vmatprep.subr.bf16.mxu0 0
      %357 = vmatpush1.bf16.msra.mxu0 0
      %358 = vmatprep.subr.bf16.mxu0 0
      %359 = vmatpush1.bf16.msra.mxu0 0
      %360 = vmatprep.subr.bf16.mxu0 0
      %361 = vmatpush1.bf16.msra.mxu0 0
      %362 = vmatprep.subr.bf16.mxu0 0
      %363 = vmatpush1.bf16.msra.mxu0 0
      %364 = vmatprep.subr.bf16.mxu0 0
      %365 = vmatpush1.bf16.msra.mxu0 0
      %366 = vmatprep.subr.bf16.mxu0 0
      %367 = vmatpush1.bf16.msra.mxu0 0
      %368 = vmatprep.subr.bf16.mxu0 0
      %369 = vmatpush1.bf16.msra.mxu0 0
      %370 = vmatprep.subr.bf16.mxu0 0
      %371 = vmatpush1.bf16.msra.mxu0 0
      %372 = vmatprep.subr.bf16.mxu0 0
      %373 = vmatpush1.bf16.msra.mxu0 0
      %374 = vmatprep.subr.bf16.mxu0 0
      %375 = vmatpush1.bf16.msra.mxu0 0
      %376 = vmatprep.subr.bf16.mxu0 0
      %377 = vmatpush1.bf16.msra.mxu0 0
      %378 = vmatprep.subr.bf16.mxu0 0
      %379 = vmatpush1.bf16.msra.mxu0 0
      %380 = vmatprep.subr.bf16.mxu0 0
      %381 = vmatpush1.bf16.msra.mxu0 0
      %382 = vmatprep.subr.bf16.mxu0 0
      %383 = vmatpush1.bf16.msra.mxu0 0
      %384 = vmatprep.subr.bf16.mxu0 0
      %385 = vmatpush1.bf16.msra.mxu0 0
      %386 = vmatprep.mubr.bf16.mxu0 0
      %387 = vmatmul.mubr.bf16.gmra.mrb[0].mxu0 %v303
      %v388 = vpop.f32.mrb[0].mxu0
      %v389 = vadd.f32 %v214, %v388
      %v390 = vpop.f32.mrb[0].mxu0
      %v391 = vpop.f32.mrb[0].mxu0
      %v392 = vadd.f32 %v214, %v391
      %v393 = vpop.f32.mrb[0].mxu0
      %394 = vmatprep.mubr.bf16.mxu0 0
      %395 = vmatmul.mubr.bf16.gmra.mrb[0].mxu0 %v306
      %v396 = vpop.f32.mrb[0].mxu0
      %v397 = vadd.f32 %v214, %v396
      %v398 = vpop.f32.mrb[0].mxu0
      %v399 = vpop.f32.mrb[0].mxu0
      %v400 = vadd.f32 %v214, %v399
      %v401 = vpop.f32.mrb[0].mxu0
      %402 = vmatprep.mubr.bf16.mxu0 0
      %403 = vmatmul.mubr.bf16.gmra.mrb[0].mxu0 %v309
      %v404 = vpop.f32.mrb[0].mxu0
      %v405 = vadd.f32 %v214, %v404
      %v406 = vpop.f32.mrb[0].mxu0
      %v407 = vpop.f32.mrb[0].mxu0
      %v408 = vadd.f32 %v214, %v407
      %v409 = vpop.f32.mrb[0].mxu0
      %410 = vmatprep.mubr.bf16.mxu0 0
      %411 = vmatmul.mubr.bf16.gmra.mrb[0].mxu0 %v312
      %v412 = vpop.f32.mrb[0].mxu0
      %v413 = vadd.f32 %v214, %v412
      %v414 = vpop.f32.mrb[0].mxu0
      %v415 = vpop.f32.mrb[0].mxu0
      %v416 = vadd.f32 %v214, %v415
      %v417 = vpop.f32.mrb[0].mxu0
      %418 = vmatprep.mubr.bf16.mxu0 0
      %419 = vmatmul.mubr.bf16.gmra.mrb[0].mxu0 %v315
      %v420 = vpop.f32.mrb[0].mxu0
      %v421 = vadd.f32 %v214, %v420
      %v422 = vpop.f32.mrb[0].mxu0
      %v423 = vpop.f32.mrb[0].mxu0
      %v424 = vadd.f32 %v214, %v423
      %v425 = vpop.f32.mrb[0].mxu0
      %426 = vmatprep.mubr.bf16.mxu0 0
      %427 = vmatmul.mubr.bf16.gmra.mrb[0].mxu0 %v318
      %v428 = vpop.f32.mrb[0].mxu0
      %v429 = vadd.f32 %v214, %v428
      %v430 = vpop.f32.mrb[0].mxu0
      %v431 = vpop.f32.mrb[0].mxu0
      %v432 = vadd.f32 %v214, %v431
      %v433 = vpop.f32.mrb[0].mxu0
      %434 = vmatprep.mubr.bf16.mxu0 0
      %435 = vmatmul.mubr.bf16.gmra.mrb[0].mxu0 %v321
      %v436 = vpop.f32.mrb[0].mxu0
      %v437 = vadd.f32 %v214, %v436
      %v438 = vpop.f32.mrb[0].mxu0
      %v439 = vpop.f32.mrb[0].mxu0
      %v440 = vadd.f32 %v214, %v439
      %v441 = vpop.f32.mrb[0].mxu0
      %442 = vmatprep.mubr.bf16.mxu0 0
      %443 = vmatmul.mubr.bf16.gmra.mrb[0].mxu0 %v324
      %v444 = vpop.f32.mrb[0].mxu0
      %v445 = vadd.f32 %v214, %v444
      %v446 = vpop.f32.mrb[0].mxu0
      %v447 = vpop.f32.mrb[0].mxu0
      %v448 = vadd.f32 %v214, %v447
      %v449 = vpop.f32.mrb[0].mxu0
      %450 = vmatprep.mubr.bf16.mxu0 0
      %451 = vmatmul.mubr.bf16.gmra.mrb[0].mxu0 %v327
      %v452 = vpop.f32.mrb[0].mxu0
      %v453 = vadd.f32 %v214, %v452
      %v454 = vpop.f32.mrb[0].mxu0
      %v455 = vpop.f32.mrb[0].mxu0
      %v456 = vadd.f32 %v214, %v455
      %v457 = vpop.f32.mrb[0].mxu0
      %458 = vmatprep.mubr.bf16.mxu0 0
      %459 = vmatmul.mubr.bf16.gmra.mrb[0].mxu0 %v330
      %v460 = vpop.f32.mrb[0].mxu0
      %v461 = vadd.f32 %v214, %v460
      %v462 = vpop.f32.mrb[0].mxu0
      %v463 = vpop.f32.mrb[0].mxu0
      %v464 = vadd.f32 %v214, %v463
      %v465 = vpop.f32.mrb[0].mxu0
      %466 = vmatprep.mubr.bf16.mxu0 0
      %467 = vmatmul.mubr.bf16.gmra.mrb[0].mxu0 %v333
      %v468 = vpop.f32.mrb[0].mxu0
      %v469 = vadd.f32 %v214, %v468
      %v470 = vpop.f32.mrb[0].mxu0
      %v471 = vpop.f32.mrb[0].mxu0
      %v472 = vadd.f32 %v214, %v471
      %v473 = vpop.f32.mrb[0].mxu0
      %474 = vmatprep.mubr.bf16.mxu0 0
      %475 = vmatmul.mubr.bf16.gmra.mrb[0].mxu0 %v336
      %v476 = vpop.f32.mrb[0].mxu0
      %v477 = vadd.f32 %v214, %v476
      %v478 = vpop.f32.mrb[0].mxu0
      %v479 = vpop.f32.mrb[0].mxu0
      %v480 = vadd.f32 %v214, %v479
      %v481 = vpop.f32.mrb[0].mxu0
      %482 = vmatprep.mubr.bf16.mxu0 0
      %483 = vmatmul.mubr.bf16.gmra.mrb[0].mxu0 %v339
      %v484 = vpop.f32.mrb[0].mxu0
      %v485 = vadd.f32 %v214, %v484
      %v486 = vpop.f32.mrb[0].mxu0
      %v487 = vpop.f32.mrb[0].mxu0
      %v488 = vadd.f32 %v214, %v487
      %v489 = vpop.f32.mrb[0].mxu0
      %490 = vmatprep.mubr.bf16.mxu0 0
      %491 = vmatmul.mubr.bf16.gmra.mrb[0].mxu0 %v342
      %v492 = vpop.f32.mrb[0].mxu0
      %v493 = vadd.f32 %v214, %v492
      %v494 = vpop.f32.mrb[0].mxu0
      %v495 = vpop.f32.mrb[0].mxu0
      %v496 = vadd.f32 %v214, %v495
      %v497 = vpop.f32.mrb[0].mxu0
      %498 = vmatprep.mubr.bf16.mxu0 0
      %499 = vmatmul.mubr.bf16.gmra.mrb[0].mxu0 %v345
      %v500 = vpop.f32.mrb[0].mxu0
      %v501 = vadd.f32 %v214, %v500
      %v502 = vpop.f32.mrb[0].mxu0
      %v503 = vpop.f32.mrb[0].mxu0
      %v504 = vadd.f32 %v214, %v503
      %v505 = vpop.f32.mrb[0].mxu0
      %506 = vmatprep.mubr.bf16.mxu0 0
      %507 = vmatmul.mubr.bf16.gmra.mrb[0].mxu0 %v348
      %v508 = vpop.f32.mrb[0].mxu0
      %v509 = vadd.f32 %v214, %v508
      %v510 = vpop.f32.mrb[0].mxu0
      %v511 = vpop.f32.mrb[0].mxu0
      %v512 = vadd.f32 %v214, %v511
      %v513 = vpop.f32.mrb[0].mxu0
      %514 = vdwg.mxu0
      %v515 = vmax.f32 %v389, 0.0
      %v516 = vmax.f32 %v392, 0.0
      %v517 = vmax.f32 %v397, 0.0
      %v518 = vmax.f32 %v400, 0.0
      %v519 = vmax.f32 %v405, 0.0
      %v520 = vmax.f32 %v408, 0.0
      %v521 = vmax.f32 %v413, 0.0
      %v522 = vmax.f32 %v416, 0.0
      %v523 = vmax.f32 %v421, 0.0
      %v524 = vmax.f32 %v424, 0.0
      %v525 = vmax.f32 %v429, 0.0
      %v526 = vmax.f32 %v432, 0.0
      %v527 = vmax.f32 %v437, 0.0
      %v528 = vmax.f32 %v440, 0.0
      %v529 = vmax.f32 %v445, 0.0
      %v530 = vmax.f32 %v448, 0.0
      %v531 = vmax.f32 %v453, 0.0
      %v532 = vmax.f32 %v456, 0.0
      %v533 = vmax.f32 %v461, 0.0
      %v534 = vmax.f32 %v464, 0.0
      %v535 = vmax.f32 %v469, 0.0
      %v536 = vmax.f32 %v472, 0.0
      %v537 = vmax.f32 %v477, 0.0
      %v538 = vmax.f32 %v480, 0.0
      %v539 = vmax.f32 %v485, 0.0
      %v540 = vmax.f32 %v488, 0.0
      %v541 = vmax.f32 %v493, 0.0
      %v542 = vmax.f32 %v496, 0.0
      %v543 = vmax.f32 %v501, 0.0
      %v544 = vmax.f32 %v504, 0.0
      %v545 = vmax.f32 %v509, 0.0
      %v546 = vmax.f32 %v512, 0.0
      %vm547 = vcmask 64512
      %548 = vst.msk [vmem:[%s172] sm:$0xff] %vm547, %v515
      %549 = vst.msk [vmem:[%s172 + $0x8] sm:$0xff] %vm547, %v516
      %550 = vst.msk [vmem:[%s172 + $0x10] sm:$0xff] %vm547, %v517
      %551 = vst.msk [vmem:[%s172 + $0x18] sm:$0xff] %vm547, %v518
      %552 = vst.msk [vmem:[%s172 + $0x20] sm:$0xff] %vm547, %v519
      %553 = vst.msk [vmem:[%s172 + $0x28] sm:$0xff] %vm547, %v520
      %554 = vst.msk [vmem:[%s172 + $0x30] sm:$0xff] %vm547, %v521
      %555 = vst.msk [vmem:[%s172 + $0x38] sm:$0xff] %vm547, %v522
      %556 = vst.msk [vmem:[%s172 + $0x40] sm:$0xff] %vm547, %v523
      %557 = vst.msk [vmem:[%s172 + $0x48] sm:$0xff] %vm547, %v524
      %558 = vst.msk [vmem:[%s172 + $0x50] sm:$0xff] %vm547, %v525
      %559 = vst.msk [vmem:[%s172 + $0x58] sm:$0xff] %vm547, %v526
      %560 = vst.msk [vmem:[%s172 + $0x60] sm:$0xff] %vm547, %v527
      %561 = vst.msk [vmem:[%s172 + $0x68] sm:$0xff] %vm547, %v528
      %562 = vst.msk [vmem:[%s172 + $0x70] sm:$0xff] %vm547, %v529
      %563 = vst.msk [vmem:[%s172 + $0x78] sm:$0xff] %vm547, %v530
      %564 = vst.msk [vmem:[%s172 + $0x80] sm:$0xff] %vm547, %v531
      %565 = vst.msk [vmem:[%s172 + $0x88] sm:$0xff] %vm547, %v532
      %566 = vst.msk [vmem:[%s172 + $0x90] sm:$0xff] %vm547, %v533
      %567 = vst.msk [vmem:[%s172 + $0x98] sm:$0xff] %vm547, %v534
      %568 = vst.msk [vmem:[%s172 + $0xa0] sm:$0xff] %vm547, %v535
      %569 = vst.msk [vmem:[%s172 + $0xa8] sm:$0xff] %vm547, %v536
      %570 = vst.msk [vmem:[%s172 + $0xb0] sm:$0xff] %vm547, %v537
      %571 = vst.msk [vmem:[%s172 + $0xb8] sm:$0xff] %vm547, %v538
      %572 = vst.msk [vmem:[%s172 + $0xc0] sm:$0xff] %vm547, %v539
      %573 = vst.msk [vmem:[%s172 + $0xc8] sm:$0xff] %vm547, %v540
      %574 = vst.msk [vmem:[%s172 + $0xd0] sm:$0xff] %vm547, %v541
      %575 = vst.msk [vmem:[%s172 + $0xd8] sm:$0xff] %vm547, %v542
      %576 = vst.msk [vmem:[%s172 + $0xe0] sm:$0xff] %vm547, %v543
      %577 = vst.msk [vmem:[%s172 + $0xe8] sm:$0xff] %vm547, %v544
      %578 = vst.msk [vmem:[%s172 + $0xf0] sm:$0xff] %vm547, %v545
      %579 = vst.msk [vmem:[%s172 + $0xf8] sm:$0xff] %vm547, %v546
      %s580 = smul.u32 32, %s14
      %p581 = scmp.lt.s32.totalorder %s580, 63
      %s582 = scalar_select %p581, %s580, 63
      %s583 = smul.addr %s582, 8
      %s584 = scalar_lea.vmem %s3, %s583
      // Predicated region
      $region33: #{basic_multi_update_block.9} parent=31 // pred_check
        %p585 = pneg %p100
      $region34: #{basic_multi_update_block.9} parent=31 // pred_check_branch
        %587 = sbr.rel (%p585) target = $region36
      $region35: #{basic_multi_update_block.9} parent=31 // pred_region
        %s588 = smul.u32 32, %s14
      $region36: #{basic_multi_update_block.9} parent=31 // pred_fallthru
        _
    $region32: #{basic_multi_update_block.9} parent=5 // pred_fallthru
      _
    %p589 = scmp.le.s32.totalorder 2, %s9
    // Predicated region
    $region37: #{basic_multi_update_block.9} parent=5 // pred_check
      %p590 = pneg %p589
    $region38: #{basic_multi_update_block.9} parent=5 // pred_check_branch
      %592 = sbr.rel (%p590) target = $region40
    $region39: #{basic_multi_update_block.9} parent=5 // pred_region
      %s593 = ssub.s32 %s9, 2
      // Predicated region
      $region41: #{basic_multi_update_block.9} parent=39 // pred_check
        %p594 = pneg %p106
      $region42: #{basic_multi_update_block.9} parent=39 // pred_check_branch
        %596 = sbr.rel (%p594) target = $region44
      $region43: #{basic_multi_update_block.9} parent=39 // pred_region
        %s597 = smul.u32 32, %s15
        %p598 = scmp.lt.s32.totalorder %s597, 63
        %s599 = scalar_select %p598, %s597, 63
        %s600 = smul.addr %s599, 8
        %s601 = scalar_lea.vmem %s3, %s600
      $region44: #{basic_multi_update_block.9} parent=39 // pred_fallthru
        _
    $region40: #{basic_multi_update_block.9} parent=5 // pred_fallthru
      _
  $region6: #{basic_multi_update_block.9} parent=0 // loop_footer
    %s13 = sadd.s32 1, %s9
  $region7: #{basic_multi_update_block.9} parent=0 // loop_footer_branch
    %8 = sbr.rel target = $region3
  $region8: #{basic_multi_update_block.9} parent=0 // loop_exit
    _

// kernel: basic_multi_update_block.13
$region0: #{basic_multi_update_block.13}
  #allocation0 [shape = 'u32[]', space=smem, size = 0x4, offset = 0x4, fixed_abs, tag = 'smem constant byte address 0x4 - core index']
  #allocation1 [shape = 'u32[144,128]{1,0:T(1,128)}', space=vmem, size = 0x12000, scoped, tag = 'internal scratch']
  %s0 = inlined_call_operand.vmem [shape: bf16[512,144], index: 0, kind: input, shape index: {}]
  %s1 = inlined_call_operand.vmem [shape: bf16[144,15], index: 1, kind: input, shape index: {}]
  %s2 = inlined_call_operand.vmem [shape: f32[1,15], index: 2, kind: input, shape index: {}]
  %s3 = inlined_call_operand.vmem [shape: f32[512,15], index: 3, kind: output, shape index: {}]
  %s4 = sld [smem:[#allocation0]]
  $region45: #{basic_multi_update_block.13} parent=0
    _
  %s6 = ssub.s32 1, %s4
  %s7 = scalar_select 0, %s6, %s4
  loop: start=0, step=1, limit=4
  $region2: #{basic_multi_update_block.13} parent=0 // loop_pre_header
    _
  $region3: #{basic_multi_update_block.13} parent=0 // loop_header
    %s9 = sphi 0, %s13
    %p10 = scmp.ge.s32.totalorder %s9, 4
    %s19 = sphi 0, %s21
    %s22 = sphi 0, %s19
    %s23 = sphi 0, %s22
    %s39 = sphi 0, %s23
    %s43 = sphi 0, %s43
    %s45 = sphi 0, %s43
    %s46 = sphi 0, %s45
    %s60 = sphi 0, %s46
    %s64 = sphi 0, %s64
    %s66 = sphi 0, %s64
    %s67 = sphi 0, %s66
    %s81 = sphi 0, %s67
    %s87 = sphi 0, %s89
    %s90 = sphi 0, %s87
    %s91 = sphi 0, %s90
    %s107 = sphi 0, %s91
  $region4: #{basic_multi_update_block.13} parent=0 // loop_header_branch
    %12 = sbr.rel (%p10) target = $region8
  $region5: #{basic_multi_update_block.13} parent=0 // loop_body
    %s14 = ssub.s32 %s9, 1
    %s15 = ssub.s32 %s9, 2
    %s16 = sadd.s32 %s9, 1
    %s17 = ssub.s32 %s9, %s16
    %p18 = scmp.eq.s32.totalorder %s17, 0
    %s20 = sadd.s32 %s19, 1
    %s21 = scalar_select %p18, %s19, %s20
    %p24 = pneg %p18
    %p25 = scmp.eq.s32.totalorder %s9, 1
    %p26 = por %p24, %p25
    %p27 = scmp.ne.s32.totalorder %s19, %s22
    %p28 = scmp.eq.s32.totalorder %s9, 0
    %p29 = por %p27, %p28
    %p30 = scmp.ne.s32.totalorder %s19, %s22
    %p31 = scmp.eq.s32.totalorder %s14, 1
    %p32 = por %p30, %p31
    %p33 = scmp.ne.s32.totalorder %s22, %s23
    %p34 = scmp.eq.s32.totalorder %s14, 0
    %p35 = por %p33, %p34
    %p36 = scmp.ne.s32.totalorder %s22, %s23
    %p37 = scmp.eq.s32.totalorder %s15, 1
    %p38 = por %p36, %p37
    %p40 = scmp.ne.s32.totalorder %s23, %s39
    %p41 = scmp.eq.s32.totalorder %s15, 0
    %p42 = por %p40, %p41
    %s44 = sadd.s32 %s43, 1
    %p47 = scmp.eq.s32.totalorder %s9, 1
    %p48 = scmp.ne.s32.totalorder %s43, %s45
    %p49 = scmp.eq.s32.totalorder %s9, 0
    %p50 = por %p48, %p49
    %p51 = scmp.ne.s32.totalorder %s43, %s45
    %p52 = scmp.eq.s32.totalorder %s14, 1
    %p53 = por %p51, %p52
    %p54 = scmp.ne.s32.totalorder %s45, %s46
    %p55 = scmp.eq.s32.totalorder %s14, 0
    %p56 = por %p54, %p55
    %p57 = scmp.ne.s32.totalorder %s45, %s46
    %p58 = scmp.eq.s32.totalorder %s15, 1
    %p59 = por %p57, %p58
    %p61 = scmp.ne.s32.totalorder %s46, %s60
    %p62 = scmp.eq.s32.totalorder %s15, 0
    %p63 = por %p61, %p62
    %s65 = sadd.s32 %s64, 1
    %p68 = scmp.eq.s32.totalorder %s9, 1
    %p69 = scmp.ne.s32.totalorder %s64, %s66
    %p70 = scmp.eq.s32.totalorder %s9, 0
    %p71 = por %p69, %p70
    %p72 = scmp.ne.s32.totalorder %s64, %s66
    %p73 = scmp.eq.s32.totalorder %s14, 1
    %p74 = por %p72, %p73
    %p75 = scmp.ne.s32.totalorder %s66, %s67
    %p76 = scmp.eq.s32.totalorder %s14, 0
    %p77 = por %p75, %p76
    %p78 = scmp.ne.s32.totalorder %s66, %s67
    %p79 = scmp.eq.s32.totalorder %s15, 1
    %p80 = por %p78, %p79
    %p82 = scmp.ne.s32.totalorder %s67, %s81
    %p83 = scmp.eq.s32.totalorder %s15, 0
    %p84 = por %p82, %p83
    %s85 = ssub.s32 %s9, %s16
    %p86 = scmp.eq.s32.totalorder %s85, 0
    %s88 = sadd.s32 %s87, 1
    %s89 = scalar_select %p86, %s87, %s88
    %p92 = pneg %p86
    %p93 = scmp.eq.s32.totalorder %s9, 1
    %p94 = por %p92, %p93
    %p95 = scmp.ne.s32.totalorder %s87, %s90
    %p96 = scmp.eq.s32.totalorder %s9, 0
    %p97 = por %p95, %p96
    %p98 = scmp.ne.s32.totalorder %s87, %s90
    %p99 = scmp.eq.s32.totalorder %s14, 1
    %p100 = por %p98, %p99
    %p101 = scmp.ne.s32.totalorder %s90, %s91
    %p102 = scmp.eq.s32.totalorder %s14, 0
    %p103 = por %p101, %p102
    %p104 = scmp.ne.s32.totalorder %s90, %s91
    %p105 = scmp.eq.s32.totalorder %s15, 1
    %p106 = por %p104, %p105
    %p108 = scmp.ne.s32.totalorder %s91, %s107
    %p109 = scmp.eq.s32.totalorder %s15, 0
    %p110 = por %p108, %p109
    %p111 = scmp.le.s32.totalorder 1, %s9
    %p112 = scmp.lt.s32.totalorder %s9, 3
    %p113 = pnand %p111, %p112
    %p114 = pneg %p113
    // Predicated region
    $region9: #{basic_multi_update_block.13} parent=5 // pred_check
      _
    $region10: #{basic_multi_update_block.13} parent=5 // pred_check_branch
      %116 = sbr.rel (%p113) target = $region12
    $region11: #{basic_multi_update_block.13} parent=5 // pred_region
      %s117 = ssub.s32 %s9, 1
      // Predicated region
      $region13: #{basic_multi_update_block.13} parent=11 // pred_check
        %p118 = pneg %p56
      $region14: #{basic_multi_update_block.13} parent=11 // pred_check_branch
        %120 = sbr.rel (%p118) target = $region16
      $region15: #{basic_multi_update_block.13} parent=11 // pred_region
        _
      $region16: #{basic_multi_update_block.13} parent=11 // pred_fallthru
        _
      // Predicated region
      $region17: #{basic_multi_update_block.13} parent=11 // pred_check
        %p121 = pneg %p77
      $region18: #{basic_multi_update_block.13} parent=11 // pred_check_branch
        %123 = sbr.rel (%p121) target = $region20
      $region19: #{basic_multi_update_block.13} parent=11 // pred_region
        _
      $region20: #{basic_multi_update_block.13} parent=11 // pred_fallthru
        _
    $region12: #{basic_multi_update_block.13} parent=5 // pred_fallthru
      _
    %p124 = scmp.lt.s32.totalorder %s9, 2
    // Predicated region
    $region21: #{basic_multi_update_block.13} parent=5 // pred_check
      %p125 = pneg %p124
    $region22: #{basic_multi_update_block.13} parent=5 // pred_check_branch
      %127 = sbr.rel (%p125) target = $region24
    $region23: #{basic_multi_update_block.13} parent=5 // pred_region
      // Predicated region
      $region25: #{basic_multi_update_block.13} parent=23 // pred_check
        %p128 = pneg %p29
      $region26: #{basic_multi_update_block.13} parent=23 // pred_check_branch
        %130 = sbr.rel (%p128) target = $region28
      $region27: #{basic_multi_update_block.13} parent=23 // pred_region
        %s131 = smul.u32 32, %s9
        %p132 = scmp.lt.s32.totalorder %s131, 63
        %s133 = scalar_select %p132, %s131, 63
        %s134 = smul.addr %s133, 2
        %s135 = smul.addr %s134, 4
        %s136 = scalar_lea.vmem %s0, %s135
        %s137 = smul.u32 32, %s9
      $region28: #{basic_multi_update_block.13} parent=23 // pred_fallthru
        _
    $region24: #{basic_multi_update_block.13} parent=5 // pred_fallthru
      _
    %p138 = scmp.le.s32.totalorder 1, %s9
    %p139 = scmp.lt.s32.totalorder %s9, 3
    %p140 = pnand %p138, %p139
    %p141 = pneg %p140
    // Predicated region
    $region29: #{basic_multi_update_block.13} parent=5 // pred_check
      _
    $region30: #{basic_multi_update_block.13} parent=5 // pred_check_branch
      %143 = sbr.rel (%p140) target = $region32
    $region31: #{basic_multi_update_block.13} parent=5 // pred_region
      %s144 = ssub.s32 %s9, 1
      %s145 = smul.u32 32, %s14
      %p146 = scmp.lt.s32.totalorder %s145, 63
      %s147 = scalar_select %p146, %s145, 63
      %s148 = smul.addr %s147, 2
      %s149 = smul.addr %s148, 4
      %s150 = scalar_lea.vmem %s0, %s149
      %p151 = pneg %p35
      %p152 = pneg %p32
      %p153 = pneg %p56
      %p154 = pneg %p53
      %p155 = pneg %p77
      %p156 = pneg %p74
      %p157 = pneg %p103
      %p158 = pneg %p100
      %s159 = smul.u32 32, %s14
      %p160 = scmp.lt.s32.totalorder %s159, 63
      %s161 = scalar_select %p160, %s159, 63
      %s162 = smul.addr %s161, 8
      %s163 = scalar_lea.vmem %s3, %s162
      %s164 = smul.u32 32, %s14
      %p165 = scmp.lt.s32.totalorder %s164, 63
      %s166 = scalar_select %p165, %s164, 63
      %s167 = smul.addr %s166, 2
      %s168 = smul.addr %s167, 4
      %s169 = scalar_lea.vmem %s0, %s168
      %s170 = smul.u32 32, %s14
      %s171 = smul.u32 32, %s14
      %p172 = scmp.lt.s32.totalorder %s171, 63
      %s173 = scalar_select %p172, %s171, 63
      %s174 = smul.addr %s173, 8
      %s175 = scalar_lea.vmem %s3, %s174
      %s176 = smul.u32 32, %s14
      %v178 = vld [vmem:[%s169] sm:$0xff]
      %v179 = vld [vmem:[%s169 + $0x8] sm:$0xff]
      %v180 = vld [vmem:[%s169 + $0x10] sm:$0xff]
      %v181 = vld [vmem:[%s169 + $0x18] sm:$0xff]
      %v182 = vld [vmem:[%s169 + $0x20] sm:$0xff]
      %v183 = vld [vmem:[%s169 + $0x28] sm:$0xff]
      %v184 = vld [vmem:[%s169 + $0x30] sm:$0xff]
      %v185 = vld [vmem:[%s169 + $0x38] sm:$0xff]
      %v186 = vld [vmem:[%s169 + $0x40] sm:$0xff]
      %v187 = vld [vmem:[%s169 + $0x48] sm:$0xff]
      %v188 = vld [vmem:[%s169 + $0x50] sm:$0xff]
      %v189 = vld [vmem:[%s169 + $0x58] sm:$0xff]
      %v190 = vld [vmem:[%s169 + $0x60] sm:$0xff]
      %v191 = vld [vmem:[%s169 + $0x68] sm:$0xff]
      %v192 = vld [vmem:[%s169 + $0x70] sm:$0xff]
      %v193 = vld [vmem:[%s169 + $0x78] sm:$0xff]
      %v194 = vld [vmem:[%s169 + $0x80] sm:$0xff]
      %v195 = vld [vmem:[%s169 + $0x88] sm:$0xff]
      %v196 = vld [vmem:[%s169 + $0x90] sm:$0xff]
      %v197 = vld [vmem:[%s169 + $0x98] sm:$0xff]
      %v198 = vld [vmem:[%s169 + $0xa0] sm:$0xff]
      %v199 = vld [vmem:[%s169 + $0xa8] sm:$0xff]
      %v200 = vld [vmem:[%s169 + $0xb0] sm:$0xff]
      %v201 = vld [vmem:[%s169 + $0xb8] sm:$0xff]
      %v202 = vld [vmem:[%s169 + $0xc0] sm:$0xff]
      %v203 = vld [vmem:[%s169 + $0xc8] sm:$0xff]
      %v204 = vld [vmem:[%s169 + $0xd0] sm:$0xff]
      %v205 = vld [vmem:[%s169 + $0xd8] sm:$0xff]
      %v206 = vld [vmem:[%s169 + $0xe0] sm:$0xff]
      %v207 = vld [vmem:[%s169 + $0xe8] sm:$0xff]
      %v208 = vld [vmem:[%s169 + $0xf0] sm:$0xff]
      %v209 = vld [vmem:[%s169 + $0xf8] sm:$0xff]
      %v210 = vld [vmem:[%s1] sm:$0xf]
      %v211 = vld [vmem:[%s1 + $0x4] sm:$0xf]
      %v212 = vld [vmem:[%s1 + $0x8] sm:$0xf]
      %v213 = vld [vmem:[%s1 + $0xc] sm:$0xf]
      %v214 = vld [vmem:[%s1 + $0x10] sm:$0xf]
      %v215 = vld [vmem:[%s1 + $0x14] sm:$0xf]
      %v216 = vld [vmem:[%s1 + $0x18] sm:$0xf]
      %v217 = vld [vmem:[%s1 + $0x1c] sm:$0xf]
      %v218 = vld [vmem:[%s1 + $0x20] sm:$0xf]
      %v219 = vld [vmem:[%s1 + $0x24] sm:$0xf]
      %v220 = vld [vmem:[%s1 + $0x28] sm:$0xf]
      %v221 = vld [vmem:[%s1 + $0x2c] sm:$0xf]
      %v222 = vld [vmem:[%s1 + $0x30] sm:$0xf]
      %v223 = vld [vmem:[%s1 + $0x34] sm:$0xf]
      %v224 = vld [vmem:[%s1 + $0x38] sm:$0xf]
      %v225 = vld [vmem:[%s1 + $0x3c] sm:$0xf]
      %v226 = vld [vmem:[%s1 + $0x40] sm:$0xf]
      %v227 = vld [vmem:[%s1 + $0x44] sm:$0xf]
      %v228 = vld [vmem:[%s2] sm:$0x1]
      %v230 = vlaneseq
      %v231 = vshrl.u32 %v230, 7
      %v232 = vsub.s32 0, %v231
      %v233 = vrot.slane %v228, %v232
      %v267 = vunpack.c.l.b16 %v178
      %v268 = vunpack.c.h.b16 %v178
      %v269 = vunpack.c.l.b16 %v179
      %v270 = vunpack.c.h.b16 %v179
      %v271 = vunpack.c.l.b16 %v180
      %v272 = vunpack.c.h.b16 %v180
      %v273 = vunpack.c.l.b16 %v181
      %v274 = vunpack.c.h.b16 %v181
      %v275 = vunpack.c.l.b16 %v182
      %v276 = vunpack.c.h.b16 %v182
      %v277 = vunpack.c.l.b16 %v183
      %v278 = vunpack.c.h.b16 %v183
      %v279 = vunpack.c.l.b16 %v184
      %v280 = vunpack.c.h.b16 %v184
      %v281 = vunpack.c.l.b16 %v185
      %v282 = vunpack.c.h.b16 %v185
      %v283 = vunpack.c.l.b16 %v186
      %v284 = vunpack.c.h.b16 %v186
      %v285 = vunpack.c.l.b16 %v187
      %v286 = vunpack.c.h.b16 %v187
      %v287 = vunpack.c.l.b16 %v188
      %v288 = vunpack.c.h.b16 %v188
      %v289 = vunpack.c.l.b16 %v189
      %v290 = vunpack.c.h.b16 %v189
      %v291 = vunpack.c.l.b16 %v190
      %v292 = vunpack.c.h.b16 %v190
      %v293 = vunpack.c.l.b16 %v191
      %v294 = vunpack.c.h.b16 %v191
      %v295 = vunpack.c.l.b16 %v192
      %v296 = vunpack.c.h.b16 %v192
      %v297 = vunpack.c.l.b16 %v193
      %v298 = vunpack.c.h.b16 %v193
      %v299 = vunpack.c.l.b16 %v194
      %v300 = vunpack.c.h.b16 %v194
      %v301 = vunpack.c.l.b16 %v195
      %v302 = vunpack.c.h.b16 %v195
      %v303 = vunpack.c.l.b16 %v196
      %v304 = vunpack.c.h.b16 %v196
      %v305 = vunpack.c.l.b16 %v197
      %v306 = vunpack.c.h.b16 %v197
      %v307 = vunpack.c.l.b16 %v198
      %v308 = vunpack.c.h.b16 %v198
      %v309 = vunpack.c.l.b16 %v199
      %v310 = vunpack.c.h.b16 %v199
      %v311 = vunpack.c.l.b16 %v200
      %v312 = vunpack.c.h.b16 %v200
      %v313 = vunpack.c.l.b16 %v201
      %v314 = vunpack.c.h.b16 %v201
      %v315 = vunpack.c.l.b16 %v202
      %v316 = vunpack.c.h.b16 %v202
      %v317 = vunpack.c.l.b16 %v203
      %v318 = vunpack.c.h.b16 %v203
      %v319 = vunpack.c.l.b16 %v204
      %v320 = vunpack.c.h.b16 %v204
      %v321 = vunpack.c.l.b16 %v205
      %v322 = vunpack.c.h.b16 %v205
      %v323 = vunpack.c.l.b16 %v206
      %v324 = vunpack.c.h.b16 %v206
      %v325 = vunpack.c.l.b16 %v207
      %v326 = vunpack.c.h.b16 %v207
      %v327 = vunpack.c.l.b16 %v208
      %v328 = vunpack.c.h.b16 %v208
      %v329 = vunpack.c.l.b16 %v209
      %v330 = vunpack.c.h.b16 %v209
      %v331 = vpack.c.b16 %v269, %v267
      %v332 = vpack.c.b16 %v270, %v268
      %v333 = vpack.c.b16 %v273, %v271
      %v334 = vpack.c.b16 %v274, %v272
      %v335 = vpack.c.b16 %v277, %v275
      %v336 = vpack.c.b16 %v278, %v276
      %v337 = vpack.c.b16 %v281, %v279
      %v338 = vpack.c.b16 %v282, %v280
      %v339 = vpack.c.b16 %v285, %v283
      %v340 = vpack.c.b16 %v286, %v284
      %v341 = vpack.c.b16 %v289, %v287
      %v342 = vpack.c.b16 %v290, %v288
      %v343 = vpack.c.b16 %v293, %v291
      %v344 = vpack.c.b16 %v294, %v292
      %v345 = vpack.c.b16 %v297, %v295
      %v346 = vpack.c.b16 %v298, %v296
      %v347 = vpack.c.b16 %v301, %v299
      %v348 = vpack.c.b16 %v302, %v300
      %v349 = vpack.c.b16 %v305, %v303
      %v350 = vpack.c.b16 %v306, %v304
      %v351 = vpack.c.b16 %v309, %v307
      %v352 = vpack.c.b16 %v310, %v308
      %v353 = vpack.c.b16 %v313, %v311
      %v354 = vpack.c.b16 %v314, %v312
      %v355 = vpack.c.b16 %v317, %v315
      %v356 = vpack.c.b16 %v318, %v316
      %v357 = vpack.c.b16 %v321, %v319
      %v358 = vpack.c.b16 %v322, %v320
      %v359 = vpack.c.b16 %v325, %v323
      %v360 = vpack.c.b16 %v326, %v324
      %v361 = vpack.c.b16 %v329, %v327
      %v362 = vpack.c.b16 %v330, %v328
      %v397 = vunpack.c.l.b16 %v210
      %v398 = vunpack.c.l.b16 %v211
      %v399 = vunpack.c.l.b16 %v212
      %v400 = vunpack.c.l.b16 %v213
      %v401 = vunpack.c.l.b16 %v214
      %v402 = vunpack.c.l.b16 %v215
      %v403 = vunpack.c.l.b16 %v216
      %v404 = vunpack.c.l.b16 %v217
      %v405 = vunpack.c.l.b16 %v218
      %v406 = vunpack.c.l.b16 %v219
      %v407 = vunpack.c.l.b16 %v220
      %v408 = vunpack.c.l.b16 %v221
      %v409 = vunpack.c.l.b16 %v222
      %v410 = vunpack.c.l.b16 %v223
      %v411 = vunpack.c.l.b16 %v224
      %v412 = vunpack.c.l.b16 %v225
      %v413 = vunpack.c.l.b16 %v226
      %v414 = vunpack.c.l.b16 %v227
      %v415 = vpack.c.b16 %v398, %v397
      %v416 = vpack.c.b16 %v400, %v399
      %v417 = vpack.c.b16 %v402, %v401
      %v418 = vpack.c.b16 %v404, %v403
      %v419 = vpack.c.b16 %v406, %v405
      %v420 = vpack.c.b16 %v408, %v407
      %v421 = vpack.c.b16 %v410, %v409
      %v422 = vpack.c.b16 %v412, %v411
      %v423 = vpack.c.b16 %v414, %v413
      %vm433 = vcmask 130048
      %v435 = vsel %vm433, %v332, 0
      %v438 = vsel %vm433, %v334, 0
      %v441 = vsel %vm433, %v336, 0
      %v444 = vsel %vm433, %v338, 0
      %v447 = vsel %vm433, %v340, 0
      %v450 = vsel %vm433, %v342, 0
      %v453 = vsel %vm433, %v344, 0
      %v456 = vsel %vm433, %v346, 0
      %v459 = vsel %vm433, %v348, 0
      %v462 = vsel %vm433, %v350, 0
      %v465 = vsel %vm433, %v352, 0
      %v468 = vsel %vm433, %v354, 0
      %v471 = vsel %vm433, %v356, 0
      %v474 = vsel %vm433, %v358, 0
      %v477 = vsel %vm433, %v360, 0
      %v480 = vsel %vm433, %v362, 0
      %482 = vmatprep.subr.bf16.mxu0 0
      %483 = vmatpush1.bf16.msra.mxu0 %v415
      %484 = vmatprep.subr.bf16.mxu0 0
      %485 = vmatpush1.bf16.msra.mxu0 %v416
      %486 = vmatprep.subr.bf16.mxu0 0
      %487 = vmatpush1.bf16.msra.mxu0 %v417
      %488 = vmatprep.subr.bf16.mxu0 0
      %489 = vmatpush1.bf16.msra.mxu0 %v418
      %490 = vmatprep.subr.bf16.mxu0 0
      %491 = vmatpush1.bf16.msra.mxu0 %v419
      %492 = vmatprep.subr.bf16.mxu0 0
      %493 = vmatpush1.bf16.msra.mxu0 %v420
      %494 = vmatprep.subr.bf16.mxu0 0
      %495 = vmatpush1.bf16.msra.mxu0 %v421
      %496 = vmatprep.subr.bf16.mxu0 0
      %497 = vmatpush1.bf16.msra.mxu0 %v422
      %498 = vmatprep.subr.bf16.mxu0 0
      %499 = vmatpush1.bf16.msra.mxu0 %v423
      %500 = vmatprep.subr.bf16.mxu0 0
      %501 = vmatpush1.bf16.msra.mxu0 0
      %502 = vmatprep.subr.bf16.mxu0 0
      %503 = vmatpush1.bf16.msra.mxu0 0
      %504 = vmatprep.subr.bf16.mxu0 0
      %505 = vmatpush1.bf16.msra.mxu0 0
      %506 = vmatprep.subr.bf16.mxu0 0
      %507 = vmatpush1.bf16.msra.mxu0 0
      %508 = vmatprep.subr.bf16.mxu0 0
      %509 = vmatpush1.bf16.msra.mxu0 0
      %510 = vmatprep.subr.bf16.mxu0 0
      %511 = vmatpush1.bf16.msra.mxu0 0
      %512 = vmatprep.subr.bf16.mxu0 0
      %513 = vmatpush1.bf16.msra.mxu0 0
      %514 = vmatprep.mubr.bf16.mxu0 %v435
      %515 = vmatmul.mubr.bf16.gmra.mrb[0].mxu0 %v331
      %v516 = vpop.f32.mrb[0].mxu0
      %v517 = vadd.f32 %v233, %v516
      %v518 = vpop.f32.mrb[0].mxu0
      %v519 = vpop.f32.mrb[0].mxu0
      %v520 = vadd.f32 %v233, %v519
      %v521 = vpop.f32.mrb[0].mxu0
      %522 = vmatprep.mubr.bf16.mxu0 %v438
      %523 = vmatmul.mubr.bf16.gmra.mrb[0].mxu0 %v333
      %v524 = vpop.f32.mrb[0].mxu0
      %v525 = vadd.f32 %v233, %v524
      %v526 = vpop.f32.mrb[0].mxu0
      %v527 = vpop.f32.mrb[0].mxu0
      %v528 = vadd.f32 %v233, %v527
      %v529 = vpop.f32.mrb[0].mxu0
      %530 = vmatprep.mubr.bf16.mxu0 %v441
      %531 = vmatmul.mubr.bf16.gmra.mrb[0].mxu0 %v335
      %v532 = vpop.f32.mrb[0].mxu0
      %v533 = vadd.f32 %v233, %v532
      %v534 = vpop.f32.mrb[0].mxu0
      %v535 = vpop.f32.mrb[0].mxu0
      %v536 = vadd.f32 %v233, %v535
      %v537 = vpop.f32.mrb[0].mxu0
      %538 = vmatprep.mubr.bf16.mxu0 %v444
      %539 = vmatmul.mubr.bf16.gmra.mrb[0].mxu0 %v337
      %v540 = vpop.f32.mrb[0].mxu0
      %v541 = vadd.f32 %v233, %v540
      %v542 = vpop.f32.mrb[0].mxu0
      %v543 = vpop.f32.mrb[0].mxu0
      %v544 = vadd.f32 %v233, %v543
      %v545 = vpop.f32.mrb[0].mxu0
      %546 = vmatprep.mubr.bf16.mxu0 %v447
      %547 = vmatmul.mubr.bf16.gmra.mrb[0].mxu0 %v339
      %v548 = vpop.f32.mrb[0].mxu0
      %v549 = vadd.f32 %v233, %v548
      %v550 = vpop.f32.mrb[0].mxu0
      %v551 = vpop.f32.mrb[0].mxu0
      %v552 = vadd.f32 %v233, %v551
      %v553 = vpop.f32.mrb[0].mxu0
      %554 = vmatprep.mubr.bf16.mxu0 %v450
      %555 = vmatmul.mubr.bf16.gmra.mrb[0].mxu0 %v341
      %v556 = vpop.f32.mrb[0].mxu0
      %v557 = vadd.f32 %v233, %v556
      %v558 = vpop.f32.mrb[0].mxu0
      %v559 = vpop.f32.mrb[0].mxu0
      %v560 = vadd.f32 %v233, %v559
      %v561 = vpop.f32.mrb[0].mxu0
      %562 = vmatprep.mubr.bf16.mxu0 %v453
      %563 = vmatmul.mubr.bf16.gmra.mrb[0].mxu0 %v343
      %v564 = vpop.f32.mrb[0].mxu0
      %v565 = vadd.f32 %v233, %v564
      %v566 = vpop.f32.mrb[0].mxu0
      %v567 = vpop.f32.mrb[0].mxu0
      %v568 = vadd.f32 %v233, %v567
      %v569 = vpop.f32.mrb[0].mxu0
      %570 = vmatprep.mubr.bf16.mxu0 %v456
      %571 = vmatmul.mubr.bf16.gmra.mrb[0].mxu0 %v345
      %v572 = vpop.f32.mrb[0].mxu0
      %v573 = vadd.f32 %v233, %v572
      %v574 = vpop.f32.mrb[0].mxu0
      %v575 = vpop.f32.mrb[0].mxu0
      %v576 = vadd.f32 %v233, %v575
      %v577 = vpop.f32.mrb[0].mxu0
      %578 = vmatprep.mubr.bf16.mxu0 %v459
      %579 = vmatmul.mubr.bf16.gmra.mrb[0].mxu0 %v347
      %v580 = vpop.f32.mrb[0].mxu0
      %v581 = vadd.f32 %v233, %v580
      %v582 = vpop.f32.mrb[0].mxu0
      %v583 = vpop.f32.mrb[0].mxu0
      %v584 = vadd.f32 %v233, %v583
      %v585 = vpop.f32.mrb[0].mxu0
      %586 = vmatprep.mubr.bf16.mxu0 %v462
      %587 = vmatmul.mubr.bf16.gmra.mrb[0].mxu0 %v349
      %v588 = vpop.f32.mrb[0].mxu0
      %v589 = vadd.f32 %v233, %v588
      %v590 = vpop.f32.mrb[0].mxu0
      %v591 = vpop.f32.mrb[0].mxu0
      %v592 = vadd.f32 %v233, %v591
      %v593 = vpop.f32.mrb[0].mxu0
      %594 = vmatprep.mubr.bf16.mxu0 %v465
      %595 = vmatmul.mubr.bf16.gmra.mrb[0].mxu0 %v351
      %v596 = vpop.f32.mrb[0].mxu0
      %v597 = vadd.f32 %v233, %v596
      %v598 = vpop.f32.mrb[0].mxu0
      %v599 = vpop.f32.mrb[0].mxu0
      %v600 = vadd.f32 %v233, %v599
      %v601 = vpop.f32.mrb[0].mxu0
      %602 = vmatprep.mubr.bf16.mxu0 %v468
      %603 = vmatmul.mubr.bf16.gmra.mrb[0].mxu0 %v353
      %v604 = vpop.f32.mrb[0].mxu0
      %v605 = vadd.f32 %v233, %v604
      %v606 = vpop.f32.mrb[0].mxu0
      %v607 = vpop.f32.mrb[0].mxu0
      %v608 = vadd.f32 %v233, %v607
      %v609 = vpop.f32.mrb[0].mxu0
      %610 = vmatprep.mubr.bf16.mxu0 %v471
      %611 = vmatmul.mubr.bf16.gmra.mrb[0].mxu0 %v355
      %v612 = vpop.f32.mrb[0].mxu0
      %v613 = vadd.f32 %v233, %v612
      %v614 = vpop.f32.mrb[0].mxu0
      %v615 = vpop.f32.mrb[0].mxu0
      %v616 = vadd.f32 %v233, %v615
      %v617 = vpop.f32.mrb[0].mxu0
      %618 = vmatprep.mubr.bf16.mxu0 %v474
      %619 = vmatmul.mubr.bf16.gmra.mrb[0].mxu0 %v357
      %v620 = vpop.f32.mrb[0].mxu0
      %v621 = vadd.f32 %v233, %v620
      %v622 = vpop.f32.mrb[0].mxu0
      %v623 = vpop.f32.mrb[0].mxu0
      %v624 = vadd.f32 %v233, %v623
      %v625 = vpop.f32.mrb[0].mxu0
      %626 = vmatprep.mubr.bf16.mxu0 %v477
      %627 = vmatmul.mubr.bf16.gmra.mrb[0].mxu0 %v359
      %v628 = vpop.f32.mrb[0].mxu0
      %v629 = vadd.f32 %v233, %v628
      %v630 = vpop.f32.mrb[0].mxu0
      %v631 = vpop.f32.mrb[0].mxu0
      %v632 = vadd.f32 %v233, %v631
      %v633 = vpop.f32.mrb[0].mxu0
      %634 = vmatprep.mubr.bf16.mxu0 %v480
      %635 = vmatmul.mubr.bf16.gmra.mrb[0].mxu0 %v361
      %v636 = vpop.f32.mrb[0].mxu0
      %v637 = vadd.f32 %v233, %v636
      %v638 = vpop.f32.mrb[0].mxu0
      %v639 = vpop.f32.mrb[0].mxu0
      %v640 = vadd.f32 %v233, %v639
      %v641 = vpop.f32.mrb[0].mxu0
      %642 = vdwg.mxu0
      %v643 = vmax.f32 %v517, 0.0
      %v644 = vmax.f32 %v520, 0.0
      %v645 = vmax.f32 %v525, 0.0
      %v646 = vmax.f32 %v528, 0.0
      %v647 = vmax.f32 %v533, 0.0
      %v648 = vmax.f32 %v536, 0.0
      %v649 = vmax.f32 %v541, 0.0
      %v650 = vmax.f32 %v544, 0.0
      %v651 = vmax.f32 %v549, 0.0
      %v652 = vmax.f32 %v552, 0.0
      %v653 = vmax.f32 %v557, 0.0
      %v654 = vmax.f32 %v560, 0.0
      %v655 = vmax.f32 %v565, 0.0
      %v656 = vmax.f32 %v568, 0.0
      %v657 = vmax.f32 %v573, 0.0
      %v658 = vmax.f32 %v576, 0.0
      %v659 = vmax.f32 %v581, 0.0
      %v660 = vmax.f32 %v584, 0.0
      %v661 = vmax.f32 %v589, 0.0
      %v662 = vmax.f32 %v592, 0.0
      %v663 = vmax.f32 %v597, 0.0
      %v664 = vmax.f32 %v600, 0.0
      %v665 = vmax.f32 %v605, 0.0
      %v666 = vmax.f32 %v608, 0.0
      %v667 = vmax.f32 %v613, 0.0
      %v668 = vmax.f32 %v616, 0.0
      %v669 = vmax.f32 %v621, 0.0
      %v670 = vmax.f32 %v624, 0.0
      %v671 = vmax.f32 %v629, 0.0
      %v672 = vmax.f32 %v632, 0.0
      %v673 = vmax.f32 %v637, 0.0
      %v674 = vmax.f32 %v640, 0.0
      %vm675 = vcmask 121856
      %676 = vst.msk [vmem:[%s175] sm:$0xff] %vm675, %v643
      %677 = vst.msk [vmem:[%s175 + $0x8] sm:$0xff] %vm675, %v644
      %678 = vst.msk [vmem:[%s175 + $0x10] sm:$0xff] %vm675, %v645
      %679 = vst.msk [vmem:[%s175 + $0x18] sm:$0xff] %vm675, %v646
      %680 = vst.msk [vmem:[%s175 + $0x20] sm:$0xff] %vm675, %v647
      %681 = vst.msk [vmem:[%s175 + $0x28] sm:$0xff] %vm675, %v648
      %682 = vst.msk [vmem:[%s175 + $0x30] sm:$0xff] %vm675, %v649
      %683 = vst.msk [vmem:[%s175 + $0x38] sm:$0xff] %vm675, %v650
      %684 = vst.msk [vmem:[%s175 + $0x40] sm:$0xff] %vm675, %v651
      %685 = vst.msk [vmem:[%s175 + $0x48] sm:$0xff] %vm675, %v652
      %686 = vst.msk [vmem:[%s175 + $0x50] sm:$0xff] %vm675, %v653
      %687 = vst.msk [vmem:[%s175 + $0x58] sm:$0xff] %vm675, %v654
      %688 = vst.msk [vmem:[%s175 + $0x60] sm:$0xff] %vm675, %v655
      %689 = vst.msk [vmem:[%s175 + $0x68] sm:$0xff] %vm675, %v656
      %690 = vst.msk [vmem:[%s175 + $0x70] sm:$0xff] %vm675, %v657
      %691 = vst.msk [vmem:[%s175 + $0x78] sm:$0xff] %vm675, %v658
      %692 = vst.msk [vmem:[%s175 + $0x80] sm:$0xff] %vm675, %v659
      %693 = vst.msk [vmem:[%s175 + $0x88] sm:$0xff] %vm675, %v660
      %694 = vst.msk [vmem:[%s175 + $0x90] sm:$0xff] %vm675, %v661
      %695 = vst.msk [vmem:[%s175 + $0x98] sm:$0xff] %vm675, %v662
      %696 = vst.msk [vmem:[%s175 + $0xa0] sm:$0xff] %vm675, %v663
      %697 = vst.msk [vmem:[%s175 + $0xa8] sm:$0xff] %vm675, %v664
      %698 = vst.msk [vmem:[%s175 + $0xb0] sm:$0xff] %vm675, %v665
      %699 = vst.msk [vmem:[%s175 + $0xb8] sm:$0xff] %vm675, %v666
      %700 = vst.msk [vmem:[%s175 + $0xc0] sm:$0xff] %vm675, %v667
      %701 = vst.msk [vmem:[%s175 + $0xc8] sm:$0xff] %vm675, %v668
      %702 = vst.msk [vmem:[%s175 + $0xd0] sm:$0xff] %vm675, %v669
      %703 = vst.msk [vmem:[%s175 + $0xd8] sm:$0xff] %vm675, %v670
      %704 = vst.msk [vmem:[%s175 + $0xe0] sm:$0xff] %vm675, %v671
      %705 = vst.msk [vmem:[%s175 + $0xe8] sm:$0xff] %vm675, %v672
      %706 = vst.msk [vmem:[%s175 + $0xf0] sm:$0xff] %vm675, %v673
      %707 = vst.msk [vmem:[%s175 + $0xf8] sm:$0xff] %vm675, %v674
      %s708 = smul.u32 32, %s14
      %p709 = scmp.lt.s32.totalorder %s708, 63
      %s710 = scalar_select %p709, %s708, 63
      %s711 = smul.addr %s710, 8
      %s712 = scalar_lea.vmem %s3, %s711
      // Predicated region
      $region33: #{basic_multi_update_block.13} parent=31 // pred_check
        %p713 = pneg %p100
      $region34: #{basic_multi_update_block.13} parent=31 // pred_check_branch
        %715 = sbr.rel (%p713) target = $region36
      $region35: #{basic_multi_update_block.13} parent=31 // pred_region
        %s716 = smul.u32 32, %s14
      $region36: #{basic_multi_update_block.13} parent=31 // pred_fallthru
        _
    $region32: #{basic_multi_update_block.13} parent=5 // pred_fallthru
      _
    %p717 = scmp.le.s32.totalorder 2, %s9
    // Predicated region
    $region37: #{basic_multi_update_block.13} parent=5 // pred_check
      %p718 = pneg %p717
    $region38: #{basic_multi_update_block.13} parent=5 // pred_check_branch
      %720 = sbr.rel (%p718) target = $region40
    $region39: #{basic_multi_update_block.13} parent=5 // pred_region
      %s721 = ssub.s32 %s9, 2
      // Predicated region
      $region41: #{basic_multi_update_block.13} parent=39 // pred_check
        %p722 = pneg %p106
      $region42: #{basic_multi_update_block.13} parent=39 // pred_check_branch
        %724 = sbr.rel (%p722) target = $region44
      $region43: #{basic_multi_update_block.13} parent=39 // pred_region
        %s725 = smul.u32 32, %s15
        %p726 = scmp.lt.s32.totalorder %s725, 63
        %s727 = scalar_select %p726, %s725, 63
        %s728 = smul.addr %s727, 8
        %s729 = scalar_lea.vmem %s3, %s728
      $region44: #{basic_multi_update_block.13} parent=39 // pred_fallthru
        _
    $region40: #{basic_multi_update_block.13} parent=5 // pred_fallthru
      _
  $region6: #{basic_multi_update_block.13} parent=0 // loop_footer
    %s13 = sadd.s32 1, %s9
  $region7: #{basic_multi_update_block.13} parent=0 // loop_footer_branch
    %8 = sbr.rel target = $region3
  $region8: #{basic_multi_update_block.13} parent=0 // loop_exit
    _

// kernel: basic_multi_update_block.15
$region0: #{basic_multi_update_block.15}
  #allocation0 [shape = 'u32[]', space=smem, size = 0x4, offset = 0x4, fixed_abs, tag = 'smem constant byte address 0x4 - core index']
  #allocation1 [shape = 'u32[144,128]{1,0:T(1,128)}', space=vmem, size = 0x12000, scoped, tag = 'internal scratch']
  %s0 = inlined_call_operand.vmem [shape: bf16[512,432], index: 0, kind: input, shape index: {}]
  %s1 = inlined_call_operand.vmem [shape: bf16[432,16], index: 1, kind: input, shape index: {}]
  %s2 = inlined_call_operand.vmem [shape: f32[1,16], index: 2, kind: input, shape index: {}]
  %s3 = inlined_call_operand.vmem [shape: f32[512,16], index: 3, kind: input, shape index: {}]
  %s4 = inlined_call_operand.vmem [shape: f32[512,16], index: 4, kind: input, shape index: {}]
  %s5 = inlined_call_operand.vmem [shape: f32[512,16], index: 5, kind: output, shape index: {}]
  %s6 = sld [smem:[#allocation0]]
  $region53: #{basic_multi_update_block.15} parent=0
    _
  %s8 = ssub.s32 1, %s6
  %s9 = scalar_select 0, %s8, %s6
  loop: start=0, step=1, limit=4
  $region2: #{basic_multi_update_block.15} parent=0 // loop_pre_header
    _
  $region3: #{basic_multi_update_block.15} parent=0 // loop_header
    %s11 = sphi 0, %s15
    %p12 = scmp.ge.s32.totalorder %s11, 4
    %s21 = sphi 0, %s23
    %s24 = sphi 0, %s21
    %s25 = sphi 0, %s24
    %s41 = sphi 0, %s25
    %s45 = sphi 0, %s45
    %s47 = sphi 0, %s45
    %s48 = sphi 0, %s47
    %s62 = sphi 0, %s48
    %s66 = sphi 0, %s66
    %s68 = sphi 0, %s66
    %s69 = sphi 0, %s68
    %s83 = sphi 0, %s69
    %s89 = sphi 0, %s91
    %s92 = sphi 0, %s89
    %s93 = sphi 0, %s92
    %s109 = sphi 0, %s93
    %s115 = sphi 0, %s117
    %s118 = sphi 0, %s115
    %s119 = sphi 0, %s118
    %s135 = sphi 0, %s119
    %s141 = sphi 0, %s143
    %s144 = sphi 0, %s141
    %s145 = sphi 0, %s144
    %s161 = sphi 0, %s145
  $region4: #{basic_multi_update_block.15} parent=0 // loop_header_branch
    %14 = sbr.rel (%p12) target = $region8
  $region5: #{basic_multi_update_block.15} parent=0 // loop_body
    %s16 = ssub.s32 %s11, 1
    %s17 = ssub.s32 %s11, 2
    %s18 = sadd.s32 %s11, 1
    %s19 = ssub.s32 %s11, %s18
    %p20 = scmp.eq.s32.totalorder %s19, 0
    %s22 = sadd.s32 %s21, 1
    %s23 = scalar_select %p20, %s21, %s22
    %p26 = pneg %p20
    %p27 = scmp.eq.s32.totalorder %s11, 1
    %p28 = por %p26, %p27
    %p29 = scmp.ne.s32.totalorder %s21, %s24
    %p30 = scmp.eq.s32.totalorder %s11, 0
    %p31 = por %p29, %p30
    %p32 = scmp.ne.s32.totalorder %s21, %s24
    %p33 = scmp.eq.s32.totalorder %s16, 1
    %p34 = por %p32, %p33
    %p35 = scmp.ne.s32.totalorder %s24, %s25
    %p36 = scmp.eq.s32.totalorder %s16, 0
    %p37 = por %p35, %p36
    %p38 = scmp.ne.s32.totalorder %s24, %s25
    %p39 = scmp.eq.s32.totalorder %s17, 1
    %p40 = por %p38, %p39
    %p42 = scmp.ne.s32.totalorder %s25, %s41
    %p43 = scmp.eq.s32.totalorder %s17, 0
    %p44 = por %p42, %p43
    %s46 = sadd.s32 %s45, 1
    %p49 = scmp.eq.s32.totalorder %s11, 1
    %p50 = scmp.ne.s32.totalorder %s45, %s47
    %p51 = scmp.eq.s32.totalorder %s11, 0
    %p52 = por %p50, %p51
    %p53 = scmp.ne.s32.totalorder %s45, %s47
    %p54 = scmp.eq.s32.totalorder %s16, 1
    %p55 = por %p53, %p54
    %p56 = scmp.ne.s32.totalorder %s47, %s48
    %p57 = scmp.eq.s32.totalorder %s16, 0
    %p58 = por %p56, %p57
    %p59 = scmp.ne.s32.totalorder %s47, %s48
    %p60 = scmp.eq.s32.totalorder %s17, 1
    %p61 = por %p59, %p60
    %p63 = scmp.ne.s32.totalorder %s48, %s62
    %p64 = scmp.eq.s32.totalorder %s17, 0
    %p65 = por %p63, %p64
    %s67 = sadd.s32 %s66, 1
    %p70 = scmp.eq.s32.totalorder %s11, 1
    %p71 = scmp.ne.s32.totalorder %s66, %s68
    %p72 = scmp.eq.s32.totalorder %s11, 0
    %p73 = por %p71, %p72
    %p74 = scmp.ne.s32.totalorder %s66, %s68
    %p75 = scmp.eq.s32.totalorder %s16, 1
    %p76 = por %p74, %p75
    %p77 = scmp.ne.s32.totalorder %s68, %s69
    %p78 = scmp.eq.s32.totalorder %s16, 0
    %p79 = por %p77, %p78
    %p80 = scmp.ne.s32.totalorder %s68, %s69
    %p81 = scmp.eq.s32.totalorder %s17, 1
    %p82 = por %p80, %p81
    %p84 = scmp.ne.s32.totalorder %s69, %s83
    %p85 = scmp.eq.s32.totalorder %s17, 0
    %p86 = por %p84, %p85
    %s87 = ssub.s32 %s11, %s18
    %p88 = scmp.eq.s32.totalorder %s87, 0
    %s90 = sadd.s32 %s89, 1
    %s91 = scalar_select %p88, %s89, %s90
    %p94 = pneg %p88
    %p95 = scmp.eq.s32.totalorder %s11, 1
    %p96 = por %p94, %p95
    %p97 = scmp.ne.s32.totalorder %s89, %s92
    %p98 = scmp.eq.s32.totalorder %s11, 0
    %p99 = por %p97, %p98
    %p100 = scmp.ne.s32.totalorder %s89, %s92
    %p101 = scmp.eq.s32.totalorder %s16, 1
    %p102 = por %p100, %p101
    %p103 = scmp.ne.s32.totalorder %s92, %s93
    %p104 = scmp.eq.s32.totalorder %s16, 0
    %p105 = por %p103, %p104
    %p106 = scmp.ne.s32.totalorder %s92, %s93
    %p107 = scmp.eq.s32.totalorder %s17, 1
    %p108 = por %p106, %p107
    %p110 = scmp.ne.s32.totalorder %s93, %s109
    %p111 = scmp.eq.s32.totalorder %s17, 0
    %p112 = por %p110, %p111
    %s113 = ssub.s32 %s11, %s18
    %p114 = scmp.eq.s32.totalorder %s113, 0
    %s116 = sadd.s32 %s115, 1
    %s117 = scalar_select %p114, %s115, %s116
    %p120 = pneg %p114
    %p121 = scmp.eq.s32.totalorder %s11, 1
    %p122 = por %p120, %p121
    %p123 = scmp.ne.s32.totalorder %s115, %s118
    %p124 = scmp.eq.s32.totalorder %s11, 0
    %p125 = por %p123, %p124
    %p126 = scmp.ne.s32.totalorder %s115, %s118
    %p127 = scmp.eq.s32.totalorder %s16, 1
    %p128 = por %p126, %p127
    %p129 = scmp.ne.s32.totalorder %s118, %s119
    %p130 = scmp.eq.s32.totalorder %s16, 0
    %p131 = por %p129, %p130
    %p132 = scmp.ne.s32.totalorder %s118, %s119
    %p133 = scmp.eq.s32.totalorder %s17, 1
    %p134 = por %p132, %p133
    %p136 = scmp.ne.s32.totalorder %s119, %s135
    %p137 = scmp.eq.s32.totalorder %s17, 0
    %p138 = por %p136, %p137
    %s139 = ssub.s32 %s11, %s18
    %p140 = scmp.eq.s32.totalorder %s139, 0
    %s142 = sadd.s32 %s141, 1
    %s143 = scalar_select %p140, %s141, %s142
    %p146 = pneg %p140
    %p147 = scmp.eq.s32.totalorder %s11, 1
    %p148 = por %p146, %p147
    %p149 = scmp.ne.s32.totalorder %s141, %s144
    %p150 = scmp.eq.s32.totalorder %s11, 0
    %p151 = por %p149, %p150
    %p152 = scmp.ne.s32.totalorder %s141, %s144
    %p153 = scmp.eq.s32.totalorder %s16, 1
    %p154 = por %p152, %p153
    %p155 = scmp.ne.s32.totalorder %s144, %s145
    %p156 = scmp.eq.s32.totalorder %s16, 0
    %p157 = por %p155, %p156
    %p158 = scmp.ne.s32.totalorder %s144, %s145
    %p159 = scmp.eq.s32.totalorder %s17, 1
    %p160 = por %p158, %p159
    %p162 = scmp.ne.s32.totalorder %s145, %s161
    %p163 = scmp.eq.s32.totalorder %s17, 0
    %p164 = por %p162, %p163
    %p165 = scmp.le.s32.totalorder 1, %s11
    %p166 = scmp.lt.s32.totalorder %s11, 3
    %p167 = pnand %p165, %p166
    %p168 = pneg %p167
    // Predicated region
    $region9: #{basic_multi_update_block.15} parent=5 // pred_check
      _
    $region10: #{basic_multi_update_block.15} parent=5 // pred_check_branch
      %170 = sbr.rel (%p167) target = $region12
    $region11: #{basic_multi_update_block.15} parent=5 // pred_region
      %s171 = ssub.s32 %s11, 1
      // Predicated region
      $region13: #{basic_multi_update_block.15} parent=11 // pred_check
        %p172 = pneg %p58
      $region14: #{basic_multi_update_block.15} parent=11 // pred_check_branch
        %174 = sbr.rel (%p172) target = $region16
      $region15: #{basic_multi_update_block.15} parent=11 // pred_region
        _
      $region16: #{basic_multi_update_block.15} parent=11 // pred_fallthru
        _
      // Predicated region
      $region17: #{basic_multi_update_block.15} parent=11 // pred_check
        %p175 = pneg %p79
      $region18: #{basic_multi_update_block.15} parent=11 // pred_check_branch
        %177 = sbr.rel (%p175) target = $region20
      $region19: #{basic_multi_update_block.15} parent=11 // pred_region
        _
      $region20: #{basic_multi_update_block.15} parent=11 // pred_fallthru
        _
    $region12: #{basic_multi_update_block.15} parent=5 // pred_fallthru
      _
    %p178 = scmp.lt.s32.totalorder %s11, 2
    // Predicated region
    $region21: #{basic_multi_update_block.15} parent=5 // pred_check
      %p179 = pneg %p178
    $region22: #{basic_multi_update_block.15} parent=5 // pred_check_branch
      %181 = sbr.rel (%p179) target = $region24
    $region23: #{basic_multi_update_block.15} parent=5 // pred_region
      // Predicated region
      $region25: #{basic_multi_update_block.15} parent=23 // pred_check
        %p182 = pneg %p31
      $region26: #{basic_multi_update_block.15} parent=23 // pred_check_branch
        %184 = sbr.rel (%p182) target = $region28
      $region27: #{basic_multi_update_block.15} parent=23 // pred_region
        %s185 = smul.u32 32, %s11
        %p186 = scmp.lt.s32.totalorder %s185, 63
        %s187 = scalar_select %p186, %s185, 63
        %s188 = smul.addr %s187, 4
        %s189 = smul.addr %s188, 4
        %s190 = scalar_lea.vmem %s0, %s189
        %s191 = smul.u32 32, %s11
      $region28: #{basic_multi_update_block.15} parent=23 // pred_fallthru
        _
      // Predicated region
      $region29: #{basic_multi_update_block.15} parent=23 // pred_check
        %p192 = pneg %p99
      $region30: #{basic_multi_update_block.15} parent=23 // pred_check_branch
        %194 = sbr.rel (%p192) target = $region32
      $region31: #{basic_multi_update_block.15} parent=23 // pred_region
        %s195 = smul.u32 32, %s11
        %p196 = scmp.lt.s32.totalorder %s195, 63
        %s197 = scalar_select %p196, %s195, 63
        %s198 = smul.addr %s197, 8
        %s199 = scalar_lea.vmem %s3, %s198
        %s200 = smul.u32 32, %s11
      $region32: #{basic_multi_update_block.15} parent=23 // pred_fallthru
        _
      // Predicated region
      $region33: #{basic_multi_update_block.15} parent=23 // pred_check
        %p201 = pneg %p125
      $region34: #{basic_multi_update_block.15} parent=23 // pred_check_branch
        %203 = sbr.rel (%p201) target = $region36
      $region35: #{basic_multi_update_block.15} parent=23 // pred_region
        %s204 = smul.u32 32, %s11
        %p205 = scmp.lt.s32.totalorder %s204, 63
        %s206 = scalar_select %p205, %s204, 63
        %s207 = smul.addr %s206, 8
        %s208 = scalar_lea.vmem %s4, %s207
        %s209 = smul.u32 32, %s11
      $region36: #{basic_multi_update_block.15} parent=23 // pred_fallthru
        _
    $region24: #{basic_multi_update_block.15} parent=5 // pred_fallthru
      _
    %p210 = scmp.le.s32.totalorder 1, %s11
    %p211 = scmp.lt.s32.totalorder %s11, 3
    %p212 = pnand %p210, %p211
    %p213 = pneg %p212
    // Predicated region
    $region37: #{basic_multi_update_block.15} parent=5 // pred_check
      _
    $region38: #{basic_multi_update_block.15} parent=5 // pred_check_branch
      %215 = sbr.rel (%p212) target = $region40
    $region39: #{basic_multi_update_block.15} parent=5 // pred_region
      %s216 = ssub.s32 %s11, 1
      %s217 = smul.u32 32, %s16
      %p218 = scmp.lt.s32.totalorder %s217, 63
      %s219 = scalar_select %p218, %s217, 63
      %s220 = smul.addr %s219, 4
      %s221 = smul.addr %s220, 4
      %s222 = scalar_lea.vmem %s0, %s221
      %p223 = pneg %p37
      %p224 = pneg %p34
      %p225 = pneg %p58
      %p226 = pneg %p55
      %p227 = pneg %p79
      %p228 = pneg %p76
      %s229 = smul.u32 32, %s16
      %p230 = scmp.lt.s32.totalorder %s229, 63
      %s231 = scalar_select %p230, %s229, 63
      %s232 = smul.addr %s231, 8
      %s233 = scalar_lea.vmem %s3, %s232
      %p234 = pneg %p105
      %p235 = pneg %p102
      %s236 = smul.u32 32, %s16
      %p237 = scmp.lt.s32.totalorder %s236, 63
      %s238 = scalar_select %p237, %s236, 63
      %s239 = smul.addr %s238, 8
      %s240 = scalar_lea.vmem %s4, %s239
      %p241 = pneg %p131
      %p242 = pneg %p128
      %p243 = pneg %p157
      %p244 = pneg %p154
      %s245 = smul.u32 32, %s16
      %p246 = scmp.lt.s32.totalorder %s245, 63
      %s247 = scalar_select %p246, %s245, 63
      %s248 = smul.addr %s247, 8
      %s249 = scalar_lea.vmem %s5, %s248
      %s250 = smul.u32 32, %s16
      %p251 = scmp.lt.s32.totalorder %s250, 63
      %s252 = scalar_select %p251, %s250, 63
      %s253 = smul.addr %s252, 4
      %s254 = smul.addr %s253, 4
      %s255 = scalar_lea.vmem %s0, %s254
      %s256 = smul.u32 32, %s16
      %s257 = smul.u32 32, %s16
      %p258 = scmp.lt.s32.totalorder %s257, 63
      %s259 = scalar_select %p258, %s257, 63
      %s260 = smul.addr %s259, 8
      %s261 = scalar_lea.vmem %s3, %s260
      %s262 = smul.u32 32, %s16
      %s263 = smul.u32 32, %s16
      %p264 = scmp.lt.s32.totalorder %s263, 63
      %s265 = scalar_select %p264, %s263, 63
      %s266 = smul.addr %s265, 8
      %s267 = scalar_lea.vmem %s4, %s266
      %s268 = smul.u32 32, %s16
      %s269 = smul.u32 32, %s16
      %p270 = scmp.lt.s32.totalorder %s269, 63
      %s271 = scalar_select %p270, %s269, 63
      %s272 = smul.addr %s271, 8
      %s273 = scalar_lea.vmem %s5, %s272
      %s274 = smul.u32 32, %s16
      %v276 = vld [vmem:[%s255] sm:$0xff]
      %v277 = vld [vmem:[%s255 + $0x8] sm:$0xff]
      %v278 = vld [vmem:[%s255 + $0x10] sm:$0xff]
      %v279 = vld [vmem:[%s255 + $0x18] sm:$0xff]
      %v280 = vld [vmem:[%s255 + $0x20] sm:$0xff]
      %v281 = vld [vmem:[%s255 + $0x28] sm:$0xff]
      %v282 = vld [vmem:[%s255 + $0x30] sm:$0xff]
      %v283 = vld [vmem:[%s255 + $0x38] sm:$0xff]
      %v284 = vld [vmem:[%s255 + $0x40] sm:$0xff]
      %v285 = vld [vmem:[%s255 + $0x48] sm:$0xff]
      %v286 = vld [vmem:[%s255 + $0x50] sm:$0xff]
      %v287 = vld [vmem:[%s255 + $0x58] sm:$0xff]
      %v288 = vld [vmem:[%s255 + $0x60] sm:$0xff]
      %v289 = vld [vmem:[%s255 + $0x68] sm:$0xff]
      %v290 = vld [vmem:[%s255 + $0x70] sm:$0xff]
      %v291 = vld [vmem:[%s255 + $0x78] sm:$0xff]
      %v292 = vld [vmem:[%s255 + $0x80] sm:$0xff]
      %v293 = vld [vmem:[%s255 + $0x88] sm:$0xff]
      %v294 = vld [vmem:[%s255 + $0x90] sm:$0xff]
      %v295 = vld [vmem:[%s255 + $0x98] sm:$0xff]
      %v296 = vld [vmem:[%s255 + $0xa0] sm:$0xff]
      %v297 = vld [vmem:[%s255 + $0xa8] sm:$0xff]
      %v298 = vld [vmem:[%s255 + $0xb0] sm:$0xff]
      %v299 = vld [vmem:[%s255 + $0xb8] sm:$0xff]
      %v300 = vld [vmem:[%s255 + $0xc0] sm:$0xff]
      %v301 = vld [vmem:[%s255 + $0xc8] sm:$0xff]
      %v302 = vld [vmem:[%s255 + $0xd0] sm:$0xff]
      %v303 = vld [vmem:[%s255 + $0xd8] sm:$0xff]
      %v304 = vld [vmem:[%s255 + $0xe0] sm:$0xff]
      %v305 = vld [vmem:[%s255 + $0xe8] sm:$0xff]
      %v306 = vld [vmem:[%s255 + $0xf0] sm:$0xff]
      %v307 = vld [vmem:[%s255 + $0xf8] sm:$0xff]
      %v308 = vld [vmem:[%s255 + $0x100] sm:$0xff]
      %v309 = vld [vmem:[%s255 + $0x108] sm:$0xff]
      %v310 = vld [vmem:[%s255 + $0x110] sm:$0xff]
      %v311 = vld [vmem:[%s255 + $0x118] sm:$0xff]
      %v312 = vld [vmem:[%s255 + $0x120] sm:$0xff]
      %v313 = vld [vmem:[%s255 + $0x128] sm:$0xff]
      %v314 = vld [vmem:[%s255 + $0x130] sm:$0xff]
      %v315 = vld [vmem:[%s255 + $0x138] sm:$0xff]
      %v316 = vld [vmem:[%s255 + $0x140] sm:$0xff]
      %v317 = vld [vmem:[%s255 + $0x148] sm:$0xff]
      %v318 = vld [vmem:[%s255 + $0x150] sm:$0xff]
      %v319 = vld [vmem:[%s255 + $0x158] sm:$0xff]
      %v320 = vld [vmem:[%s255 + $0x160] sm:$0xff]
      %v321 = vld [vmem:[%s255 + $0x168] sm:$0xff]
      %v322 = vld [vmem:[%s255 + $0x170] sm:$0xff]
      %v323 = vld [vmem:[%s255 + $0x178] sm:$0xff]
      %v324 = vld [vmem:[%s255 + $0x180] sm:$0xff]
      %v325 = vld [vmem:[%s255 + $0x188] sm:$0xff]
      %v326 = vld [vmem:[%s255 + $0x190] sm:$0xff]
      %v327 = vld [vmem:[%s255 + $0x198] sm:$0xff]
      %v328 = vld [vmem:[%s255 + $0x1a0] sm:$0xff]
      %v329 = vld [vmem:[%s255 + $0x1a8] sm:$0xff]
      %v330 = vld [vmem:[%s255 + $0x1b0] sm:$0xff]
      %v331 = vld [vmem:[%s255 + $0x1b8] sm:$0xff]
      %v332 = vld [vmem:[%s255 + $0x1c0] sm:$0xff]
      %v333 = vld [vmem:[%s255 + $0x1c8] sm:$0xff]
      %v334 = vld [vmem:[%s255 + $0x1d0] sm:$0xff]
      %v335 = vld [vmem:[%s255 + $0x1d8] sm:$0xff]
      %v336 = vld [vmem:[%s255 + $0x1e0] sm:$0xff]
      %v337 = vld [vmem:[%s255 + $0x1e8] sm:$0xff]
      %v338 = vld [vmem:[%s255 + $0x1f0] sm:$0xff]
      %v339 = vld [vmem:[%s255 + $0x1f8] sm:$0xff]
      %v340 = vld [vmem:[%s1] sm:$0xf]
      %v341 = vld [vmem:[%s1 + $0x4] sm:$0xf]
      %v342 = vld [vmem:[%s1 + $0x8] sm:$0xf]
      %v343 = vld [vmem:[%s1 + $0xc] sm:$0xf]
      %v344 = vld [vmem:[%s1 + $0x10] sm:$0xf]
      %v345 = vld [vmem:[%s1 + $0x14] sm:$0xf]
      %v346 = vld [vmem:[%s1 + $0x18] sm:$0xf]
      %v347 = vld [vmem:[%s1 + $0x1c] sm:$0xf]
      %v348 = vld [vmem:[%s1 + $0x20] sm:$0xf]
      %v349 = vld [vmem:[%s1 + $0x24] sm:$0xf]
      %v350 = vld [vmem:[%s1 + $0x28] sm:$0xf]
      %v351 = vld [vmem:[%s1 + $0x2c] sm:$0xf]
      %v352 = vld [vmem:[%s1 + $0x30] sm:$0xf]
      %v353 = vld [vmem:[%s1 + $0x34] sm:$0xf]
      %v354 = vld [vmem:[%s1 + $0x38] sm:$0xf]
      %v355 = vld [vmem:[%s1 + $0x3c] sm:$0xf]
      %v356 = vld [vmem:[%s1 + $0x40] sm:$0xf]
      %v357 = vld [vmem:[%s1 + $0x44] sm:$0xf]
      %v358 = vld [vmem:[%s1 + $0x48] sm:$0xf]
      %v359 = vld [vmem:[%s1 + $0x4c] sm:$0xf]
      %v360 = vld [vmem:[%s1 + $0x50] sm:$0xf]
      %v361 = vld [vmem:[%s1 + $0x54] sm:$0xf]
      %v362 = vld [vmem:[%s1 + $0x58] sm:$0xf]
      %v363 = vld [vmem:[%s1 + $0x5c] sm:$0xf]
      %v364 = vld [vmem:[%s1 + $0x60] sm:$0xf]
      %v365 = vld [vmem:[%s1 + $0x64] sm:$0xf]
      %v366 = vld [vmem:[%s1 + $0x68] sm:$0xf]
      %v367 = vld [vmem:[%s1 + $0x6c] sm:$0xf]
      %v368 = vld [vmem:[%s1 + $0x70] sm:$0xf]
      %v369 = vld [vmem:[%s1 + $0x74] sm:$0xf]
      %v370 = vld [vmem:[%s1 + $0x78] sm:$0xf]
      %v371 = vld [vmem:[%s1 + $0x7c] sm:$0xf]
      %v372 = vld [vmem:[%s1 + $0x80] sm:$0xf]
      %v373 = vld [vmem:[%s1 + $0x84] sm:$0xf]
      %v374 = vld [vmem:[%s1 + $0x88] sm:$0xf]
      %v375 = vld [vmem:[%s1 + $0x8c] sm:$0xf]
      %v376 = vld [vmem:[%s1 + $0x90] sm:$0xf]
      %v377 = vld [vmem:[%s1 + $0x94] sm:$0xf]
      %v378 = vld [vmem:[%s1 + $0x98] sm:$0xf]
      %v379 = vld [vmem:[%s1 + $0x9c] sm:$0xf]
      %v380 = vld [vmem:[%s1 + $0xa0] sm:$0xf]
      %v381 = vld [vmem:[%s1 + $0xa4] sm:$0xf]
      %v382 = vld [vmem:[%s1 + $0xa8] sm:$0xf]
      %v383 = vld [vmem:[%s1 + $0xac] sm:$0xf]
      %v384 = vld [vmem:[%s1 + $0xb0] sm:$0xf]
      %v385 = vld [vmem:[%s1 + $0xb4] sm:$0xf]
      %v386 = vld [vmem:[%s1 + $0xb8] sm:$0xf]
      %v387 = vld [vmem:[%s1 + $0xbc] sm:$0xf]
      %v388 = vld [vmem:[%s1 + $0xc0] sm:$0xf]
      %v389 = vld [vmem:[%s1 + $0xc4] sm:$0xf]
      %v390 = vld [vmem:[%s1 + $0xc8] sm:$0xf]
      %v391 = vld [vmem:[%s1 + $0xcc] sm:$0xf]
      %v392 = vld [vmem:[%s1 + $0xd0] sm:$0xf]
      %v393 = vld [vmem:[%s1 + $0xd4] sm:$0xf]
      %v394 = vld [vmem:[%s2] sm:$0x1]
      %v396 = vlaneseq
      %v397 = vshrl.u32 %v396, 7
      %v398 = vsub.s32 0, %v397
      %v399 = vrot.slane %v394, %v398
      %v465 = vunpack.c.l.b16 %v276
      %v466 = vunpack.c.h.b16 %v276
      %v467 = vunpack.c.l.b16 %v277
      %v468 = vunpack.c.h.b16 %v277
      %v469 = vunpack.c.l.b16 %v278
      %v470 = vunpack.c.h.b16 %v278
      %v471 = vunpack.c.l.b16 %v279
      %v472 = vunpack.c.h.b16 %v279
      %v473 = vunpack.c.l.b16 %v280
      %v474 = vunpack.c.h.b16 %v280
      %v475 = vunpack.c.l.b16 %v281
      %v476 = vunpack.c.h.b16 %v281
      %v477 = vunpack.c.l.b16 %v282
      %v478 = vunpack.c.h.b16 %v282
      %v479 = vunpack.c.l.b16 %v283
      %v480 = vunpack.c.h.b16 %v283
      %v481 = vunpack.c.l.b16 %v284
      %v482 = vunpack.c.h.b16 %v284
      %v483 = vunpack.c.l.b16 %v285
      %v484 = vunpack.c.h.b16 %v285
      %v485 = vunpack.c.l.b16 %v286
      %v486 = vunpack.c.h.b16 %v286
      %v487 = vunpack.c.l.b16 %v287
      %v488 = vunpack.c.h.b16 %v287
      %v489 = vunpack.c.l.b16 %v288
      %v490 = vunpack.c.h.b16 %v288
      %v491 = vunpack.c.l.b16 %v289
      %v492 = vunpack.c.h.b16 %v289
      %v493 = vunpack.c.l.b16 %v290
      %v494 = vunpack.c.h.b16 %v290
      %v495 = vunpack.c.l.b16 %v291
      %v496 = vunpack.c.h.b16 %v291
      %v497 = vunpack.c.l.b16 %v292
      %v498 = vunpack.c.h.b16 %v292
      %v499 = vunpack.c.l.b16 %v293
      %v500 = vunpack.c.h.b16 %v293
      %v501 = vunpack.c.l.b16 %v294
      %v502 = vunpack.c.h.b16 %v294
      %v503 = vunpack.c.l.b16 %v295
      %v504 = vunpack.c.h.b16 %v295
      %v505 = vunpack.c.l.b16 %v296
      %v506 = vunpack.c.h.b16 %v296
      %v507 = vunpack.c.l.b16 %v297
      %v508 = vunpack.c.h.b16 %v297
      %v509 = vunpack.c.l.b16 %v298
      %v510 = vunpack.c.h.b16 %v298
      %v511 = vunpack.c.l.b16 %v299
      %v512 = vunpack.c.h.b16 %v299
      %v513 = vunpack.c.l.b16 %v300
      %v514 = vunpack.c.h.b16 %v300
      %v515 = vunpack.c.l.b16 %v301
      %v516 = vunpack.c.h.b16 %v301
      %v517 = vunpack.c.l.b16 %v302
      %v518 = vunpack.c.h.b16 %v302
      %v519 = vunpack.c.l.b16 %v303
      %v520 = vunpack.c.h.b16 %v303
      %v521 = vunpack.c.l.b16 %v304
      %v522 = vunpack.c.h.b16 %v304
      %v523 = vunpack.c.l.b16 %v305
      %v524 = vunpack.c.h.b16 %v305
      %v525 = vunpack.c.l.b16 %v306
      %v526 = vunpack.c.h.b16 %v306
      %v527 = vunpack.c.l.b16 %v307
      %v528 = vunpack.c.h.b16 %v307
      %v529 = vunpack.c.l.b16 %v308
      %v530 = vunpack.c.h.b16 %v308
      %v531 = vunpack.c.l.b16 %v309
      %v532 = vunpack.c.h.b16 %v309
      %v533 = vunpack.c.l.b16 %v310
      %v534 = vunpack.c.h.b16 %v310
      %v535 = vunpack.c.l.b16 %v311
      %v536 = vunpack.c.h.b16 %v311
      %v537 = vunpack.c.l.b16 %v312
      %v538 = vunpack.c.h.b16 %v312
      %v539 = vunpack.c.l.b16 %v313
      %v540 = vunpack.c.h.b16 %v313
      %v541 = vunpack.c.l.b16 %v314
      %v542 = vunpack.c.h.b16 %v314
      %v543 = vunpack.c.l.b16 %v315
      %v544 = vunpack.c.h.b16 %v315
      %v545 = vunpack.c.l.b16 %v316
      %v546 = vunpack.c.h.b16 %v316
      %v547 = vunpack.c.l.b16 %v317
      %v548 = vunpack.c.h.b16 %v317
      %v549 = vunpack.c.l.b16 %v318
      %v550 = vunpack.c.h.b16 %v318
      %v551 = vunpack.c.l.b16 %v319
      %v552 = vunpack.c.h.b16 %v319
      %v553 = vunpack.c.l.b16 %v320
      %v554 = vunpack.c.h.b16 %v320
      %v555 = vunpack.c.l.b16 %v321
      %v556 = vunpack.c.h.b16 %v321
      %v557 = vunpack.c.l.b16 %v322
      %v558 = vunpack.c.h.b16 %v322
      %v559 = vunpack.c.l.b16 %v323
      %v560 = vunpack.c.h.b16 %v323
      %v561 = vunpack.c.l.b16 %v324
      %v562 = vunpack.c.h.b16 %v324
      %v563 = vunpack.c.l.b16 %v325
      %v564 = vunpack.c.h.b16 %v325
      %v565 = vunpack.c.l.b16 %v326
      %v566 = vunpack.c.h.b16 %v326
      %v567 = vunpack.c.l.b16 %v327
      %v568 = vunpack.c.h.b16 %v327
      %v569 = vunpack.c.l.b16 %v328
      %v570 = vunpack.c.h.b16 %v328
      %v571 = vunpack.c.l.b16 %v329
      %v572 = vunpack.c.h.b16 %v329
      %v573 = vunpack.c.l.b16 %v330
      %v574 = vunpack.c.h.b16 %v330
      %v575 = vunpack.c.l.b16 %v331
      %v576 = vunpack.c.h.b16 %v331
      %v577 = vunpack.c.l.b16 %v332
      %v578 = vunpack.c.h.b16 %v332
      %v579 = vunpack.c.l.b16 %v333
      %v580 = vunpack.c.h.b16 %v333
      %v581 = vunpack.c.l.b16 %v334
      %v582 = vunpack.c.h.b16 %v334
      %v583 = vunpack.c.l.b16 %v335
      %v584 = vunpack.c.h.b16 %v335
      %v585 = vunpack.c.l.b16 %v336
      %v586 = vunpack.c.h.b16 %v336
      %v587 = vunpack.c.l.b16 %v337
      %v588 = vunpack.c.h.b16 %v337
      %v589 = vunpack.c.l.b16 %v338
      %v590 = vunpack.c.h.b16 %v338
      %v591 = vunpack.c.l.b16 %v339
      %v592 = vunpack.c.h.b16 %v339
      %v593 = vpack.c.b16 %v469, %v465
      %v594 = vpack.c.b16 %v470, %v466
      %v595 = vpack.c.b16 %v471, %v467
      %v596 = vpack.c.b16 %v472, %v468
      %v597 = vpack.c.b16 %v477, %v473
      %v598 = vpack.c.b16 %v478, %v474
      %v599 = vpack.c.b16 %v479, %v475
      %v600 = vpack.c.b16 %v480, %v476
      %v601 = vpack.c.b16 %v485, %v481
      %v602 = vpack.c.b16 %v486, %v482
      %v603 = vpack.c.b16 %v487, %v483
      %v604 = vpack.c.b16 %v488, %v484
      %v605 = vpack.c.b16 %v493, %v489
      %v606 = vpack.c.b16 %v494, %v490
      %v607 = vpack.c.b16 %v495, %v491
      %v608 = vpack.c.b16 %v496, %v492
      %v609 = vpack.c.b16 %v501, %v497
      %v610 = vpack.c.b16 %v502, %v498
      %v611 = vpack.c.b16 %v503, %v499
      %v612 = vpack.c.b16 %v504, %v500
      %v613 = vpack.c.b16 %v509, %v505
      %v614 = vpack.c.b16 %v510, %v506
      %v615 = vpack.c.b16 %v511, %v507
      %v616 = vpack.c.b16 %v512, %v508
      %v617 = vpack.c.b16 %v517, %v513
      %v618 = vpack.c.b16 %v518, %v514
      %v619 = vpack.c.b16 %v519, %v515
      %v620 = vpack.c.b16 %v520, %v516
      %v621 = vpack.c.b16 %v525, %v521
      %v622 = vpack.c.b16 %v526, %v522
      %v623 = vpack.c.b16 %v527, %v523
      %v624 = vpack.c.b16 %v528, %v524
      %v625 = vpack.c.b16 %v533, %v529
      %v626 = vpack.c.b16 %v534, %v530
      %v627 = vpack.c.b16 %v535, %v531
      %v628 = vpack.c.b16 %v536, %v532
      %v629 = vpack.c.b16 %v541, %v537
      %v630 = vpack.c.b16 %v542, %v538
      %v631 = vpack.c.b16 %v543, %v539
      %v632 = vpack.c.b16 %v544, %v540
      %v633 = vpack.c.b16 %v549, %v545
      %v634 = vpack.c.b16 %v550, %v546
      %v635 = vpack.c.b16 %v551, %v547
      %v636 = vpack.c.b16 %v552, %v548
      %v637 = vpack.c.b16 %v557, %v553
      %v638 = vpack.c.b16 %v558, %v554
      %v639 = vpack.c.b16 %v559, %v555
      %v640 = vpack.c.b16 %v560, %v556
      %v641 = vpack.c.b16 %v565, %v561
      %v642 = vpack.c.b16 %v566, %v562
      %v643 = vpack.c.b16 %v567, %v563
      %v644 = vpack.c.b16 %v568, %v564
      %v645 = vpack.c.b16 %v573, %v569
      %v646 = vpack.c.b16 %v574, %v570
      %v647 = vpack.c.b16 %v575, %v571
      %v648 = vpack.c.b16 %v576, %v572
      %v649 = vpack.c.b16 %v581, %v577
      %v650 = vpack.c.b16 %v582, %v578
      %v651 = vpack.c.b16 %v583, %v579
      %v652 = vpack.c.b16 %v584, %v580
      %v653 = vpack.c.b16 %v589, %v585
      %v654 = vpack.c.b16 %v590, %v586
      %v655 = vpack.c.b16 %v591, %v587
      %v656 = vpack.c.b16 %v592, %v588
      %v759 = vunpack.c.l.b16 %v340
      %v760 = vunpack.c.l.b16 %v341
      %v761 = vunpack.c.l.b16 %v342
      %v762 = vunpack.c.l.b16 %v343
      %v763 = vunpack.c.l.b16 %v344
      %v764 = vunpack.c.l.b16 %v345
      %v765 = vunpack.c.l.b16 %v346
      %v766 = vunpack.c.l.b16 %v347
      %v767 = vunpack.c.l.b16 %v348
      %v768 = vunpack.c.l.b16 %v349
      %v769 = vunpack.c.l.b16 %v350
      %v770 = vunpack.c.l.b16 %v351
      %v771 = vunpack.c.l.b16 %v352
      %v772 = vunpack.c.l.b16 %v353
      %v773 = vunpack.c.l.b16 %v354
      %v774 = vunpack.c.l.b16 %v355
      %v775 = vunpack.c.l.b16 %v356
      %v776 = vunpack.c.l.b16 %v357
      %v777 = vunpack.c.l.b16 %v358
      %v778 = vunpack.c.l.b16 %v359
      %v779 = vunpack.c.l.b16 %v360
      %v780 = vunpack.c.l.b16 %v361
      %v781 = vunpack.c.l.b16 %v362
      %v782 = vunpack.c.l.b16 %v363
      %v783 = vunpack.c.l.b16 %v364
      %v784 = vunpack.c.l.b16 %v365
      %v785 = vunpack.c.l.b16 %v366
      %v786 = vunpack.c.l.b16 %v367
      %v787 = vunpack.c.l.b16 %v368
      %v788 = vunpack.c.l.b16 %v369
      %v789 = vunpack.c.l.b16 %v370
      %v790 = vunpack.c.l.b16 %v371
      %v791 = vunpack.c.l.b16 %v372
      %v792 = vunpack.c.l.b16 %v373
      %v793 = vunpack.c.l.b16 %v374
      %v794 = vunpack.c.l.b16 %v375
      %v795 = vunpack.c.l.b16 %v376
      %v796 = vunpack.c.l.b16 %v377
      %v797 = vunpack.c.l.b16 %v378
      %v798 = vunpack.c.l.b16 %v379
      %v799 = vunpack.c.l.b16 %v380
      %v800 = vunpack.c.l.b16 %v381
      %v801 = vunpack.c.l.b16 %v382
      %v802 = vunpack.c.l.b16 %v383
      %v803 = vunpack.c.l.b16 %v384
      %v804 = vunpack.c.l.b16 %v385
      %v805 = vunpack.c.l.b16 %v386
      %v806 = vunpack.c.l.b16 %v387
      %v807 = vunpack.c.l.b16 %v388
      %v808 = vunpack.c.l.b16 %v389
      %v809 = vunpack.c.l.b16 %v390
      %v810 = vunpack.c.l.b16 %v391
      %v811 = vunpack.c.l.b16 %v392
      %v812 = vunpack.c.l.b16 %v393
      %v813 = vpack.c.b16 %v760, %v759
      %v814 = vpack.c.b16 %v762, %v761
      %v815 = vpack.c.b16 %v764, %v763
      %v816 = vpack.c.b16 %v766, %v765
      %v817 = vpack.c.b16 %v768, %v767
      %v818 = vpack.c.b16 %v770, %v769
      %v819 = vpack.c.b16 %v772, %v771
      %v820 = vpack.c.b16 %v774, %v773
      %v821 = vpack.c.b16 %v776, %v775
      %v822 = vpack.c.b16 %v778, %v777
      %v823 = vpack.c.b16 %v780, %v779
      %v824 = vpack.c.b16 %v782, %v781
      %v825 = vpack.c.b16 %v784, %v783
      %v826 = vpack.c.b16 %v786, %v785
      %v827 = vpack.c.b16 %v788, %v787
      %v828 = vpack.c.b16 %v790, %v789
      %v829 = vpack.c.b16 %v792, %v791
      %v830 = vpack.c.b16 %v794, %v793
      %v831 = vpack.c.b16 %v796, %v795
      %v832 = vpack.c.b16 %v798, %v797
      %v833 = vpack.c.b16 %v800, %v799
      %v834 = vpack.c.b16 %v802, %v801
      %v835 = vpack.c.b16 %v804, %v803
      %v836 = vpack.c.b16 %v806, %v805
      %v837 = vpack.c.b16 %v808, %v807
      %v838 = vpack.c.b16 %v810, %v809
      %v839 = vpack.c.b16 %v812, %v811
      %vm867 = vcmask 392192
      %v869 = vsel %vm867, %v596, 0
      %v872 = vsel %vm867, %v600, 0
      %v875 = vsel %vm867, %v604, 0
      %v878 = vsel %vm867, %v608, 0
      %v881 = vsel %vm867, %v612, 0
      %v884 = vsel %vm867, %v616, 0
      %v887 = vsel %vm867, %v620, 0
      %v890 = vsel %vm867, %v624, 0
      %v893 = vsel %vm867, %v628, 0
      %v896 = vsel %vm867, %v632, 0
      %v899 = vsel %vm867, %v636, 0
      %v902 = vsel %vm867, %v640, 0
      %v905 = vsel %vm867, %v644, 0
      %v908 = vsel %vm867, %v648, 0
      %v911 = vsel %vm867, %v652, 0
      %v914 = vsel %vm867, %v656, 0
      %916 = vmatprep.subr.bf16.mxu0 0
      %917 = vmatpush1.bf16.msra.mxu0 %v813
      %918 = vmatprep.subr.bf16.mxu0 0
      %919 = vmatpush1.bf16.msra.mxu0 %v814
      %920 = vmatprep.subr.bf16.mxu0 0
      %921 = vmatpush1.bf16.msra.mxu0 %v815
      %922 = vmatprep.subr.bf16.mxu0 0
      %923 = vmatpush1.bf16.msra.mxu0 %v816
      %924 = vmatprep.subr.bf16.mxu0 0
      %925 = vmatpush1.bf16.msra.mxu0 %v817
      %926 = vmatprep.subr.bf16.mxu0 0
      %927 = vmatpush1.bf16.msra.mxu0 %v818
      %928 = vmatprep.subr.bf16.mxu0 0
      %929 = vmatpush1.bf16.msra.mxu0 %v819
      %930 = vmatprep.subr.bf16.mxu0 0
      %931 = vmatpush1.bf16.msra.mxu0 %v820
      %932 = vmatprep.subr.bf16.mxu0 0
      %933 = vmatpush1.bf16.msra.mxu0 %v821
      %934 = vmatprep.subr.bf16.mxu0 0
      %935 = vmatpush1.bf16.msra.mxu0 %v822
      %936 = vmatprep.subr.bf16.mxu0 0
      %937 = vmatpush1.bf16.msra.mxu0 %v823
      %938 = vmatprep.subr.bf16.mxu0 0
      %939 = vmatpush1.bf16.msra.mxu0 %v824
      %940 = vmatprep.subr.bf16.mxu0 0
      %941 = vmatpush1.bf16.msra.mxu0 %v825
      %942 = vmatprep.subr.bf16.mxu0 0
      %943 = vmatpush1.bf16.msra.mxu0 %v826
      %944 = vmatprep.subr.bf16.mxu0 0
      %945 = vmatpush1.bf16.msra.mxu0 %v827
      %946 = vmatprep.subr.bf16.mxu0 0
      %947 = vmatpush1.bf16.msra.mxu0 %v828
      %948 = vmatprep.mubr.bf16.mxu0 %v594
      %949 = vmatmul.mubr.bf16.gmra.mrb[0].mxu0 %v593
      %v950 = vpop.f32.mrb[0].mxu0
      %v951 = vadd.f32 %v399, %v950
      %v952 = vpop.f32.mrb[0].mxu0
      %v953 = vpop.f32.mrb[0].mxu0
      %v954 = vadd.f32 %v399, %v953
      %v955 = vpop.f32.mrb[0].mxu0
      %956 = vmatprep.mubr.bf16.mxu0 %v598
      %957 = vmatmul.mubr.bf16.gmra.mrb[0].mxu0 %v597
      %v958 = vpop.f32.mrb[0].mxu0
      %v959 = vadd.f32 %v399, %v958
      %v960 = vpop.f32.mrb[0].mxu0
      %v961 = vpop.f32.mrb[0].mxu0
      %v962 = vadd.f32 %v399, %v961
      %v963 = vpop.f32.mrb[0].mxu0
      %964 = vmatprep.mubr.bf16.mxu0 %v602
      %965 = vmatmul.mubr.bf16.gmra.mrb[0].mxu0 %v601
      %v966 = vpop.f32.mrb[0].mxu0
      %v967 = vadd.f32 %v399, %v966
      %v968 = vpop.f32.mrb[0].mxu0
      %v969 = vpop.f32.mrb[0].mxu0
      %v970 = vadd.f32 %v399, %v969
      %v971 = vpop.f32.mrb[0].mxu0
      %972 = vmatprep.mubr.bf16.mxu0 %v606
      %973 = vmatmul.mubr.bf16.gmra.mrb[0].mxu0 %v605
      %v974 = vpop.f32.mrb[0].mxu0
      %v975 = vadd.f32 %v399, %v974
      %v976 = vpop.f32.mrb[0].mxu0
      %v977 = vpop.f32.mrb[0].mxu0
      %v978 = vadd.f32 %v399, %v977
      %v979 = vpop.f32.mrb[0].mxu0
      %980 = vmatprep.mubr.bf16.mxu0 %v610
      %981 = vmatmul.mubr.bf16.gmra.mrb[0].mxu0 %v609
      %v982 = vpop.f32.mrb[0].mxu0
      %v983 = vadd.f32 %v399, %v982
      %v984 = vpop.f32.mrb[0].mxu0
      %v985 = vpop.f32.mrb[0].mxu0
      %v986 = vadd.f32 %v399, %v985
      %v987 = vpop.f32.mrb[0].mxu0
      %988 = vmatprep.mubr.bf16.mxu0 %v614
      %989 = vmatmul.mubr.bf16.gmra.mrb[0].mxu0 %v613
      %v990 = vpop.f32.mrb[0].mxu0
      %v991 = vadd.f32 %v399, %v990
      %v992 = vpop.f32.mrb[0].mxu0
      %v993 = vpop.f32.mrb[0].mxu0
      %v994 = vadd.f32 %v399, %v993
      %v995 = vpop.f32.mrb[0].mxu0
      %996 = vmatprep.mubr.bf16.mxu0 %v618
      %997 = vmatmul.mubr.bf16.gmra.mrb[0].mxu0 %v617
      %v998 = vpop.f32.mrb[0].mxu0
      %v999 = vadd.f32 %v399, %v998
      %v1000 = vpop.f32.mrb[0].mxu0
      %v1001 = vpop.f32.mrb[0].mxu0
      %v1002 = vadd.f32 %v399, %v1001
      %v1003 = vpop.f32.mrb[0].mxu0
      %1004 = vmatprep.mubr.bf16.mxu0 %v622
      %1005 = vmatmul.mubr.bf16.gmra.mrb[0].mxu0 %v621
      %v1006 = vpop.f32.mrb[0].mxu0
      %v1007 = vadd.f32 %v399, %v1006
      %v1008 = vpop.f32.mrb[0].mxu0
      %v1009 = vpop.f32.mrb[0].mxu0
      %v1010 = vadd.f32 %v399, %v1009
      %v1011 = vpop.f32.mrb[0].mxu0
      %1012 = vmatprep.mubr.bf16.mxu0 %v626
      %1013 = vmatmul.mubr.bf16.gmra.mrb[0].mxu0 %v625
      %v1014 = vpop.f32.mrb[0].mxu0
      %v1015 = vadd.f32 %v399, %v1014
      %v1016 = vpop.f32.mrb[0].mxu0
      %v1017 = vpop.f32.mrb[0].mxu0
      %v1018 = vadd.f32 %v399, %v1017
      %v1019 = vpop.f32.mrb[0].mxu0
      %1020 = vmatprep.mubr.bf16.mxu0 %v630
      %1021 = vmatmul.mubr.bf16.gmra.mrb[0].mxu0 %v629
      %v1022 = vpop.f32.mrb[0].mxu0
      %v1023 = vadd.f32 %v399, %v1022
      %v1024 = vpop.f32.mrb[0].mxu0
      %v1025 = vpop.f32.mrb[0].mxu0
      %v1026 = vadd.f32 %v399, %v1025
      %v1027 = vpop.f32.mrb[0].mxu0
      %1028 = vmatprep.mubr.bf16.mxu0 %v634
      %1029 = vmatmul.mubr.bf16.gmra.mrb[0].mxu0 %v633
      %v1030 = vpop.f32.mrb[0].mxu0
      %v1031 = vadd.f32 %v399, %v1030
      %v1032 = vpop.f32.mrb[0].mxu0
      %v1033 = vpop.f32.mrb[0].mxu0
      %v1034 = vadd.f32 %v399, %v1033
      %v1035 = vpop.f32.mrb[0].mxu0
      %1036 = vmatprep.mubr.bf16.mxu0 %v638
      %1037 = vmatmul.mubr.bf16.gmra.mrb[0].mxu0 %v637
      %v1038 = vpop.f32.mrb[0].mxu0
      %v1039 = vadd.f32 %v399, %v1038
      %v1040 = vpop.f32.mrb[0].mxu0
      %v1041 = vpop.f32.mrb[0].mxu0
      %v1042 = vadd.f32 %v399, %v1041
      %v1043 = vpop.f32.mrb[0].mxu0
      %1044 = vmatprep.mubr.bf16.mxu0 %v642
      %1045 = vmatmul.mubr.bf16.gmra.mrb[0].mxu0 %v641
      %v1046 = vpop.f32.mrb[0].mxu0
      %v1047 = vadd.f32 %v399, %v1046
      %v1048 = vpop.f32.mrb[0].mxu0
      %v1049 = vpop.f32.mrb[0].mxu0
      %v1050 = vadd.f32 %v399, %v1049
      %v1051 = vpop.f32.mrb[0].mxu0
      %1052 = vmatprep.mubr.bf16.mxu0 %v646
      %1053 = vmatmul.mubr.bf16.gmra.mrb[0].mxu0 %v645
      %v1054 = vpop.f32.mrb[0].mxu0
      %v1055 = vadd.f32 %v399, %v1054
      %v1056 = vpop.f32.mrb[0].mxu0
      %v1057 = vpop.f32.mrb[0].mxu0
      %v1058 = vadd.f32 %v399, %v1057
      %v1059 = vpop.f32.mrb[0].mxu0
      %1060 = vmatprep.mubr.bf16.mxu0 %v650
      %1061 = vmatmul.mubr.bf16.gmra.mrb[0].mxu0 %v649
      %v1062 = vpop.f32.mrb[0].mxu0
      %v1063 = vadd.f32 %v399, %v1062
      %v1064 = vpop.f32.mrb[0].mxu0
      %v1065 = vpop.f32.mrb[0].mxu0
      %v1066 = vadd.f32 %v399, %v1065
      %v1067 = vpop.f32.mrb[0].mxu0
      %1068 = vmatprep.mubr.bf16.mxu0 %v654
      %1069 = vmatmul.mubr.bf16.gmra.mrb[0].mxu0 %v653
      %v1070 = vpop.f32.mrb[0].mxu0
      %v1071 = vadd.f32 %v399, %v1070
      %v1072 = vpop.f32.mrb[0].mxu0
      %v1073 = vpop.f32.mrb[0].mxu0
      %v1074 = vadd.f32 %v399, %v1073
      %v1075 = vpop.f32.mrb[0].mxu0
      %1076 = vdwg.mxu0
      %1077 = vmatprep.subr.bf16.mxu0 0
      %1078 = vmatpush1.bf16.msra.mxu0 %v829
      %1079 = vmatprep.subr.bf16.mxu0 0
      %1080 = vmatpush1.bf16.msra.mxu0 %v830
      %1081 = vmatprep.subr.bf16.mxu0 0
      %1082 = vmatpush1.bf16.msra.mxu0 %v831
      %1083 = vmatprep.subr.bf16.mxu0 0
      %1084 = vmatpush1.bf16.msra.mxu0 %v832
      %1085 = vmatprep.subr.bf16.mxu0 0
      %1086 = vmatpush1.bf16.msra.mxu0 %v833
      %1087 = vmatprep.subr.bf16.mxu0 0
      %1088 = vmatpush1.bf16.msra.mxu0 %v834
      %1089 = vmatprep.subr.bf16.mxu0 0
      %1090 = vmatpush1.bf16.msra.mxu0 %v835
      %1091 = vmatprep.subr.bf16.mxu0 0
      %1092 = vmatpush1.bf16.msra.mxu0 %v836
      %1093 = vmatprep.subr.bf16.mxu0 0
      %1094 = vmatpush1.bf16.msra.mxu0 %v837
      %1095 = vmatprep.subr.bf16.mxu0 0
      %1096 = vmatpush1.bf16.msra.mxu0 %v838
      %1097 = vmatprep.subr.bf16.mxu0 0
      %1098 = vmatpush1.bf16.msra.mxu0 %v839
      %1099 = vmatprep.subr.bf16.mxu0 0
      %1100 = vmatpush1.bf16.msra.mxu0 0
      %1101 = vmatprep.subr.bf16.mxu0 0
      %1102 = vmatpush1.bf16.msra.mxu0 0
      %1103 = vmatprep.subr.bf16.mxu0 0
      %1104 = vmatpush1.bf16.msra.mxu0 0
      %1105 = vmatprep.subr.bf16.mxu0 0
      %1106 = vmatpush1.bf16.msra.mxu0 0
      %1107 = vmatprep.subr.bf16.mxu0 0
      %1108 = vmatpush1.bf16.msra.mxu0 0
      %1109 = vmatprep.mubr.bf16.mxu0 %v869
      %1110 = vmatmul.mubr.bf16.gmra.mrb[0].mxu0 %v595
      %v1111 = vpop.f32.mrb[0].mxu0
      %v1112 = vadd.f32 %v951, %v1111
      %v1113 = vpop.f32.mrb[0].mxu0
      %v1114 = vpop.f32.mrb[0].mxu0
      %v1115 = vadd.f32 %v954, %v1114
      %v1116 = vpop.f32.mrb[0].mxu0
      %1117 = vmatprep.mubr.bf16.mxu0 %v872
      %1118 = vmatmul.mubr.bf16.gmra.mrb[0].mxu0 %v599
      %v1119 = vpop.f32.mrb[0].mxu0
      %v1120 = vadd.f32 %v959, %v1119
      %v1121 = vpop.f32.mrb[0].mxu0
      %v1122 = vpop.f32.mrb[0].mxu0
      %v1123 = vadd.f32 %v962, %v1122
      %v1124 = vpop.f32.mrb[0].mxu0
      %1125 = vmatprep.mubr.bf16.mxu0 %v875
      %1126 = vmatmul.mubr.bf16.gmra.mrb[0].mxu0 %v603
      %v1127 = vpop.f32.mrb[0].mxu0
      %v1128 = vadd.f32 %v967, %v1127
      %v1129 = vpop.f32.mrb[0].mxu0
      %v1130 = vpop.f32.mrb[0].mxu0
      %v1131 = vadd.f32 %v970, %v1130
      %v1132 = vpop.f32.mrb[0].mxu0
      %1133 = vmatprep.mubr.bf16.mxu0 %v878
      %1134 = vmatmul.mubr.bf16.gmra.mrb[0].mxu0 %v607
      %v1135 = vpop.f32.mrb[0].mxu0
      %v1136 = vadd.f32 %v975, %v1135
      %v1137 = vpop.f32.mrb[0].mxu0
      %v1138 = vpop.f32.mrb[0].mxu0
      %v1139 = vadd.f32 %v978, %v1138
      %v1140 = vpop.f32.mrb[0].mxu0
      %1141 = vmatprep.mubr.bf16.mxu0 %v881
      %1142 = vmatmul.mubr.bf16.gmra.mrb[0].mxu0 %v611
      %v1143 = vpop.f32.mrb[0].mxu0
      %v1144 = vadd.f32 %v983, %v1143
      %v1145 = vpop.f32.mrb[0].mxu0
      %v1146 = vpop.f32.mrb[0].mxu0
      %v1147 = vadd.f32 %v986, %v1146
      %v1148 = vpop.f32.mrb[0].mxu0
      %1149 = vmatprep.mubr.bf16.mxu0 %v884
      %1150 = vmatmul.mubr.bf16.gmra.mrb[0].mxu0 %v615
      %v1151 = vpop.f32.mrb[0].mxu0
      %v1152 = vadd.f32 %v991, %v1151
      %v1153 = vpop.f32.mrb[0].mxu0
      %v1154 = vpop.f32.mrb[0].mxu0
      %v1155 = vadd.f32 %v994, %v1154
      %v1156 = vpop.f32.mrb[0].mxu0
      %1157 = vmatprep.mubr.bf16.mxu0 %v887
      %1158 = vmatmul.mubr.bf16.gmra.mrb[0].mxu0 %v619
      %v1159 = vpop.f32.mrb[0].mxu0
      %v1160 = vadd.f32 %v999, %v1159
      %v1161 = vpop.f32.mrb[0].mxu0
      %v1162 = vpop.f32.mrb[0].mxu0
      %v1163 = vadd.f32 %v1002, %v1162
      %v1164 = vpop.f32.mrb[0].mxu0
      %1165 = vmatprep.mubr.bf16.mxu0 %v890
      %1166 = vmatmul.mubr.bf16.gmra.mrb[0].mxu0 %v623
      %v1167 = vpop.f32.mrb[0].mxu0
      %v1168 = vadd.f32 %v1007, %v1167
      %v1169 = vpop.f32.mrb[0].mxu0
      %v1170 = vpop.f32.mrb[0].mxu0
      %v1171 = vadd.f32 %v1010, %v1170
      %v1172 = vpop.f32.mrb[0].mxu0
      %1173 = vmatprep.mubr.bf16.mxu0 %v893
      %1174 = vmatmul.mubr.bf16.gmra.mrb[0].mxu0 %v627
      %v1175 = vpop.f32.mrb[0].mxu0
      %v1176 = vadd.f32 %v1015, %v1175
      %v1177 = vpop.f32.mrb[0].mxu0
      %v1178 = vpop.f32.mrb[0].mxu0
      %v1179 = vadd.f32 %v1018, %v1178
      %v1180 = vpop.f32.mrb[0].mxu0
      %1181 = vmatprep.mubr.bf16.mxu0 %v896
      %1182 = vmatmul.mubr.bf16.gmra.mrb[0].mxu0 %v631
      %v1183 = vpop.f32.mrb[0].mxu0
      %v1184 = vadd.f32 %v1023, %v1183
      %v1185 = vpop.f32.mrb[0].mxu0
      %v1186 = vpop.f32.mrb[0].mxu0
      %v1187 = vadd.f32 %v1026, %v1186
      %v1188 = vpop.f32.mrb[0].mxu0
      %1189 = vmatprep.mubr.bf16.mxu0 %v899
      %1190 = vmatmul.mubr.bf16.gmra.mrb[0].mxu0 %v635
      %v1191 = vpop.f32.mrb[0].mxu0
      %v1192 = vadd.f32 %v1031, %v1191
      %v1193 = vpop.f32.mrb[0].mxu0
      %v1194 = vpop.f32.mrb[0].mxu0
      %v1195 = vadd.f32 %v1034, %v1194
      %v1196 = vpop.f32.mrb[0].mxu0
      %1197 = vmatprep.mubr.bf16.mxu0 %v902
      %1198 = vmatmul.mubr.bf16.gmra.mrb[0].mxu0 %v639
      %v1199 = vpop.f32.mrb[0].mxu0
      %v1200 = vadd.f32 %v1039, %v1199
      %v1201 = vpop.f32.mrb[0].mxu0
      %v1202 = vpop.f32.mrb[0].mxu0
      %v1203 = vadd.f32 %v1042, %v1202
      %v1204 = vpop.f32.mrb[0].mxu0
      %1205 = vmatprep.mubr.bf16.mxu0 %v905
      %1206 = vmatmul.mubr.bf16.gmra.mrb[0].mxu0 %v643
      %v1207 = vpop.f32.mrb[0].mxu0
      %v1208 = vadd.f32 %v1047, %v1207
      %v1209 = vpop.f32.mrb[0].mxu0
      %v1210 = vpop.f32.mrb[0].mxu0
      %v1211 = vadd.f32 %v1050, %v1210
      %v1212 = vpop.f32.mrb[0].mxu0
      %1213 = vmatprep.mubr.bf16.mxu0 %v908
      %1214 = vmatmul.mubr.bf16.gmra.mrb[0].mxu0 %v647
      %v1215 = vpop.f32.mrb[0].mxu0
      %v1216 = vadd.f32 %v1055, %v1215
      %v1217 = vpop.f32.mrb[0].mxu0
      %v1218 = vpop.f32.mrb[0].mxu0
      %v1219 = vadd.f32 %v1058, %v1218
      %v1220 = vpop.f32.mrb[0].mxu0
      %1221 = vmatprep.mubr.bf16.mxu0 %v911
      %1222 = vmatmul.mubr.bf16.gmra.mrb[0].mxu0 %v651
      %v1223 = vpop.f32.mrb[0].mxu0
      %v1224 = vadd.f32 %v1063, %v1223
      %v1225 = vpop.f32.mrb[0].mxu0
      %v1226 = vpop.f32.mrb[0].mxu0
      %v1227 = vadd.f32 %v1066, %v1226
      %v1228 = vpop.f32.mrb[0].mxu0
      %1229 = vmatprep.mubr.bf16.mxu0 %v914
      %1230 = vmatmul.mubr.bf16.gmra.mrb[0].mxu0 %v655
      %v1231 = vpop.f32.mrb[0].mxu0
      %v1232 = vadd.f32 %v1071, %v1231
      %v1233 = vpop.f32.mrb[0].mxu0
      %v1234 = vpop.f32.mrb[0].mxu0
      %v1235 = vadd.f32 %v1074, %v1234
      %v1236 = vpop.f32.mrb[0].mxu0
      %1237 = vdwg.mxu0
      %v1238 = vtanh.pop %v1112
      %v1239 = vtanh.pop %v1115
      %v1240 = vtanh.pop %v1120
      %v1241 = vtanh.pop %v1123
      %v1242 = vtanh.pop %v1128
      %v1243 = vtanh.pop %v1131
      %v1244 = vtanh.pop %v1136
      %v1245 = vtanh.pop %v1139
      %v1246 = vtanh.pop %v1144
      %v1247 = vtanh.pop %v1147
      %v1248 = vtanh.pop %v1152
      %v1249 = vtanh.pop %v1155
      %v1250 = vtanh.pop %v1160
      %v1251 = vtanh.pop %v1163
      %v1252 = vtanh.pop %v1168
      %v1253 = vtanh.pop %v1171
      %v1254 = vtanh.pop %v1176
      %v1255 = vtanh.pop %v1179
      %v1256 = vtanh.pop %v1184
      %v1257 = vtanh.pop %v1187
      %v1258 = vtanh.pop %v1192
      %v1259 = vtanh.pop %v1195
      %v1260 = vtanh.pop %v1200
      %v1261 = vtanh.pop %v1203
      %v1262 = vtanh.pop %v1208
      %v1263 = vtanh.pop %v1211
      %v1264 = vtanh.pop %v1216
      %v1265 = vtanh.pop %v1219
      %v1266 = vtanh.pop %v1224
      %v1267 = vtanh.pop %v1227
      %v1268 = vtanh.pop %v1232
      %v1269 = vtanh.pop %v1235
      %v1270 = vld [vmem:[%s261] sm:$0xff]
      %v1271 = vld [vmem:[%s261 + $0x8] sm:$0xff]
      %v1272 = vld [vmem:[%s261 + $0x10] sm:$0xff]
      %v1273 = vld [vmem:[%s261 + $0x18] sm:$0xff]
      %v1274 = vld [vmem:[%s261 + $0x20] sm:$0xff]
      %v1275 = vld [vmem:[%s261 + $0x28] sm:$0xff]
      %v1276 = vld [vmem:[%s261 + $0x30] sm:$0xff]
      %v1277 = vld [vmem:[%s261 + $0x38] sm:$0xff]
      %v1278 = vld [vmem:[%s261 + $0x40] sm:$0xff]
      %v1279 = vld [vmem:[%s261 + $0x48] sm:$0xff]
      %v1280 = vld [vmem:[%s261 + $0x50] sm:$0xff]
      %v1281 = vld [vmem:[%s261 + $0x58] sm:$0xff]
      %v1282 = vld [vmem:[%s261 + $0x60] sm:$0xff]
      %v1283 = vld [vmem:[%s261 + $0x68] sm:$0xff]
      %v1284 = vld [vmem:[%s261 + $0x70] sm:$0xff]
      %v1285 = vld [vmem:[%s261 + $0x78] sm:$0xff]
      %v1286 = vld [vmem:[%s261 + $0x80] sm:$0xff]
      %v1287 = vld [vmem:[%s261 + $0x88] sm:$0xff]
      %v1288 = vld [vmem:[%s261 + $0x90] sm:$0xff]
      %v1289 = vld [vmem:[%s261 + $0x98] sm:$0xff]
      %v1290 = vld [vmem:[%s261 + $0xa0] sm:$0xff]
      %v1291 = vld [vmem:[%s261 + $0xa8] sm:$0xff]
      %v1292 = vld [vmem:[%s261 + $0xb0] sm:$0xff]
      %v1293 = vld [vmem:[%s261 + $0xb8] sm:$0xff]
      %v1294 = vld [vmem:[%s261 + $0xc0] sm:$0xff]
      %v1295 = vld [vmem:[%s261 + $0xc8] sm:$0xff]
      %v1296 = vld [vmem:[%s261 + $0xd0] sm:$0xff]
      %v1297 = vld [vmem:[%s261 + $0xd8] sm:$0xff]
      %v1298 = vld [vmem:[%s261 + $0xe0] sm:$0xff]
      %v1299 = vld [vmem:[%s261 + $0xe8] sm:$0xff]
      %v1300 = vld [vmem:[%s261 + $0xf0] sm:$0xff]
      %v1301 = vld [vmem:[%s261 + $0xf8] sm:$0xff]
      %v1302 = vsub.f32 1.0, %v1270
      %v1303 = vsub.f32 1.0, %v1271
      %v1304 = vsub.f32 1.0, %v1272
      %v1305 = vsub.f32 1.0, %v1273
      %v1306 = vsub.f32 1.0, %v1274
      %v1307 = vsub.f32 1.0, %v1275
      %v1308 = vsub.f32 1.0, %v1276
      %v1309 = vsub.f32 1.0, %v1277
      %v1310 = vsub.f32 1.0, %v1278
      %v1311 = vsub.f32 1.0, %v1279
      %v1312 = vsub.f32 1.0, %v1280
      %v1313 = vsub.f32 1.0, %v1281
      %v1314 = vsub.f32 1.0, %v1282
      %v1315 = vsub.f32 1.0, %v1283
      %v1316 = vsub.f32 1.0, %v1284
      %v1317 = vsub.f32 1.0, %v1285
      %v1318 = vsub.f32 1.0, %v1286
      %v1319 = vsub.f32 1.0, %v1287
      %v1320 = vsub.f32 1.0, %v1288
      %v1321 = vsub.f32 1.0, %v1289
      %v1322 = vsub.f32 1.0, %v1290
      %v1323 = vsub.f32 1.0, %v1291
      %v1324 = vsub.f32 1.0, %v1292
      %v1325 = vsub.f32 1.0, %v1293
      %v1326 = vsub.f32 1.0, %v1294
      %v1327 = vsub.f32 1.0, %v1295
      %v1328 = vsub.f32 1.0, %v1296
      %v1329 = vsub.f32 1.0, %v1297
      %v1330 = vsub.f32 1.0, %v1298
      %v1331 = vsub.f32 1.0, %v1299
      %v1332 = vsub.f32 1.0, %v1300
      %v1333 = vsub.f32 1.0, %v1301
      %v1334 = vld [vmem:[%s267] sm:$0xff]
      %v1335 = vld [vmem:[%s267 + $0x8] sm:$0xff]
      %v1336 = vld [vmem:[%s267 + $0x10] sm:$0xff]
      %v1337 = vld [vmem:[%s267 + $0x18] sm:$0xff]
      %v1338 = vld [vmem:[%s267 + $0x20] sm:$0xff]
      %v1339 = vld [vmem:[%s267 + $0x28] sm:$0xff]
      %v1340 = vld [vmem:[%s267 + $0x30] sm:$0xff]
      %v1341 = vld [vmem:[%s267 + $0x38] sm:$0xff]
      %v1342 = vld [vmem:[%s267 + $0x40] sm:$0xff]
      %v1343 = vld [vmem:[%s267 + $0x48] sm:$0xff]
      %v1344 = vld [vmem:[%s267 + $0x50] sm:$0xff]
      %v1345 = vld [vmem:[%s267 + $0x58] sm:$0xff]
      %v1346 = vld [vmem:[%s267 + $0x60] sm:$0xff]
      %v1347 = vld [vmem:[%s267 + $0x68] sm:$0xff]
      %v1348 = vld [vmem:[%s267 + $0x70] sm:$0xff]
      %v1349 = vld [vmem:[%s267 + $0x78] sm:$0xff]
      %v1350 = vld [vmem:[%s267 + $0x80] sm:$0xff]
      %v1351 = vld [vmem:[%s267 + $0x88] sm:$0xff]
      %v1352 = vld [vmem:[%s267 + $0x90] sm:$0xff]
      %v1353 = vld [vmem:[%s267 + $0x98] sm:$0xff]
      %v1354 = vld [vmem:[%s267 + $0xa0] sm:$0xff]
      %v1355 = vld [vmem:[%s267 + $0xa8] sm:$0xff]
      %v1356 = vld [vmem:[%s267 + $0xb0] sm:$0xff]
      %v1357 = vld [vmem:[%s267 + $0xb8] sm:$0xff]
      %v1358 = vld [vmem:[%s267 + $0xc0] sm:$0xff]
      %v1359 = vld [vmem:[%s267 + $0xc8] sm:$0xff]
      %v1360 = vld [vmem:[%s267 + $0xd0] sm:$0xff]
      %v1361 = vld [vmem:[%s267 + $0xd8] sm:$0xff]
      %v1362 = vld [vmem:[%s267 + $0xe0] sm:$0xff]
      %v1363 = vld [vmem:[%s267 + $0xe8] sm:$0xff]
      %v1364 = vld [vmem:[%s267 + $0xf0] sm:$0xff]
      %v1365 = vld [vmem:[%s267 + $0xf8] sm:$0xff]
      %v1366 = vmul.f32 %v1302, %v1334
      %v1367 = vmul.f32 %v1303, %v1335
      %v1368 = vmul.f32 %v1304, %v1336
      %v1369 = vmul.f32 %v1305, %v1337
      %v1370 = vmul.f32 %v1306, %v1338
      %v1371 = vmul.f32 %v1307, %v1339
      %v1372 = vmul.f32 %v1308, %v1340
      %v1373 = vmul.f32 %v1309, %v1341
      %v1374 = vmul.f32 %v1310, %v1342
      %v1375 = vmul.f32 %v1311, %v1343
      %v1376 = vmul.f32 %v1312, %v1344
      %v1377 = vmul.f32 %v1313, %v1345
      %v1378 = vmul.f32 %v1314, %v1346
      %v1379 = vmul.f32 %v1315, %v1347
      %v1380 = vmul.f32 %v1316, %v1348
      %v1381 = vmul.f32 %v1317, %v1349
      %v1382 = vmul.f32 %v1318, %v1350
      %v1383 = vmul.f32 %v1319, %v1351
      %v1384 = vmul.f32 %v1320, %v1352
      %v1385 = vmul.f32 %v1321, %v1353
      %v1386 = vmul.f32 %v1322, %v1354
      %v1387 = vmul.f32 %v1323, %v1355
      %v1388 = vmul.f32 %v1324, %v1356
      %v1389 = vmul.f32 %v1325, %v1357
      %v1390 = vmul.f32 %v1326, %v1358
      %v1391 = vmul.f32 %v1327, %v1359
      %v1392 = vmul.f32 %v1328, %v1360
      %v1393 = vmul.f32 %v1329, %v1361
      %v1394 = vmul.f32 %v1330, %v1362
      %v1395 = vmul.f32 %v1331, %v1363
      %v1396 = vmul.f32 %v1332, %v1364
      %v1397 = vmul.f32 %v1333, %v1365
      %v1398 = vmul.f32 %v1270, %v1238
      %v1399 = vmul.f32 %v1271, %v1239
      %v1400 = vmul.f32 %v1272, %v1240
      %v1401 = vmul.f32 %v1273, %v1241
      %v1402 = vmul.f32 %v1274, %v1242
      %v1403 = vmul.f32 %v1275, %v1243
      %v1404 = vmul.f32 %v1276, %v1244
      %v1405 = vmul.f32 %v1277, %v1245
      %v1406 = vmul.f32 %v1278, %v1246
      %v1407 = vmul.f32 %v1279, %v1247
      %v1408 = vmul.f32 %v1280, %v1248
      %v1409 = vmul.f32 %v1281, %v1249
      %v1410 = vmul.f32 %v1282, %v1250
      %v1411 = vmul.f32 %v1283, %v1251
      %v1412 = vmul.f32 %v1284, %v1252
      %v1413 = vmul.f32 %v1285, %v1253
      %v1414 = vmul.f32 %v1286, %v1254
      %v1415 = vmul.f32 %v1287, %v1255
      %v1416 = vmul.f32 %v1288, %v1256
      %v1417 = vmul.f32 %v1289, %v1257
      %v1418 = vmul.f32 %v1290, %v1258
      %v1419 = vmul.f32 %v1291, %v1259
      %v1420 = vmul.f32 %v1292, %v1260
      %v1421 = vmul.f32 %v1293, %v1261
      %v1422 = vmul.f32 %v1294, %v1262
      %v1423 = vmul.f32 %v1295, %v1263
      %v1424 = vmul.f32 %v1296, %v1264
      %v1425 = vmul.f32 %v1297, %v1265
      %v1426 = vmul.f32 %v1298, %v1266
      %v1427 = vmul.f32 %v1299, %v1267
      %v1428 = vmul.f32 %v1300, %v1268
      %v1429 = vmul.f32 %v1301, %v1269
      %v1430 = vadd.f32 %v1366, %v1398
      %v1431 = vadd.f32 %v1367, %v1399
      %v1432 = vadd.f32 %v1368, %v1400
      %v1433 = vadd.f32 %v1369, %v1401
      %v1434 = vadd.f32 %v1370, %v1402
      %v1435 = vadd.f32 %v1371, %v1403
      %v1436 = vadd.f32 %v1372, %v1404
      %v1437 = vadd.f32 %v1373, %v1405
      %v1438 = vadd.f32 %v1374, %v1406
      %v1439 = vadd.f32 %v1375, %v1407
      %v1440 = vadd.f32 %v1376, %v1408
      %v1441 = vadd.f32 %v1377, %v1409
      %v1442 = vadd.f32 %v1378, %v1410
      %v1443 = vadd.f32 %v1379, %v1411
      %v1444 = vadd.f32 %v1380, %v1412
      %v1445 = vadd.f32 %v1381, %v1413
      %v1446 = vadd.f32 %v1382, %v1414
      %v1447 = vadd.f32 %v1383, %v1415
      %v1448 = vadd.f32 %v1384, %v1416
      %v1449 = vadd.f32 %v1385, %v1417
      %v1450 = vadd.f32 %v1386, %v1418
      %v1451 = vadd.f32 %v1387, %v1419
      %v1452 = vadd.f32 %v1388, %v1420
      %v1453 = vadd.f32 %v1389, %v1421
      %v1454 = vadd.f32 %v1390, %v1422
      %v1455 = vadd.f32 %v1391, %v1423
      %v1456 = vadd.f32 %v1392, %v1424
      %v1457 = vadd.f32 %v1393, %v1425
      %v1458 = vadd.f32 %v1394, %v1426
      %v1459 = vadd.f32 %v1395, %v1427
      %v1460 = vadd.f32 %v1396, %v1428
      %v1461 = vadd.f32 %v1397, %v1429
      %vm1462 = vcmask 130048
      %1463 = vst.msk [vmem:[%s273] sm:$0xff] %vm1462, %v1430
      %1464 = vst.msk [vmem:[%s273 + $0x8] sm:$0xff] %vm1462, %v1431
      %1465 = vst.msk [vmem:[%s273 + $0x10] sm:$0xff] %vm1462, %v1432
      %1466 = vst.msk [vmem:[%s273 + $0x18] sm:$0xff] %vm1462, %v1433
      %1467 = vst.msk [vmem:[%s273 + $0x20] sm:$0xff] %vm1462, %v1434
      %1468 = vst.msk [vmem:[%s273 + $0x28] sm:$0xff] %vm1462, %v1435
      %1469 = vst.msk [vmem:[%s273 + $0x30] sm:$0xff] %vm1462, %v1436
      %1470 = vst.msk [vmem:[%s273 + $0x38] sm:$0xff] %vm1462, %v1437
      %1471 = vst.msk [vmem:[%s273 + $0x40] sm:$0xff] %vm1462, %v1438
      %1472 = vst.msk [vmem:[%s273 + $0x48] sm:$0xff] %vm1462, %v1439
      %1473 = vst.msk [vmem:[%s273 + $0x50] sm:$0xff] %vm1462, %v1440
      %1474 = vst.msk [vmem:[%s273 + $0x58] sm:$0xff] %vm1462, %v1441
      %1475 = vst.msk [vmem:[%s273 + $0x60] sm:$0xff] %vm1462, %v1442
      %1476 = vst.msk [vmem:[%s273 + $0x68] sm:$0xff] %vm1462, %v1443
      %1477 = vst.msk [vmem:[%s273 + $0x70] sm:$0xff] %vm1462, %v1444
      %1478 = vst.msk [vmem:[%s273 + $0x78] sm:$0xff] %vm1462, %v1445
      %1479 = vst.msk [vmem:[%s273 + $0x80] sm:$0xff] %vm1462, %v1446
      %1480 = vst.msk [vmem:[%s273 + $0x88] sm:$0xff] %vm1462, %v1447
      %1481 = vst.msk [vmem:[%s273 + $0x90] sm:$0xff] %vm1462, %v1448
      %1482 = vst.msk [vmem:[%s273 + $0x98] sm:$0xff] %vm1462, %v1449
      %1483 = vst.msk [vmem:[%s273 + $0xa0] sm:$0xff] %vm1462, %v1450
      %1484 = vst.msk [vmem:[%s273 + $0xa8] sm:$0xff] %vm1462, %v1451
      %1485 = vst.msk [vmem:[%s273 + $0xb0] sm:$0xff] %vm1462, %v1452
      %1486 = vst.msk [vmem:[%s273 + $0xb8] sm:$0xff] %vm1462, %v1453
      %1487 = vst.msk [vmem:[%s273 + $0xc0] sm:$0xff] %vm1462, %v1454
      %1488 = vst.msk [vmem:[%s273 + $0xc8] sm:$0xff] %vm1462, %v1455
      %1489 = vst.msk [vmem:[%s273 + $0xd0] sm:$0xff] %vm1462, %v1456
      %1490 = vst.msk [vmem:[%s273 + $0xd8] sm:$0xff] %vm1462, %v1457
      %1491 = vst.msk [vmem:[%s273 + $0xe0] sm:$0xff] %vm1462, %v1458
      %1492 = vst.msk [vmem:[%s273 + $0xe8] sm:$0xff] %vm1462, %v1459
      %1493 = vst.msk [vmem:[%s273 + $0xf0] sm:$0xff] %vm1462, %v1460
      %1494 = vst.msk [vmem:[%s273 + $0xf8] sm:$0xff] %vm1462, %v1461
      %s1495 = smul.u32 32, %s16
      %p1496 = scmp.lt.s32.totalorder %s1495, 63
      %s1497 = scalar_select %p1496, %s1495, 63
      %s1498 = smul.addr %s1497, 8
      %s1499 = scalar_lea.vmem %s5, %s1498
      // Predicated region
      $region41: #{basic_multi_update_block.15} parent=39 // pred_check
        %p1500 = pneg %p154
      $region42: #{basic_multi_update_block.15} parent=39 // pred_check_branch
        %1502 = sbr.rel (%p1500) target = $region44
      $region43: #{basic_multi_update_block.15} parent=39 // pred_region
        %s1503 = smul.u32 32, %s16
      $region44: #{basic_multi_update_block.15} parent=39 // pred_fallthru
        _
    $region40: #{basic_multi_update_block.15} parent=5 // pred_fallthru
      _
    %p1504 = scmp.le.s32.totalorder 2, %s11
    // Predicated region
    $region45: #{basic_multi_update_block.15} parent=5 // pred_check
      %p1505 = pneg %p1504
    $region46: #{basic_multi_update_block.15} parent=5 // pred_check_branch
      %1507 = sbr.rel (%p1505) target = $region48
    $region47: #{basic_multi_update_block.15} parent=5 // pred_region
      %s1508 = ssub.s32 %s11, 2
      // Predicated region
      $region49: #{basic_multi_update_block.15} parent=47 // pred_check
        %p1509 = pneg %p160
      $region50: #{basic_multi_update_block.15} parent=47 // pred_check_branch
        %1511 = sbr.rel (%p1509) target = $region52
      $region51: #{basic_multi_update_block.15} parent=47 // pred_region
        %s1512 = smul.u32 32, %s17
        %p1513 = scmp.lt.s32.totalorder %s1512, 63
        %s1514 = scalar_select %p1513, %s1512, 63
        %s1515 = smul.addr %s1514, 8
        %s1516 = scalar_lea.vmem %s5, %s1515
      $region52: #{basic_multi_update_block.15} parent=47 // pred_fallthru
        _
    $region48: #{basic_multi_update_block.15} parent=5 // pred_fallthru
      _
  $region6: #{basic_multi_update_block.15} parent=0 // loop_footer
    %s15 = sadd.s32 1, %s11
  $region7: #{basic_multi_update_block.15} parent=0 // loop_footer_branch
    %10 = sbr.rel target = $region3
  $region8: #{basic_multi_update_block.15} parent=0 // loop_exit
    _

// kernel: basic_multi_update_block.14
$region0: #{basic_multi_update_block.14}
  #allocation0 [shape = 'u32[]', space=smem, size = 0x4, offset = 0x4, fixed_abs, tag = 'smem constant byte address 0x4 - core index']
  #allocation1 [shape = 'u32[144,128]{1,0:T(1,128)}', space=vmem, size = 0x12000, scoped, tag = 'internal scratch']
  %s0 = inlined_call_operand.vmem [shape: bf16[512,432], index: 0, kind: input, shape index: {}]
  %s1 = inlined_call_operand.vmem [shape: bf16[432,16], index: 1, kind: input, shape index: {}]
  %s2 = inlined_call_operand.vmem [shape: f32[1,16], index: 2, kind: input, shape index: {}]
  %s3 = inlined_call_operand.vmem [shape: bf16[432,16], index: 3, kind: input, shape index: {}]
  %s4 = inlined_call_operand.vmem [shape: f32[1,16], index: 4, kind: input, shape index: {}]
  %s5 = inlined_call_operand.vmem [shape: f32[512,16], index: 5, kind: input, shape index: {}]
  %s6 = inlined_call_operand.vmem [shape: f32[512,16], index: 6, kind: output, shape index: {0}]
  %s7 = inlined_call_operand.vmem [shape: f32[512,16], index: 7, kind: output, shape index: {1}]
  %8 = xla_tuple %s6, %s7
  %s9 = sld [smem:[#allocation0]]
  $region65: #{basic_multi_update_block.14} parent=0
    _
  %s11 = ssub.s32 1, %s9
  %s12 = scalar_select 0, %s11, %s9
  loop: start=0, step=1, limit=4
  $region2: #{basic_multi_update_block.14} parent=0 // loop_pre_header
    _
  $region3: #{basic_multi_update_block.14} parent=0 // loop_header
    %s14 = sphi 0, %s18
    %p15 = scmp.ge.s32.totalorder %s14, 4
    %s24 = sphi 0, %s26
    %s27 = sphi 0, %s24
    %s28 = sphi 0, %s27
    %s44 = sphi 0, %s28
    %s48 = sphi 0, %s48
    %s50 = sphi 0, %s48
    %s51 = sphi 0, %s50
    %s65 = sphi 0, %s51
    %s69 = sphi 0, %s69
    %s71 = sphi 0, %s69
    %s72 = sphi 0, %s71
    %s86 = sphi 0, %s72
    %s90 = sphi 0, %s90
    %s92 = sphi 0, %s90
    %s93 = sphi 0, %s92
    %s107 = sphi 0, %s93
    %s111 = sphi 0, %s111
    %s113 = sphi 0, %s111
    %s114 = sphi 0, %s113
    %s128 = sphi 0, %s114
    %s134 = sphi 0, %s136
    %s137 = sphi 0, %s134
    %s138 = sphi 0, %s137
    %s154 = sphi 0, %s138
    %s160 = sphi 0, %s162
    %s163 = sphi 0, %s160
    %s164 = sphi 0, %s163
    %s180 = sphi 0, %s164
    %s186 = sphi 0, %s188
    %s189 = sphi 0, %s186
    %s190 = sphi 0, %s189
    %s206 = sphi 0, %s190
  $region4: #{basic_multi_update_block.14} parent=0 // loop_header_branch
    %17 = sbr.rel (%p15) target = $region8
  $region5: #{basic_multi_update_block.14} parent=0 // loop_body
    %s19 = ssub.s32 %s14, 1
    %s20 = ssub.s32 %s14, 2
    %s21 = sadd.s32 %s14, 1
    %s22 = ssub.s32 %s14, %s21
    %p23 = scmp.eq.s32.totalorder %s22, 0
    %s25 = sadd.s32 %s24, 1
    %s26 = scalar_select %p23, %s24, %s25
    %p29 = pneg %p23
    %p30 = scmp.eq.s32.totalorder %s14, 1
    %p31 = por %p29, %p30
    %p32 = scmp.ne.s32.totalorder %s24, %s27
    %p33 = scmp.eq.s32.totalorder %s14, 0
    %p34 = por %p32, %p33
    %p35 = scmp.ne.s32.totalorder %s24, %s27
    %p36 = scmp.eq.s32.totalorder %s19, 1
    %p37 = por %p35, %p36
    %p38 = scmp.ne.s32.totalorder %s27, %s28
    %p39 = scmp.eq.s32.totalorder %s19, 0
    %p40 = por %p38, %p39
    %p41 = scmp.ne.s32.totalorder %s27, %s28
    %p42 = scmp.eq.s32.totalorder %s20, 1
    %p43 = por %p41, %p42
    %p45 = scmp.ne.s32.totalorder %s28, %s44
    %p46 = scmp.eq.s32.totalorder %s20, 0
    %p47 = por %p45, %p46
    %s49 = sadd.s32 %s48, 1
    %p52 = scmp.eq.s32.totalorder %s14, 1
    %p53 = scmp.ne.s32.totalorder %s48, %s50
    %p54 = scmp.eq.s32.totalorder %s14, 0
    %p55 = por %p53, %p54
    %p56 = scmp.ne.s32.totalorder %s48, %s50
    %p57 = scmp.eq.s32.totalorder %s19, 1
    %p58 = por %p56, %p57
    %p59 = scmp.ne.s32.totalorder %s50, %s51
    %p60 = scmp.eq.s32.totalorder %s19, 0
    %p61 = por %p59, %p60
    %p62 = scmp.ne.s32.totalorder %s50, %s51
    %p63 = scmp.eq.s32.totalorder %s20, 1
    %p64 = por %p62, %p63
    %p66 = scmp.ne.s32.totalorder %s51, %s65
    %p67 = scmp.eq.s32.totalorder %s20, 0
    %p68 = por %p66, %p67
    %s70 = sadd.s32 %s69, 1
    %p73 = scmp.eq.s32.totalorder %s14, 1
    %p74 = scmp.ne.s32.totalorder %s69, %s71
    %p75 = scmp.eq.s32.totalorder %s14, 0
    %p76 = por %p74, %p75
    %p77 = scmp.ne.s32.totalorder %s69, %s71
    %p78 = scmp.eq.s32.totalorder %s19, 1
    %p79 = por %p77, %p78
    %p80 = scmp.ne.s32.totalorder %s71, %s72
    %p81 = scmp.eq.s32.totalorder %s19, 0
    %p82 = por %p80, %p81
    %p83 = scmp.ne.s32.totalorder %s71, %s72
    %p84 = scmp.eq.s32.totalorder %s20, 1
    %p85 = por %p83, %p84
    %p87 = scmp.ne.s32.totalorder %s72, %s86
    %p88 = scmp.eq.s32.totalorder %s20, 0
    %p89 = por %p87, %p88
    %s91 = sadd.s32 %s90, 1
    %p94 = scmp.eq.s32.totalorder %s14, 1
    %p95 = scmp.ne.s32.totalorder %s90, %s92
    %p96 = scmp.eq.s32.totalorder %s14, 0
    %p97 = por %p95, %p96
    %p98 = scmp.ne.s32.totalorder %s90, %s92
    %p99 = scmp.eq.s32.totalorder %s19, 1
    %p100 = por %p98, %p99
    %p101 = scmp.ne.s32.totalorder %s92, %s93
    %p102 = scmp.eq.s32.totalorder %s19, 0
    %p103 = por %p101, %p102
    %p104 = scmp.ne.s32.totalorder %s92, %s93
    %p105 = scmp.eq.s32.totalorder %s20, 1
    %p106 = por %p104, %p105
    %p108 = scmp.ne.s32.totalorder %s93, %s107
    %p109 = scmp.eq.s32.totalorder %s20, 0
    %p110 = por %p108, %p109
    %s112 = sadd.s32 %s111, 1
    %p115 = scmp.eq.s32.totalorder %s14, 1
    %p116 = scmp.ne.s32.totalorder %s111, %s113
    %p117 = scmp.eq.s32.totalorder %s14, 0
    %p118 = por %p116, %p117
    %p119 = scmp.ne.s32.totalorder %s111, %s113
    %p120 = scmp.eq.s32.totalorder %s19, 1
    %p121 = por %p119, %p120
    %p122 = scmp.ne.s32.totalorder %s113, %s114
    %p123 = scmp.eq.s32.totalorder %s19, 0
    %p124 = por %p122, %p123
    %p125 = scmp.ne.s32.totalorder %s113, %s114
    %p126 = scmp.eq.s32.totalorder %s20, 1
    %p127 = por %p125, %p126
    %p129 = scmp.ne.s32.totalorder %s114, %s128
    %p130 = scmp.eq.s32.totalorder %s20, 0
    %p131 = por %p129, %p130
    %s132 = ssub.s32 %s14, %s21
    %p133 = scmp.eq.s32.totalorder %s132, 0
    %s135 = sadd.s32 %s134, 1
    %s136 = scalar_select %p133, %s134, %s135
    %p139 = pneg %p133
    %p140 = scmp.eq.s32.totalorder %s14, 1
    %p141 = por %p139, %p140
    %p142 = scmp.ne.s32.totalorder %s134, %s137
    %p143 = scmp.eq.s32.totalorder %s14, 0
    %p144 = por %p142, %p143
    %p145 = scmp.ne.s32.totalorder %s134, %s137
    %p146 = scmp.eq.s32.totalorder %s19, 1
    %p147 = por %p145, %p146
    %p148 = scmp.ne.s32.totalorder %s137, %s138
    %p149 = scmp.eq.s32.totalorder %s19, 0
    %p150 = por %p148, %p149
    %p151 = scmp.ne.s32.totalorder %s137, %s138
    %p152 = scmp.eq.s32.totalorder %s20, 1
    %p153 = por %p151, %p152
    %p155 = scmp.ne.s32.totalorder %s138, %s154
    %p156 = scmp.eq.s32.totalorder %s20, 0
    %p157 = por %p155, %p156
    %s158 = ssub.s32 %s14, %s21
    %p159 = scmp.eq.s32.totalorder %s158, 0
    %s161 = sadd.s32 %s160, 1
    %s162 = scalar_select %p159, %s160, %s161
    %p165 = pneg %p159
    %p166 = scmp.eq.s32.totalorder %s14, 1
    %p167 = por %p165, %p166
    %p168 = scmp.ne.s32.totalorder %s160, %s163
    %p169 = scmp.eq.s32.totalorder %s14, 0
    %p170 = por %p168, %p169
    %p171 = scmp.ne.s32.totalorder %s160, %s163
    %p172 = scmp.eq.s32.totalorder %s19, 1
    %p173 = por %p171, %p172
    %p174 = scmp.ne.s32.totalorder %s163, %s164
    %p175 = scmp.eq.s32.totalorder %s19, 0
    %p176 = por %p174, %p175
    %p177 = scmp.ne.s32.totalorder %s163, %s164
    %p178 = scmp.eq.s32.totalorder %s20, 1
    %p179 = por %p177, %p178
    %p181 = scmp.ne.s32.totalorder %s164, %s180
    %p182 = scmp.eq.s32.totalorder %s20, 0
    %p183 = por %p181, %p182
    %s184 = ssub.s32 %s14, %s21
    %p185 = scmp.eq.s32.totalorder %s184, 0
    %s187 = sadd.s32 %s186, 1
    %s188 = scalar_select %p185, %s186, %s187
    %p191 = pneg %p185
    %p192 = scmp.eq.s32.totalorder %s14, 1
    %p193 = por %p191, %p192
    %p194 = scmp.ne.s32.totalorder %s186, %s189
    %p195 = scmp.eq.s32.totalorder %s14, 0
    %p196 = por %p194, %p195
    %p197 = scmp.ne.s32.totalorder %s186, %s189
    %p198 = scmp.eq.s32.totalorder %s19, 1
    %p199 = por %p197, %p198
    %p200 = scmp.ne.s32.totalorder %s189, %s190
    %p201 = scmp.eq.s32.totalorder %s19, 0
    %p202 = por %p200, %p201
    %p203 = scmp.ne.s32.totalorder %s189, %s190
    %p204 = scmp.eq.s32.totalorder %s20, 1
    %p205 = por %p203, %p204
    %p207 = scmp.ne.s32.totalorder %s190, %s206
    %p208 = scmp.eq.s32.totalorder %s20, 0
    %p209 = por %p207, %p208
    %p210 = scmp.le.s32.totalorder 1, %s14
    %p211 = scmp.lt.s32.totalorder %s14, 3
    %p212 = pnand %p210, %p211
    %p213 = pneg %p212
    // Predicated region
    $region9: #{basic_multi_update_block.14} parent=5 // pred_check
      _
    $region10: #{basic_multi_update_block.14} parent=5 // pred_check_branch
      %215 = sbr.rel (%p212) target = $region12
    $region11: #{basic_multi_update_block.14} parent=5 // pred_region
      %s216 = ssub.s32 %s14, 1
      // Predicated region
      $region13: #{basic_multi_update_block.14} parent=11 // pred_check
        %p217 = pneg %p61
      $region14: #{basic_multi_update_block.14} parent=11 // pred_check_branch
        %219 = sbr.rel (%p217) target = $region16
      $region15: #{basic_multi_update_block.14} parent=11 // pred_region
        _
      $region16: #{basic_multi_update_block.14} parent=11 // pred_fallthru
        _
      // Predicated region
      $region17: #{basic_multi_update_block.14} parent=11 // pred_check
        %p220 = pneg %p82
      $region18: #{basic_multi_update_block.14} parent=11 // pred_check_branch
        %222 = sbr.rel (%p220) target = $region20
      $region19: #{basic_multi_update_block.14} parent=11 // pred_region
        _
      $region20: #{basic_multi_update_block.14} parent=11 // pred_fallthru
        _
      // Predicated region
      $region21: #{basic_multi_update_block.14} parent=11 // pred_check
        %p223 = pneg %p103
      $region22: #{basic_multi_update_block.14} parent=11 // pred_check_branch
        %225 = sbr.rel (%p223) target = $region24
      $region23: #{basic_multi_update_block.14} parent=11 // pred_region
        _
      $region24: #{basic_multi_update_block.14} parent=11 // pred_fallthru
        _
      // Predicated region
      $region25: #{basic_multi_update_block.14} parent=11 // pred_check
        %p226 = pneg %p124
      $region26: #{basic_multi_update_block.14} parent=11 // pred_check_branch
        %228 = sbr.rel (%p226) target = $region28
      $region27: #{basic_multi_update_block.14} parent=11 // pred_region
        _
      $region28: #{basic_multi_update_block.14} parent=11 // pred_fallthru
        _
    $region12: #{basic_multi_update_block.14} parent=5 // pred_fallthru
      _
    %p229 = scmp.lt.s32.totalorder %s14, 2
    // Predicated region
    $region29: #{basic_multi_update_block.14} parent=5 // pred_check
      %p230 = pneg %p229
    $region30: #{basic_multi_update_block.14} parent=5 // pred_check_branch
      %232 = sbr.rel (%p230) target = $region32
    $region31: #{basic_multi_update_block.14} parent=5 // pred_region
      // Predicated region
      $region33: #{basic_multi_update_block.14} parent=31 // pred_check
        %p233 = pneg %p34
      $region34: #{basic_multi_update_block.14} parent=31 // pred_check_branch
        %235 = sbr.rel (%p233) target = $region36
      $region35: #{basic_multi_update_block.14} parent=31 // pred_region
        %s236 = smul.u32 32, %s14
        %p237 = scmp.lt.s32.totalorder %s236, 63
        %s238 = scalar_select %p237, %s236, 63
        %s239 = smul.addr %s238, 4
        %s240 = smul.addr %s239, 4
        %s241 = scalar_lea.vmem %s0, %s240
        %s242 = smul.u32 32, %s14
      $region36: #{basic_multi_update_block.14} parent=31 // pred_fallthru
        _
      // Predicated region
      $region37: #{basic_multi_update_block.14} parent=31 // pred_check
        %p243 = pneg %p144
      $region38: #{basic_multi_update_block.14} parent=31 // pred_check_branch
        %245 = sbr.rel (%p243) target = $region40
      $region39: #{basic_multi_update_block.14} parent=31 // pred_region
        %s246 = smul.u32 32, %s14
        %p247 = scmp.lt.s32.totalorder %s246, 63
        %s248 = scalar_select %p247, %s246, 63
        %s249 = smul.addr %s248, 8
        %s250 = scalar_lea.vmem %s5, %s249
        %s251 = smul.u32 32, %s14
      $region40: #{basic_multi_update_block.14} parent=31 // pred_fallthru
        _
    $region32: #{basic_multi_update_block.14} parent=5 // pred_fallthru
      _
    %p252 = scmp.le.s32.totalorder 1, %s14
    %p253 = scmp.lt.s32.totalorder %s14, 3
    %p254 = pnand %p252, %p253
    %p255 = pneg %p254
    // Predicated region
    $region41: #{basic_multi_update_block.14} parent=5 // pred_check
      _
    $region42: #{basic_multi_update_block.14} parent=5 // pred_check_branch
      %257 = sbr.rel (%p254) target = $region44
    $region43: #{basic_multi_update_block.14} parent=5 // pred_region
      %s258 = ssub.s32 %s14, 1
      %s259 = smul.u32 32, %s19
      %p260 = scmp.lt.s32.totalorder %s259, 63
      %s261 = scalar_select %p260, %s259, 63
      %s262 = smul.addr %s261, 4
      %s263 = smul.addr %s262, 4
      %s264 = scalar_lea.vmem %s0, %s263
      %p265 = pneg %p40
      %p266 = pneg %p37
      %p267 = pneg %p61
      %p268 = pneg %p58
      %p269 = pneg %p82
      %p270 = pneg %p79
      %p271 = pneg %p103
      %p272 = pneg %p100
      %p273 = pneg %p124
      %p274 = pneg %p121
      %s275 = smul.u32 32, %s19
      %p276 = scmp.lt.s32.totalorder %s275, 63
      %s277 = scalar_select %p276, %s275, 63
      %s278 = smul.addr %s277, 8
      %s279 = scalar_lea.vmem %s5, %s278
      %p280 = pneg %p150
      %p281 = pneg %p147
      %p282 = pneg %p176
      %p283 = pneg %p173
      %s284 = smul.u32 32, %s19
      %p285 = scmp.lt.s32.totalorder %s284, 63
      %s286 = scalar_select %p285, %s284, 63
      %s287 = smul.addr %s286, 8
      %s288 = scalar_lea.vmem %s6, %s287
      %p289 = pneg %p202
      %p290 = pneg %p199
      %s291 = smul.u32 32, %s19
      %p292 = scmp.lt.s32.totalorder %s291, 63
      %s293 = scalar_select %p292, %s291, 63
      %s294 = smul.addr %s293, 8
      %s295 = scalar_lea.vmem %s7, %s294
      %s296 = smul.u32 32, %s19
      %p297 = scmp.lt.s32.totalorder %s296, 63
      %s298 = scalar_select %p297, %s296, 63
      %s299 = smul.addr %s298, 4
      %s300 = smul.addr %s299, 4
      %s301 = scalar_lea.vmem %s0, %s300
      %s302 = smul.u32 32, %s19
      %s303 = smul.u32 32, %s19
      %p304 = scmp.lt.s32.totalorder %s303, 63
      %s305 = scalar_select %p304, %s303, 63
      %s306 = smul.addr %s305, 8
      %s307 = scalar_lea.vmem %s5, %s306
      %s308 = smul.u32 32, %s19
      %s309 = smul.u32 32, %s19
      %p310 = scmp.lt.s32.totalorder %s309, 63
      %s311 = scalar_select %p310, %s309, 63
      %s312 = smul.addr %s311, 8
      %s313 = scalar_lea.vmem %s6, %s312
      %s314 = smul.u32 32, %s19
      %s315 = smul.u32 32, %s19
      %p316 = scmp.lt.s32.totalorder %s315, 63
      %s317 = scalar_select %p316, %s315, 63
      %s318 = smul.addr %s317, 8
      %s319 = scalar_lea.vmem %s7, %s318
      %s320 = smul.u32 32, %s19
      %v322 = vld [vmem:[%s301] sm:$0xff]
      %v323 = vld [vmem:[%s301 + $0x8] sm:$0xff]
      %v324 = vld [vmem:[%s301 + $0x10] sm:$0xff]
      %v325 = vld [vmem:[%s301 + $0x18] sm:$0xff]
      %v326 = vld [vmem:[%s301 + $0x20] sm:$0xff]
      %v327 = vld [vmem:[%s301 + $0x28] sm:$0xff]
      %v328 = vld [vmem:[%s301 + $0x30] sm:$0xff]
      %v329 = vld [vmem:[%s301 + $0x38] sm:$0xff]
      %v330 = vld [vmem:[%s301 + $0x40] sm:$0xff]
      %v331 = vld [vmem:[%s301 + $0x48] sm:$0xff]
      %v332 = vld [vmem:[%s301 + $0x50] sm:$0xff]
      %v333 = vld [vmem:[%s301 + $0x58] sm:$0xff]
      %v334 = vld [vmem:[%s301 + $0x60] sm:$0xff]
      %v335 = vld [vmem:[%s301 + $0x68] sm:$0xff]
      %v336 = vld [vmem:[%s301 + $0x70] sm:$0xff]
      %v337 = vld [vmem:[%s301 + $0x78] sm:$0xff]
      %v338 = vld [vmem:[%s301 + $0x80] sm:$0xff]
      %v339 = vld [vmem:[%s301 + $0x88] sm:$0xff]
      %v340 = vld [vmem:[%s301 + $0x90] sm:$0xff]
      %v341 = vld [vmem:[%s301 + $0x98] sm:$0xff]
      %v342 = vld [vmem:[%s301 + $0xa0] sm:$0xff]
      %v343 = vld [vmem:[%s301 + $0xa8] sm:$0xff]
      %v344 = vld [vmem:[%s301 + $0xb0] sm:$0xff]
      %v345 = vld [vmem:[%s301 + $0xb8] sm:$0xff]
      %v346 = vld [vmem:[%s301 + $0xc0] sm:$0xff]
      %v347 = vld [vmem:[%s301 + $0xc8] sm:$0xff]
      %v348 = vld [vmem:[%s301 + $0xd0] sm:$0xff]
      %v349 = vld [vmem:[%s301 + $0xd8] sm:$0xff]
      %v350 = vld [vmem:[%s301 + $0xe0] sm:$0xff]
      %v351 = vld [vmem:[%s301 + $0xe8] sm:$0xff]
      %v352 = vld [vmem:[%s301 + $0xf0] sm:$0xff]
      %v353 = vld [vmem:[%s301 + $0xf8] sm:$0xff]
      %v354 = vld [vmem:[%s301 + $0x100] sm:$0xff]
      %v355 = vld [vmem:[%s301 + $0x108] sm:$0xff]
      %v356 = vld [vmem:[%s301 + $0x110] sm:$0xff]
      %v357 = vld [vmem:[%s301 + $0x118] sm:$0xff]
      %v358 = vld [vmem:[%s301 + $0x120] sm:$0xff]
      %v359 = vld [vmem:[%s301 + $0x128] sm:$0xff]
      %v360 = vld [vmem:[%s301 + $0x130] sm:$0xff]
      %v361 = vld [vmem:[%s301 + $0x138] sm:$0xff]
      %v362 = vld [vmem:[%s301 + $0x140] sm:$0xff]
      %v363 = vld [vmem:[%s301 + $0x148] sm:$0xff]
      %v364 = vld [vmem:[%s301 + $0x150] sm:$0xff]
      %v365 = vld [vmem:[%s301 + $0x158] sm:$0xff]
      %v366 = vld [vmem:[%s301 + $0x160] sm:$0xff]
      %v367 = vld [vmem:[%s301 + $0x168] sm:$0xff]
      %v368 = vld [vmem:[%s301 + $0x170] sm:$0xff]
      %v369 = vld [vmem:[%s301 + $0x178] sm:$0xff]
      %v370 = vld [vmem:[%s301 + $0x180] sm:$0xff]
      %v371 = vld [vmem:[%s301 + $0x188] sm:$0xff]
      %v372 = vld [vmem:[%s301 + $0x190] sm:$0xff]
      %v373 = vld [vmem:[%s301 + $0x198] sm:$0xff]
      %v374 = vld [vmem:[%s301 + $0x1a0] sm:$0xff]
      %v375 = vld [vmem:[%s301 + $0x1a8] sm:$0xff]
      %v376 = vld [vmem:[%s301 + $0x1b0] sm:$0xff]
      %v377 = vld [vmem:[%s301 + $0x1b8] sm:$0xff]
      %v378 = vld [vmem:[%s301 + $0x1c0] sm:$0xff]
      %v379 = vld [vmem:[%s301 + $0x1c8] sm:$0xff]
      %v380 = vld [vmem:[%s301 + $0x1d0] sm:$0xff]
      %v381 = vld [vmem:[%s301 + $0x1d8] sm:$0xff]
      %v382 = vld [vmem:[%s301 + $0x1e0] sm:$0xff]
      %v383 = vld [vmem:[%s301 + $0x1e8] sm:$0xff]
      %v384 = vld [vmem:[%s301 + $0x1f0] sm:$0xff]
      %v385 = vld [vmem:[%s301 + $0x1f8] sm:$0xff]
      %v386 = vld [vmem:[%s1] sm:$0xf]
      %v387 = vld [vmem:[%s1 + $0x4] sm:$0xf]
      %v388 = vld [vmem:[%s1 + $0x8] sm:$0xf]
      %v389 = vld [vmem:[%s1 + $0xc] sm:$0xf]
      %v390 = vld [vmem:[%s1 + $0x10] sm:$0xf]
      %v391 = vld [vmem:[%s1 + $0x14] sm:$0xf]
      %v392 = vld [vmem:[%s1 + $0x18] sm:$0xf]
      %v393 = vld [vmem:[%s1 + $0x1c] sm:$0xf]
      %v394 = vld [vmem:[%s1 + $0x20] sm:$0xf]
      %v395 = vld [vmem:[%s1 + $0x24] sm:$0xf]
      %v396 = vld [vmem:[%s1 + $0x28] sm:$0xf]
      %v397 = vld [vmem:[%s1 + $0x2c] sm:$0xf]
      %v398 = vld [vmem:[%s1 + $0x30] sm:$0xf]
      %v399 = vld [vmem:[%s1 + $0x34] sm:$0xf]
      %v400 = vld [vmem:[%s1 + $0x38] sm:$0xf]
      %v401 = vld [vmem:[%s1 + $0x3c] sm:$0xf]
      %v402 = vld [vmem:[%s1 + $0x40] sm:$0xf]
      %v403 = vld [vmem:[%s1 + $0x44] sm:$0xf]
      %v404 = vld [vmem:[%s1 + $0x48] sm:$0xf]
      %v405 = vld [vmem:[%s1 + $0x4c] sm:$0xf]
      %v406 = vld [vmem:[%s1 + $0x50] sm:$0xf]
      %v407 = vld [vmem:[%s1 + $0x54] sm:$0xf]
      %v408 = vld [vmem:[%s1 + $0x58] sm:$0xf]
      %v409 = vld [vmem:[%s1 + $0x5c] sm:$0xf]
      %v410 = vld [vmem:[%s1 + $0x60] sm:$0xf]
      %v411 = vld [vmem:[%s1 + $0x64] sm:$0xf]
      %v412 = vld [vmem:[%s1 + $0x68] sm:$0xf]
      %v413 = vld [vmem:[%s1 + $0x6c] sm:$0xf]
      %v414 = vld [vmem:[%s1 + $0x70] sm:$0xf]
      %v415 = vld [vmem:[%s1 + $0x74] sm:$0xf]
      %v416 = vld [vmem:[%s1 + $0x78] sm:$0xf]
      %v417 = vld [vmem:[%s1 + $0x7c] sm:$0xf]
      %v418 = vld [vmem:[%s1 + $0x80] sm:$0xf]
      %v419 = vld [vmem:[%s1 + $0x84] sm:$0xf]
      %v420 = vld [vmem:[%s1 + $0x88] sm:$0xf]
      %v421 = vld [vmem:[%s1 + $0x8c] sm:$0xf]
      %v422 = vld [vmem:[%s1 + $0x90] sm:$0xf]
      %v423 = vld [vmem:[%s1 + $0x94] sm:$0xf]
      %v424 = vld [vmem:[%s1 + $0x98] sm:$0xf]
      %v425 = vld [vmem:[%s1 + $0x9c] sm:$0xf]
      %v426 = vld [vmem:[%s1 + $0xa0] sm:$0xf]
      %v427 = vld [vmem:[%s1 + $0xa4] sm:$0xf]
      %v428 = vld [vmem:[%s1 + $0xa8] sm:$0xf]
      %v429 = vld [vmem:[%s1 + $0xac] sm:$0xf]
      %v430 = vld [vmem:[%s1 + $0xb0] sm:$0xf]
      %v431 = vld [vmem:[%s1 + $0xb4] sm:$0xf]
      %v432 = vld [vmem:[%s1 + $0xb8] sm:$0xf]
      %v433 = vld [vmem:[%s1 + $0xbc] sm:$0xf]
      %v434 = vld [vmem:[%s1 + $0xc0] sm:$0xf]
      %v435 = vld [vmem:[%s1 + $0xc4] sm:$0xf]
      %v436 = vld [vmem:[%s1 + $0xc8] sm:$0xf]
      %v437 = vld [vmem:[%s1 + $0xcc] sm:$0xf]
      %v438 = vld [vmem:[%s1 + $0xd0] sm:$0xf]
      %v439 = vld [vmem:[%s1 + $0xd4] sm:$0xf]
      %v440 = vld [vmem:[%s2] sm:$0x1]
      %v442 = vlaneseq
      %v443 = vshrl.u32 %v442, 7
      %v444 = vsub.s32 0, %v443
      %v445 = vrot.slane %v440, %v444
      %v511 = vunpack.c.l.b16 %v322
      %v512 = vunpack.c.h.b16 %v322
      %v513 = vunpack.c.l.b16 %v323
      %v514 = vunpack.c.h.b16 %v323
      %v515 = vunpack.c.l.b16 %v324
      %v516 = vunpack.c.h.b16 %v324
      %v517 = vunpack.c.l.b16 %v325
      %v518 = vunpack.c.h.b16 %v325
      %v519 = vunpack.c.l.b16 %v326
      %v520 = vunpack.c.h.b16 %v326
      %v521 = vunpack.c.l.b16 %v327
      %v522 = vunpack.c.h.b16 %v327
      %v523 = vunpack.c.l.b16 %v328
      %v524 = vunpack.c.h.b16 %v328
      %v525 = vunpack.c.l.b16 %v329
      %v526 = vunpack.c.h.b16 %v329
      %v527 = vunpack.c.l.b16 %v330
      %v528 = vunpack.c.h.b16 %v330
      %v529 = vunpack.c.l.b16 %v331
      %v530 = vunpack.c.h.b16 %v331
      %v531 = vunpack.c.l.b16 %v332
      %v532 = vunpack.c.h.b16 %v332
      %v533 = vunpack.c.l.b16 %v333
      %v534 = vunpack.c.h.b16 %v333
      %v535 = vunpack.c.l.b16 %v334
      %v536 = vunpack.c.h.b16 %v334
      %v537 = vunpack.c.l.b16 %v335
      %v538 = vunpack.c.h.b16 %v335
      %v539 = vunpack.c.l.b16 %v336
      %v540 = vunpack.c.h.b16 %v336
      %v541 = vunpack.c.l.b16 %v337
      %v542 = vunpack.c.h.b16 %v337
      %v543 = vunpack.c.l.b16 %v338
      %v544 = vunpack.c.h.b16 %v338
      %v545 = vunpack.c.l.b16 %v339
      %v546 = vunpack.c.h.b16 %v339
      %v547 = vunpack.c.l.b16 %v340
      %v548 = vunpack.c.h.b16 %v340
      %v549 = vunpack.c.l.b16 %v341
      %v550 = vunpack.c.h.b16 %v341
      %v551 = vunpack.c.l.b16 %v342
      %v552 = vunpack.c.h.b16 %v342
      %v553 = vunpack.c.l.b16 %v343
      %v554 = vunpack.c.h.b16 %v343
      %v555 = vunpack.c.l.b16 %v344
      %v556 = vunpack.c.h.b16 %v344
      %v557 = vunpack.c.l.b16 %v345
      %v558 = vunpack.c.h.b16 %v345
      %v559 = vunpack.c.l.b16 %v346
      %v560 = vunpack.c.h.b16 %v346
      %v561 = vunpack.c.l.b16 %v347
      %v562 = vunpack.c.h.b16 %v347
      %v563 = vunpack.c.l.b16 %v348
      %v564 = vunpack.c.h.b16 %v348
      %v565 = vunpack.c.l.b16 %v349
      %v566 = vunpack.c.h.b16 %v349
      %v567 = vunpack.c.l.b16 %v350
      %v568 = vunpack.c.h.b16 %v350
      %v569 = vunpack.c.l.b16 %v351
      %v570 = vunpack.c.h.b16 %v351
      %v571 = vunpack.c.l.b16 %v352
      %v572 = vunpack.c.h.b16 %v352
      %v573 = vunpack.c.l.b16 %v353
      %v574 = vunpack.c.h.b16 %v353
      %v575 = vunpack.c.l.b16 %v354
      %v576 = vunpack.c.h.b16 %v354
      %v577 = vunpack.c.l.b16 %v355
      %v578 = vunpack.c.h.b16 %v355
      %v579 = vunpack.c.l.b16 %v356
      %v580 = vunpack.c.h.b16 %v356
      %v581 = vunpack.c.l.b16 %v357
      %v582 = vunpack.c.h.b16 %v357
      %v583 = vunpack.c.l.b16 %v358
      %v584 = vunpack.c.h.b16 %v358
      %v585 = vunpack.c.l.b16 %v359
      %v586 = vunpack.c.h.b16 %v359
      %v587 = vunpack.c.l.b16 %v360
      %v588 = vunpack.c.h.b16 %v360
      %v589 = vunpack.c.l.b16 %v361
      %v590 = vunpack.c.h.b16 %v361
      %v591 = vunpack.c.l.b16 %v362
      %v592 = vunpack.c.h.b16 %v362
      %v593 = vunpack.c.l.b16 %v363
      %v594 = vunpack.c.h.b16 %v363
      %v595 = vunpack.c.l.b16 %v364
      %v596 = vunpack.c.h.b16 %v364
      %v597 = vunpack.c.l.b16 %v365
      %v598 = vunpack.c.h.b16 %v365
      %v599 = vunpack.c.l.b16 %v366
      %v600 = vunpack.c.h.b16 %v366
      %v601 = vunpack.c.l.b16 %v367
      %v602 = vunpack.c.h.b16 %v367
      %v603 = vunpack.c.l.b16 %v368
      %v604 = vunpack.c.h.b16 %v368
      %v605 = vunpack.c.l.b16 %v369
      %v606 = vunpack.c.h.b16 %v369
      %v607 = vunpack.c.l.b16 %v370
      %v608 = vunpack.c.h.b16 %v370
      %v609 = vunpack.c.l.b16 %v371
      %v610 = vunpack.c.h.b16 %v371
      %v611 = vunpack.c.l.b16 %v372
      %v612 = vunpack.c.h.b16 %v372
      %v613 = vunpack.c.l.b16 %v373
      %v614 = vunpack.c.h.b16 %v373
      %v615 = vunpack.c.l.b16 %v374
      %v616 = vunpack.c.h.b16 %v374
      %v617 = vunpack.c.l.b16 %v375
      %v618 = vunpack.c.h.b16 %v375
      %v619 = vunpack.c.l.b16 %v376
      %v620 = vunpack.c.h.b16 %v376
      %v621 = vunpack.c.l.b16 %v377
      %v622 = vunpack.c.h.b16 %v377
      %v623 = vunpack.c.l.b16 %v378
      %v624 = vunpack.c.h.b16 %v378
      %v625 = vunpack.c.l.b16 %v379
      %v626 = vunpack.c.h.b16 %v379
      %v627 = vunpack.c.l.b16 %v380
      %v628 = vunpack.c.h.b16 %v380
      %v629 = vunpack.c.l.b16 %v381
      %v630 = vunpack.c.h.b16 %v381
      %v631 = vunpack.c.l.b16 %v382
      %v632 = vunpack.c.h.b16 %v382
      %v633 = vunpack.c.l.b16 %v383
      %v634 = vunpack.c.h.b16 %v383
      %v635 = vunpack.c.l.b16 %v384
      %v636 = vunpack.c.h.b16 %v384
      %v637 = vunpack.c.l.b16 %v385
      %v638 = vunpack.c.h.b16 %v385
      %v639 = vpack.c.b16 %v515, %v511
      %v640 = vpack.c.b16 %v516, %v512
      %v641 = vpack.c.b16 %v517, %v513
      %v642 = vpack.c.b16 %v518, %v514
      %v643 = vpack.c.b16 %v523, %v519
      %v644 = vpack.c.b16 %v524, %v520
      %v645 = vpack.c.b16 %v525, %v521
      %v646 = vpack.c.b16 %v526, %v522
      %v647 = vpack.c.b16 %v531, %v527
      %v648 = vpack.c.b16 %v532, %v528
      %v649 = vpack.c.b16 %v533, %v529
      %v650 = vpack.c.b16 %v534, %v530
      %v651 = vpack.c.b16 %v539, %v535
      %v652 = vpack.c.b16 %v540, %v536
      %v653 = vpack.c.b16 %v541, %v537
      %v654 = vpack.c.b16 %v542, %v538
      %v655 = vpack.c.b16 %v547, %v543
      %v656 = vpack.c.b16 %v548, %v544
      %v657 = vpack.c.b16 %v549, %v545
      %v658 = vpack.c.b16 %v550, %v546
      %v659 = vpack.c.b16 %v555, %v551
      %v660 = vpack.c.b16 %v556, %v552
      %v661 = vpack.c.b16 %v557, %v553
      %v662 = vpack.c.b16 %v558, %v554
      %v663 = vpack.c.b16 %v563, %v559
      %v664 = vpack.c.b16 %v564, %v560
      %v665 = vpack.c.b16 %v565, %v561
      %v666 = vpack.c.b16 %v566, %v562
      %v667 = vpack.c.b16 %v571, %v567
      %v668 = vpack.c.b16 %v572, %v568
      %v669 = vpack.c.b16 %v573, %v569
      %v670 = vpack.c.b16 %v574, %v570
      %v671 = vpack.c.b16 %v579, %v575
      %v672 = vpack.c.b16 %v580, %v576
      %v673 = vpack.c.b16 %v581, %v577
      %v674 = vpack.c.b16 %v582, %v578
      %v675 = vpack.c.b16 %v587, %v583
      %v676 = vpack.c.b16 %v588, %v584
      %v677 = vpack.c.b16 %v589, %v585
      %v678 = vpack.c.b16 %v590, %v586
      %v679 = vpack.c.b16 %v595, %v591
      %v680 = vpack.c.b16 %v596, %v592
      %v681 = vpack.c.b16 %v597, %v593
      %v682 = vpack.c.b16 %v598, %v594
      %v683 = vpack.c.b16 %v603, %v599
      %v684 = vpack.c.b16 %v604, %v600
      %v685 = vpack.c.b16 %v605, %v601
      %v686 = vpack.c.b16 %v606, %v602
      %v687 = vpack.c.b16 %v611, %v607
      %v688 = vpack.c.b16 %v612, %v608
      %v689 = vpack.c.b16 %v613, %v609
      %v690 = vpack.c.b16 %v614, %v610
      %v691 = vpack.c.b16 %v619, %v615
      %v692 = vpack.c.b16 %v620, %v616
      %v693 = vpack.c.b16 %v621, %v617
      %v694 = vpack.c.b16 %v622, %v618
      %v695 = vpack.c.b16 %v627, %v623
      %v696 = vpack.c.b16 %v628, %v624
      %v697 = vpack.c.b16 %v629, %v625
      %v698 = vpack.c.b16 %v630, %v626
      %v699 = vpack.c.b16 %v635, %v631
      %v700 = vpack.c.b16 %v636, %v632
      %v701 = vpack.c.b16 %v637, %v633
      %v702 = vpack.c.b16 %v638, %v634
      %v805 = vunpack.c.l.b16 %v386
      %v806 = vunpack.c.l.b16 %v387
      %v807 = vunpack.c.l.b16 %v388
      %v808 = vunpack.c.l.b16 %v389
      %v809 = vunpack.c.l.b16 %v390
      %v810 = vunpack.c.l.b16 %v391
      %v811 = vunpack.c.l.b16 %v392
      %v812 = vunpack.c.l.b16 %v393
      %v813 = vunpack.c.l.b16 %v394
      %v814 = vunpack.c.l.b16 %v395
      %v815 = vunpack.c.l.b16 %v396
      %v816 = vunpack.c.l.b16 %v397
      %v817 = vunpack.c.l.b16 %v398
      %v818 = vunpack.c.l.b16 %v399
      %v819 = vunpack.c.l.b16 %v400
      %v820 = vunpack.c.l.b16 %v401
      %v821 = vunpack.c.l.b16 %v402
      %v822 = vunpack.c.l.b16 %v403
      %v823 = vunpack.c.l.b16 %v404
      %v824 = vunpack.c.l.b16 %v405
      %v825 = vunpack.c.l.b16 %v406
      %v826 = vunpack.c.l.b16 %v407
      %v827 = vunpack.c.l.b16 %v408
      %v828 = vunpack.c.l.b16 %v409
      %v829 = vunpack.c.l.b16 %v410
      %v830 = vunpack.c.l.b16 %v411
      %v831 = vunpack.c.l.b16 %v412
      %v832 = vunpack.c.l.b16 %v413
      %v833 = vunpack.c.l.b16 %v414
      %v834 = vunpack.c.l.b16 %v415
      %v835 = vunpack.c.l.b16 %v416
      %v836 = vunpack.c.l.b16 %v417
      %v837 = vunpack.c.l.b16 %v418
      %v838 = vunpack.c.l.b16 %v419
      %v839 = vunpack.c.l.b16 %v420
      %v840 = vunpack.c.l.b16 %v421
      %v841 = vunpack.c.l.b16 %v422
      %v842 = vunpack.c.l.b16 %v423
      %v843 = vunpack.c.l.b16 %v424
      %v844 = vunpack.c.l.b16 %v425
      %v845 = vunpack.c.l.b16 %v426
      %v846 = vunpack.c.l.b16 %v427
      %v847 = vunpack.c.l.b16 %v428
      %v848 = vunpack.c.l.b16 %v429
      %v849 = vunpack.c.l.b16 %v430
      %v850 = vunpack.c.l.b16 %v431
      %v851 = vunpack.c.l.b16 %v432
      %v852 = vunpack.c.l.b16 %v433
      %v853 = vunpack.c.l.b16 %v434
      %v854 = vunpack.c.l.b16 %v435
      %v855 = vunpack.c.l.b16 %v436
      %v856 = vunpack.c.l.b16 %v437
      %v857 = vunpack.c.l.b16 %v438
      %v858 = vunpack.c.l.b16 %v439
      %v859 = vpack.c.b16 %v806, %v805
      %v860 = vpack.c.b16 %v808, %v807
      %v861 = vpack.c.b16 %v810, %v809
      %v862 = vpack.c.b16 %v812, %v811
      %v863 = vpack.c.b16 %v814, %v813
      %v864 = vpack.c.b16 %v816, %v815
      %v865 = vpack.c.b16 %v818, %v817
      %v866 = vpack.c.b16 %v820, %v819
      %v867 = vpack.c.b16 %v822, %v821
      %v868 = vpack.c.b16 %v824, %v823
      %v869 = vpack.c.b16 %v826, %v825
      %v870 = vpack.c.b16 %v828, %v827
      %v871 = vpack.c.b16 %v830, %v829
      %v872 = vpack.c.b16 %v832, %v831
      %v873 = vpack.c.b16 %v834, %v833
      %v874 = vpack.c.b16 %v836, %v835
      %v875 = vpack.c.b16 %v838, %v837
      %v876 = vpack.c.b16 %v840, %v839
      %v877 = vpack.c.b16 %v842, %v841
      %v878 = vpack.c.b16 %v844, %v843
      %v879 = vpack.c.b16 %v846, %v845
      %v880 = vpack.c.b16 %v848, %v847
      %v881 = vpack.c.b16 %v850, %v849
      %v882 = vpack.c.b16 %v852, %v851
      %v883 = vpack.c.b16 %v854, %v853
      %v884 = vpack.c.b16 %v856, %v855
      %v885 = vpack.c.b16 %v858, %v857
      %vm913 = vcmask 392192
      %v915 = vsel %vm913, %v642, 0
      %v918 = vsel %vm913, %v646, 0
      %v921 = vsel %vm913, %v650, 0
      %v924 = vsel %vm913, %v654, 0
      %v927 = vsel %vm913, %v658, 0
      %v930 = vsel %vm913, %v662, 0
      %v933 = vsel %vm913, %v666, 0
      %v936 = vsel %vm913, %v670, 0
      %v939 = vsel %vm913, %v674, 0
      %v942 = vsel %vm913, %v678, 0
      %v945 = vsel %vm913, %v682, 0
      %v948 = vsel %vm913, %v686, 0
      %v951 = vsel %vm913, %v690, 0
      %v954 = vsel %vm913, %v694, 0
      %v957 = vsel %vm913, %v698, 0
      %v960 = vsel %vm913, %v702, 0
      %962 = vmatprep.subr.bf16.mxu0 0
      %963 = vmatpush1.bf16.msra.mxu0 %v859
      %964 = vmatprep.subr.bf16.mxu0 0
      %965 = vmatpush1.bf16.msra.mxu0 %v860
      %966 = vmatprep.subr.bf16.mxu0 0
      %967 = vmatpush1.bf16.msra.mxu0 %v861
      %968 = vmatprep.subr.bf16.mxu0 0
      %969 = vmatpush1.bf16.msra.mxu0 %v862
      %970 = vmatprep.subr.bf16.mxu0 0
      %971 = vmatpush1.bf16.msra.mxu0 %v863
      %972 = vmatprep.subr.bf16.mxu0 0
      %973 = vmatpush1.bf16.msra.mxu0 %v864
      %974 = vmatprep.subr.bf16.mxu0 0
      %975 = vmatpush1.bf16.msra.mxu0 %v865
      %976 = vmatprep.subr.bf16.mxu0 0
      %977 = vmatpush1.bf16.msra.mxu0 %v866
      %978 = vmatprep.subr.bf16.mxu0 0
      %979 = vmatpush1.bf16.msra.mxu0 %v867
      %980 = vmatprep.subr.bf16.mxu0 0
      %981 = vmatpush1.bf16.msra.mxu0 %v868
      %982 = vmatprep.subr.bf16.mxu0 0
      %983 = vmatpush1.bf16.msra.mxu0 %v869
      %984 = vmatprep.subr.bf16.mxu0 0
      %985 = vmatpush1.bf16.msra.mxu0 %v870
      %986 = vmatprep.subr.bf16.mxu0 0
      %987 = vmatpush1.bf16.msra.mxu0 %v871
      %988 = vmatprep.subr.bf16.mxu0 0
      %989 = vmatpush1.bf16.msra.mxu0 %v872
      %990 = vmatprep.subr.bf16.mxu0 0
      %991 = vmatpush1.bf16.msra.mxu0 %v873
      %992 = vmatprep.subr.bf16.mxu0 0
      %993 = vmatpush1.bf16.msra.mxu0 %v874
      %994 = vmatprep.mubr.bf16.mxu0 %v640
      %995 = vmatmul.mubr.bf16.gmra.mrb[0].mxu0 %v639
      %v996 = vpop.f32.mrb[0].mxu0
      %v997 = vadd.f32 %v445, %v996
      %v998 = vpop.f32.mrb[0].mxu0
      %v999 = vpop.f32.mrb[0].mxu0
      %v1000 = vadd.f32 %v445, %v999
      %v1001 = vpop.f32.mrb[0].mxu0
      %1002 = vmatprep.mubr.bf16.mxu0 %v644
      %1003 = vmatmul.mubr.bf16.gmra.mrb[0].mxu0 %v643
      %v1004 = vpop.f32.mrb[0].mxu0
      %v1005 = vadd.f32 %v445, %v1004
      %v1006 = vpop.f32.mrb[0].mxu0
      %v1007 = vpop.f32.mrb[0].mxu0
      %v1008 = vadd.f32 %v445, %v1007
      %v1009 = vpop.f32.mrb[0].mxu0
      %1010 = vmatprep.mubr.bf16.mxu0 %v648
      %1011 = vmatmul.mubr.bf16.gmra.mrb[0].mxu0 %v647
      %v1012 = vpop.f32.mrb[0].mxu0
      %v1013 = vadd.f32 %v445, %v1012
      %v1014 = vpop.f32.mrb[0].mxu0
      %v1015 = vpop.f32.mrb[0].mxu0
      %v1016 = vadd.f32 %v445, %v1015
      %v1017 = vpop.f32.mrb[0].mxu0
      %1018 = vmatprep.mubr.bf16.mxu0 %v652
      %1019 = vmatmul.mubr.bf16.gmra.mrb[0].mxu0 %v651
      %v1020 = vpop.f32.mrb[0].mxu0
      %v1021 = vadd.f32 %v445, %v1020
      %v1022 = vpop.f32.mrb[0].mxu0
      %v1023 = vpop.f32.mrb[0].mxu0
      %v1024 = vadd.f32 %v445, %v1023
      %v1025 = vpop.f32.mrb[0].mxu0
      %1026 = vmatprep.mubr.bf16.mxu0 %v656
      %1027 = vmatmul.mubr.bf16.gmra.mrb[0].mxu0 %v655
      %v1028 = vpop.f32.mrb[0].mxu0
      %v1029 = vadd.f32 %v445, %v1028
      %v1030 = vpop.f32.mrb[0].mxu0
      %v1031 = vpop.f32.mrb[0].mxu0
      %v1032 = vadd.f32 %v445, %v1031
      %v1033 = vpop.f32.mrb[0].mxu0
      %1034 = vmatprep.mubr.bf16.mxu0 %v660
      %1035 = vmatmul.mubr.bf16.gmra.mrb[0].mxu0 %v659
      %v1036 = vpop.f32.mrb[0].mxu0
      %v1037 = vadd.f32 %v445, %v1036
      %v1038 = vpop.f32.mrb[0].mxu0
      %v1039 = vpop.f32.mrb[0].mxu0
      %v1040 = vadd.f32 %v445, %v1039
      %v1041 = vpop.f32.mrb[0].mxu0
      %1042 = vmatprep.mubr.bf16.mxu0 %v664
      %1043 = vmatmul.mubr.bf16.gmra.mrb[0].mxu0 %v663
      %v1044 = vpop.f32.mrb[0].mxu0
      %v1045 = vadd.f32 %v445, %v1044
      %v1046 = vpop.f32.mrb[0].mxu0
      %v1047 = vpop.f32.mrb[0].mxu0
      %v1048 = vadd.f32 %v445, %v1047
      %v1049 = vpop.f32.mrb[0].mxu0
      %1050 = vmatprep.mubr.bf16.mxu0 %v668
      %1051 = vmatmul.mubr.bf16.gmra.mrb[0].mxu0 %v667
      %v1052 = vpop.f32.mrb[0].mxu0
      %v1053 = vadd.f32 %v445, %v1052
      %v1054 = vpop.f32.mrb[0].mxu0
      %v1055 = vpop.f32.mrb[0].mxu0
      %v1056 = vadd.f32 %v445, %v1055
      %v1057 = vpop.f32.mrb[0].mxu0
      %1058 = vmatprep.mubr.bf16.mxu0 %v672
      %1059 = vmatmul.mubr.bf16.gmra.mrb[0].mxu0 %v671
      %v1060 = vpop.f32.mrb[0].mxu0
      %v1061 = vadd.f32 %v445, %v1060
      %v1062 = vpop.f32.mrb[0].mxu0
      %v1063 = vpop.f32.mrb[0].mxu0
      %v1064 = vadd.f32 %v445, %v1063
      %v1065 = vpop.f32.mrb[0].mxu0
      %1066 = vmatprep.mubr.bf16.mxu0 %v676
      %1067 = vmatmul.mubr.bf16.gmra.mrb[0].mxu0 %v675
      %v1068 = vpop.f32.mrb[0].mxu0
      %v1069 = vadd.f32 %v445, %v1068
      %v1070 = vpop.f32.mrb[0].mxu0
      %v1071 = vpop.f32.mrb[0].mxu0
      %v1072 = vadd.f32 %v445, %v1071
      %v1073 = vpop.f32.mrb[0].mxu0
      %1074 = vmatprep.mubr.bf16.mxu0 %v680
      %1075 = vmatmul.mubr.bf16.gmra.mrb[0].mxu0 %v679
      %v1076 = vpop.f32.mrb[0].mxu0
      %v1077 = vadd.f32 %v445, %v1076
      %v1078 = vpop.f32.mrb[0].mxu0
      %v1079 = vpop.f32.mrb[0].mxu0
      %v1080 = vadd.f32 %v445, %v1079
      %v1081 = vpop.f32.mrb[0].mxu0
      %1082 = vmatprep.mubr.bf16.mxu0 %v684
      %1083 = vmatmul.mubr.bf16.gmra.mrb[0].mxu0 %v683
      %v1084 = vpop.f32.mrb[0].mxu0
      %v1085 = vadd.f32 %v445, %v1084
      %v1086 = vpop.f32.mrb[0].mxu0
      %v1087 = vpop.f32.mrb[0].mxu0
      %v1088 = vadd.f32 %v445, %v1087
      %v1089 = vpop.f32.mrb[0].mxu0
      %1090 = vmatprep.mubr.bf16.mxu0 %v688
      %1091 = vmatmul.mubr.bf16.gmra.mrb[0].mxu0 %v687
      %v1092 = vpop.f32.mrb[0].mxu0
      %v1093 = vadd.f32 %v445, %v1092
      %v1094 = vpop.f32.mrb[0].mxu0
      %v1095 = vpop.f32.mrb[0].mxu0
      %v1096 = vadd.f32 %v445, %v1095
      %v1097 = vpop.f32.mrb[0].mxu0
      %1098 = vmatprep.mubr.bf16.mxu0 %v692
      %1099 = vmatmul.mubr.bf16.gmra.mrb[0].mxu0 %v691
      %v1100 = vpop.f32.mrb[0].mxu0
      %v1101 = vadd.f32 %v445, %v1100
      %v1102 = vpop.f32.mrb[0].mxu0
      %v1103 = vpop.f32.mrb[0].mxu0
      %v1104 = vadd.f32 %v445, %v1103
      %v1105 = vpop.f32.mrb[0].mxu0
      %1106 = vmatprep.mubr.bf16.mxu0 %v696
      %1107 = vmatmul.mubr.bf16.gmra.mrb[0].mxu0 %v695
      %v1108 = vpop.f32.mrb[0].mxu0
      %v1109 = vadd.f32 %v445, %v1108
      %v1110 = vpop.f32.mrb[0].mxu0
      %v1111 = vpop.f32.mrb[0].mxu0
      %v1112 = vadd.f32 %v445, %v1111
      %v1113 = vpop.f32.mrb[0].mxu0
      %1114 = vmatprep.mubr.bf16.mxu0 %v700
      %1115 = vmatmul.mubr.bf16.gmra.mrb[0].mxu0 %v699
      %v1116 = vpop.f32.mrb[0].mxu0
      %v1117 = vadd.f32 %v445, %v1116
      %v1118 = vpop.f32.mrb[0].mxu0
      %v1119 = vpop.f32.mrb[0].mxu0
      %v1120 = vadd.f32 %v445, %v1119
      %v1121 = vpop.f32.mrb[0].mxu0
      %1122 = vdwg.mxu0
      %1123 = vmatprep.subr.bf16.mxu0 0
      %1124 = vmatpush1.bf16.msra.mxu0 %v875
      %1125 = vmatprep.subr.bf16.mxu0 0
      %1126 = vmatpush1.bf16.msra.mxu0 %v876
      %1127 = vmatprep.subr.bf16.mxu0 0
      %1128 = vmatpush1.bf16.msra.mxu0 %v877
      %1129 = vmatprep.subr.bf16.mxu0 0
      %1130 = vmatpush1.bf16.msra.mxu0 %v878
      %1131 = vmatprep.subr.bf16.mxu0 0
      %1132 = vmatpush1.bf16.msra.mxu0 %v879
      %1133 = vmatprep.subr.bf16.mxu0 0
      %1134 = vmatpush1.bf16.msra.mxu0 %v880
      %1135 = vmatprep.subr.bf16.mxu0 0
      %1136 = vmatpush1.bf16.msra.mxu0 %v881
      %1137 = vmatprep.subr.bf16.mxu0 0
      %1138 = vmatpush1.bf16.msra.mxu0 %v882
      %1139 = vmatprep.subr.bf16.mxu0 0
      %1140 = vmatpush1.bf16.msra.mxu0 %v883
      %1141 = vmatprep.subr.bf16.mxu0 0
      %1142 = vmatpush1.bf16.msra.mxu0 %v884
      %1143 = vmatprep.subr.bf16.mxu0 0
      %1144 = vmatpush1.bf16.msra.mxu0 %v885
      %1145 = vmatprep.subr.bf16.mxu0 0
      %1146 = vmatpush1.bf16.msra.mxu0 0
      %1147 = vmatprep.subr.bf16.mxu0 0
      %1148 = vmatpush1.bf16.msra.mxu0 0
      %1149 = vmatprep.subr.bf16.mxu0 0
      %1150 = vmatpush1.bf16.msra.mxu0 0
      %1151 = vmatprep.subr.bf16.mxu0 0
      %1152 = vmatpush1.bf16.msra.mxu0 0
      %1153 = vmatprep.subr.bf16.mxu0 0
      %1154 = vmatpush1.bf16.msra.mxu0 0
      %1155 = vmatprep.mubr.bf16.mxu0 %v915
      %1156 = vmatmul.mubr.bf16.gmra.mrb[0].mxu0 %v641
      %v1157 = vpop.f32.mrb[0].mxu0
      %v1158 = vadd.f32 %v997, %v1157
      %v1159 = vpop.f32.mrb[0].mxu0
      %v1160 = vpop.f32.mrb[0].mxu0
      %v1161 = vadd.f32 %v1000, %v1160
      %v1162 = vpop.f32.mrb[0].mxu0
      %1163 = vmatprep.mubr.bf16.mxu0 %v918
      %1164 = vmatmul.mubr.bf16.gmra.mrb[0].mxu0 %v645
      %v1165 = vpop.f32.mrb[0].mxu0
      %v1166 = vadd.f32 %v1005, %v1165
      %v1167 = vpop.f32.mrb[0].mxu0
      %v1168 = vpop.f32.mrb[0].mxu0
      %v1169 = vadd.f32 %v1008, %v1168
      %v1170 = vpop.f32.mrb[0].mxu0
      %1171 = vmatprep.mubr.bf16.mxu0 %v921
      %1172 = vmatmul.mubr.bf16.gmra.mrb[0].mxu0 %v649
      %v1173 = vpop.f32.mrb[0].mxu0
      %v1174 = vadd.f32 %v1013, %v1173
      %v1175 = vpop.f32.mrb[0].mxu0
      %v1176 = vpop.f32.mrb[0].mxu0
      %v1177 = vadd.f32 %v1016, %v1176
      %v1178 = vpop.f32.mrb[0].mxu0
      %1179 = vmatprep.mubr.bf16.mxu0 %v924
      %1180 = vmatmul.mubr.bf16.gmra.mrb[0].mxu0 %v653
      %v1181 = vpop.f32.mrb[0].mxu0
      %v1182 = vadd.f32 %v1021, %v1181
      %v1183 = vpop.f32.mrb[0].mxu0
      %v1184 = vpop.f32.mrb[0].mxu0
      %v1185 = vadd.f32 %v1024, %v1184
      %v1186 = vpop.f32.mrb[0].mxu0
      %1187 = vmatprep.mubr.bf16.mxu0 %v927
      %1188 = vmatmul.mubr.bf16.gmra.mrb[0].mxu0 %v657
      %v1189 = vpop.f32.mrb[0].mxu0
      %v1190 = vadd.f32 %v1029, %v1189
      %v1191 = vpop.f32.mrb[0].mxu0
      %v1192 = vpop.f32.mrb[0].mxu0
      %v1193 = vadd.f32 %v1032, %v1192
      %v1194 = vpop.f32.mrb[0].mxu0
      %1195 = vmatprep.mubr.bf16.mxu0 %v930
      %1196 = vmatmul.mubr.bf16.gmra.mrb[0].mxu0 %v661
      %v1197 = vpop.f32.mrb[0].mxu0
      %v1198 = vadd.f32 %v1037, %v1197
      %v1199 = vpop.f32.mrb[0].mxu0
      %v1200 = vpop.f32.mrb[0].mxu0
      %v1201 = vadd.f32 %v1040, %v1200
      %v1202 = vpop.f32.mrb[0].mxu0
      %1203 = vmatprep.mubr.bf16.mxu0 %v933
      %1204 = vmatmul.mubr.bf16.gmra.mrb[0].mxu0 %v665
      %v1205 = vpop.f32.mrb[0].mxu0
      %v1206 = vadd.f32 %v1045, %v1205
      %v1207 = vpop.f32.mrb[0].mxu0
      %v1208 = vpop.f32.mrb[0].mxu0
      %v1209 = vadd.f32 %v1048, %v1208
      %v1210 = vpop.f32.mrb[0].mxu0
      %1211 = vmatprep.mubr.bf16.mxu0 %v936
      %1212 = vmatmul.mubr.bf16.gmra.mrb[0].mxu0 %v669
      %v1213 = vpop.f32.mrb[0].mxu0
      %v1214 = vadd.f32 %v1053, %v1213
      %v1215 = vpop.f32.mrb[0].mxu0
      %v1216 = vpop.f32.mrb[0].mxu0
      %v1217 = vadd.f32 %v1056, %v1216
      %v1218 = vpop.f32.mrb[0].mxu0
      %1219 = vmatprep.mubr.bf16.mxu0 %v939
      %1220 = vmatmul.mubr.bf16.gmra.mrb[0].mxu0 %v673
      %v1221 = vpop.f32.mrb[0].mxu0
      %v1222 = vadd.f32 %v1061, %v1221
      %v1223 = vpop.f32.mrb[0].mxu0
      %v1224 = vpop.f32.mrb[0].mxu0
      %v1225 = vadd.f32 %v1064, %v1224
      %v1226 = vpop.f32.mrb[0].mxu0
      %1227 = vmatprep.mubr.bf16.mxu0 %v942
      %1228 = vmatmul.mubr.bf16.gmra.mrb[0].mxu0 %v677
      %v1229 = vpop.f32.mrb[0].mxu0
      %v1230 = vadd.f32 %v1069, %v1229
      %v1231 = vpop.f32.mrb[0].mxu0
      %v1232 = vpop.f32.mrb[0].mxu0
      %v1233 = vadd.f32 %v1072, %v1232
      %v1234 = vpop.f32.mrb[0].mxu0
      %1235 = vmatprep.mubr.bf16.mxu0 %v945
      %1236 = vmatmul.mubr.bf16.gmra.mrb[0].mxu0 %v681
      %v1237 = vpop.f32.mrb[0].mxu0
      %v1238 = vadd.f32 %v1077, %v1237
      %v1239 = vpop.f32.mrb[0].mxu0
      %v1240 = vpop.f32.mrb[0].mxu0
      %v1241 = vadd.f32 %v1080, %v1240
      %v1242 = vpop.f32.mrb[0].mxu0
      %1243 = vmatprep.mubr.bf16.mxu0 %v948
      %1244 = vmatmul.mubr.bf16.gmra.mrb[0].mxu0 %v685
      %v1245 = vpop.f32.mrb[0].mxu0
      %v1246 = vadd.f32 %v1085, %v1245
      %v1247 = vpop.f32.mrb[0].mxu0
      %v1248 = vpop.f32.mrb[0].mxu0
      %v1249 = vadd.f32 %v1088, %v1248
      %v1250 = vpop.f32.mrb[0].mxu0
      %1251 = vmatprep.mubr.bf16.mxu0 %v951
      %1252 = vmatmul.mubr.bf16.gmra.mrb[0].mxu0 %v689
      %v1253 = vpop.f32.mrb[0].mxu0
      %v1254 = vadd.f32 %v1093, %v1253
      %v1255 = vpop.f32.mrb[0].mxu0
      %v1256 = vpop.f32.mrb[0].mxu0
      %v1257 = vadd.f32 %v1096, %v1256
      %v1258 = vpop.f32.mrb[0].mxu0
      %1259 = vmatprep.mubr.bf16.mxu0 %v954
      %1260 = vmatmul.mubr.bf16.gmra.mrb[0].mxu0 %v693
      %v1261 = vpop.f32.mrb[0].mxu0
      %v1262 = vadd.f32 %v1101, %v1261
      %v1263 = vpop.f32.mrb[0].mxu0
      %v1264 = vpop.f32.mrb[0].mxu0
      %v1265 = vadd.f32 %v1104, %v1264
      %v1266 = vpop.f32.mrb[0].mxu0
      %1267 = vmatprep.mubr.bf16.mxu0 %v957
      %1268 = vmatmul.mubr.bf16.gmra.mrb[0].mxu0 %v697
      %v1269 = vpop.f32.mrb[0].mxu0
      %v1270 = vadd.f32 %v1109, %v1269
      %v1271 = vpop.f32.mrb[0].mxu0
      %v1272 = vpop.f32.mrb[0].mxu0
      %v1273 = vadd.f32 %v1112, %v1272
      %v1274 = vpop.f32.mrb[0].mxu0
      %1275 = vmatprep.mubr.bf16.mxu0 %v960
      %1276 = vmatmul.mubr.bf16.gmra.mrb[0].mxu0 %v701
      %v1277 = vpop.f32.mrb[0].mxu0
      %v1278 = vadd.f32 %v1117, %v1277
      %v1279 = vpop.f32.mrb[0].mxu0
      %v1280 = vpop.f32.mrb[0].mxu0
      %v1281 = vadd.f32 %v1120, %v1280
      %v1282 = vpop.f32.mrb[0].mxu0
      %1283 = vdwg.mxu0
      %v1284 = vsub.f32 0.0, %v1158
      %v1285 = vsub.f32 0.0, %v1161
      %v1286 = vsub.f32 0.0, %v1166
      %v1287 = vsub.f32 0.0, %v1169
      %v1288 = vsub.f32 0.0, %v1174
      %v1289 = vsub.f32 0.0, %v1177
      %v1290 = vsub.f32 0.0, %v1182
      %v1291 = vsub.f32 0.0, %v1185
      %v1292 = vsub.f32 0.0, %v1190
      %v1293 = vsub.f32 0.0, %v1193
      %v1294 = vsub.f32 0.0, %v1198
      %v1295 = vsub.f32 0.0, %v1201
      %v1296 = vsub.f32 0.0, %v1206
      %v1297 = vsub.f32 0.0, %v1209
      %v1298 = vsub.f32 0.0, %v1214
      %v1299 = vsub.f32 0.0, %v1217
      %v1300 = vsub.f32 0.0, %v1222
      %v1301 = vsub.f32 0.0, %v1225
      %v1302 = vsub.f32 0.0, %v1230
      %v1303 = vsub.f32 0.0, %v1233
      %v1304 = vsub.f32 0.0, %v1238
      %v1305 = vsub.f32 0.0, %v1241
      %v1306 = vsub.f32 0.0, %v1246
      %v1307 = vsub.f32 0.0, %v1249
      %v1308 = vsub.f32 0.0, %v1254
      %v1309 = vsub.f32 0.0, %v1257
      %v1310 = vsub.f32 0.0, %v1262
      %v1311 = vsub.f32 0.0, %v1265
      %v1312 = vsub.f32 0.0, %v1270
      %v1313 = vsub.f32 0.0, %v1273
      %v1314 = vsub.f32 0.0, %v1278
      %v1315 = vsub.f32 0.0, %v1281
      %v1316 = vmul.f32 %v1284, 1.442695
      %v1317 = vpow.pop %v1316
      %v1318 = vmul.f32 %v1285, 1.442695
      %v1319 = vpow.pop %v1318
      %v1320 = vmul.f32 %v1286, 1.442695
      %v1321 = vpow.pop %v1320
      %v1322 = vmul.f32 %v1287, 1.442695
      %v1323 = vpow.pop %v1322
      %v1324 = vmul.f32 %v1288, 1.442695
      %v1325 = vpow.pop %v1324
      %v1326 = vmul.f32 %v1289, 1.442695
      %v1327 = vpow.pop %v1326
      %v1328 = vmul.f32 %v1290, 1.442695
      %v1329 = vpow.pop %v1328
      %v1330 = vmul.f32 %v1291, 1.442695
      %v1331 = vpow.pop %v1330
      %v1332 = vmul.f32 %v1292, 1.442695
      %v1333 = vpow.pop %v1332
      %v1334 = vmul.f32 %v1293, 1.442695
      %v1335 = vpow.pop %v1334
      %v1336 = vmul.f32 %v1294, 1.442695
      %v1337 = vpow.pop %v1336
      %v1338 = vmul.f32 %v1295, 1.442695
      %v1339 = vpow.pop %v1338
      %v1340 = vmul.f32 %v1296, 1.442695
      %v1341 = vpow.pop %v1340
      %v1342 = vmul.f32 %v1297, 1.442695
      %v1343 = vpow.pop %v1342
      %v1344 = vmul.f32 %v1298, 1.442695
      %v1345 = vpow.pop %v1344
      %v1346 = vmul.f32 %v1299, 1.442695
      %v1347 = vpow.pop %v1346
      %v1348 = vmul.f32 %v1300, 1.442695
      %v1349 = vpow.pop %v1348
      %v1350 = vmul.f32 %v1301, 1.442695
      %v1351 = vpow.pop %v1350
      %v1352 = vmul.f32 %v1302, 1.442695
      %v1353 = vpow.pop %v1352
      %v1354 = vmul.f32 %v1303, 1.442695
      %v1355 = vpow.pop %v1354
      %v1356 = vmul.f32 %v1304, 1.442695
      %v1357 = vpow.pop %v1356
      %v1358 = vmul.f32 %v1305, 1.442695
      %v1359 = vpow.pop %v1358
      %v1360 = vmul.f32 %v1306, 1.442695
      %v1361 = vpow.pop %v1360
      %v1362 = vmul.f32 %v1307, 1.442695
      %v1363 = vpow.pop %v1362
      %v1364 = vmul.f32 %v1308, 1.442695
      %v1365 = vpow.pop %v1364
      %v1366 = vmul.f32 %v1309, 1.442695
      %v1367 = vpow.pop %v1366
      %v1368 = vmul.f32 %v1310, 1.442695
      %v1369 = vpow.pop %v1368
      %v1370 = vmul.f32 %v1311, 1.442695
      %v1371 = vpow.pop %v1370
      %v1372 = vmul.f32 %v1312, 1.442695
      %v1373 = vpow.pop %v1372
      %v1374 = vmul.f32 %v1313, 1.442695
      %v1375 = vpow.pop %v1374
      %v1376 = vmul.f32 %v1314, 1.442695
      %v1377 = vpow.pop %v1376
      %v1378 = vmul.f32 %v1315, 1.442695
      %v1379 = vpow.pop %v1378
      %v1380 = vadd.f32 %v1317, 1.0
      %v1381 = vadd.f32 %v1319, 1.0
      %v1382 = vadd.f32 %v1321, 1.0
      %v1383 = vadd.f32 %v1323, 1.0
      %v1384 = vadd.f32 %v1325, 1.0
      %v1385 = vadd.f32 %v1327, 1.0
      %v1386 = vadd.f32 %v1329, 1.0
      %v1387 = vadd.f32 %v1331, 1.0
      %v1388 = vadd.f32 %v1333, 1.0
      %v1389 = vadd.f32 %v1335, 1.0
      %v1390 = vadd.f32 %v1337, 1.0
      %v1391 = vadd.f32 %v1339, 1.0
      %v1392 = vadd.f32 %v1341, 1.0
      %v1393 = vadd.f32 %v1343, 1.0
      %v1394 = vadd.f32 %v1345, 1.0
      %v1395 = vadd.f32 %v1347, 1.0
      %v1396 = vadd.f32 %v1349, 1.0
      %v1397 = vadd.f32 %v1351, 1.0
      %v1398 = vadd.f32 %v1353, 1.0
      %v1399 = vadd.f32 %v1355, 1.0
      %v1400 = vadd.f32 %v1357, 1.0
      %v1401 = vadd.f32 %v1359, 1.0
      %v1402 = vadd.f32 %v1361, 1.0
      %v1403 = vadd.f32 %v1363, 1.0
      %v1404 = vadd.f32 %v1365, 1.0
      %v1405 = vadd.f32 %v1367, 1.0
      %v1406 = vadd.f32 %v1369, 1.0
      %v1407 = vadd.f32 %v1371, 1.0
      %v1408 = vadd.f32 %v1373, 1.0
      %v1409 = vadd.f32 %v1375, 1.0
      %v1410 = vadd.f32 %v1377, 1.0
      %v1411 = vadd.f32 %v1379, 1.0
      %v1412 = vrcp.pop %v1380
      %v1413 = vrcp.pop %v1381
      %v1414 = vrcp.pop %v1382
      %v1415 = vrcp.pop %v1383
      %v1416 = vrcp.pop %v1384
      %v1417 = vrcp.pop %v1385
      %v1418 = vrcp.pop %v1386
      %v1419 = vrcp.pop %v1387
      %v1420 = vrcp.pop %v1388
      %v1421 = vrcp.pop %v1389
      %v1422 = vrcp.pop %v1390
      %v1423 = vrcp.pop %v1391
      %v1424 = vrcp.pop %v1392
      %v1425 = vrcp.pop %v1393
      %v1426 = vrcp.pop %v1394
      %v1427 = vrcp.pop %v1395
      %v1428 = vrcp.pop %v1396
      %v1429 = vrcp.pop %v1397
      %v1430 = vrcp.pop %v1398
      %v1431 = vrcp.pop %v1399
      %v1432 = vrcp.pop %v1400
      %v1433 = vrcp.pop %v1401
      %v1434 = vrcp.pop %v1402
      %v1435 = vrcp.pop %v1403
      %v1436 = vrcp.pop %v1404
      %v1437 = vrcp.pop %v1405
      %v1438 = vrcp.pop %v1406
      %v1439 = vrcp.pop %v1407
      %v1440 = vrcp.pop %v1408
      %v1441 = vrcp.pop %v1409
      %v1442 = vrcp.pop %v1410
      %v1443 = vrcp.pop %v1411
      %v1444 = vld [vmem:[%s3] sm:$0xf]
      %v1445 = vld [vmem:[%s3 + $0x4] sm:$0xf]
      %v1446 = vld [vmem:[%s3 + $0x8] sm:$0xf]
      %v1447 = vld [vmem:[%s3 + $0xc] sm:$0xf]
      %v1448 = vld [vmem:[%s3 + $0x10] sm:$0xf]
      %v1449 = vld [vmem:[%s3 + $0x14] sm:$0xf]
      %v1450 = vld [vmem:[%s3 + $0x18] sm:$0xf]
      %v1451 = vld [vmem:[%s3 + $0x1c] sm:$0xf]
      %v1452 = vld [vmem:[%s3 + $0x20] sm:$0xf]
      %v1453 = vld [vmem:[%s3 + $0x24] sm:$0xf]
      %v1454 = vld [vmem:[%s3 + $0x28] sm:$0xf]
      %v1455 = vld [vmem:[%s3 + $0x2c] sm:$0xf]
      %v1456 = vld [vmem:[%s3 + $0x30] sm:$0xf]
      %v1457 = vld [vmem:[%s3 + $0x34] sm:$0xf]
      %v1458 = vld [vmem:[%s3 + $0x38] sm:$0xf]
      %v1459 = vld [vmem:[%s3 + $0x3c] sm:$0xf]
      %v1460 = vld [vmem:[%s3 + $0x40] sm:$0xf]
      %v1461 = vld [vmem:[%s3 + $0x44] sm:$0xf]
      %v1462 = vld [vmem:[%s3 + $0x48] sm:$0xf]
      %v1463 = vld [vmem:[%s3 + $0x4c] sm:$0xf]
      %v1464 = vld [vmem:[%s3 + $0x50] sm:$0xf]
      %v1465 = vld [vmem:[%s3 + $0x54] sm:$0xf]
      %v1466 = vld [vmem:[%s3 + $0x58] sm:$0xf]
      %v1467 = vld [vmem:[%s3 + $0x5c] sm:$0xf]
      %v1468 = vld [vmem:[%s3 + $0x60] sm:$0xf]
      %v1469 = vld [vmem:[%s3 + $0x64] sm:$0xf]
      %v1470 = vld [vmem:[%s3 + $0x68] sm:$0xf]
      %v1471 = vld [vmem:[%s3 + $0x6c] sm:$0xf]
      %v1472 = vld [vmem:[%s3 + $0x70] sm:$0xf]
      %v1473 = vld [vmem:[%s3 + $0x74] sm:$0xf]
      %v1474 = vld [vmem:[%s3 + $0x78] sm:$0xf]
      %v1475 = vld [vmem:[%s3 + $0x7c] sm:$0xf]
      %v1476 = vld [vmem:[%s3 + $0x80] sm:$0xf]
      %v1477 = vld [vmem:[%s3 + $0x84] sm:$0xf]
      %v1478 = vld [vmem:[%s3 + $0x88] sm:$0xf]
      %v1479 = vld [vmem:[%s3 + $0x8c] sm:$0xf]
      %v1480 = vld [vmem:[%s3 + $0x90] sm:$0xf]
      %v1481 = vld [vmem:[%s3 + $0x94] sm:$0xf]
      %v1482 = vld [vmem:[%s3 + $0x98] sm:$0xf]
      %v1483 = vld [vmem:[%s3 + $0x9c] sm:$0xf]
      %v1484 = vld [vmem:[%s3 + $0xa0] sm:$0xf]
      %v1485 = vld [vmem:[%s3 + $0xa4] sm:$0xf]
      %v1486 = vld [vmem:[%s3 + $0xa8] sm:$0xf]
      %v1487 = vld [vmem:[%s3 + $0xac] sm:$0xf]
      %v1488 = vld [vmem:[%s3 + $0xb0] sm:$0xf]
      %v1489 = vld [vmem:[%s3 + $0xb4] sm:$0xf]
      %v1490 = vld [vmem:[%s3 + $0xb8] sm:$0xf]
      %v1491 = vld [vmem:[%s3 + $0xbc] sm:$0xf]
      %v1492 = vld [vmem:[%s3 + $0xc0] sm:$0xf]
      %v1493 = vld [vmem:[%s3 + $0xc4] sm:$0xf]
      %v1494 = vld [vmem:[%s3 + $0xc8] sm:$0xf]
      %v1495 = vld [vmem:[%s3 + $0xcc] sm:$0xf]
      %v1496 = vld [vmem:[%s3 + $0xd0] sm:$0xf]
      %v1497 = vld [vmem:[%s3 + $0xd4] sm:$0xf]
      %v1498 = vld [vmem:[%s4] sm:$0x1]
      %v1500 = vlaneseq
      %v1501 = vshrl.u32 %v1500, 7
      %v1502 = vsub.s32 0, %v1501
      %v1503 = vrot.slane %v1498, %v1502
      %v1559 = vunpack.c.l.b16 %v1444
      %v1560 = vunpack.c.l.b16 %v1445
      %v1561 = vunpack.c.l.b16 %v1446
      %v1562 = vunpack.c.l.b16 %v1447
      %v1563 = vunpack.c.l.b16 %v1448
      %v1564 = vunpack.c.l.b16 %v1449
      %v1565 = vunpack.c.l.b16 %v1450
      %v1566 = vunpack.c.l.b16 %v1451
      %v1567 = vunpack.c.l.b16 %v1452
      %v1568 = vunpack.c.l.b16 %v1453
      %v1569 = vunpack.c.l.b16 %v1454
      %v1570 = vunpack.c.l.b16 %v1455
      %v1571 = vunpack.c.l.b16 %v1456
      %v1572 = vunpack.c.l.b16 %v1457
      %v1573 = vunpack.c.l.b16 %v1458
      %v1574 = vunpack.c.l.b16 %v1459
      %v1575 = vunpack.c.l.b16 %v1460
      %v1576 = vunpack.c.l.b16 %v1461
      %v1577 = vunpack.c.l.b16 %v1462
      %v1578 = vunpack.c.l.b16 %v1463
      %v1579 = vunpack.c.l.b16 %v1464
      %v1580 = vunpack.c.l.b16 %v1465
      %v1581 = vunpack.c.l.b16 %v1466
      %v1582 = vunpack.c.l.b16 %v1467
      %v1583 = vunpack.c.l.b16 %v1468
      %v1584 = vunpack.c.l.b16 %v1469
      %v1585 = vunpack.c.l.b16 %v1470
      %v1586 = vunpack.c.l.b16 %v1471
      %v1587 = vunpack.c.l.b16 %v1472
      %v1588 = vunpack.c.l.b16 %v1473
      %v1589 = vunpack.c.l.b16 %v1474
      %v1590 = vunpack.c.l.b16 %v1475
      %v1591 = vunpack.c.l.b16 %v1476
      %v1592 = vunpack.c.l.b16 %v1477
      %v1593 = vunpack.c.l.b16 %v1478
      %v1594 = vunpack.c.l.b16 %v1479
      %v1595 = vunpack.c.l.b16 %v1480
      %v1596 = vunpack.c.l.b16 %v1481
      %v1597 = vunpack.c.l.b16 %v1482
      %v1598 = vunpack.c.l.b16 %v1483
      %v1599 = vunpack.c.l.b16 %v1484
      %v1600 = vunpack.c.l.b16 %v1485
      %v1601 = vunpack.c.l.b16 %v1486
      %v1602 = vunpack.c.l.b16 %v1487
      %v1603 = vunpack.c.l.b16 %v1488
      %v1604 = vunpack.c.l.b16 %v1489
      %v1605 = vunpack.c.l.b16 %v1490
      %v1606 = vunpack.c.l.b16 %v1491
      %v1607 = vunpack.c.l.b16 %v1492
      %v1608 = vunpack.c.l.b16 %v1493
      %v1609 = vunpack.c.l.b16 %v1494
      %v1610 = vunpack.c.l.b16 %v1495
      %v1611 = vunpack.c.l.b16 %v1496
      %v1612 = vunpack.c.l.b16 %v1497
      %v1613 = vpack.c.b16 %v1560, %v1559
      %v1614 = vpack.c.b16 %v1562, %v1561
      %v1615 = vpack.c.b16 %v1564, %v1563
      %v1616 = vpack.c.b16 %v1566, %v1565
      %v1617 = vpack.c.b16 %v1568, %v1567
      %v1618 = vpack.c.b16 %v1570, %v1569
      %v1619 = vpack.c.b16 %v1572, %v1571
      %v1620 = vpack.c.b16 %v1574, %v1573
      %v1621 = vpack.c.b16 %v1576, %v1575
      %v1622 = vpack.c.b16 %v1578, %v1577
      %v1623 = vpack.c.b16 %v1580, %v1579
      %v1624 = vpack.c.b16 %v1582, %v1581
      %v1625 = vpack.c.b16 %v1584, %v1583
      %v1626 = vpack.c.b16 %v1586, %v1585
      %v1627 = vpack.c.b16 %v1588, %v1587
      %v1628 = vpack.c.b16 %v1590, %v1589
      %v1629 = vpack.c.b16 %v1592, %v1591
      %v1630 = vpack.c.b16 %v1594, %v1593
      %v1631 = vpack.c.b16 %v1596, %v1595
      %v1632 = vpack.c.b16 %v1598, %v1597
      %v1633 = vpack.c.b16 %v1600, %v1599
      %v1634 = vpack.c.b16 %v1602, %v1601
      %v1635 = vpack.c.b16 %v1604, %v1603
      %v1636 = vpack.c.b16 %v1606, %v1605
      %v1637 = vpack.c.b16 %v1608, %v1607
      %v1638 = vpack.c.b16 %v1610, %v1609
      %v1639 = vpack.c.b16 %v1612, %v1611
      %1667 = vmatprep.subr.bf16.mxu0 0
      %1668 = vmatpush1.bf16.msra.mxu0 %v1613
      %1669 = vmatprep.subr.bf16.mxu0 0
      %1670 = vmatpush1.bf16.msra.mxu0 %v1614
      %1671 = vmatprep.subr.bf16.mxu0 0
      %1672 = vmatpush1.bf16.msra.mxu0 %v1615
      %1673 = vmatprep.subr.bf16.mxu0 0
      %1674 = vmatpush1.bf16.msra.mxu0 %v1616
      %1675 = vmatprep.subr.bf16.mxu0 0
      %1676 = vmatpush1.bf16.msra.mxu0 %v1617
      %1677 = vmatprep.subr.bf16.mxu0 0
      %1678 = vmatpush1.bf16.msra.mxu0 %v1618
      %1679 = vmatprep.subr.bf16.mxu0 0
      %1680 = vmatpush1.bf16.msra.mxu0 %v1619
      %1681 = vmatprep.subr.bf16.mxu0 0
      %1682 = vmatpush1.bf16.msra.mxu0 %v1620
      %1683 = vmatprep.subr.bf16.mxu0 0
      %1684 = vmatpush1.bf16.msra.mxu0 %v1621
      %1685 = vmatprep.subr.bf16.mxu0 0
      %1686 = vmatpush1.bf16.msra.mxu0 %v1622
      %1687 = vmatprep.subr.bf16.mxu0 0
      %1688 = vmatpush1.bf16.msra.mxu0 %v1623
      %1689 = vmatprep.subr.bf16.mxu0 0
      %1690 = vmatpush1.bf16.msra.mxu0 %v1624
      %1691 = vmatprep.subr.bf16.mxu0 0
      %1692 = vmatpush1.bf16.msra.mxu0 %v1625
      %1693 = vmatprep.subr.bf16.mxu0 0
      %1694 = vmatpush1.bf16.msra.mxu0 %v1626
      %1695 = vmatprep.subr.bf16.mxu0 0
      %1696 = vmatpush1.bf16.msra.mxu0 %v1627
      %1697 = vmatprep.subr.bf16.mxu0 0
      %1698 = vmatpush1.bf16.msra.mxu0 %v1628
      %1699 = vmatprep.mubr.bf16.mxu0 %v640
      %1700 = vmatmul.mubr.bf16.gmra.mrb[0].mxu0 %v639
      %v1701 = vpop.f32.mrb[0].mxu0
      %v1702 = vadd.f32 %v1503, %v1701
      %v1703 = vpop.f32.mrb[0].mxu0
      %v1704 = vpop.f32.mrb[0].mxu0
      %v1705 = vadd.f32 %v1503, %v1704
      %v1706 = vpop.f32.mrb[0].mxu0
      %1707 = vmatprep.mubr.bf16.mxu0 %v644
      %1708 = vmatmul.mubr.bf16.gmra.mrb[0].mxu0 %v643
      %v1709 = vpop.f32.mrb[0].mxu0
      %v1710 = vadd.f32 %v1503, %v1709
      %v1711 = vpop.f32.mrb[0].mxu0
      %v1712 = vpop.f32.mrb[0].mxu0
      %v1713 = vadd.f32 %v1503, %v1712
      %v1714 = vpop.f32.mrb[0].mxu0
      %1715 = vmatprep.mubr.bf16.mxu0 %v648
      %1716 = vmatmul.mubr.bf16.gmra.mrb[0].mxu0 %v647
      %v1717 = vpop.f32.mrb[0].mxu0
      %v1718 = vadd.f32 %v1503, %v1717
      %v1719 = vpop.f32.mrb[0].mxu0
      %v1720 = vpop.f32.mrb[0].mxu0
      %v1721 = vadd.f32 %v1503, %v1720
      %v1722 = vpop.f32.mrb[0].mxu0
      %1723 = vmatprep.mubr.bf16.mxu0 %v652
      %1724 = vmatmul.mubr.bf16.gmra.mrb[0].mxu0 %v651
      %v1725 = vpop.f32.mrb[0].mxu0
      %v1726 = vadd.f32 %v1503, %v1725
      %v1727 = vpop.f32.mrb[0].mxu0
      %v1728 = vpop.f32.mrb[0].mxu0
      %v1729 = vadd.f32 %v1503, %v1728
      %v1730 = vpop.f32.mrb[0].mxu0
      %1731 = vmatprep.mubr.bf16.mxu0 %v656
      %1732 = vmatmul.mubr.bf16.gmra.mrb[0].mxu0 %v655
      %v1733 = vpop.f32.mrb[0].mxu0
      %v1734 = vadd.f32 %v1503, %v1733
      %v1735 = vpop.f32.mrb[0].mxu0
      %v1736 = vpop.f32.mrb[0].mxu0
      %v1737 = vadd.f32 %v1503, %v1736
      %v1738 = vpop.f32.mrb[0].mxu0
      %1739 = vmatprep.mubr.bf16.mxu0 %v660
      %1740 = vmatmul.mubr.bf16.gmra.mrb[0].mxu0 %v659
      %v1741 = vpop.f32.mrb[0].mxu0
      %v1742 = vadd.f32 %v1503, %v1741
      %v1743 = vpop.f32.mrb[0].mxu0
      %v1744 = vpop.f32.mrb[0].mxu0
      %v1745 = vadd.f32 %v1503, %v1744
      %v1746 = vpop.f32.mrb[0].mxu0
      %1747 = vmatprep.mubr.bf16.mxu0 %v664
      %1748 = vmatmul.mubr.bf16.gmra.mrb[0].mxu0 %v663
      %v1749 = vpop.f32.mrb[0].mxu0
      %v1750 = vadd.f32 %v1503, %v1749
      %v1751 = vpop.f32.mrb[0].mxu0
      %v1752 = vpop.f32.mrb[0].mxu0
      %v1753 = vadd.f32 %v1503, %v1752
      %v1754 = vpop.f32.mrb[0].mxu0
      %1755 = vmatprep.mubr.bf16.mxu0 %v668
      %1756 = vmatmul.mubr.bf16.gmra.mrb[0].mxu0 %v667
      %v1757 = vpop.f32.mrb[0].mxu0
      %v1758 = vadd.f32 %v1503, %v1757
      %v1759 = vpop.f32.mrb[0].mxu0
      %v1760 = vpop.f32.mrb[0].mxu0
      %v1761 = vadd.f32 %v1503, %v1760
      %v1762 = vpop.f32.mrb[0].mxu0
      %1763 = vmatprep.mubr.bf16.mxu0 %v672
      %1764 = vmatmul.mubr.bf16.gmra.mrb[0].mxu0 %v671
      %v1765 = vpop.f32.mrb[0].mxu0
      %v1766 = vadd.f32 %v1503, %v1765
      %v1767 = vpop.f32.mrb[0].mxu0
      %v1768 = vpop.f32.mrb[0].mxu0
      %v1769 = vadd.f32 %v1503, %v1768
      %v1770 = vpop.f32.mrb[0].mxu0
      %1771 = vmatprep.mubr.bf16.mxu0 %v676
      %1772 = vmatmul.mubr.bf16.gmra.mrb[0].mxu0 %v675
      %v1773 = vpop.f32.mrb[0].mxu0
      %v1774 = vadd.f32 %v1503, %v1773
      %v1775 = vpop.f32.mrb[0].mxu0
      %v1776 = vpop.f32.mrb[0].mxu0
      %v1777 = vadd.f32 %v1503, %v1776
      %v1778 = vpop.f32.mrb[0].mxu0
      %1779 = vmatprep.mubr.bf16.mxu0 %v680
      %1780 = vmatmul.mubr.bf16.gmra.mrb[0].mxu0 %v679
      %v1781 = vpop.f32.mrb[0].mxu0
      %v1782 = vadd.f32 %v1503, %v1781
      %v1783 = vpop.f32.mrb[0].mxu0
      %v1784 = vpop.f32.mrb[0].mxu0
      %v1785 = vadd.f32 %v1503, %v1784
      %v1786 = vpop.f32.mrb[0].mxu0
      %1787 = vmatprep.mubr.bf16.mxu0 %v684
      %1788 = vmatmul.mubr.bf16.gmra.mrb[0].mxu0 %v683
      %v1789 = vpop.f32.mrb[0].mxu0
      %v1790 = vadd.f32 %v1503, %v1789
      %v1791 = vpop.f32.mrb[0].mxu0
      %v1792 = vpop.f32.mrb[0].mxu0
      %v1793 = vadd.f32 %v1503, %v1792
      %v1794 = vpop.f32.mrb[0].mxu0
      %1795 = vmatprep.mubr.bf16.mxu0 %v688
      %1796 = vmatmul.mubr.bf16.gmra.mrb[0].mxu0 %v687
      %v1797 = vpop.f32.mrb[0].mxu0
      %v1798 = vadd.f32 %v1503, %v1797
      %v1799 = vpop.f32.mrb[0].mxu0
      %v1800 = vpop.f32.mrb[0].mxu0
      %v1801 = vadd.f32 %v1503, %v1800
      %v1802 = vpop.f32.mrb[0].mxu0
      %1803 = vmatprep.mubr.bf16.mxu0 %v692
      %1804 = vmatmul.mubr.bf16.gmra.mrb[0].mxu0 %v691
      %v1805 = vpop.f32.mrb[0].mxu0
      %v1806 = vadd.f32 %v1503, %v1805
      %v1807 = vpop.f32.mrb[0].mxu0
      %v1808 = vpop.f32.mrb[0].mxu0
      %v1809 = vadd.f32 %v1503, %v1808
      %v1810 = vpop.f32.mrb[0].mxu0
      %1811 = vmatprep.mubr.bf16.mxu0 %v696
      %1812 = vmatmul.mubr.bf16.gmra.mrb[0].mxu0 %v695
      %v1813 = vpop.f32.mrb[0].mxu0
      %v1814 = vadd.f32 %v1503, %v1813
      %v1815 = vpop.f32.mrb[0].mxu0
      %v1816 = vpop.f32.mrb[0].mxu0
      %v1817 = vadd.f32 %v1503, %v1816
      %v1818 = vpop.f32.mrb[0].mxu0
      %1819 = vmatprep.mubr.bf16.mxu0 %v700
      %1820 = vmatmul.mubr.bf16.gmra.mrb[0].mxu0 %v699
      %v1821 = vpop.f32.mrb[0].mxu0
      %v1822 = vadd.f32 %v1503, %v1821
      %v1823 = vpop.f32.mrb[0].mxu0
      %v1824 = vpop.f32.mrb[0].mxu0
      %v1825 = vadd.f32 %v1503, %v1824
      %v1826 = vpop.f32.mrb[0].mxu0
      %1827 = vdwg.mxu0
      %1828 = vmatprep.subr.bf16.mxu0 0
      %1829 = vmatpush1.bf16.msra.mxu0 %v1629
      %1830 = vmatprep.subr.bf16.mxu0 0
      %1831 = vmatpush1.bf16.msra.mxu0 %v1630
      %1832 = vmatprep.subr.bf16.mxu0 0
      %1833 = vmatpush1.bf16.msra.mxu0 %v1631
      %1834 = vmatprep.subr.bf16.mxu0 0
      %1835 = vmatpush1.bf16.msra.mxu0 %v1632
      %1836 = vmatprep.subr.bf16.mxu0 0
      %1837 = vmatpush1.bf16.msra.mxu0 %v1633
      %1838 = vmatprep.subr.bf16.mxu0 0
      %1839 = vmatpush1.bf16.msra.mxu0 %v1634
      %1840 = vmatprep.subr.bf16.mxu0 0
      %1841 = vmatpush1.bf16.msra.mxu0 %v1635
      %1842 = vmatprep.subr.bf16.mxu0 0
      %1843 = vmatpush1.bf16.msra.mxu0 %v1636
      %1844 = vmatprep.subr.bf16.mxu0 0
      %1845 = vmatpush1.bf16.msra.mxu0 %v1637
      %1846 = vmatprep.subr.bf16.mxu0 0
      %1847 = vmatpush1.bf16.msra.mxu0 %v1638
      %1848 = vmatprep.subr.bf16.mxu0 0
      %1849 = vmatpush1.bf16.msra.mxu0 %v1639
      %1850 = vmatprep.subr.bf16.mxu0 0
      %1851 = vmatpush1.bf16.msra.mxu0 0
      %1852 = vmatprep.subr.bf16.mxu0 0
      %1853 = vmatpush1.bf16.msra.mxu0 0
      %1854 = vmatprep.subr.bf16.mxu0 0
      %1855 = vmatpush1.bf16.msra.mxu0 0
      %1856 = vmatprep.subr.bf16.mxu0 0
      %1857 = vmatpush1.bf16.msra.mxu0 0
      %1858 = vmatprep.subr.bf16.mxu0 0
      %1859 = vmatpush1.bf16.msra.mxu0 0
      %1860 = vmatprep.mubr.bf16.mxu0 %v915
      %1861 = vmatmul.mubr.bf16.gmra.mrb[0].mxu0 %v641
      %v1862 = vpop.f32.mrb[0].mxu0
      %v1863 = vadd.f32 %v1702, %v1862
      %v1864 = vpop.f32.mrb[0].mxu0
      %v1865 = vpop.f32.mrb[0].mxu0
      %v1866 = vadd.f32 %v1705, %v1865
      %v1867 = vpop.f32.mrb[0].mxu0
      %1868 = vmatprep.mubr.bf16.mxu0 %v918
      %1869 = vmatmul.mubr.bf16.gmra.mrb[0].mxu0 %v645
      %v1870 = vpop.f32.mrb[0].mxu0
      %v1871 = vadd.f32 %v1710, %v1870
      %v1872 = vpop.f32.mrb[0].mxu0
      %v1873 = vpop.f32.mrb[0].mxu0
      %v1874 = vadd.f32 %v1713, %v1873
      %v1875 = vpop.f32.mrb[0].mxu0
      %1876 = vmatprep.mubr.bf16.mxu0 %v921
      %1877 = vmatmul.mubr.bf16.gmra.mrb[0].mxu0 %v649
      %v1878 = vpop.f32.mrb[0].mxu0
      %v1879 = vadd.f32 %v1718, %v1878
      %v1880 = vpop.f32.mrb[0].mxu0
      %v1881 = vpop.f32.mrb[0].mxu0
      %v1882 = vadd.f32 %v1721, %v1881
      %v1883 = vpop.f32.mrb[0].mxu0
      %1884 = vmatprep.mubr.bf16.mxu0 %v924
      %1885 = vmatmul.mubr.bf16.gmra.mrb[0].mxu0 %v653
      %v1886 = vpop.f32.mrb[0].mxu0
      %v1887 = vadd.f32 %v1726, %v1886
      %v1888 = vpop.f32.mrb[0].mxu0
      %v1889 = vpop.f32.mrb[0].mxu0
      %v1890 = vadd.f32 %v1729, %v1889
      %v1891 = vpop.f32.mrb[0].mxu0
      %1892 = vmatprep.mubr.bf16.mxu0 %v927
      %1893 = vmatmul.mubr.bf16.gmra.mrb[0].mxu0 %v657
      %v1894 = vpop.f32.mrb[0].mxu0
      %v1895 = vadd.f32 %v1734, %v1894
      %v1896 = vpop.f32.mrb[0].mxu0
      %v1897 = vpop.f32.mrb[0].mxu0
      %v1898 = vadd.f32 %v1737, %v1897
      %v1899 = vpop.f32.mrb[0].mxu0
      %1900 = vmatprep.mubr.bf16.mxu0 %v930
      %1901 = vmatmul.mubr.bf16.gmra.mrb[0].mxu0 %v661
      %v1902 = vpop.f32.mrb[0].mxu0
      %v1903 = vadd.f32 %v1742, %v1902
      %v1904 = vpop.f32.mrb[0].mxu0
      %v1905 = vpop.f32.mrb[0].mxu0
      %v1906 = vadd.f32 %v1745, %v1905
      %v1907 = vpop.f32.mrb[0].mxu0
      %1908 = vmatprep.mubr.bf16.mxu0 %v933
      %1909 = vmatmul.mubr.bf16.gmra.mrb[0].mxu0 %v665
      %v1910 = vpop.f32.mrb[0].mxu0
      %v1911 = vadd.f32 %v1750, %v1910
      %v1912 = vpop.f32.mrb[0].mxu0
      %v1913 = vpop.f32.mrb[0].mxu0
      %v1914 = vadd.f32 %v1753, %v1913
      %v1915 = vpop.f32.mrb[0].mxu0
      %1916 = vmatprep.mubr.bf16.mxu0 %v936
      %1917 = vmatmul.mubr.bf16.gmra.mrb[0].mxu0 %v669
      %v1918 = vpop.f32.mrb[0].mxu0
      %v1919 = vadd.f32 %v1758, %v1918
      %v1920 = vpop.f32.mrb[0].mxu0
      %v1921 = vpop.f32.mrb[0].mxu0
      %v1922 = vadd.f32 %v1761, %v1921
      %v1923 = vpop.f32.mrb[0].mxu0
      %1924 = vmatprep.mubr.bf16.mxu0 %v939
      %1925 = vmatmul.mubr.bf16.gmra.mrb[0].mxu0 %v673
      %v1926 = vpop.f32.mrb[0].mxu0
      %v1927 = vadd.f32 %v1766, %v1926
      %v1928 = vpop.f32.mrb[0].mxu0
      %v1929 = vpop.f32.mrb[0].mxu0
      %v1930 = vadd.f32 %v1769, %v1929
      %v1931 = vpop.f32.mrb[0].mxu0
      %1932 = vmatprep.mubr.bf16.mxu0 %v942
      %1933 = vmatmul.mubr.bf16.gmra.mrb[0].mxu0 %v677
      %v1934 = vpop.f32.mrb[0].mxu0
      %v1935 = vadd.f32 %v1774, %v1934
      %v1936 = vpop.f32.mrb[0].mxu0
      %v1937 = vpop.f32.mrb[0].mxu0
      %v1938 = vadd.f32 %v1777, %v1937
      %v1939 = vpop.f32.mrb[0].mxu0
      %1940 = vmatprep.mubr.bf16.mxu0 %v945
      %1941 = vmatmul.mubr.bf16.gmra.mrb[0].mxu0 %v681
      %v1942 = vpop.f32.mrb[0].mxu0
      %v1943 = vadd.f32 %v1782, %v1942
      %v1944 = vpop.f32.mrb[0].mxu0
      %v1945 = vpop.f32.mrb[0].mxu0
      %v1946 = vadd.f32 %v1785, %v1945
      %v1947 = vpop.f32.mrb[0].mxu0
      %1948 = vmatprep.mubr.bf16.mxu0 %v948
      %1949 = vmatmul.mubr.bf16.gmra.mrb[0].mxu0 %v685
      %v1950 = vpop.f32.mrb[0].mxu0
      %v1951 = vadd.f32 %v1790, %v1950
      %v1952 = vpop.f32.mrb[0].mxu0
      %v1953 = vpop.f32.mrb[0].mxu0
      %v1954 = vadd.f32 %v1793, %v1953
      %v1955 = vpop.f32.mrb[0].mxu0
      %1956 = vmatprep.mubr.bf16.mxu0 %v951
      %1957 = vmatmul.mubr.bf16.gmra.mrb[0].mxu0 %v689
      %v1958 = vpop.f32.mrb[0].mxu0
      %v1959 = vadd.f32 %v1798, %v1958
      %v1960 = vpop.f32.mrb[0].mxu0
      %v1961 = vpop.f32.mrb[0].mxu0
      %v1962 = vadd.f32 %v1801, %v1961
      %v1963 = vpop.f32.mrb[0].mxu0
      %1964 = vmatprep.mubr.bf16.mxu0 %v954
      %1965 = vmatmul.mubr.bf16.gmra.mrb[0].mxu0 %v693
      %v1966 = vpop.f32.mrb[0].mxu0
      %v1967 = vadd.f32 %v1806, %v1966
      %v1968 = vpop.f32.mrb[0].mxu0
      %v1969 = vpop.f32.mrb[0].mxu0
      %v1970 = vadd.f32 %v1809, %v1969
      %v1971 = vpop.f32.mrb[0].mxu0
      %1972 = vmatprep.mubr.bf16.mxu0 %v957
      %1973 = vmatmul.mubr.bf16.gmra.mrb[0].mxu0 %v697
      %v1974 = vpop.f32.mrb[0].mxu0
      %v1975 = vadd.f32 %v1814, %v1974
      %v1976 = vpop.f32.mrb[0].mxu0
      %v1977 = vpop.f32.mrb[0].mxu0
      %v1978 = vadd.f32 %v1817, %v1977
      %v1979 = vpop.f32.mrb[0].mxu0
      %1980 = vmatprep.mubr.bf16.mxu0 %v960
      %1981 = vmatmul.mubr.bf16.gmra.mrb[0].mxu0 %v701
      %v1982 = vpop.f32.mrb[0].mxu0
      %v1983 = vadd.f32 %v1822, %v1982
      %v1984 = vpop.f32.mrb[0].mxu0
      %v1985 = vpop.f32.mrb[0].mxu0
      %v1986 = vadd.f32 %v1825, %v1985
      %v1987 = vpop.f32.mrb[0].mxu0
      %1988 = vdwg.mxu0
      %v1989 = vsub.f32 0.0, %v1863
      %v1990 = vsub.f32 0.0, %v1866
      %v1991 = vsub.f32 0.0, %v1871
      %v1992 = vsub.f32 0.0, %v1874
      %v1993 = vsub.f32 0.0, %v1879
      %v1994 = vsub.f32 0.0, %v1882
      %v1995 = vsub.f32 0.0, %v1887
      %v1996 = vsub.f32 0.0, %v1890
      %v1997 = vsub.f32 0.0, %v1895
      %v1998 = vsub.f32 0.0, %v1898
      %v1999 = vsub.f32 0.0, %v1903
      %v2000 = vsub.f32 0.0, %v1906
      %v2001 = vsub.f32 0.0, %v1911
      %v2002 = vsub.f32 0.0, %v1914
      %v2003 = vsub.f32 0.0, %v1919
      %v2004 = vsub.f32 0.0, %v1922
      %v2005 = vsub.f32 0.0, %v1927
      %v2006 = vsub.f32 0.0, %v1930
      %v2007 = vsub.f32 0.0, %v1935
      %v2008 = vsub.f32 0.0, %v1938
      %v2009 = vsub.f32 0.0, %v1943
      %v2010 = vsub.f32 0.0, %v1946
      %v2011 = vsub.f32 0.0, %v1951
      %v2012 = vsub.f32 0.0, %v1954
      %v2013 = vsub.f32 0.0, %v1959
      %v2014 = vsub.f32 0.0, %v1962
      %v2015 = vsub.f32 0.0, %v1967
      %v2016 = vsub.f32 0.0, %v1970
      %v2017 = vsub.f32 0.0, %v1975
      %v2018 = vsub.f32 0.0, %v1978
      %v2019 = vsub.f32 0.0, %v1983
      %v2020 = vsub.f32 0.0, %v1986
      %v2021 = vmul.f32 %v1989, 1.442695
      %v2022 = vpow.pop %v2021
      %v2023 = vmul.f32 %v1990, 1.442695
      %v2024 = vpow.pop %v2023
      %v2025 = vmul.f32 %v1991, 1.442695
      %v2026 = vpow.pop %v2025
      %v2027 = vmul.f32 %v1992, 1.442695
      %v2028 = vpow.pop %v2027
      %v2029 = vmul.f32 %v1993, 1.442695
      %v2030 = vpow.pop %v2029
      %v2031 = vmul.f32 %v1994, 1.442695
      %v2032 = vpow.pop %v2031
      %v2033 = vmul.f32 %v1995, 1.442695
      %v2034 = vpow.pop %v2033
      %v2035 = vmul.f32 %v1996, 1.442695
      %v2036 = vpow.pop %v2035
      %v2037 = vmul.f32 %v1997, 1.442695
      %v2038 = vpow.pop %v2037
      %v2039 = vmul.f32 %v1998, 1.442695
      %v2040 = vpow.pop %v2039
      %v2041 = vmul.f32 %v1999, 1.442695
      %v2042 = vpow.pop %v2041
      %v2043 = vmul.f32 %v2000, 1.442695
      %v2044 = vpow.pop %v2043
      %v2045 = vmul.f32 %v2001, 1.442695
      %v2046 = vpow.pop %v2045
      %v2047 = vmul.f32 %v2002, 1.442695
      %v2048 = vpow.pop %v2047
      %v2049 = vmul.f32 %v2003, 1.442695
      %v2050 = vpow.pop %v2049
      %v2051 = vmul.f32 %v2004, 1.442695
      %v2052 = vpow.pop %v2051
      %v2053 = vmul.f32 %v2005, 1.442695
      %v2054 = vpow.pop %v2053
      %v2055 = vmul.f32 %v2006, 1.442695
      %v2056 = vpow.pop %v2055
      %v2057 = vmul.f32 %v2007, 1.442695
      %v2058 = vpow.pop %v2057
      %v2059 = vmul.f32 %v2008, 1.442695
      %v2060 = vpow.pop %v2059
      %v2061 = vmul.f32 %v2009, 1.442695
      %v2062 = vpow.pop %v2061
      %v2063 = vmul.f32 %v2010, 1.442695
      %v2064 = vpow.pop %v2063
      %v2065 = vmul.f32 %v2011, 1.442695
      %v2066 = vpow.pop %v2065
      %v2067 = vmul.f32 %v2012, 1.442695
      %v2068 = vpow.pop %v2067
      %v2069 = vmul.f32 %v2013, 1.442695
      %v2070 = vpow.pop %v2069
      %v2071 = vmul.f32 %v2014, 1.442695
      %v2072 = vpow.pop %v2071
      %v2073 = vmul.f32 %v2015, 1.442695
      %v2074 = vpow.pop %v2073
      %v2075 = vmul.f32 %v2016, 1.442695
      %v2076 = vpow.pop %v2075
      %v2077 = vmul.f32 %v2017, 1.442695
      %v2078 = vpow.pop %v2077
      %v2079 = vmul.f32 %v2018, 1.442695
      %v2080 = vpow.pop %v2079
      %v2081 = vmul.f32 %v2019, 1.442695
      %v2082 = vpow.pop %v2081
      %v2083 = vmul.f32 %v2020, 1.442695
      %v2084 = vpow.pop %v2083
      %v2085 = vadd.f32 %v2022, 1.0
      %v2086 = vadd.f32 %v2024, 1.0
      %v2087 = vadd.f32 %v2026, 1.0
      %v2088 = vadd.f32 %v2028, 1.0
      %v2089 = vadd.f32 %v2030, 1.0
      %v2090 = vadd.f32 %v2032, 1.0
      %v2091 = vadd.f32 %v2034, 1.0
      %v2092 = vadd.f32 %v2036, 1.0
      %v2093 = vadd.f32 %v2038, 1.0
      %v2094 = vadd.f32 %v2040, 1.0
      %v2095 = vadd.f32 %v2042, 1.0
      %v2096 = vadd.f32 %v2044, 1.0
      %v2097 = vadd.f32 %v2046, 1.0
      %v2098 = vadd.f32 %v2048, 1.0
      %v2099 = vadd.f32 %v2050, 1.0
      %v2100 = vadd.f32 %v2052, 1.0
      %v2101 = vadd.f32 %v2054, 1.0
      %v2102 = vadd.f32 %v2056, 1.0
      %v2103 = vadd.f32 %v2058, 1.0
      %v2104 = vadd.f32 %v2060, 1.0
      %v2105 = vadd.f32 %v2062, 1.0
      %v2106 = vadd.f32 %v2064, 1.0
      %v2107 = vadd.f32 %v2066, 1.0
      %v2108 = vadd.f32 %v2068, 1.0
      %v2109 = vadd.f32 %v2070, 1.0
      %v2110 = vadd.f32 %v2072, 1.0
      %v2111 = vadd.f32 %v2074, 1.0
      %v2112 = vadd.f32 %v2076, 1.0
      %v2113 = vadd.f32 %v2078, 1.0
      %v2114 = vadd.f32 %v2080, 1.0
      %v2115 = vadd.f32 %v2082, 1.0
      %v2116 = vadd.f32 %v2084, 1.0
      %v2117 = vrcp.pop %v2085
      %v2118 = vrcp.pop %v2086
      %v2119 = vrcp.pop %v2087
      %v2120 = vrcp.pop %v2088
      %v2121 = vrcp.pop %v2089
      %v2122 = vrcp.pop %v2090
      %v2123 = vrcp.pop %v2091
      %v2124 = vrcp.pop %v2092
      %v2125 = vrcp.pop %v2093
      %v2126 = vrcp.pop %v2094
      %v2127 = vrcp.pop %v2095
      %v2128 = vrcp.pop %v2096
      %v2129 = vrcp.pop %v2097
      %v2130 = vrcp.pop %v2098
      %v2131 = vrcp.pop %v2099
      %v2132 = vrcp.pop %v2100
      %v2133 = vrcp.pop %v2101
      %v2134 = vrcp.pop %v2102
      %v2135 = vrcp.pop %v2103
      %v2136 = vrcp.pop %v2104
      %v2137 = vrcp.pop %v2105
      %v2138 = vrcp.pop %v2106
      %v2139 = vrcp.pop %v2107
      %v2140 = vrcp.pop %v2108
      %v2141 = vrcp.pop %v2109
      %v2142 = vrcp.pop %v2110
      %v2143 = vrcp.pop %v2111
      %v2144 = vrcp.pop %v2112
      %v2145 = vrcp.pop %v2113
      %v2146 = vrcp.pop %v2114
      %v2147 = vrcp.pop %v2115
      %v2148 = vrcp.pop %v2116
      %vm2149 = vcmask 130048
      %2150 = vst.msk [vmem:[%s313] sm:$0xff] %vm2149, %v1412
      %2151 = vst.msk [vmem:[%s313 + $0x8] sm:$0xff] %vm2149, %v1413
      %2152 = vst.msk [vmem:[%s313 + $0x10] sm:$0xff] %vm2149, %v1414
      %2153 = vst.msk [vmem:[%s313 + $0x18] sm:$0xff] %vm2149, %v1415
      %2154 = vst.msk [vmem:[%s313 + $0x20] sm:$0xff] %vm2149, %v1416
      %2155 = vst.msk [vmem:[%s313 + $0x28] sm:$0xff] %vm2149, %v1417
      %2156 = vst.msk [vmem:[%s313 + $0x30] sm:$0xff] %vm2149, %v1418
      %2157 = vst.msk [vmem:[%s313 + $0x38] sm:$0xff] %vm2149, %v1419
      %2158 = vst.msk [vmem:[%s313 + $0x40] sm:$0xff] %vm2149, %v1420
      %2159 = vst.msk [vmem:[%s313 + $0x48] sm:$0xff] %vm2149, %v1421
      %2160 = vst.msk [vmem:[%s313 + $0x50] sm:$0xff] %vm2149, %v1422
      %2161 = vst.msk [vmem:[%s313 + $0x58] sm:$0xff] %vm2149, %v1423
      %2162 = vst.msk [vmem:[%s313 + $0x60] sm:$0xff] %vm2149, %v1424
      %2163 = vst.msk [vmem:[%s313 + $0x68] sm:$0xff] %vm2149, %v1425
      %2164 = vst.msk [vmem:[%s313 + $0x70] sm:$0xff] %vm2149, %v1426
      %2165 = vst.msk [vmem:[%s313 + $0x78] sm:$0xff] %vm2149, %v1427
      %2166 = vst.msk [vmem:[%s313 + $0x80] sm:$0xff] %vm2149, %v1428
      %2167 = vst.msk [vmem:[%s313 + $0x88] sm:$0xff] %vm2149, %v1429
      %2168 = vst.msk [vmem:[%s313 + $0x90] sm:$0xff] %vm2149, %v1430
      %2169 = vst.msk [vmem:[%s313 + $0x98] sm:$0xff] %vm2149, %v1431
      %2170 = vst.msk [vmem:[%s313 + $0xa0] sm:$0xff] %vm2149, %v1432
      %2171 = vst.msk [vmem:[%s313 + $0xa8] sm:$0xff] %vm2149, %v1433
      %2172 = vst.msk [vmem:[%s313 + $0xb0] sm:$0xff] %vm2149, %v1434
      %2173 = vst.msk [vmem:[%s313 + $0xb8] sm:$0xff] %vm2149, %v1435
      %2174 = vst.msk [vmem:[%s313 + $0xc0] sm:$0xff] %vm2149, %v1436
      %2175 = vst.msk [vmem:[%s313 + $0xc8] sm:$0xff] %vm2149, %v1437
      %2176 = vst.msk [vmem:[%s313 + $0xd0] sm:$0xff] %vm2149, %v1438
      %2177 = vst.msk [vmem:[%s313 + $0xd8] sm:$0xff] %vm2149, %v1439
      %2178 = vst.msk [vmem:[%s313 + $0xe0] sm:$0xff] %vm2149, %v1440
      %2179 = vst.msk [vmem:[%s313 + $0xe8] sm:$0xff] %vm2149, %v1441
      %2180 = vst.msk [vmem:[%s313 + $0xf0] sm:$0xff] %vm2149, %v1442
      %2181 = vst.msk [vmem:[%s313 + $0xf8] sm:$0xff] %vm2149, %v1443
      %v2182 = vld [vmem:[%s307] sm:$0xff]
      %v2183 = vld [vmem:[%s307 + $0x8] sm:$0xff]
      %v2184 = vld [vmem:[%s307 + $0x10] sm:$0xff]
      %v2185 = vld [vmem:[%s307 + $0x18] sm:$0xff]
      %v2186 = vld [vmem:[%s307 + $0x20] sm:$0xff]
      %v2187 = vld [vmem:[%s307 + $0x28] sm:$0xff]
      %v2188 = vld [vmem:[%s307 + $0x30] sm:$0xff]
      %v2189 = vld [vmem:[%s307 + $0x38] sm:$0xff]
      %v2190 = vld [vmem:[%s307 + $0x40] sm:$0xff]
      %v2191 = vld [vmem:[%s307 + $0x48] sm:$0xff]
      %v2192 = vld [vmem:[%s307 + $0x50] sm:$0xff]
      %v2193 = vld [vmem:[%s307 + $0x58] sm:$0xff]
      %v2194 = vld [vmem:[%s307 + $0x60] sm:$0xff]
      %v2195 = vld [vmem:[%s307 + $0x68] sm:$0xff]
      %v2196 = vld [vmem:[%s307 + $0x70] sm:$0xff]
      %v2197 = vld [vmem:[%s307 + $0x78] sm:$0xff]
      %v2198 = vld [vmem:[%s307 + $0x80] sm:$0xff]
      %v2199 = vld [vmem:[%s307 + $0x88] sm:$0xff]
      %v2200 = vld [vmem:[%s307 + $0x90] sm:$0xff]
      %v2201 = vld [vmem:[%s307 + $0x98] sm:$0xff]
      %v2202 = vld [vmem:[%s307 + $0xa0] sm:$0xff]
      %v2203 = vld [vmem:[%s307 + $0xa8] sm:$0xff]
      %v2204 = vld [vmem:[%s307 + $0xb0] sm:$0xff]
      %v2205 = vld [vmem:[%s307 + $0xb8] sm:$0xff]
      %v2206 = vld [vmem:[%s307 + $0xc0] sm:$0xff]
      %v2207 = vld [vmem:[%s307 + $0xc8] sm:$0xff]
      %v2208 = vld [vmem:[%s307 + $0xd0] sm:$0xff]
      %v2209 = vld [vmem:[%s307 + $0xd8] sm:$0xff]
      %v2210 = vld [vmem:[%s307 + $0xe0] sm:$0xff]
      %v2211 = vld [vmem:[%s307 + $0xe8] sm:$0xff]
      %v2212 = vld [vmem:[%s307 + $0xf0] sm:$0xff]
      %v2213 = vld [vmem:[%s307 + $0xf8] sm:$0xff]
      %v2214 = vmul.f32 %v2117, %v2182
      %v2215 = vmul.f32 %v2118, %v2183
      %v2216 = vmul.f32 %v2119, %v2184
      %v2217 = vmul.f32 %v2120, %v2185
      %v2218 = vmul.f32 %v2121, %v2186
      %v2219 = vmul.f32 %v2122, %v2187
      %v2220 = vmul.f32 %v2123, %v2188
      %v2221 = vmul.f32 %v2124, %v2189
      %v2222 = vmul.f32 %v2125, %v2190
      %v2223 = vmul.f32 %v2126, %v2191
      %v2224 = vmul.f32 %v2127, %v2192
      %v2225 = vmul.f32 %v2128, %v2193
      %v2226 = vmul.f32 %v2129, %v2194
      %v2227 = vmul.f32 %v2130, %v2195
      %v2228 = vmul.f32 %v2131, %v2196
      %v2229 = vmul.f32 %v2132, %v2197
      %v2230 = vmul.f32 %v2133, %v2198
      %v2231 = vmul.f32 %v2134, %v2199
      %v2232 = vmul.f32 %v2135, %v2200
      %v2233 = vmul.f32 %v2136, %v2201
      %v2234 = vmul.f32 %v2137, %v2202
      %v2235 = vmul.f32 %v2138, %v2203
      %v2236 = vmul.f32 %v2139, %v2204
      %v2237 = vmul.f32 %v2140, %v2205
      %v2238 = vmul.f32 %v2141, %v2206
      %v2239 = vmul.f32 %v2142, %v2207
      %v2240 = vmul.f32 %v2143, %v2208
      %v2241 = vmul.f32 %v2144, %v2209
      %v2242 = vmul.f32 %v2145, %v2210
      %v2243 = vmul.f32 %v2146, %v2211
      %v2244 = vmul.f32 %v2147, %v2212
      %v2245 = vmul.f32 %v2148, %v2213
      %2246 = vst.msk [vmem:[%s319] sm:$0xff] %vm2149, %v2214
      %2247 = vst.msk [vmem:[%s319 + $0x8] sm:$0xff] %vm2149, %v2215
      %2248 = vst.msk [vmem:[%s319 + $0x10] sm:$0xff] %vm2149, %v2216
      %2249 = vst.msk [vmem:[%s319 + $0x18] sm:$0xff] %vm2149, %v2217
      %2250 = vst.msk [vmem:[%s319 + $0x20] sm:$0xff] %vm2149, %v2218
      %2251 = vst.msk [vmem:[%s319 + $0x28] sm:$0xff] %vm2149, %v2219
      %2252 = vst.msk [vmem:[%s319 + $0x30] sm:$0xff] %vm2149, %v2220
      %2253 = vst.msk [vmem:[%s319 + $0x38] sm:$0xff] %vm2149, %v2221
      %2254 = vst.msk [vmem:[%s319 + $0x40] sm:$0xff] %vm2149, %v2222
      %2255 = vst.msk [vmem:[%s319 + $0x48] sm:$0xff] %vm2149, %v2223
      %2256 = vst.msk [vmem:[%s319 + $0x50] sm:$0xff] %vm2149, %v2224
      %2257 = vst.msk [vmem:[%s319 + $0x58] sm:$0xff] %vm2149, %v2225
      %2258 = vst.msk [vmem:[%s319 + $0x60] sm:$0xff] %vm2149, %v2226
      %2259 = vst.msk [vmem:[%s319 + $0x68] sm:$0xff] %vm2149, %v2227
      %2260 = vst.msk [vmem:[%s319 + $0x70] sm:$0xff] %vm2149, %v2228
      %2261 = vst.msk [vmem:[%s319 + $0x78] sm:$0xff] %vm2149, %v2229
      %2262 = vst.msk [vmem:[%s319 + $0x80] sm:$0xff] %vm2149, %v2230
      %2263 = vst.msk [vmem:[%s319 + $0x88] sm:$0xff] %vm2149, %v2231
      %2264 = vst.msk [vmem:[%s319 + $0x90] sm:$0xff] %vm2149, %v2232
      %2265 = vst.msk [vmem:[%s319 + $0x98] sm:$0xff] %vm2149, %v2233
      %2266 = vst.msk [vmem:[%s319 + $0xa0] sm:$0xff] %vm2149, %v2234
      %2267 = vst.msk [vmem:[%s319 + $0xa8] sm:$0xff] %vm2149, %v2235
      %2268 = vst.msk [vmem:[%s319 + $0xb0] sm:$0xff] %vm2149, %v2236
      %2269 = vst.msk [vmem:[%s319 + $0xb8] sm:$0xff] %vm2149, %v2237
      %2270 = vst.msk [vmem:[%s319 + $0xc0] sm:$0xff] %vm2149, %v2238
      %2271 = vst.msk [vmem:[%s319 + $0xc8] sm:$0xff] %vm2149, %v2239
      %2272 = vst.msk [vmem:[%s319 + $0xd0] sm:$0xff] %vm2149, %v2240
      %2273 = vst.msk [vmem:[%s319 + $0xd8] sm:$0xff] %vm2149, %v2241
      %2274 = vst.msk [vmem:[%s319 + $0xe0] sm:$0xff] %vm2149, %v2242
      %2275 = vst.msk [vmem:[%s319 + $0xe8] sm:$0xff] %vm2149, %v2243
      %2276 = vst.msk [vmem:[%s319 + $0xf0] sm:$0xff] %vm2149, %v2244
      %2277 = vst.msk [vmem:[%s319 + $0xf8] sm:$0xff] %vm2149, %v2245
      %s2278 = smul.u32 32, %s19
      %p2279 = scmp.lt.s32.totalorder %s2278, 63
      %s2280 = scalar_select %p2279, %s2278, 63
      %s2281 = smul.addr %s2280, 8
      %s2282 = scalar_lea.vmem %s6, %s2281
      %s2283 = smul.u32 32, %s19
      %p2284 = scmp.lt.s32.totalorder %s2283, 63
      %s2285 = scalar_select %p2284, %s2283, 63
      %s2286 = smul.addr %s2285, 8
      %s2287 = scalar_lea.vmem %s7, %s2286
      // Predicated region
      $region45: #{basic_multi_update_block.14} parent=43 // pred_check
        %p2288 = pneg %p173
      $region46: #{basic_multi_update_block.14} parent=43 // pred_check_branch
        %2290 = sbr.rel (%p2288) target = $region48
      $region47: #{basic_multi_update_block.14} parent=43 // pred_region
        %s2291 = smul.u32 32, %s19
      $region48: #{basic_multi_update_block.14} parent=43 // pred_fallthru
        _
      // Predicated region
      $region49: #{basic_multi_update_block.14} parent=43 // pred_check
        %p2292 = pneg %p199
      $region50: #{basic_multi_update_block.14} parent=43 // pred_check_branch
        %2294 = sbr.rel (%p2292) target = $region52
      $region51: #{basic_multi_update_block.14} parent=43 // pred_region
        %s2295 = smul.u32 32, %s19
      $region52: #{basic_multi_update_block.14} parent=43 // pred_fallthru
        _
    $region44: #{basic_multi_update_block.14} parent=5 // pred_fallthru
      _
    %p2296 = scmp.le.s32.totalorder 2, %s14
    // Predicated region
    $region53: #{basic_multi_update_block.14} parent=5 // pred_check
      %p2297 = pneg %p2296
    $region54: #{basic_multi_update_block.14} parent=5 // pred_check_branch
      %2299 = sbr.rel (%p2297) target = $region56
    $region55: #{basic_multi_update_block.14} parent=5 // pred_region
      %s2300 = ssub.s32 %s14, 2
      // Predicated region
      $region57: #{basic_multi_update_block.14} parent=55 // pred_check
        %p2301 = pneg %p179
      $region58: #{basic_multi_update_block.14} parent=55 // pred_check_branch
        %2303 = sbr.rel (%p2301) target = $region60
      $region59: #{basic_multi_update_block.14} parent=55 // pred_region
        %s2304 = smul.u32 32, %s20
        %p2305 = scmp.lt.s32.totalorder %s2304, 63
        %s2306 = scalar_select %p2305, %s2304, 63
        %s2307 = smul.addr %s2306, 8
        %s2308 = scalar_lea.vmem %s6, %s2307
      $region60: #{basic_multi_update_block.14} parent=55 // pred_fallthru
        _
      // Predicated region
      $region61: #{basic_multi_update_block.14} parent=55 // pred_check
        %p2309 = pneg %p205
      $region62: #{basic_multi_update_block.14} parent=55 // pred_check_branch
        %2311 = sbr.rel (%p2309) target = $region64
      $region63: #{basic_multi_update_block.14} parent=55 // pred_region
        %s2312 = smul.u32 32, %s20
        %p2313 = scmp.lt.s32.totalorder %s2312, 63
        %s2314 = scalar_select %p2313, %s2312, 63
        %s2315 = smul.addr %s2314, 8
        %s2316 = scalar_lea.vmem %s7, %s2315
      $region64: #{basic_multi_update_block.14} parent=55 // pred_fallthru
        _
    $region56: #{basic_multi_update_block.14} parent=5 // pred_fallthru
      _
  $region6: #{basic_multi_update_block.14} parent=0 // loop_footer
    %s18 = sadd.s32 1, %s14
  $region7: #{basic_multi_update_block.14} parent=0 // loop_footer_branch
    %13 = sbr.rel target = $region3
  $region8: #{basic_multi_update_block.14} parent=0 // loop_exit
    _

// kernel: basic_multi_update_block.16
$region0: #{basic_multi_update_block.16}
  #allocation0 [shape = 'u32[]', space=smem, size = 0x4, offset = 0x4, fixed_abs, tag = 'smem constant byte address 0x4 - core index']
  #allocation1 [shape = 'u32[144,128]{1,0:T(1,128)}', space=vmem, size = 0x12000, scoped, tag = 'internal scratch']
  #allocation2 [shape = 'f32[1,1]{1,0:T(1,128)S(1)}', space=vmem, size = 0x200, scoped, tag = 'scoped memory for basic_multi_update_block.16']
  %s0 = inlined_call_operand.vmem [shape: bf16[512,144], index: 0, kind: input, shape index: {}]
  %s1 = inlined_call_operand.vmem [shape: bf16[144,128], index: 1, kind: input, shape index: {}]
  %s2 = inlined_call_operand.vmem [shape: f32[1,128], index: 2, kind: input, shape index: {}]
  %s3 = inlined_call_operand.vmem [shape: bf16[128,1], index: 3, kind: input, shape index: {}]
  %s4 = inlined_call_operand.<no memory space> [shape: f32[1,1], index: 4, kind: input, shape index: {}]
  %s5 = inlined_call_operand.vmem [shape: f32[512,1], index: 5, kind: output, shape index: {}]
  %s6 = sld [smem:[#allocation0]]
  $region53: #{basic_multi_update_block.16} parent=0
    _
  %s8 = ssub.s32 1, %s6
  %s9 = scalar_select 0, %s8, %s6
  %v10 = vstv %s4
  %11 = vst [vmem:[#allocation2] sm:$0x1] %v10
  loop: start=0, step=1, limit=4
  $region2: #{basic_multi_update_block.16} parent=0 // loop_pre_header
    _
  $region3: #{basic_multi_update_block.16} parent=0 // loop_header
    %s13 = sphi 0, %s17
    %p14 = scmp.ge.s32.totalorder %s13, 4
    %s23 = sphi 0, %s25
    %s26 = sphi 0, %s23
    %s27 = sphi 0, %s26
    %s43 = sphi 0, %s27
    %s47 = sphi 0, %s47
    %s49 = sphi 0, %s47
    %s50 = sphi 0, %s49
    %s64 = sphi 0, %s50
    %s68 = sphi 0, %s68
    %s70 = sphi 0, %s68
    %s71 = sphi 0, %s70
    %s85 = sphi 0, %s71
    %s89 = sphi 0, %s89
    %s91 = sphi 0, %s89
    %s92 = sphi 0, %s91
    %s106 = sphi 0, %s92
    %s110 = sphi 0, %s110
    %s112 = sphi 0, %s110
    %s113 = sphi 0, %s112
    %s127 = sphi 0, %s113
    %s133 = sphi 0, %s135
    %s136 = sphi 0, %s133
    %s137 = sphi 0, %s136
    %s153 = sphi 0, %s137
  $region4: #{basic_multi_update_block.16} parent=0 // loop_header_branch
    %16 = sbr.rel (%p14) target = $region8
  $region5: #{basic_multi_update_block.16} parent=0 // loop_body
    %s18 = ssub.s32 %s13, 1
    %s19 = ssub.s32 %s13, 2
    %s20 = sadd.s32 %s13, 1
    %s21 = ssub.s32 %s13, %s20
    %p22 = scmp.eq.s32.totalorder %s21, 0
    %s24 = sadd.s32 %s23, 1
    %s25 = scalar_select %p22, %s23, %s24
    %p28 = pneg %p22
    %p29 = scmp.eq.s32.totalorder %s13, 1
    %p30 = por %p28, %p29
    %p31 = scmp.ne.s32.totalorder %s23, %s26
    %p32 = scmp.eq.s32.totalorder %s13, 0
    %p33 = por %p31, %p32
    %p34 = scmp.ne.s32.totalorder %s23, %s26
    %p35 = scmp.eq.s32.totalorder %s18, 1
    %p36 = por %p34, %p35
    %p37 = scmp.ne.s32.totalorder %s26, %s27
    %p38 = scmp.eq.s32.totalorder %s18, 0
    %p39 = por %p37, %p38
    %p40 = scmp.ne.s32.totalorder %s26, %s27
    %p41 = scmp.eq.s32.totalorder %s19, 1
    %p42 = por %p40, %p41
    %p44 = scmp.ne.s32.totalorder %s27, %s43
    %p45 = scmp.eq.s32.totalorder %s19, 0
    %p46 = por %p44, %p45
    %s48 = sadd.s32 %s47, 1
    %p51 = scmp.eq.s32.totalorder %s13, 1
    %p52 = scmp.ne.s32.totalorder %s47, %s49
    %p53 = scmp.eq.s32.totalorder %s13, 0
    %p54 = por %p52, %p53
    %p55 = scmp.ne.s32.totalorder %s47, %s49
    %p56 = scmp.eq.s32.totalorder %s18, 1
    %p57 = por %p55, %p56
    %p58 = scmp.ne.s32.totalorder %s49, %s50
    %p59 = scmp.eq.s32.totalorder %s18, 0
    %p60 = por %p58, %p59
    %p61 = scmp.ne.s32.totalorder %s49, %s50
    %p62 = scmp.eq.s32.totalorder %s19, 1
    %p63 = por %p61, %p62
    %p65 = scmp.ne.s32.totalorder %s50, %s64
    %p66 = scmp.eq.s32.totalorder %s19, 0
    %p67 = por %p65, %p66
    %s69 = sadd.s32 %s68, 1
    %p72 = scmp.eq.s32.totalorder %s13, 1
    %p73 = scmp.ne.s32.totalorder %s68, %s70
    %p74 = scmp.eq.s32.totalorder %s13, 0
    %p75 = por %p73, %p74
    %p76 = scmp.ne.s32.totalorder %s68, %s70
    %p77 = scmp.eq.s32.totalorder %s18, 1
    %p78 = por %p76, %p77
    %p79 = scmp.ne.s32.totalorder %s70, %s71
    %p80 = scmp.eq.s32.totalorder %s18, 0
    %p81 = por %p79, %p80
    %p82 = scmp.ne.s32.totalorder %s70, %s71
    %p83 = scmp.eq.s32.totalorder %s19, 1
    %p84 = por %p82, %p83
    %p86 = scmp.ne.s32.totalorder %s71, %s85
    %p87 = scmp.eq.s32.totalorder %s19, 0
    %p88 = por %p86, %p87
    %s90 = sadd.s32 %s89, 1
    %p93 = scmp.eq.s32.totalorder %s13, 1
    %p94 = scmp.ne.s32.totalorder %s89, %s91
    %p95 = scmp.eq.s32.totalorder %s13, 0
    %p96 = por %p94, %p95
    %p97 = scmp.ne.s32.totalorder %s89, %s91
    %p98 = scmp.eq.s32.totalorder %s18, 1
    %p99 = por %p97, %p98
    %p100 = scmp.ne.s32.totalorder %s91, %s92
    %p101 = scmp.eq.s32.totalorder %s18, 0
    %p102 = por %p100, %p101
    %p103 = scmp.ne.s32.totalorder %s91, %s92
    %p104 = scmp.eq.s32.totalorder %s19, 1
    %p105 = por %p103, %p104
    %p107 = scmp.ne.s32.totalorder %s92, %s106
    %p108 = scmp.eq.s32.totalorder %s19, 0
    %p109 = por %p107, %p108
    %s111 = sadd.s32 %s110, 1
    %p114 = scmp.eq.s32.totalorder %s13, 1
    %p115 = scmp.ne.s32.totalorder %s110, %s112
    %p116 = scmp.eq.s32.totalorder %s13, 0
    %p117 = por %p115, %p116
    %p118 = scmp.ne.s32.totalorder %s110, %s112
    %p119 = scmp.eq.s32.totalorder %s18, 1
    %p120 = por %p118, %p119
    %p121 = scmp.ne.s32.totalorder %s112, %s113
    %p122 = scmp.eq.s32.totalorder %s18, 0
    %p123 = por %p121, %p122
    %p124 = scmp.ne.s32.totalorder %s112, %s113
    %p125 = scmp.eq.s32.totalorder %s19, 1
    %p126 = por %p124, %p125
    %p128 = scmp.ne.s32.totalorder %s113, %s127
    %p129 = scmp.eq.s32.totalorder %s19, 0
    %p130 = por %p128, %p129
    %s131 = ssub.s32 %s13, %s20
    %p132 = scmp.eq.s32.totalorder %s131, 0
    %s134 = sadd.s32 %s133, 1
    %s135 = scalar_select %p132, %s133, %s134
    %p138 = pneg %p132
    %p139 = scmp.eq.s32.totalorder %s13, 1
    %p140 = por %p138, %p139
    %p141 = scmp.ne.s32.totalorder %s133, %s136
    %p142 = scmp.eq.s32.totalorder %s13, 0
    %p143 = por %p141, %p142
    %p144 = scmp.ne.s32.totalorder %s133, %s136
    %p145 = scmp.eq.s32.totalorder %s18, 1
    %p146 = por %p144, %p145
    %p147 = scmp.ne.s32.totalorder %s136, %s137
    %p148 = scmp.eq.s32.totalorder %s18, 0
    %p149 = por %p147, %p148
    %p150 = scmp.ne.s32.totalorder %s136, %s137
    %p151 = scmp.eq.s32.totalorder %s19, 1
    %p152 = por %p150, %p151
    %p154 = scmp.ne.s32.totalorder %s137, %s153
    %p155 = scmp.eq.s32.totalorder %s19, 0
    %p156 = por %p154, %p155
    %p157 = scmp.le.s32.totalorder 1, %s13
    %p158 = scmp.lt.s32.totalorder %s13, 3
    %p159 = pnand %p157, %p158
    %p160 = pneg %p159
    // Predicated region
    $region9: #{basic_multi_update_block.16} parent=5 // pred_check
      _
    $region10: #{basic_multi_update_block.16} parent=5 // pred_check_branch
      %162 = sbr.rel (%p159) target = $region12
    $region11: #{basic_multi_update_block.16} parent=5 // pred_region
      %s163 = ssub.s32 %s13, 1
      // Predicated region
      $region13: #{basic_multi_update_block.16} parent=11 // pred_check
        %p164 = pneg %p60
      $region14: #{basic_multi_update_block.16} parent=11 // pred_check_branch
        %166 = sbr.rel (%p164) target = $region16
      $region15: #{basic_multi_update_block.16} parent=11 // pred_region
        _
      $region16: #{basic_multi_update_block.16} parent=11 // pred_fallthru
        _
      // Predicated region
      $region17: #{basic_multi_update_block.16} parent=11 // pred_check
        %p167 = pneg %p81
      $region18: #{basic_multi_update_block.16} parent=11 // pred_check_branch
        %169 = sbr.rel (%p167) target = $region20
      $region19: #{basic_multi_update_block.16} parent=11 // pred_region
        _
      $region20: #{basic_multi_update_block.16} parent=11 // pred_fallthru
        _
      // Predicated region
      $region21: #{basic_multi_update_block.16} parent=11 // pred_check
        %p170 = pneg %p102
      $region22: #{basic_multi_update_block.16} parent=11 // pred_check_branch
        %172 = sbr.rel (%p170) target = $region24
      $region23: #{basic_multi_update_block.16} parent=11 // pred_region
        _
      $region24: #{basic_multi_update_block.16} parent=11 // pred_fallthru
        _
      // Predicated region
      $region25: #{basic_multi_update_block.16} parent=11 // pred_check
        %p173 = pneg %p123
      $region26: #{basic_multi_update_block.16} parent=11 // pred_check_branch
        %175 = sbr.rel (%p173) target = $region28
      $region27: #{basic_multi_update_block.16} parent=11 // pred_region
        _
      $region28: #{basic_multi_update_block.16} parent=11 // pred_fallthru
        _
    $region12: #{basic_multi_update_block.16} parent=5 // pred_fallthru
      _
    %p176 = scmp.lt.s32.totalorder %s13, 2
    // Predicated region
    $region29: #{basic_multi_update_block.16} parent=5 // pred_check
      %p177 = pneg %p176
    $region30: #{basic_multi_update_block.16} parent=5 // pred_check_branch
      %179 = sbr.rel (%p177) target = $region32
    $region31: #{basic_multi_update_block.16} parent=5 // pred_region
      // Predicated region
      $region33: #{basic_multi_update_block.16} parent=31 // pred_check
        %p180 = pneg %p33
      $region34: #{basic_multi_update_block.16} parent=31 // pred_check_branch
        %182 = sbr.rel (%p180) target = $region36
      $region35: #{basic_multi_update_block.16} parent=31 // pred_region
        %s183 = smul.u32 32, %s13
        %p184 = scmp.lt.s32.totalorder %s183, 63
        %s185 = scalar_select %p184, %s183, 63
        %s186 = smul.addr %s185, 2
        %s187 = smul.addr %s186, 4
        %s188 = scalar_lea.vmem %s0, %s187
        %s189 = smul.u32 32, %s13
      $region36: #{basic_multi_update_block.16} parent=31 // pred_fallthru
        _
    $region32: #{basic_multi_update_block.16} parent=5 // pred_fallthru
      _
    %p190 = scmp.le.s32.totalorder 1, %s13
    %p191 = scmp.lt.s32.totalorder %s13, 3
    %p192 = pnand %p190, %p191
    %p193 = pneg %p192
    // Predicated region
    $region37: #{basic_multi_update_block.16} parent=5 // pred_check
      _
    $region38: #{basic_multi_update_block.16} parent=5 // pred_check_branch
      %195 = sbr.rel (%p192) target = $region40
    $region39: #{basic_multi_update_block.16} parent=5 // pred_region
      %s196 = ssub.s32 %s13, 1
      %s197 = smul.u32 32, %s18
      %p198 = scmp.lt.s32.totalorder %s197, 63
      %s199 = scalar_select %p198, %s197, 63
      %s200 = smul.addr %s199, 2
      %s201 = smul.addr %s200, 4
      %s202 = scalar_lea.vmem %s0, %s201
      %p203 = pneg %p39
      %p204 = pneg %p36
      %p205 = pneg %p60
      %p206 = pneg %p57
      %p207 = pneg %p81
      %p208 = pneg %p78
      %p209 = pneg %p102
      %p210 = pneg %p99
      %p211 = pneg %p123
      %p212 = pneg %p120
      %p213 = pneg %p149
      %p214 = pneg %p146
      %s215 = smul.u32 32, %s18
      %p216 = scmp.lt.s32.totalorder %s215, 63
      %s217 = scalar_select %p216, %s215, 63
      %s218 = smul.addr %s217, 8
      %s219 = scalar_lea.vmem %s5, %s218
      %s220 = smul.u32 32, %s18
      %p221 = scmp.lt.s32.totalorder %s220, 63
      %s222 = scalar_select %p221, %s220, 63
      %s223 = smul.addr %s222, 2
      %s224 = smul.addr %s223, 4
      %s225 = scalar_lea.vmem %s0, %s224
      %s226 = smul.u32 32, %s18
      %s227 = smul.u32 32, %s18
      %p228 = scmp.lt.s32.totalorder %s227, 63
      %s229 = scalar_select %p228, %s227, 63
      %s230 = smul.addr %s229, 8
      %s231 = scalar_lea.vmem %s5, %s230
      %s232 = smul.u32 32, %s18
      %v234 = vld [vmem:[%s225] sm:$0xff]
      %v235 = vld [vmem:[%s225 + $0x8] sm:$0xff]
      %v236 = vld [vmem:[%s225 + $0x10] sm:$0xff]
      %v237 = vld [vmem:[%s225 + $0x18] sm:$0xff]
      %v238 = vld [vmem:[%s225 + $0x20] sm:$0xff]
      %v239 = vld [vmem:[%s225 + $0x28] sm:$0xff]
      %v240 = vld [vmem:[%s225 + $0x30] sm:$0xff]
      %v241 = vld [vmem:[%s225 + $0x38] sm:$0xff]
      %v242 = vld [vmem:[%s225 + $0x40] sm:$0xff]
      %v243 = vld [vmem:[%s225 + $0x48] sm:$0xff]
      %v244 = vld [vmem:[%s225 + $0x50] sm:$0xff]
      %v245 = vld [vmem:[%s225 + $0x58] sm:$0xff]
      %v246 = vld [vmem:[%s225 + $0x60] sm:$0xff]
      %v247 = vld [vmem:[%s225 + $0x68] sm:$0xff]
      %v248 = vld [vmem:[%s225 + $0x70] sm:$0xff]
      %v249 = vld [vmem:[%s225 + $0x78] sm:$0xff]
      %v250 = vld [vmem:[%s225 + $0x80] sm:$0xff]
      %v251 = vld [vmem:[%s225 + $0x88] sm:$0xff]
      %v252 = vld [vmem:[%s225 + $0x90] sm:$0xff]
      %v253 = vld [vmem:[%s225 + $0x98] sm:$0xff]
      %v254 = vld [vmem:[%s225 + $0xa0] sm:$0xff]
      %v255 = vld [vmem:[%s225 + $0xa8] sm:$0xff]
      %v256 = vld [vmem:[%s225 + $0xb0] sm:$0xff]
      %v257 = vld [vmem:[%s225 + $0xb8] sm:$0xff]
      %v258 = vld [vmem:[%s225 + $0xc0] sm:$0xff]
      %v259 = vld [vmem:[%s225 + $0xc8] sm:$0xff]
      %v260 = vld [vmem:[%s225 + $0xd0] sm:$0xff]
      %v261 = vld [vmem:[%s225 + $0xd8] sm:$0xff]
      %v262 = vld [vmem:[%s225 + $0xe0] sm:$0xff]
      %v263 = vld [vmem:[%s225 + $0xe8] sm:$0xff]
      %v264 = vld [vmem:[%s225 + $0xf0] sm:$0xff]
      %v265 = vld [vmem:[%s225 + $0xf8] sm:$0xff]
      %v266 = vld [vmem:[%s1] sm:$0xf]
      %v267 = vld [vmem:[%s1 + $0x4] sm:$0xf]
      %v268 = vld [vmem:[%s1 + $0x8] sm:$0xf]
      %v269 = vld [vmem:[%s1 + $0xc] sm:$0xf]
      %v270 = vld [vmem:[%s1 + $0x10] sm:$0xf]
      %v271 = vld [vmem:[%s1 + $0x14] sm:$0xf]
      %v272 = vld [vmem:[%s1 + $0x18] sm:$0xf]
      %v273 = vld [vmem:[%s1 + $0x1c] sm:$0xf]
      %v274 = vld [vmem:[%s1 + $0x20] sm:$0xf]
      %v275 = vld [vmem:[%s1 + $0x24] sm:$0xf]
      %v276 = vld [vmem:[%s1 + $0x28] sm:$0xf]
      %v277 = vld [vmem:[%s1 + $0x2c] sm:$0xf]
      %v278 = vld [vmem:[%s1 + $0x30] sm:$0xf]
      %v279 = vld [vmem:[%s1 + $0x34] sm:$0xf]
      %v280 = vld [vmem:[%s1 + $0x38] sm:$0xf]
      %v281 = vld [vmem:[%s1 + $0x3c] sm:$0xf]
      %v282 = vld [vmem:[%s1 + $0x40] sm:$0xf]
      %v283 = vld [vmem:[%s1 + $0x44] sm:$0xf]
      %v284 = vld [vmem:[%s2] sm:$0x1]
      %v286 = vlaneseq
      %v287 = vshrl.u32 %v286, 7
      %v288 = vsub.s32 0, %v287
      %v289 = vrot.slane %v284, %v288
      %v323 = vunpack.c.l.b16 %v234
      %v324 = vunpack.c.h.b16 %v234
      %v325 = vunpack.c.l.b16 %v235
      %v326 = vunpack.c.h.b16 %v235
      %v327 = vunpack.c.l.b16 %v236
      %v328 = vunpack.c.h.b16 %v236
      %v329 = vunpack.c.l.b16 %v237
      %v330 = vunpack.c.h.b16 %v237
      %v331 = vunpack.c.l.b16 %v238
      %v332 = vunpack.c.h.b16 %v238
      %v333 = vunpack.c.l.b16 %v239
      %v334 = vunpack.c.h.b16 %v239
      %v335 = vunpack.c.l.b16 %v240
      %v336 = vunpack.c.h.b16 %v240
      %v337 = vunpack.c.l.b16 %v241
      %v338 = vunpack.c.h.b16 %v241
      %v339 = vunpack.c.l.b16 %v242
      %v340 = vunpack.c.h.b16 %v242
      %v341 = vunpack.c.l.b16 %v243
      %v342 = vunpack.c.h.b16 %v243
      %v343 = vunpack.c.l.b16 %v244
      %v344 = vunpack.c.h.b16 %v244
      %v345 = vunpack.c.l.b16 %v245
      %v346 = vunpack.c.h.b16 %v245
      %v347 = vunpack.c.l.b16 %v246
      %v348 = vunpack.c.h.b16 %v246
      %v349 = vunpack.c.l.b16 %v247
      %v350 = vunpack.c.h.b16 %v247
      %v351 = vunpack.c.l.b16 %v248
      %v352 = vunpack.c.h.b16 %v248
      %v353 = vunpack.c.l.b16 %v249
      %v354 = vunpack.c.h.b16 %v249
      %v355 = vunpack.c.l.b16 %v250
      %v356 = vunpack.c.h.b16 %v250
      %v357 = vunpack.c.l.b16 %v251
      %v358 = vunpack.c.h.b16 %v251
      %v359 = vunpack.c.l.b16 %v252
      %v360 = vunpack.c.h.b16 %v252
      %v361 = vunpack.c.l.b16 %v253
      %v362 = vunpack.c.h.b16 %v253
      %v363 = vunpack.c.l.b16 %v254
      %v364 = vunpack.c.h.b16 %v254
      %v365 = vunpack.c.l.b16 %v255
      %v366 = vunpack.c.h.b16 %v255
      %v367 = vunpack.c.l.b16 %v256
      %v368 = vunpack.c.h.b16 %v256
      %v369 = vunpack.c.l.b16 %v257
      %v370 = vunpack.c.h.b16 %v257
      %v371 = vunpack.c.l.b16 %v258
      %v372 = vunpack.c.h.b16 %v258
      %v373 = vunpack.c.l.b16 %v259
      %v374 = vunpack.c.h.b16 %v259
      %v375 = vunpack.c.l.b16 %v260
      %v376 = vunpack.c.h.b16 %v260
      %v377 = vunpack.c.l.b16 %v261
      %v378 = vunpack.c.h.b16 %v261
      %v379 = vunpack.c.l.b16 %v262
      %v380 = vunpack.c.h.b16 %v262
      %v381 = vunpack.c.l.b16 %v263
      %v382 = vunpack.c.h.b16 %v263
      %v383 = vunpack.c.l.b16 %v264
      %v384 = vunpack.c.h.b16 %v264
      %v385 = vunpack.c.l.b16 %v265
      %v386 = vunpack.c.h.b16 %v265
      %v387 = vpack.c.b16 %v325, %v323
      %v388 = vpack.c.b16 %v326, %v324
      %v389 = vpack.c.b16 %v329, %v327
      %v390 = vpack.c.b16 %v330, %v328
      %v391 = vpack.c.b16 %v333, %v331
      %v392 = vpack.c.b16 %v334, %v332
      %v393 = vpack.c.b16 %v337, %v335
      %v394 = vpack.c.b16 %v338, %v336
      %v395 = vpack.c.b16 %v341, %v339
      %v396 = vpack.c.b16 %v342, %v340
      %v397 = vpack.c.b16 %v345, %v343
      %v398 = vpack.c.b16 %v346, %v344
      %v399 = vpack.c.b16 %v349, %v347
      %v400 = vpack.c.b16 %v350, %v348
      %v401 = vpack.c.b16 %v353, %v351
      %v402 = vpack.c.b16 %v354, %v352
      %v403 = vpack.c.b16 %v357, %v355
      %v404 = vpack.c.b16 %v358, %v356
      %v405 = vpack.c.b16 %v361, %v359
      %v406 = vpack.c.b16 %v362, %v360
      %v407 = vpack.c.b16 %v365, %v363
      %v408 = vpack.c.b16 %v366, %v364
      %v409 = vpack.c.b16 %v369, %v367
      %v410 = vpack.c.b16 %v370, %v368
      %v411 = vpack.c.b16 %v373, %v371
      %v412 = vpack.c.b16 %v374, %v372
      %v413 = vpack.c.b16 %v377, %v375
      %v414 = vpack.c.b16 %v378, %v376
      %v415 = vpack.c.b16 %v381, %v379
      %v416 = vpack.c.b16 %v382, %v380
      %v417 = vpack.c.b16 %v385, %v383
      %v418 = vpack.c.b16 %v386, %v384
      %v453 = vunpack.c.l.b16 %v266
      %v454 = vunpack.c.l.b16 %v267
      %v455 = vunpack.c.l.b16 %v268
      %v456 = vunpack.c.l.b16 %v269
      %v457 = vunpack.c.l.b16 %v270
      %v458 = vunpack.c.l.b16 %v271
      %v459 = vunpack.c.l.b16 %v272
      %v460 = vunpack.c.l.b16 %v273
      %v461 = vunpack.c.l.b16 %v274
      %v462 = vunpack.c.l.b16 %v275
      %v463 = vunpack.c.l.b16 %v276
      %v464 = vunpack.c.l.b16 %v277
      %v465 = vunpack.c.l.b16 %v278
      %v466 = vunpack.c.l.b16 %v279
      %v467 = vunpack.c.l.b16 %v280
      %v468 = vunpack.c.l.b16 %v281
      %v469 = vunpack.c.l.b16 %v282
      %v470 = vunpack.c.l.b16 %v283
      %v471 = vpack.c.b16 %v454, %v453
      %v472 = vpack.c.b16 %v456, %v455
      %v473 = vpack.c.b16 %v458, %v457
      %v474 = vpack.c.b16 %v460, %v459
      %v475 = vpack.c.b16 %v462, %v461
      %v476 = vpack.c.b16 %v464, %v463
      %v477 = vpack.c.b16 %v466, %v465
      %v478 = vpack.c.b16 %v468, %v467
      %v479 = vpack.c.b16 %v470, %v469
      %vm489 = vcmask 130048
      %v491 = vsel %vm489, %v388, 0
      %v494 = vsel %vm489, %v390, 0
      %v497 = vsel %vm489, %v392, 0
      %v500 = vsel %vm489, %v394, 0
      %v503 = vsel %vm489, %v396, 0
      %v506 = vsel %vm489, %v398, 0
      %v509 = vsel %vm489, %v400, 0
      %v512 = vsel %vm489, %v402, 0
      %v515 = vsel %vm489, %v404, 0
      %v518 = vsel %vm489, %v406, 0
      %v521 = vsel %vm489, %v408, 0
      %v524 = vsel %vm489, %v410, 0
      %v527 = vsel %vm489, %v412, 0
      %v530 = vsel %vm489, %v414, 0
      %v533 = vsel %vm489, %v416, 0
      %v536 = vsel %vm489, %v418, 0
      %538 = vmatprep.subr.bf16.mxu0 0
      %539 = vmatpush1.bf16.msra.mxu0 %v471
      %540 = vmatprep.subr.bf16.mxu0 0
      %541 = vmatpush1.bf16.msra.mxu0 %v472
      %542 = vmatprep.subr.bf16.mxu0 0
      %543 = vmatpush1.bf16.msra.mxu0 %v473
      %544 = vmatprep.subr.bf16.mxu0 0
      %545 = vmatpush1.bf16.msra.mxu0 %v474
      %546 = vmatprep.subr.bf16.mxu0 0
      %547 = vmatpush1.bf16.msra.mxu0 %v475
      %548 = vmatprep.subr.bf16.mxu0 0
      %549 = vmatpush1.bf16.msra.mxu0 %v476
      %550 = vmatprep.subr.bf16.mxu0 0
      %551 = vmatpush1.bf16.msra.mxu0 %v477
      %552 = vmatprep.subr.bf16.mxu0 0
      %553 = vmatpush1.bf16.msra.mxu0 %v478
      %554 = vmatprep.subr.bf16.mxu0 0
      %555 = vmatpush1.bf16.msra.mxu0 %v479
      %556 = vmatprep.subr.bf16.mxu0 0
      %557 = vmatpush1.bf16.msra.mxu0 0
      %558 = vmatprep.subr.bf16.mxu0 0
      %559 = vmatpush1.bf16.msra.mxu0 0
      %560 = vmatprep.subr.bf16.mxu0 0
      %561 = vmatpush1.bf16.msra.mxu0 0
      %562 = vmatprep.subr.bf16.mxu0 0
      %563 = vmatpush1.bf16.msra.mxu0 0
      %564 = vmatprep.subr.bf16.mxu0 0
      %565 = vmatpush1.bf16.msra.mxu0 0
      %566 = vmatprep.subr.bf16.mxu0 0
      %567 = vmatpush1.bf16.msra.mxu0 0
      %568 = vmatprep.subr.bf16.mxu0 0
      %569 = vmatpush1.bf16.msra.mxu0 0
      %570 = vmatprep.mubr.bf16.mxu0 %v491
      %571 = vmatmul.mubr.bf16.gmra.mrb[0].mxu0 %v387
      %v572 = vpop.f32.mrb[0].mxu0
      %v573 = vadd.f32 %v289, %v572
      %v574 = vpop.f32.mrb[0].mxu0
      %v575 = vpop.f32.mrb[0].mxu0
      %v576 = vadd.f32 %v289, %v575
      %v577 = vpop.f32.mrb[0].mxu0
      %578 = vmatprep.mubr.bf16.mxu0 %v494
      %579 = vmatmul.mubr.bf16.gmra.mrb[0].mxu0 %v389
      %v580 = vpop.f32.mrb[0].mxu0
      %v581 = vadd.f32 %v289, %v580
      %v582 = vpop.f32.mrb[0].mxu0
      %v583 = vpop.f32.mrb[0].mxu0
      %v584 = vadd.f32 %v289, %v583
      %v585 = vpop.f32.mrb[0].mxu0
      %586 = vmatprep.mubr.bf16.mxu0 %v497
      %587 = vmatmul.mubr.bf16.gmra.mrb[0].mxu0 %v391
      %v588 = vpop.f32.mrb[0].mxu0
      %v589 = vadd.f32 %v289, %v588
      %v590 = vpop.f32.mrb[0].mxu0
      %v591 = vpop.f32.mrb[0].mxu0
      %v592 = vadd.f32 %v289, %v591
      %v593 = vpop.f32.mrb[0].mxu0
      %594 = vmatprep.mubr.bf16.mxu0 %v500
      %595 = vmatmul.mubr.bf16.gmra.mrb[0].mxu0 %v393
      %v596 = vpop.f32.mrb[0].mxu0
      %v597 = vadd.f32 %v289, %v596
      %v598 = vpop.f32.mrb[0].mxu0
      %v599 = vpop.f32.mrb[0].mxu0
      %v600 = vadd.f32 %v289, %v599
      %v601 = vpop.f32.mrb[0].mxu0
      %602 = vmatprep.mubr.bf16.mxu0 %v503
      %603 = vmatmul.mubr.bf16.gmra.mrb[0].mxu0 %v395
      %v604 = vpop.f32.mrb[0].mxu0
      %v605 = vadd.f32 %v289, %v604
      %v606 = vpop.f32.mrb[0].mxu0
      %v607 = vpop.f32.mrb[0].mxu0
      %v608 = vadd.f32 %v289, %v607
      %v609 = vpop.f32.mrb[0].mxu0
      %610 = vmatprep.mubr.bf16.mxu0 %v506
      %611 = vmatmul.mubr.bf16.gmra.mrb[0].mxu0 %v397
      %v612 = vpop.f32.mrb[0].mxu0
      %v613 = vadd.f32 %v289, %v612
      %v614 = vpop.f32.mrb[0].mxu0
      %v615 = vpop.f32.mrb[0].mxu0
      %v616 = vadd.f32 %v289, %v615
      %v617 = vpop.f32.mrb[0].mxu0
      %618 = vmatprep.mubr.bf16.mxu0 %v509
      %619 = vmatmul.mubr.bf16.gmra.mrb[0].mxu0 %v399
      %v620 = vpop.f32.mrb[0].mxu0
      %v621 = vadd.f32 %v289, %v620
      %v622 = vpop.f32.mrb[0].mxu0
      %v623 = vpop.f32.mrb[0].mxu0
      %v624 = vadd.f32 %v289, %v623
      %v625 = vpop.f32.mrb[0].mxu0
      %626 = vmatprep.mubr.bf16.mxu0 %v512
      %627 = vmatmul.mubr.bf16.gmra.mrb[0].mxu0 %v401
      %v628 = vpop.f32.mrb[0].mxu0
      %v629 = vadd.f32 %v289, %v628
      %v630 = vpop.f32.mrb[0].mxu0
      %v631 = vpop.f32.mrb[0].mxu0
      %v632 = vadd.f32 %v289, %v631
      %v633 = vpop.f32.mrb[0].mxu0
      %634 = vmatprep.mubr.bf16.mxu0 %v515
      %635 = vmatmul.mubr.bf16.gmra.mrb[0].mxu0 %v403
      %v636 = vpop.f32.mrb[0].mxu0
      %v637 = vadd.f32 %v289, %v636
      %v638 = vpop.f32.mrb[0].mxu0
      %v639 = vpop.f32.mrb[0].mxu0
      %v640 = vadd.f32 %v289, %v639
      %v641 = vpop.f32.mrb[0].mxu0
      %642 = vmatprep.mubr.bf16.mxu0 %v518
      %643 = vmatmul.mubr.bf16.gmra.mrb[0].mxu0 %v405
      %v644 = vpop.f32.mrb[0].mxu0
      %v645 = vadd.f32 %v289, %v644
      %v646 = vpop.f32.mrb[0].mxu0
      %v647 = vpop.f32.mrb[0].mxu0
      %v648 = vadd.f32 %v289, %v647
      %v649 = vpop.f32.mrb[0].mxu0
      %650 = vmatprep.mubr.bf16.mxu0 %v521
      %651 = vmatmul.mubr.bf16.gmra.mrb[0].mxu0 %v407
      %v652 = vpop.f32.mrb[0].mxu0
      %v653 = vadd.f32 %v289, %v652
      %v654 = vpop.f32.mrb[0].mxu0
      %v655 = vpop.f32.mrb[0].mxu0
      %v656 = vadd.f32 %v289, %v655
      %v657 = vpop.f32.mrb[0].mxu0
      %658 = vmatprep.mubr.bf16.mxu0 %v524
      %659 = vmatmul.mubr.bf16.gmra.mrb[0].mxu0 %v409
      %v660 = vpop.f32.mrb[0].mxu0
      %v661 = vadd.f32 %v289, %v660
      %v662 = vpop.f32.mrb[0].mxu0
      %v663 = vpop.f32.mrb[0].mxu0
      %v664 = vadd.f32 %v289, %v663
      %v665 = vpop.f32.mrb[0].mxu0
      %666 = vmatprep.mubr.bf16.mxu0 %v527
      %667 = vmatmul.mubr.bf16.gmra.mrb[0].mxu0 %v411
      %v668 = vpop.f32.mrb[0].mxu0
      %v669 = vadd.f32 %v289, %v668
      %v670 = vpop.f32.mrb[0].mxu0
      %v671 = vpop.f32.mrb[0].mxu0
      %v672 = vadd.f32 %v289, %v671
      %v673 = vpop.f32.mrb[0].mxu0
      %674 = vmatprep.mubr.bf16.mxu0 %v530
      %675 = vmatmul.mubr.bf16.gmra.mrb[0].mxu0 %v413
      %v676 = vpop.f32.mrb[0].mxu0
      %v677 = vadd.f32 %v289, %v676
      %v678 = vpop.f32.mrb[0].mxu0
      %v679 = vpop.f32.mrb[0].mxu0
      %v680 = vadd.f32 %v289, %v679
      %v681 = vpop.f32.mrb[0].mxu0
      %682 = vmatprep.mubr.bf16.mxu0 %v533
      %683 = vmatmul.mubr.bf16.gmra.mrb[0].mxu0 %v415
      %v684 = vpop.f32.mrb[0].mxu0
      %v685 = vadd.f32 %v289, %v684
      %v686 = vpop.f32.mrb[0].mxu0
      %v687 = vpop.f32.mrb[0].mxu0
      %v688 = vadd.f32 %v289, %v687
      %v689 = vpop.f32.mrb[0].mxu0
      %690 = vmatprep.mubr.bf16.mxu0 %v536
      %691 = vmatmul.mubr.bf16.gmra.mrb[0].mxu0 %v417
      %v692 = vpop.f32.mrb[0].mxu0
      %v693 = vadd.f32 %v289, %v692
      %v694 = vpop.f32.mrb[0].mxu0
      %v695 = vpop.f32.mrb[0].mxu0
      %v696 = vadd.f32 %v289, %v695
      %v697 = vpop.f32.mrb[0].mxu0
      %698 = vdwg.mxu0
      %v699 = vmax.f32 %v573, 0.0
      %v700 = vmax.f32 %v576, 0.0
      %v701 = vmax.f32 %v581, 0.0
      %v702 = vmax.f32 %v584, 0.0
      %v703 = vmax.f32 %v589, 0.0
      %v704 = vmax.f32 %v592, 0.0
      %v705 = vmax.f32 %v597, 0.0
      %v706 = vmax.f32 %v600, 0.0
      %v707 = vmax.f32 %v605, 0.0
      %v708 = vmax.f32 %v608, 0.0
      %v709 = vmax.f32 %v613, 0.0
      %v710 = vmax.f32 %v616, 0.0
      %v711 = vmax.f32 %v621, 0.0
      %v712 = vmax.f32 %v624, 0.0
      %v713 = vmax.f32 %v629, 0.0
      %v714 = vmax.f32 %v632, 0.0
      %v715 = vmax.f32 %v637, 0.0
      %v716 = vmax.f32 %v640, 0.0
      %v717 = vmax.f32 %v645, 0.0
      %v718 = vmax.f32 %v648, 0.0
      %v719 = vmax.f32 %v653, 0.0
      %v720 = vmax.f32 %v656, 0.0
      %v721 = vmax.f32 %v661, 0.0
      %v722 = vmax.f32 %v664, 0.0
      %v723 = vmax.f32 %v669, 0.0
      %v724 = vmax.f32 %v672, 0.0
      %v725 = vmax.f32 %v677, 0.0
      %v726 = vmax.f32 %v680, 0.0
      %v727 = vmax.f32 %v685, 0.0
      %v728 = vmax.f32 %v688, 0.0
      %v729 = vmax.f32 %v693, 0.0
      %v730 = vmax.f32 %v696, 0.0
      %v731 = vpack.c.bf16 %v700, %v699
      %v732 = vpack.c.bf16 %v702, %v701
      %v733 = vpack.c.bf16 %v704, %v703
      %v734 = vpack.c.bf16 %v706, %v705
      %v735 = vpack.c.bf16 %v708, %v707
      %v736 = vpack.c.bf16 %v710, %v709
      %v737 = vpack.c.bf16 %v712, %v711
      %v738 = vpack.c.bf16 %v714, %v713
      %v739 = vpack.c.bf16 %v716, %v715
      %v740 = vpack.c.bf16 %v718, %v717
      %v741 = vpack.c.bf16 %v720, %v719
      %v742 = vpack.c.bf16 %v722, %v721
      %v743 = vpack.c.bf16 %v724, %v723
      %v744 = vpack.c.bf16 %v726, %v725
      %v745 = vpack.c.bf16 %v728, %v727
      %v746 = vpack.c.bf16 %v730, %v729
      %v747 = vld [vmem:[%s3] sm:$0xf]
      %v748 = vld [vmem:[%s3 + $0x4] sm:$0xf]
      %v749 = vld [vmem:[%s3 + $0x8] sm:$0xf]
      %v750 = vld [vmem:[%s3 + $0xc] sm:$0xf]
      %v751 = vld [vmem:[%s3 + $0x10] sm:$0xf]
      %v752 = vld [vmem:[%s3 + $0x14] sm:$0xf]
      %v753 = vld [vmem:[%s3 + $0x18] sm:$0xf]
      %v754 = vld [vmem:[%s3 + $0x1c] sm:$0xf]
      %v755 = vld [vmem:[%s3 + $0x20] sm:$0xf]
      %v756 = vld [vmem:[%s3 + $0x24] sm:$0xf]
      %v757 = vld [vmem:[%s3 + $0x28] sm:$0xf]
      %v758 = vld [vmem:[%s3 + $0x2c] sm:$0xf]
      %v759 = vld [vmem:[%s3 + $0x30] sm:$0xf]
      %v760 = vld [vmem:[%s3 + $0x34] sm:$0xf]
      %v761 = vld [vmem:[%s3 + $0x38] sm:$0xf]
      %v762 = vld [vmem:[%s3 + $0x3c] sm:$0xf]
      %v763 = vld [vmem:[#allocation2] sm:$0x1]
      %v765 = vlaneseq
      %v766 = vshrl.u32 %v765, 7
      %v767 = vsub.s32 0, %v766
      %v768 = vrot.slane %v763, %v767
      %v786 = vunpack.c.l.b16 %v747
      %v787 = vunpack.c.l.b16 %v748
      %v788 = vunpack.c.l.b16 %v749
      %v789 = vunpack.c.l.b16 %v750
      %v790 = vunpack.c.l.b16 %v751
      %v791 = vunpack.c.l.b16 %v752
      %v792 = vunpack.c.l.b16 %v753
      %v793 = vunpack.c.l.b16 %v754
      %v794 = vunpack.c.l.b16 %v755
      %v795 = vunpack.c.l.b16 %v756
      %v796 = vunpack.c.l.b16 %v757
      %v797 = vunpack.c.l.b16 %v758
      %v798 = vunpack.c.l.b16 %v759
      %v799 = vunpack.c.l.b16 %v760
      %v800 = vunpack.c.l.b16 %v761
      %v801 = vunpack.c.l.b16 %v762
      %v802 = vpack.c.b16 %v787, %v786
      %v803 = vpack.c.b16 %v789, %v788
      %v804 = vpack.c.b16 %v791, %v790
      %v805 = vpack.c.b16 %v793, %v792
      %v806 = vpack.c.b16 %v795, %v794
      %v807 = vpack.c.b16 %v797, %v796
      %v808 = vpack.c.b16 %v799, %v798
      %v809 = vpack.c.b16 %v801, %v800
      %818 = vmatprep.subr.bf16.mxu0 0
      %819 = vmatpush1.bf16.msra.mxu0 %v802
      %820 = vmatprep.subr.bf16.mxu0 0
      %821 = vmatpush1.bf16.msra.mxu0 %v803
      %822 = vmatprep.subr.bf16.mxu0 0
      %823 = vmatpush1.bf16.msra.mxu0 %v804
      %824 = vmatprep.subr.bf16.mxu0 0
      %825 = vmatpush1.bf16.msra.mxu0 %v805
      %826 = vmatprep.subr.bf16.mxu0 0
      %827 = vmatpush1.bf16.msra.mxu0 %v806
      %828 = vmatprep.subr.bf16.mxu0 0
      %829 = vmatpush1.bf16.msra.mxu0 %v807
      %830 = vmatprep.subr.bf16.mxu0 0
      %831 = vmatpush1.bf16.msra.mxu0 %v808
      %832 = vmatprep.subr.bf16.mxu0 0
      %833 = vmatpush1.bf16.msra.mxu0 %v809
      %834 = vmatprep.subr.bf16.mxu0 0
      %835 = vmatpush1.bf16.msra.mxu0 0
      %836 = vmatprep.subr.bf16.mxu0 0
      %837 = vmatpush1.bf16.msra.mxu0 0
      %838 = vmatprep.subr.bf16.mxu0 0
      %839 = vmatpush1.bf16.msra.mxu0 0
      %840 = vmatprep.subr.bf16.mxu0 0
      %841 = vmatpush1.bf16.msra.mxu0 0
      %842 = vmatprep.subr.bf16.mxu0 0
      %843 = vmatpush1.bf16.msra.mxu0 0
      %844 = vmatprep.subr.bf16.mxu0 0
      %845 = vmatpush1.bf16.msra.mxu0 0
      %846 = vmatprep.subr.bf16.mxu0 0
      %847 = vmatpush1.bf16.msra.mxu0 0
      %848 = vmatprep.subr.bf16.mxu0 0
      %849 = vmatpush1.bf16.msra.mxu0 0
      %850 = vmatprep.mubr.bf16.mxu0 0
      %851 = vmatmul.mubr.bf16.gmra.mrb[0].mxu0 %v731
      %v852 = vpop.f32.mrb[0].mxu0
      %v853 = vadd.f32 %v768, %v852
      %v854 = vpop.f32.mrb[0].mxu0
      %v855 = vpop.f32.mrb[0].mxu0
      %v856 = vadd.f32 %v768, %v855
      %v857 = vpop.f32.mrb[0].mxu0
      %858 = vmatprep.mubr.bf16.mxu0 0
      %859 = vmatmul.mubr.bf16.gmra.mrb[0].mxu0 %v732
      %v860 = vpop.f32.mrb[0].mxu0
      %v861 = vadd.f32 %v768, %v860
      %v862 = vpop.f32.mrb[0].mxu0
      %v863 = vpop.f32.mrb[0].mxu0
      %v864 = vadd.f32 %v768, %v863
      %v865 = vpop.f32.mrb[0].mxu0
      %866 = vmatprep.mubr.bf16.mxu0 0
      %867 = vmatmul.mubr.bf16.gmra.mrb[0].mxu0 %v733
      %v868 = vpop.f32.mrb[0].mxu0
      %v869 = vadd.f32 %v768, %v868
      %v870 = vpop.f32.mrb[0].mxu0
      %v871 = vpop.f32.mrb[0].mxu0
      %v872 = vadd.f32 %v768, %v871
      %v873 = vpop.f32.mrb[0].mxu0
      %874 = vmatprep.mubr.bf16.mxu0 0
      %875 = vmatmul.mubr.bf16.gmra.mrb[0].mxu0 %v734
      %v876 = vpop.f32.mrb[0].mxu0
      %v877 = vadd.f32 %v768, %v876
      %v878 = vpop.f32.mrb[0].mxu0
      %v879 = vpop.f32.mrb[0].mxu0
      %v880 = vadd.f32 %v768, %v879
      %v881 = vpop.f32.mrb[0].mxu0
      %882 = vmatprep.mubr.bf16.mxu0 0
      %883 = vmatmul.mubr.bf16.gmra.mrb[0].mxu0 %v735
      %v884 = vpop.f32.mrb[0].mxu0
      %v885 = vadd.f32 %v768, %v884
      %v886 = vpop.f32.mrb[0].mxu0
      %v887 = vpop.f32.mrb[0].mxu0
      %v888 = vadd.f32 %v768, %v887
      %v889 = vpop.f32.mrb[0].mxu0
      %890 = vmatprep.mubr.bf16.mxu0 0
      %891 = vmatmul.mubr.bf16.gmra.mrb[0].mxu0 %v736
      %v892 = vpop.f32.mrb[0].mxu0
      %v893 = vadd.f32 %v768, %v892
      %v894 = vpop.f32.mrb[0].mxu0
      %v895 = vpop.f32.mrb[0].mxu0
      %v896 = vadd.f32 %v768, %v895
      %v897 = vpop.f32.mrb[0].mxu0
      %898 = vmatprep.mubr.bf16.mxu0 0
      %899 = vmatmul.mubr.bf16.gmra.mrb[0].mxu0 %v737
      %v900 = vpop.f32.mrb[0].mxu0
      %v901 = vadd.f32 %v768, %v900
      %v902 = vpop.f32.mrb[0].mxu0
      %v903 = vpop.f32.mrb[0].mxu0
      %v904 = vadd.f32 %v768, %v903
      %v905 = vpop.f32.mrb[0].mxu0
      %906 = vmatprep.mubr.bf16.mxu0 0
      %907 = vmatmul.mubr.bf16.gmra.mrb[0].mxu0 %v738
      %v908 = vpop.f32.mrb[0].mxu0
      %v909 = vadd.f32 %v768, %v908
      %v910 = vpop.f32.mrb[0].mxu0
      %v911 = vpop.f32.mrb[0].mxu0
      %v912 = vadd.f32 %v768, %v911
      %v913 = vpop.f32.mrb[0].mxu0
      %914 = vmatprep.mubr.bf16.mxu0 0
      %915 = vmatmul.mubr.bf16.gmra.mrb[0].mxu0 %v739
      %v916 = vpop.f32.mrb[0].mxu0
      %v917 = vadd.f32 %v768, %v916
      %v918 = vpop.f32.mrb[0].mxu0
      %v919 = vpop.f32.mrb[0].mxu0
      %v920 = vadd.f32 %v768, %v919
      %v921 = vpop.f32.mrb[0].mxu0
      %922 = vmatprep.mubr.bf16.mxu0 0
      %923 = vmatmul.mubr.bf16.gmra.mrb[0].mxu0 %v740
      %v924 = vpop.f32.mrb[0].mxu0
      %v925 = vadd.f32 %v768, %v924
      %v926 = vpop.f32.mrb[0].mxu0
      %v927 = vpop.f32.mrb[0].mxu0
      %v928 = vadd.f32 %v768, %v927
      %v929 = vpop.f32.mrb[0].mxu0
      %930 = vmatprep.mubr.bf16.mxu0 0
      %931 = vmatmul.mubr.bf16.gmra.mrb[0].mxu0 %v741
      %v932 = vpop.f32.mrb[0].mxu0
      %v933 = vadd.f32 %v768, %v932
      %v934 = vpop.f32.mrb[0].mxu0
      %v935 = vpop.f32.mrb[0].mxu0
      %v936 = vadd.f32 %v768, %v935
      %v937 = vpop.f32.mrb[0].mxu0
      %938 = vmatprep.mubr.bf16.mxu0 0
      %939 = vmatmul.mubr.bf16.gmra.mrb[0].mxu0 %v742
      %v940 = vpop.f32.mrb[0].mxu0
      %v941 = vadd.f32 %v768, %v940
      %v942 = vpop.f32.mrb[0].mxu0
      %v943 = vpop.f32.mrb[0].mxu0
      %v944 = vadd.f32 %v768, %v943
      %v945 = vpop.f32.mrb[0].mxu0
      %946 = vmatprep.mubr.bf16.mxu0 0
      %947 = vmatmul.mubr.bf16.gmra.mrb[0].mxu0 %v743
      %v948 = vpop.f32.mrb[0].mxu0
      %v949 = vadd.f32 %v768, %v948
      %v950 = vpop.f32.mrb[0].mxu0
      %v951 = vpop.f32.mrb[0].mxu0
      %v952 = vadd.f32 %v768, %v951
      %v953 = vpop.f32.mrb[0].mxu0
      %954 = vmatprep.mubr.bf16.mxu0 0
      %955 = vmatmul.mubr.bf16.gmra.mrb[0].mxu0 %v744
      %v956 = vpop.f32.mrb[0].mxu0
      %v957 = vadd.f32 %v768, %v956
      %v958 = vpop.f32.mrb[0].mxu0
      %v959 = vpop.f32.mrb[0].mxu0
      %v960 = vadd.f32 %v768, %v959
      %v961 = vpop.f32.mrb[0].mxu0
      %962 = vmatprep.mubr.bf16.mxu0 0
      %963 = vmatmul.mubr.bf16.gmra.mrb[0].mxu0 %v745
      %v964 = vpop.f32.mrb[0].mxu0
      %v965 = vadd.f32 %v768, %v964
      %v966 = vpop.f32.mrb[0].mxu0
      %v967 = vpop.f32.mrb[0].mxu0
      %v968 = vadd.f32 %v768, %v967
      %v969 = vpop.f32.mrb[0].mxu0
      %970 = vmatprep.mubr.bf16.mxu0 0
      %971 = vmatmul.mubr.bf16.gmra.mrb[0].mxu0 %v746
      %v972 = vpop.f32.mrb[0].mxu0
      %v973 = vadd.f32 %v768, %v972
      %v974 = vpop.f32.mrb[0].mxu0
      %v975 = vpop.f32.mrb[0].mxu0
      %v976 = vadd.f32 %v768, %v975
      %v977 = vpop.f32.mrb[0].mxu0
      %978 = vdwg.mxu0
      %vm979 = vcmask 7168
      %980 = vst.msk [vmem:[%s231] sm:$0xff] %vm979, %v853
      %981 = vst.msk [vmem:[%s231 + $0x8] sm:$0xff] %vm979, %v856
      %982 = vst.msk [vmem:[%s231 + $0x10] sm:$0xff] %vm979, %v861
      %983 = vst.msk [vmem:[%s231 + $0x18] sm:$0xff] %vm979, %v864
      %984 = vst.msk [vmem:[%s231 + $0x20] sm:$0xff] %vm979, %v869
      %985 = vst.msk [vmem:[%s231 + $0x28] sm:$0xff] %vm979, %v872
      %986 = vst.msk [vmem:[%s231 + $0x30] sm:$0xff] %vm979, %v877
      %987 = vst.msk [vmem:[%s231 + $0x38] sm:$0xff] %vm979, %v880
      %988 = vst.msk [vmem:[%s231 + $0x40] sm:$0xff] %vm979, %v885
      %989 = vst.msk [vmem:[%s231 + $0x48] sm:$0xff] %vm979, %v888
      %990 = vst.msk [vmem:[%s231 + $0x50] sm:$0xff] %vm979, %v893
      %991 = vst.msk [vmem:[%s231 + $0x58] sm:$0xff] %vm979, %v896
      %992 = vst.msk [vmem:[%s231 + $0x60] sm:$0xff] %vm979, %v901
      %993 = vst.msk [vmem:[%s231 + $0x68] sm:$0xff] %vm979, %v904
      %994 = vst.msk [vmem:[%s231 + $0x70] sm:$0xff] %vm979, %v909
      %995 = vst.msk [vmem:[%s231 + $0x78] sm:$0xff] %vm979, %v912
      %996 = vst.msk [vmem:[%s231 + $0x80] sm:$0xff] %vm979, %v917
      %997 = vst.msk [vmem:[%s231 + $0x88] sm:$0xff] %vm979, %v920
      %998 = vst.msk [vmem:[%s231 + $0x90] sm:$0xff] %vm979, %v925
      %999 = vst.msk [vmem:[%s231 + $0x98] sm:$0xff] %vm979, %v928
      %1000 = vst.msk [vmem:[%s231 + $0xa0] sm:$0xff] %vm979, %v933
      %1001 = vst.msk [vmem:[%s231 + $0xa8] sm:$0xff] %vm979, %v936
      %1002 = vst.msk [vmem:[%s231 + $0xb0] sm:$0xff] %vm979, %v941
      %1003 = vst.msk [vmem:[%s231 + $0xb8] sm:$0xff] %vm979, %v944
      %1004 = vst.msk [vmem:[%s231 + $0xc0] sm:$0xff] %vm979, %v949
      %1005 = vst.msk [vmem:[%s231 + $0xc8] sm:$0xff] %vm979, %v952
      %1006 = vst.msk [vmem:[%s231 + $0xd0] sm:$0xff] %vm979, %v957
      %1007 = vst.msk [vmem:[%s231 + $0xd8] sm:$0xff] %vm979, %v960
      %1008 = vst.msk [vmem:[%s231 + $0xe0] sm:$0xff] %vm979, %v965
      %1009 = vst.msk [vmem:[%s231 + $0xe8] sm:$0xff] %vm979, %v968
      %1010 = vst.msk [vmem:[%s231 + $0xf0] sm:$0xff] %vm979, %v973
      %1011 = vst.msk [vmem:[%s231 + $0xf8] sm:$0xff] %vm979, %v976
      %s1012 = smul.u32 32, %s18
      %p1013 = scmp.lt.s32.totalorder %s1012, 63
      %s1014 = scalar_select %p1013, %s1012, 63
      %s1015 = smul.addr %s1014, 8
      %s1016 = scalar_lea.vmem %s5, %s1015
      // Predicated region
      $region41: #{basic_multi_update_block.16} parent=39 // pred_check
        %p1017 = pneg %p146
      $region42: #{basic_multi_update_block.16} parent=39 // pred_check_branch
        %1019 = sbr.rel (%p1017) target = $region44
      $region43: #{basic_multi_update_block.16} parent=39 // pred_region
        %s1020 = smul.u32 32, %s18
      $region44: #{basic_multi_update_block.16} parent=39 // pred_fallthru
        _
    $region40: #{basic_multi_update_block.16} parent=5 // pred_fallthru
      _
    %p1021 = scmp.le.s32.totalorder 2, %s13
    // Predicated region
    $region45: #{basic_multi_update_block.16} parent=5 // pred_check
      %p1022 = pneg %p1021
    $region46: #{basic_multi_update_block.16} parent=5 // pred_check_branch
      %1024 = sbr.rel (%p1022) target = $region48
    $region47: #{basic_multi_update_block.16} parent=5 // pred_region
      %s1025 = ssub.s32 %s13, 2
      // Predicated region
      $region49: #{basic_multi_update_block.16} parent=47 // pred_check
        %p1026 = pneg %p152
      $region50: #{basic_multi_update_block.16} parent=47 // pred_check_branch
        %1028 = sbr.rel (%p1026) target = $region52
      $region51: #{basic_multi_update_block.16} parent=47 // pred_region
        %s1029 = smul.u32 32, %s19
        %p1030 = scmp.lt.s32.totalorder %s1029, 63
        %s1031 = scalar_select %p1030, %s1029, 63
        %s1032 = smul.addr %s1031, 8
        %s1033 = scalar_lea.vmem %s5, %s1032
      $region52: #{basic_multi_update_block.16} parent=47 // pred_fallthru
        _
    $region48: #{basic_multi_update_block.16} parent=5 // pred_fallthru
      _
  $region6: #{basic_multi_update_block.16} parent=0 // loop_footer
    %s17 = sadd.s32 1, %s13
  $region7: #{basic_multi_update_block.16} parent=0 // loop_footer_branch
    %12 = sbr.rel target = $region3
  $region8: #{basic_multi_update_block.16} parent=0 // loop_exit
    _

// kernel: basic_multi_update_block.17
$region0: #{basic_multi_update_block.17}
  #allocation0 [shape = 'u32[]', space=smem, size = 0x4, offset = 0x4, fixed_abs, tag = 'smem constant byte address 0x4 - core index']
  #allocation1 [shape = 'u32[144,128]{1,0:T(1,128)}', space=vmem, size = 0x12000, scoped, tag = 'internal scratch']
  %s0 = inlined_call_operand.vmem [shape: bf16[512,144], index: 0, kind: input, shape index: {}]
  %s1 = inlined_call_operand.vmem [shape: bf16[144,128], index: 1, kind: input, shape index: {}]
  %s2 = inlined_call_operand.vmem [shape: f32[1,128], index: 2, kind: input, shape index: {}]
  %s3 = inlined_call_operand.vmem [shape: bf16[128,36], index: 3, kind: input, shape index: {}]
  %s4 = inlined_call_operand.vmem [shape: f32[1,36], index: 4, kind: input, shape index: {}]
  %s5 = inlined_call_operand.hbm [shape: f32[512,36], index: 5, kind: output, shape index: {}]
  %s6 = sld [smem:[#allocation0]]
  $region53: #{basic_multi_update_block.17} parent=0
    _
  %s8 = ssub.s32 1, %s6
  %s9 = scalar_select 0, %s8, %s6
  $region1: #{basic_multi_update_block.17} parent=0
    #allocation2 [shape = 'u8[262144]{0}', space=vmem, size = 0x40000, scoped, tag = 'output window, operand 0']
    #allocation3 [shape = 's32[2]{0}', space=sflag, size = 0x8, scoped, tag = 'scoped memory for basic_multi_update_block.17']
    %10 = vsyncpa [#allocation3], 0
    %s11 = scalar_lea.sflag [#allocation3], 1
    %12 = vsyncpa %s11, 0
    loop: start=0, step=1, limit=4
    $region2: #{basic_multi_update_block.17} parent=1 // loop_pre_header
      _
    $region3: #{basic_multi_update_block.17} parent=1 // loop_header
      %s14 = sphi 0, %s18
      %p15 = scmp.ge.s32.totalorder %s14, 4
      %s24 = sphi 0, %s26
      %s27 = sphi 0, %s24
      %s28 = sphi 0, %s27
      %s44 = sphi 0, %s28
      %s48 = sphi 0, %s48
      %s50 = sphi 0, %s48
      %s51 = sphi 0, %s50
      %s65 = sphi 0, %s51
      %s69 = sphi 0, %s69
      %s71 = sphi 0, %s69
      %s72 = sphi 0, %s71
      %s86 = sphi 0, %s72
      %s90 = sphi 0, %s90
      %s92 = sphi 0, %s90
      %s93 = sphi 0, %s92
      %s107 = sphi 0, %s93
      %s111 = sphi 0, %s111
      %s113 = sphi 0, %s111
      %s114 = sphi 0, %s113
      %s128 = sphi 0, %s114
      %s134 = sphi 0, %s136
      %s137 = sphi 0, %s134
      %s138 = sphi 0, %s137
      %s154 = sphi 0, %s138
    $region4: #{basic_multi_update_block.17} parent=1 // loop_header_branch
      %17 = sbr.rel (%p15) target = $region8
    $region5: #{basic_multi_update_block.17} parent=1 // loop_body
      %s19 = ssub.s32 %s14, 1
      %s20 = ssub.s32 %s14, 2
      %s21 = sadd.s32 %s14, 1
      %s22 = ssub.s32 %s14, %s21
      %p23 = scmp.eq.s32.totalorder %s22, 0
      %s25 = sadd.s32 %s24, 1
      %s26 = scalar_select %p23, %s24, %s25
      %p29 = pneg %p23
      %p30 = scmp.eq.s32.totalorder %s14, 1
      %p31 = por %p29, %p30
      %p32 = scmp.ne.s32.totalorder %s24, %s27
      %p33 = scmp.eq.s32.totalorder %s14, 0
      %p34 = por %p32, %p33
      %p35 = scmp.ne.s32.totalorder %s24, %s27
      %p36 = scmp.eq.s32.totalorder %s19, 1
      %p37 = por %p35, %p36
      %p38 = scmp.ne.s32.totalorder %s27, %s28
      %p39 = scmp.eq.s32.totalorder %s19, 0
      %p40 = por %p38, %p39
      %p41 = scmp.ne.s32.totalorder %s27, %s28
      %p42 = scmp.eq.s32.totalorder %s20, 1
      %p43 = por %p41, %p42
      %p45 = scmp.ne.s32.totalorder %s28, %s44
      %p46 = scmp.eq.s32.totalorder %s20, 0
      %p47 = por %p45, %p46
      %s49 = sadd.s32 %s48, 1
      %p52 = scmp.eq.s32.totalorder %s14, 1
      %p53 = scmp.ne.s32.totalorder %s48, %s50
      %p54 = scmp.eq.s32.totalorder %s14, 0
      %p55 = por %p53, %p54
      %p56 = scmp.ne.s32.totalorder %s48, %s50
      %p57 = scmp.eq.s32.totalorder %s19, 1
      %p58 = por %p56, %p57
      %p59 = scmp.ne.s32.totalorder %s50, %s51
      %p60 = scmp.eq.s32.totalorder %s19, 0
      %p61 = por %p59, %p60
      %p62 = scmp.ne.s32.totalorder %s50, %s51
      %p63 = scmp.eq.s32.totalorder %s20, 1
      %p64 = por %p62, %p63
      %p66 = scmp.ne.s32.totalorder %s51, %s65
      %p67 = scmp.eq.s32.totalorder %s20, 0
      %p68 = por %p66, %p67
      %s70 = sadd.s32 %s69, 1
      %p73 = scmp.eq.s32.totalorder %s14, 1
      %p74 = scmp.ne.s32.totalorder %s69, %s71
      %p75 = scmp.eq.s32.totalorder %s14, 0
      %p76 = por %p74, %p75
      %p77 = scmp.ne.s32.totalorder %s69, %s71
      %p78 = scmp.eq.s32.totalorder %s19, 1
      %p79 = por %p77, %p78
      %p80 = scmp.ne.s32.totalorder %s71, %s72
      %p81 = scmp.eq.s32.totalorder %s19, 0
      %p82 = por %p80, %p81
      %p83 = scmp.ne.s32.totalorder %s71, %s72
      %p84 = scmp.eq.s32.totalorder %s20, 1
      %p85 = por %p83, %p84
      %p87 = scmp.ne.s32.totalorder %s72, %s86
      %p88 = scmp.eq.s32.totalorder %s20, 0
      %p89 = por %p87, %p88
      %s91 = sadd.s32 %s90, 1
      %p94 = scmp.eq.s32.totalorder %s14, 1
      %p95 = scmp.ne.s32.totalorder %s90, %s92
      %p96 = scmp.eq.s32.totalorder %s14, 0
      %p97 = por %p95, %p96
      %p98 = scmp.ne.s32.totalorder %s90, %s92
      %p99 = scmp.eq.s32.totalorder %s19, 1
      %p100 = por %p98, %p99
      %p101 = scmp.ne.s32.totalorder %s92, %s93
      %p102 = scmp.eq.s32.totalorder %s19, 0
      %p103 = por %p101, %p102
      %p104 = scmp.ne.s32.totalorder %s92, %s93
      %p105 = scmp.eq.s32.totalorder %s20, 1
      %p106 = por %p104, %p105
      %p108 = scmp.ne.s32.totalorder %s93, %s107
      %p109 = scmp.eq.s32.totalorder %s20, 0
      %p110 = por %p108, %p109
      %s112 = sadd.s32 %s111, 1
      %p115 = scmp.eq.s32.totalorder %s14, 1
      %p116 = scmp.ne.s32.totalorder %s111, %s113
      %p117 = scmp.eq.s32.totalorder %s14, 0
      %p118 = por %p116, %p117
      %p119 = scmp.ne.s32.totalorder %s111, %s113
      %p120 = scmp.eq.s32.totalorder %s19, 1
      %p121 = por %p119, %p120
      %p122 = scmp.ne.s32.totalorder %s113, %s114
      %p123 = scmp.eq.s32.totalorder %s19, 0
      %p124 = por %p122, %p123
      %p125 = scmp.ne.s32.totalorder %s113, %s114
      %p126 = scmp.eq.s32.totalorder %s20, 1
      %p127 = por %p125, %p126
      %p129 = scmp.ne.s32.totalorder %s114, %s128
      %p130 = scmp.eq.s32.totalorder %s20, 0
      %p131 = por %p129, %p130
      %s132 = ssub.s32 %s14, %s21
      %p133 = scmp.eq.s32.totalorder %s132, 0
      %s135 = sadd.s32 %s134, 1
      %s136 = scalar_select %p133, %s134, %s135
      %p139 = pneg %p133
      %p140 = scmp.eq.s32.totalorder %s14, 1
      %p141 = por %p139, %p140
      %p142 = scmp.ne.s32.totalorder %s134, %s137
      %p143 = scmp.eq.s32.totalorder %s14, 0
      %p144 = por %p142, %p143
      %p145 = scmp.ne.s32.totalorder %s134, %s137
      %p146 = scmp.eq.s32.totalorder %s19, 1
      %p147 = por %p145, %p146
      %p148 = scmp.ne.s32.totalorder %s137, %s138
      %p149 = scmp.eq.s32.totalorder %s19, 0
      %p150 = por %p148, %p149
      %p151 = scmp.ne.s32.totalorder %s137, %s138
      %p152 = scmp.eq.s32.totalorder %s20, 1
      %p153 = por %p151, %p152
      %p155 = scmp.ne.s32.totalorder %s138, %s154
      %p156 = scmp.eq.s32.totalorder %s20, 0
      %p157 = por %p155, %p156
      %p158 = scmp.le.s32.totalorder 1, %s14
      %p159 = scmp.lt.s32.totalorder %s14, 3
      %p160 = pnand %p158, %p159
      %p161 = pneg %p160
      // Predicated region
      $region9: #{basic_multi_update_block.17} parent=5 // pred_check
        _
      $region10: #{basic_multi_update_block.17} parent=5 // pred_check_branch
        %163 = sbr.rel (%p160) target = $region12
      $region11: #{basic_multi_update_block.17} parent=5 // pred_region
        %s164 = ssub.s32 %s14, 1
        // Predicated region
        $region13: #{basic_multi_update_block.17} parent=11 // pred_check
          %p165 = pneg %p61
        $region14: #{basic_multi_update_block.17} parent=11 // pred_check_branch
          %167 = sbr.rel (%p165) target = $region16
        $region15: #{basic_multi_update_block.17} parent=11 // pred_region
          _
        $region16: #{basic_multi_update_block.17} parent=11 // pred_fallthru
          _
        // Predicated region
        $region17: #{basic_multi_update_block.17} parent=11 // pred_check
          %p168 = pneg %p82
        $region18: #{basic_multi_update_block.17} parent=11 // pred_check_branch
          %170 = sbr.rel (%p168) target = $region20
        $region19: #{basic_multi_update_block.17} parent=11 // pred_region
          _
        $region20: #{basic_multi_update_block.17} parent=11 // pred_fallthru
          _
        // Predicated region
        $region21: #{basic_multi_update_block.17} parent=11 // pred_check
          %p171 = pneg %p103
        $region22: #{basic_multi_update_block.17} parent=11 // pred_check_branch
          %173 = sbr.rel (%p171) target = $region24
        $region23: #{basic_multi_update_block.17} parent=11 // pred_region
          _
        $region24: #{basic_multi_update_block.17} parent=11 // pred_fallthru
          _
        // Predicated region
        $region25: #{basic_multi_update_block.17} parent=11 // pred_check
          %p174 = pneg %p124
        $region26: #{basic_multi_update_block.17} parent=11 // pred_check_branch
          %176 = sbr.rel (%p174) target = $region28
        $region27: #{basic_multi_update_block.17} parent=11 // pred_region
          _
        $region28: #{basic_multi_update_block.17} parent=11 // pred_fallthru
          _
      $region12: #{basic_multi_update_block.17} parent=5 // pred_fallthru
        _
      %p177 = scmp.lt.s32.totalorder %s14, 2
      // Predicated region
      $region29: #{basic_multi_update_block.17} parent=5 // pred_check
        %p178 = pneg %p177
      $region30: #{basic_multi_update_block.17} parent=5 // pred_check_branch
        %180 = sbr.rel (%p178) target = $region32
      $region31: #{basic_multi_update_block.17} parent=5 // pred_region
        // Predicated region
        $region33: #{basic_multi_update_block.17} parent=31 // pred_check
          %p181 = pneg %p34
        $region34: #{basic_multi_update_block.17} parent=31 // pred_check_branch
          %183 = sbr.rel (%p181) target = $region36
        $region35: #{basic_multi_update_block.17} parent=31 // pred_region
          %s184 = smul.u32 32, %s14
          %p185 = scmp.lt.s32.totalorder %s184, 63
          %s186 = scalar_select %p185, %s184, 63
          %s187 = smul.addr %s186, 2
          %s188 = smul.addr %s187, 4
          %s189 = scalar_lea.vmem %s0, %s188
          %s190 = smul.u32 32, %s14
        $region36: #{basic_multi_update_block.17} parent=31 // pred_fallthru
          _
      $region32: #{basic_multi_update_block.17} parent=5 // pred_fallthru
        _
      %p191 = scmp.le.s32.totalorder 1, %s14
      %p192 = scmp.lt.s32.totalorder %s14, 3
      %p193 = pnand %p191, %p192
      %p194 = pneg %p193
      // Predicated region
      $region37: #{basic_multi_update_block.17} parent=5 // pred_check
        _
      $region38: #{basic_multi_update_block.17} parent=5 // pred_check_branch
        %196 = sbr.rel (%p193) target = $region40
      $region39: #{basic_multi_update_block.17} parent=5 // pred_region
        %s197 = ssub.s32 %s14, 1
        %s198 = smul.u32 32, %s19
        %p199 = scmp.lt.s32.totalorder %s198, 63
        %s200 = scalar_select %p199, %s198, 63
        %s201 = smul.addr %s200, 2
        %s202 = smul.addr %s201, 4
        %s203 = scalar_lea.vmem %s0, %s202
        %p204 = pneg %p40
        %p205 = pneg %p37
        %p206 = pneg %p61
        %p207 = pneg %p58
        %p208 = pneg %p82
        %p209 = pneg %p79
        %p210 = pneg %p103
        %p211 = pneg %p100
        %p212 = pneg %p124
        %p213 = pneg %p121
        %p214 = pneg %p150
        %p215 = pneg %p147
        %s216 = sand.u32 %s137, 1
        %s217 = scalar_lea.sflag [#allocation3], %s216
        %s218 = sand.u32 %s137, 1
        %s219 = smul.addr %s218, 256
        %s220 = scalar_lea.vmem [#allocation2], %s219
        %s221 = smul.u32 32, %s19
        %p222 = scmp.lt.s32.totalorder %s221, 63
        %s223 = scalar_select %p222, %s221, 63
        %s224 = smul.addr %s223, 2
        %s225 = smul.addr %s224, 4
        %s226 = scalar_lea.vmem %s0, %s225
        %s227 = smul.u32 32, %s19
        %s228 = smul.u32 32, %s19
        %v230 = vld [vmem:[%s226] sm:$0xff]
        %v231 = vld [vmem:[%s226 + $0x8] sm:$0xff]
        %v232 = vld [vmem:[%s226 + $0x10] sm:$0xff]
        %v233 = vld [vmem:[%s226 + $0x18] sm:$0xff]
        %v234 = vld [vmem:[%s226 + $0x20] sm:$0xff]
        %v235 = vld [vmem:[%s226 + $0x28] sm:$0xff]
        %v236 = vld [vmem:[%s226 + $0x30] sm:$0xff]
        %v237 = vld [vmem:[%s226 + $0x38] sm:$0xff]
        %v238 = vld [vmem:[%s226 + $0x40] sm:$0xff]
        %v239 = vld [vmem:[%s226 + $0x48] sm:$0xff]
        %v240 = vld [vmem:[%s226 + $0x50] sm:$0xff]
        %v241 = vld [vmem:[%s226 + $0x58] sm:$0xff]
        %v242 = vld [vmem:[%s226 + $0x60] sm:$0xff]
        %v243 = vld [vmem:[%s226 + $0x68] sm:$0xff]
        %v244 = vld [vmem:[%s226 + $0x70] sm:$0xff]
        %v245 = vld [vmem:[%s226 + $0x78] sm:$0xff]
        %v246 = vld [vmem:[%s226 + $0x80] sm:$0xff]
        %v247 = vld [vmem:[%s226 + $0x88] sm:$0xff]
        %v248 = vld [vmem:[%s226 + $0x90] sm:$0xff]
        %v249 = vld [vmem:[%s226 + $0x98] sm:$0xff]
        %v250 = vld [vmem:[%s226 + $0xa0] sm:$0xff]
        %v251 = vld [vmem:[%s226 + $0xa8] sm:$0xff]
        %v252 = vld [vmem:[%s226 + $0xb0] sm:$0xff]
        %v253 = vld [vmem:[%s226 + $0xb8] sm:$0xff]
        %v254 = vld [vmem:[%s226 + $0xc0] sm:$0xff]
        %v255 = vld [vmem:[%s226 + $0xc8] sm:$0xff]
        %v256 = vld [vmem:[%s226 + $0xd0] sm:$0xff]
        %v257 = vld [vmem:[%s226 + $0xd8] sm:$0xff]
        %v258 = vld [vmem:[%s226 + $0xe0] sm:$0xff]
        %v259 = vld [vmem:[%s226 + $0xe8] sm:$0xff]
        %v260 = vld [vmem:[%s226 + $0xf0] sm:$0xff]
        %v261 = vld [vmem:[%s226 + $0xf8] sm:$0xff]
        %v262 = vld [vmem:[%s1] sm:$0xf]
        %v263 = vld [vmem:[%s1 + $0x4] sm:$0xf]
        %v264 = vld [vmem:[%s1 + $0x8] sm:$0xf]
        %v265 = vld [vmem:[%s1 + $0xc] sm:$0xf]
        %v266 = vld [vmem:[%s1 + $0x10] sm:$0xf]
        %v267 = vld [vmem:[%s1 + $0x14] sm:$0xf]
        %v268 = vld [vmem:[%s1 + $0x18] sm:$0xf]
        %v269 = vld [vmem:[%s1 + $0x1c] sm:$0xf]
        %v270 = vld [vmem:[%s1 + $0x20] sm:$0xf]
        %v271 = vld [vmem:[%s1 + $0x24] sm:$0xf]
        %v272 = vld [vmem:[%s1 + $0x28] sm:$0xf]
        %v273 = vld [vmem:[%s1 + $0x2c] sm:$0xf]
        %v274 = vld [vmem:[%s1 + $0x30] sm:$0xf]
        %v275 = vld [vmem:[%s1 + $0x34] sm:$0xf]
        %v276 = vld [vmem:[%s1 + $0x38] sm:$0xf]
        %v277 = vld [vmem:[%s1 + $0x3c] sm:$0xf]
        %v278 = vld [vmem:[%s1 + $0x40] sm:$0xf]
        %v279 = vld [vmem:[%s1 + $0x44] sm:$0xf]
        %v280 = vld [vmem:[%s2] sm:$0x1]
        %v282 = vlaneseq
        %v283 = vshrl.u32 %v282, 7
        %v284 = vsub.s32 0, %v283
        %v285 = vrot.slane %v280, %v284
        %v319 = vunpack.c.l.b16 %v230
        %v320 = vunpack.c.h.b16 %v230
        %v321 = vunpack.c.l.b16 %v231
        %v322 = vunpack.c.h.b16 %v231
        %v323 = vunpack.c.l.b16 %v232
        %v324 = vunpack.c.h.b16 %v232
        %v325 = vunpack.c.l.b16 %v233
        %v326 = vunpack.c.h.b16 %v233
        %v327 = vunpack.c.l.b16 %v234
        %v328 = vunpack.c.h.b16 %v234
        %v329 = vunpack.c.l.b16 %v235
        %v330 = vunpack.c.h.b16 %v235
        %v331 = vunpack.c.l.b16 %v236
        %v332 = vunpack.c.h.b16 %v236
        %v333 = vunpack.c.l.b16 %v237
        %v334 = vunpack.c.h.b16 %v237
        %v335 = vunpack.c.l.b16 %v238
        %v336 = vunpack.c.h.b16 %v238
        %v337 = vunpack.c.l.b16 %v239
        %v338 = vunpack.c.h.b16 %v239
        %v339 = vunpack.c.l.b16 %v240
        %v340 = vunpack.c.h.b16 %v240
        %v341 = vunpack.c.l.b16 %v241
        %v342 = vunpack.c.h.b16 %v241
        %v343 = vunpack.c.l.b16 %v242
        %v344 = vunpack.c.h.b16 %v242
        %v345 = vunpack.c.l.b16 %v243
        %v346 = vunpack.c.h.b16 %v243
        %v347 = vunpack.c.l.b16 %v244
        %v348 = vunpack.c.h.b16 %v244
        %v349 = vunpack.c.l.b16 %v245
        %v350 = vunpack.c.h.b16 %v245
        %v351 = vunpack.c.l.b16 %v246
        %v352 = vunpack.c.h.b16 %v246
        %v353 = vunpack.c.l.b16 %v247
        %v354 = vunpack.c.h.b16 %v247
        %v355 = vunpack.c.l.b16 %v248
        %v356 = vunpack.c.h.b16 %v248
        %v357 = vunpack.c.l.b16 %v249
        %v358 = vunpack.c.h.b16 %v249
        %v359 = vunpack.c.l.b16 %v250
        %v360 = vunpack.c.h.b16 %v250
        %v361 = vunpack.c.l.b16 %v251
        %v362 = vunpack.c.h.b16 %v251
        %v363 = vunpack.c.l.b16 %v252
        %v364 = vunpack.c.h.b16 %v252
        %v365 = vunpack.c.l.b16 %v253
        %v366 = vunpack.c.h.b16 %v253
        %v367 = vunpack.c.l.b16 %v254
        %v368 = vunpack.c.h.b16 %v254
        %v369 = vunpack.c.l.b16 %v255
        %v370 = vunpack.c.h.b16 %v255
        %v371 = vunpack.c.l.b16 %v256
        %v372 = vunpack.c.h.b16 %v256
        %v373 = vunpack.c.l.b16 %v257
        %v374 = vunpack.c.h.b16 %v257
        %v375 = vunpack.c.l.b16 %v258
        %v376 = vunpack.c.h.b16 %v258
        %v377 = vunpack.c.l.b16 %v259
        %v378 = vunpack.c.h.b16 %v259
        %v379 = vunpack.c.l.b16 %v260
        %v380 = vunpack.c.h.b16 %v260
        %v381 = vunpack.c.l.b16 %v261
        %v382 = vunpack.c.h.b16 %v261
        %v383 = vpack.c.b16 %v321, %v319
        %v384 = vpack.c.b16 %v322, %v320
        %v385 = vpack.c.b16 %v325, %v323
        %v386 = vpack.c.b16 %v326, %v324
        %v387 = vpack.c.b16 %v329, %v327
        %v388 = vpack.c.b16 %v330, %v328
        %v389 = vpack.c.b16 %v333, %v331
        %v390 = vpack.c.b16 %v334, %v332
        %v391 = vpack.c.b16 %v337, %v335
        %v392 = vpack.c.b16 %v338, %v336
        %v393 = vpack.c.b16 %v341, %v339
        %v394 = vpack.c.b16 %v342, %v340
        %v395 = vpack.c.b16 %v345, %v343
        %v396 = vpack.c.b16 %v346, %v344
        %v397 = vpack.c.b16 %v349, %v347
        %v398 = vpack.c.b16 %v350, %v348
        %v399 = vpack.c.b16 %v353, %v351
        %v400 = vpack.c.b16 %v354, %v352
        %v401 = vpack.c.b16 %v357, %v355
        %v402 = vpack.c.b16 %v358, %v356
        %v403 = vpack.c.b16 %v361, %v359
        %v404 = vpack.c.b16 %v362, %v360
        %v405 = vpack.c.b16 %v365, %v363
        %v406 = vpack.c.b16 %v366, %v364
        %v407 = vpack.c.b16 %v369, %v367
        %v408 = vpack.c.b16 %v370, %v368
        %v409 = vpack.c.b16 %v373, %v371
        %v410 = vpack.c.b16 %v374, %v372
        %v411 = vpack.c.b16 %v377, %v375
        %v412 = vpack.c.b16 %v378, %v376
        %v413 = vpack.c.b16 %v381, %v379
        %v414 = vpack.c.b16 %v382, %v380
        %v449 = vunpack.c.l.b16 %v262
        %v450 = vunpack.c.l.b16 %v263
        %v451 = vunpack.c.l.b16 %v264
        %v452 = vunpack.c.l.b16 %v265
        %v453 = vunpack.c.l.b16 %v266
        %v454 = vunpack.c.l.b16 %v267
        %v455 = vunpack.c.l.b16 %v268
        %v456 = vunpack.c.l.b16 %v269
        %v457 = vunpack.c.l.b16 %v270
        %v458 = vunpack.c.l.b16 %v271
        %v459 = vunpack.c.l.b16 %v272
        %v460 = vunpack.c.l.b16 %v273
        %v461 = vunpack.c.l.b16 %v274
        %v462 = vunpack.c.l.b16 %v275
        %v463 = vunpack.c.l.b16 %v276
        %v464 = vunpack.c.l.b16 %v277
        %v465 = vunpack.c.l.b16 %v278
        %v466 = vunpack.c.l.b16 %v279
        %v467 = vpack.c.b16 %v450, %v449
        %v468 = vpack.c.b16 %v452, %v451
        %v469 = vpack.c.b16 %v454, %v453
        %v470 = vpack.c.b16 %v456, %v455
        %v471 = vpack.c.b16 %v458, %v457
        %v472 = vpack.c.b16 %v460, %v459
        %v473 = vpack.c.b16 %v462, %v461
        %v474 = vpack.c.b16 %v464, %v463
        %v475 = vpack.c.b16 %v466, %v465
        %vm485 = vcmask 130048
        %v487 = vsel %vm485, %v384, 0
        %v490 = vsel %vm485, %v386, 0
        %v493 = vsel %vm485, %v388, 0
        %v496 = vsel %vm485, %v390, 0
        %v499 = vsel %vm485, %v392, 0
        %v502 = vsel %vm485, %v394, 0
        %v505 = vsel %vm485, %v396, 0
        %v508 = vsel %vm485, %v398, 0
        %v511 = vsel %vm485, %v400, 0
        %v514 = vsel %vm485, %v402, 0
        %v517 = vsel %vm485, %v404, 0
        %v520 = vsel %vm485, %v406, 0
        %v523 = vsel %vm485, %v408, 0
        %v526 = vsel %vm485, %v410, 0
        %v529 = vsel %vm485, %v412, 0
        %v532 = vsel %vm485, %v414, 0
        %534 = vmatprep.subr.bf16.mxu0 0
        %535 = vmatpush1.bf16.msra.mxu0 %v467
        %536 = vmatprep.subr.bf16.mxu0 0
        %537 = vmatpush1.bf16.msra.mxu0 %v468
        %538 = vmatprep.subr.bf16.mxu0 0
        %539 = vmatpush1.bf16.msra.mxu0 %v469
        %540 = vmatprep.subr.bf16.mxu0 0
        %541 = vmatpush1.bf16.msra.mxu0 %v470
        %542 = vmatprep.subr.bf16.mxu0 0
        %543 = vmatpush1.bf16.msra.mxu0 %v471
        %544 = vmatprep.subr.bf16.mxu0 0
        %545 = vmatpush1.bf16.msra.mxu0 %v472
        %546 = vmatprep.subr.bf16.mxu0 0
        %547 = vmatpush1.bf16.msra.mxu0 %v473
        %548 = vmatprep.subr.bf16.mxu0 0
        %549 = vmatpush1.bf16.msra.mxu0 %v474
        %550 = vmatprep.subr.bf16.mxu0 0
        %551 = vmatpush1.bf16.msra.mxu0 %v475
        %552 = vmatprep.subr.bf16.mxu0 0
        %553 = vmatpush1.bf16.msra.mxu0 0
        %554 = vmatprep.subr.bf16.mxu0 0
        %555 = vmatpush1.bf16.msra.mxu0 0
        %556 = vmatprep.subr.bf16.mxu0 0
        %557 = vmatpush1.bf16.msra.mxu0 0
        %558 = vmatprep.subr.bf16.mxu0 0
        %559 = vmatpush1.bf16.msra.mxu0 0
        %560 = vmatprep.subr.bf16.mxu0 0
        %561 = vmatpush1.bf16.msra.mxu0 0
        %562 = vmatprep.subr.bf16.mxu0 0
        %563 = vmatpush1.bf16.msra.mxu0 0
        %564 = vmatprep.subr.bf16.mxu0 0
        %565 = vmatpush1.bf16.msra.mxu0 0
        %566 = vmatprep.mubr.bf16.mxu0 %v487
        %567 = vmatmul.mubr.bf16.gmra.mrb[0].mxu0 %v383
        %v568 = vpop.f32.mrb[0].mxu0
        %v569 = vadd.f32 %v285, %v568
        %v570 = vpop.f32.mrb[0].mxu0
        %v571 = vpop.f32.mrb[0].mxu0
        %v572 = vadd.f32 %v285, %v571
        %v573 = vpop.f32.mrb[0].mxu0
        %574 = vmatprep.mubr.bf16.mxu0 %v490
        %575 = vmatmul.mubr.bf16.gmra.mrb[0].mxu0 %v385
        %v576 = vpop.f32.mrb[0].mxu0
        %v577 = vadd.f32 %v285, %v576
        %v578 = vpop.f32.mrb[0].mxu0
        %v579 = vpop.f32.mrb[0].mxu0
        %v580 = vadd.f32 %v285, %v579
        %v581 = vpop.f32.mrb[0].mxu0
        %582 = vmatprep.mubr.bf16.mxu0 %v493
        %583 = vmatmul.mubr.bf16.gmra.mrb[0].mxu0 %v387
        %v584 = vpop.f32.mrb[0].mxu0
        %v585 = vadd.f32 %v285, %v584
        %v586 = vpop.f32.mrb[0].mxu0
        %v587 = vpop.f32.mrb[0].mxu0
        %v588 = vadd.f32 %v285, %v587
        %v589 = vpop.f32.mrb[0].mxu0
        %590 = vmatprep.mubr.bf16.mxu0 %v496
        %591 = vmatmul.mubr.bf16.gmra.mrb[0].mxu0 %v389
        %v592 = vpop.f32.mrb[0].mxu0
        %v593 = vadd.f32 %v285, %v592
        %v594 = vpop.f32.mrb[0].mxu0
        %v595 = vpop.f32.mrb[0].mxu0
        %v596 = vadd.f32 %v285, %v595
        %v597 = vpop.f32.mrb[0].mxu0
        %598 = vmatprep.mubr.bf16.mxu0 %v499
        %599 = vmatmul.mubr.bf16.gmra.mrb[0].mxu0 %v391
        %v600 = vpop.f32.mrb[0].mxu0
        %v601 = vadd.f32 %v285, %v600
        %v602 = vpop.f32.mrb[0].mxu0
        %v603 = vpop.f32.mrb[0].mxu0
        %v604 = vadd.f32 %v285, %v603
        %v605 = vpop.f32.mrb[0].mxu0
        %606 = vmatprep.mubr.bf16.mxu0 %v502
        %607 = vmatmul.mubr.bf16.gmra.mrb[0].mxu0 %v393
        %v608 = vpop.f32.mrb[0].mxu0
        %v609 = vadd.f32 %v285, %v608
        %v610 = vpop.f32.mrb[0].mxu0
        %v611 = vpop.f32.mrb[0].mxu0
        %v612 = vadd.f32 %v285, %v611
        %v613 = vpop.f32.mrb[0].mxu0
        %614 = vmatprep.mubr.bf16.mxu0 %v505
        %615 = vmatmul.mubr.bf16.gmra.mrb[0].mxu0 %v395
        %v616 = vpop.f32.mrb[0].mxu0
        %v617 = vadd.f32 %v285, %v616
        %v618 = vpop.f32.mrb[0].mxu0
        %v619 = vpop.f32.mrb[0].mxu0
        %v620 = vadd.f32 %v285, %v619
        %v621 = vpop.f32.mrb[0].mxu0
        %622 = vmatprep.mubr.bf16.mxu0 %v508
        %623 = vmatmul.mubr.bf16.gmra.mrb[0].mxu0 %v397
        %v624 = vpop.f32.mrb[0].mxu0
        %v625 = vadd.f32 %v285, %v624
        %v626 = vpop.f32.mrb[0].mxu0
        %v627 = vpop.f32.mrb[0].mxu0
        %v628 = vadd.f32 %v285, %v627
        %v629 = vpop.f32.mrb[0].mxu0
        %630 = vmatprep.mubr.bf16.mxu0 %v511
        %631 = vmatmul.mubr.bf16.gmra.mrb[0].mxu0 %v399
        %v632 = vpop.f32.mrb[0].mxu0
        %v633 = vadd.f32 %v285, %v632
        %v634 = vpop.f32.mrb[0].mxu0
        %v635 = vpop.f32.mrb[0].mxu0
        %v636 = vadd.f32 %v285, %v635
        %v637 = vpop.f32.mrb[0].mxu0
        %638 = vmatprep.mubr.bf16.mxu0 %v514
        %639 = vmatmul.mubr.bf16.gmra.mrb[0].mxu0 %v401
        %v640 = vpop.f32.mrb[0].mxu0
        %v641 = vadd.f32 %v285, %v640
        %v642 = vpop.f32.mrb[0].mxu0
        %v643 = vpop.f32.mrb[0].mxu0
        %v644 = vadd.f32 %v285, %v643
        %v645 = vpop.f32.mrb[0].mxu0
        %646 = vmatprep.mubr.bf16.mxu0 %v517
        %647 = vmatmul.mubr.bf16.gmra.mrb[0].mxu0 %v403
        %v648 = vpop.f32.mrb[0].mxu0
        %v649 = vadd.f32 %v285, %v648
        %v650 = vpop.f32.mrb[0].mxu0
        %v651 = vpop.f32.mrb[0].mxu0
        %v652 = vadd.f32 %v285, %v651
        %v653 = vpop.f32.mrb[0].mxu0
        %654 = vmatprep.mubr.bf16.mxu0 %v520
        %655 = vmatmul.mubr.bf16.gmra.mrb[0].mxu0 %v405
        %v656 = vpop.f32.mrb[0].mxu0
        %v657 = vadd.f32 %v285, %v656
        %v658 = vpop.f32.mrb[0].mxu0
        %v659 = vpop.f32.mrb[0].mxu0
        %v660 = vadd.f32 %v285, %v659
        %v661 = vpop.f32.mrb[0].mxu0
        %662 = vmatprep.mubr.bf16.mxu0 %v523
        %663 = vmatmul.mubr.bf16.gmra.mrb[0].mxu0 %v407
        %v664 = vpop.f32.mrb[0].mxu0
        %v665 = vadd.f32 %v285, %v664
        %v666 = vpop.f32.mrb[0].mxu0
        %v667 = vpop.f32.mrb[0].mxu0
        %v668 = vadd.f32 %v285, %v667
        %v669 = vpop.f32.mrb[0].mxu0
        %670 = vmatprep.mubr.bf16.mxu0 %v526
        %671 = vmatmul.mubr.bf16.gmra.mrb[0].mxu0 %v409
        %v672 = vpop.f32.mrb[0].mxu0
        %v673 = vadd.f32 %v285, %v672
        %v674 = vpop.f32.mrb[0].mxu0
        %v675 = vpop.f32.mrb[0].mxu0
        %v676 = vadd.f32 %v285, %v675
        %v677 = vpop.f32.mrb[0].mxu0
        %678 = vmatprep.mubr.bf16.mxu0 %v529
        %679 = vmatmul.mubr.bf16.gmra.mrb[0].mxu0 %v411
        %v680 = vpop.f32.mrb[0].mxu0
        %v681 = vadd.f32 %v285, %v680
        %v682 = vpop.f32.mrb[0].mxu0
        %v683 = vpop.f32.mrb[0].mxu0
        %v684 = vadd.f32 %v285, %v683
        %v685 = vpop.f32.mrb[0].mxu0
        %686 = vmatprep.mubr.bf16.mxu0 %v532
        %687 = vmatmul.mubr.bf16.gmra.mrb[0].mxu0 %v413
        %v688 = vpop.f32.mrb[0].mxu0
        %v689 = vadd.f32 %v285, %v688
        %v690 = vpop.f32.mrb[0].mxu0
        %v691 = vpop.f32.mrb[0].mxu0
        %v692 = vadd.f32 %v285, %v691
        %v693 = vpop.f32.mrb[0].mxu0
        %694 = vdwg.mxu0
        %v695 = vmax.f32 %v569, 0.0
        %v696 = vmax.f32 %v572, 0.0
        %v697 = vmax.f32 %v577, 0.0
        %v698 = vmax.f32 %v580, 0.0
        %v699 = vmax.f32 %v585, 0.0
        %v700 = vmax.f32 %v588, 0.0
        %v701 = vmax.f32 %v593, 0.0
        %v702 = vmax.f32 %v596, 0.0
        %v703 = vmax.f32 %v601, 0.0
        %v704 = vmax.f32 %v604, 0.0
        %v705 = vmax.f32 %v609, 0.0
        %v706 = vmax.f32 %v612, 0.0
        %v707 = vmax.f32 %v617, 0.0
        %v708 = vmax.f32 %v620, 0.0
        %v709 = vmax.f32 %v625, 0.0
        %v710 = vmax.f32 %v628, 0.0
        %v711 = vmax.f32 %v633, 0.0
        %v712 = vmax.f32 %v636, 0.0
        %v713 = vmax.f32 %v641, 0.0
        %v714 = vmax.f32 %v644, 0.0
        %v715 = vmax.f32 %v649, 0.0
        %v716 = vmax.f32 %v652, 0.0
        %v717 = vmax.f32 %v657, 0.0
        %v718 = vmax.f32 %v660, 0.0
        %v719 = vmax.f32 %v665, 0.0
        %v720 = vmax.f32 %v668, 0.0
        %v721 = vmax.f32 %v673, 0.0
        %v722 = vmax.f32 %v676, 0.0
        %v723 = vmax.f32 %v681, 0.0
        %v724 = vmax.f32 %v684, 0.0
        %v725 = vmax.f32 %v689, 0.0
        %v726 = vmax.f32 %v692, 0.0
        %v727 = vpack.c.bf16 %v696, %v695
        %v728 = vpack.c.bf16 %v698, %v697
        %v729 = vpack.c.bf16 %v700, %v699
        %v730 = vpack.c.bf16 %v702, %v701
        %v731 = vpack.c.bf16 %v704, %v703
        %v732 = vpack.c.bf16 %v706, %v705
        %v733 = vpack.c.bf16 %v708, %v707
        %v734 = vpack.c.bf16 %v710, %v709
        %v735 = vpack.c.bf16 %v712, %v711
        %v736 = vpack.c.bf16 %v714, %v713
        %v737 = vpack.c.bf16 %v716, %v715
        %v738 = vpack.c.bf16 %v718, %v717
        %v739 = vpack.c.bf16 %v720, %v719
        %v740 = vpack.c.bf16 %v722, %v721
        %v741 = vpack.c.bf16 %v724, %v723
        %v742 = vpack.c.bf16 %v726, %v725
        %v743 = vld [vmem:[%s3] sm:$0xf]
        %v744 = vld [vmem:[%s3 + $0x4] sm:$0xf]
        %v745 = vld [vmem:[%s3 + $0x8] sm:$0xf]
        %v746 = vld [vmem:[%s3 + $0xc] sm:$0xf]
        %v747 = vld [vmem:[%s3 + $0x10] sm:$0xf]
        %v748 = vld [vmem:[%s3 + $0x14] sm:$0xf]
        %v749 = vld [vmem:[%s3 + $0x18] sm:$0xf]
        %v750 = vld [vmem:[%s3 + $0x1c] sm:$0xf]
        %v751 = vld [vmem:[%s3 + $0x20] sm:$0xf]
        %v752 = vld [vmem:[%s3 + $0x24] sm:$0xf]
        %v753 = vld [vmem:[%s3 + $0x28] sm:$0xf]
        %v754 = vld [vmem:[%s3 + $0x2c] sm:$0xf]
        %v755 = vld [vmem:[%s3 + $0x30] sm:$0xf]
        %v756 = vld [vmem:[%s3 + $0x34] sm:$0xf]
        %v757 = vld [vmem:[%s3 + $0x38] sm:$0xf]
        %v758 = vld [vmem:[%s3 + $0x3c] sm:$0xf]
        %v759 = vld [vmem:[%s4] sm:$0x1]
        %v761 = vlaneseq
        %v762 = vshrl.u32 %v761, 7
        %v763 = vsub.s32 0, %v762
        %v764 = vrot.slane %v759, %v763
        %v782 = vunpack.c.l.b16 %v743
        %v783 = vunpack.c.l.b16 %v744
        %v784 = vunpack.c.l.b16 %v745
        %v785 = vunpack.c.l.b16 %v746
        %v786 = vunpack.c.l.b16 %v747
        %v787 = vunpack.c.l.b16 %v748
        %v788 = vunpack.c.l.b16 %v749
        %v789 = vunpack.c.l.b16 %v750
        %v790 = vunpack.c.l.b16 %v751
        %v791 = vunpack.c.l.b16 %v752
        %v792 = vunpack.c.l.b16 %v753
        %v793 = vunpack.c.l.b16 %v754
        %v794 = vunpack.c.l.b16 %v755
        %v795 = vunpack.c.l.b16 %v756
        %v796 = vunpack.c.l.b16 %v757
        %v797 = vunpack.c.l.b16 %v758
        %v798 = vpack.c.b16 %v783, %v782
        %v799 = vpack.c.b16 %v785, %v784
        %v800 = vpack.c.b16 %v787, %v786
        %v801 = vpack.c.b16 %v789, %v788
        %v802 = vpack.c.b16 %v791, %v790
        %v803 = vpack.c.b16 %v793, %v792
        %v804 = vpack.c.b16 %v795, %v794
        %v805 = vpack.c.b16 %v797, %v796
        %814 = vmatprep.subr.bf16.mxu0 0
        %815 = vmatpush1.bf16.msra.mxu0 %v798
        %816 = vmatprep.subr.bf16.mxu0 0
        %817 = vmatpush1.bf16.msra.mxu0 %v799
        %818 = vmatprep.subr.bf16.mxu0 0
        %819 = vmatpush1.bf16.msra.mxu0 %v800
        %820 = vmatprep.subr.bf16.mxu0 0
        %821 = vmatpush1.bf16.msra.mxu0 %v801
        %822 = vmatprep.subr.bf16.mxu0 0
        %823 = vmatpush1.bf16.msra.mxu0 %v802
        %824 = vmatprep.subr.bf16.mxu0 0
        %825 = vmatpush1.bf16.msra.mxu0 %v803
        %826 = vmatprep.subr.bf16.mxu0 0
        %827 = vmatpush1.bf16.msra.mxu0 %v804
        %828 = vmatprep.subr.bf16.mxu0 0
        %829 = vmatpush1.bf16.msra.mxu0 %v805
        %830 = vmatprep.subr.bf16.mxu0 0
        %831 = vmatpush1.bf16.msra.mxu0 0
        %832 = vmatprep.subr.bf16.mxu0 0
        %833 = vmatpush1.bf16.msra.mxu0 0
        %834 = vmatprep.subr.bf16.mxu0 0
        %835 = vmatpush1.bf16.msra.mxu0 0
        %836 = vmatprep.subr.bf16.mxu0 0
        %837 = vmatpush1.bf16.msra.mxu0 0
        %838 = vmatprep.subr.bf16.mxu0 0
        %839 = vmatpush1.bf16.msra.mxu0 0
        %840 = vmatprep.subr.bf16.mxu0 0
        %841 = vmatpush1.bf16.msra.mxu0 0
        %842 = vmatprep.subr.bf16.mxu0 0
        %843 = vmatpush1.bf16.msra.mxu0 0
        %844 = vmatprep.subr.bf16.mxu0 0
        %845 = vmatpush1.bf16.msra.mxu0 0
        %846 = vmatprep.mubr.bf16.mxu0 0
        %847 = vmatmul.mubr.bf16.gmra.mrb[0].mxu0 %v727
        %v848 = vpop.f32.mrb[0].mxu0
        %v849 = vadd.f32 %v764, %v848
        %v850 = vpop.f32.mrb[0].mxu0
        %v851 = vpop.f32.mrb[0].mxu0
        %v852 = vadd.f32 %v764, %v851
        %v853 = vpop.f32.mrb[0].mxu0
        %854 = vmatprep.mubr.bf16.mxu0 0
        %855 = vmatmul.mubr.bf16.gmra.mrb[0].mxu0 %v728
        %v856 = vpop.f32.mrb[0].mxu0
        %v857 = vadd.f32 %v764, %v856
        %v858 = vpop.f32.mrb[0].mxu0
        %v859 = vpop.f32.mrb[0].mxu0
        %v860 = vadd.f32 %v764, %v859
        %v861 = vpop.f32.mrb[0].mxu0
        %862 = vmatprep.mubr.bf16.mxu0 0
        %863 = vmatmul.mubr.bf16.gmra.mrb[0].mxu0 %v729
        %v864 = vpop.f32.mrb[0].mxu0
        %v865 = vadd.f32 %v764, %v864
        %v866 = vpop.f32.mrb[0].mxu0
        %v867 = vpop.f32.mrb[0].mxu0
        %v868 = vadd.f32 %v764, %v867
        %v869 = vpop.f32.mrb[0].mxu0
        %870 = vmatprep.mubr.bf16.mxu0 0
        %871 = vmatmul.mubr.bf16.gmra.mrb[0].mxu0 %v730
        %v872 = vpop.f32.mrb[0].mxu0
        %v873 = vadd.f32 %v764, %v872
        %v874 = vpop.f32.mrb[0].mxu0
        %v875 = vpop.f32.mrb[0].mxu0
        %v876 = vadd.f32 %v764, %v875
        %v877 = vpop.f32.mrb[0].mxu0
        %878 = vmatprep.mubr.bf16.mxu0 0
        %879 = vmatmul.mubr.bf16.gmra.mrb[0].mxu0 %v731
        %v880 = vpop.f32.mrb[0].mxu0
        %v881 = vadd.f32 %v764, %v880
        %v882 = vpop.f32.mrb[0].mxu0
        %v883 = vpop.f32.mrb[0].mxu0
        %v884 = vadd.f32 %v764, %v883
        %v885 = vpop.f32.mrb[0].mxu0
        %886 = vmatprep.mubr.bf16.mxu0 0
        %887 = vmatmul.mubr.bf16.gmra.mrb[0].mxu0 %v732
        %v888 = vpop.f32.mrb[0].mxu0
        %v889 = vadd.f32 %v764, %v888
        %v890 = vpop.f32.mrb[0].mxu0
        %v891 = vpop.f32.mrb[0].mxu0
        %v892 = vadd.f32 %v764, %v891
        %v893 = vpop.f32.mrb[0].mxu0
        %894 = vmatprep.mubr.bf16.mxu0 0
        %895 = vmatmul.mubr.bf16.gmra.mrb[0].mxu0 %v733
        %v896 = vpop.f32.mrb[0].mxu0
        %v897 = vadd.f32 %v764, %v896
        %v898 = vpop.f32.mrb[0].mxu0
        %v899 = vpop.f32.mrb[0].mxu0
        %v900 = vadd.f32 %v764, %v899
        %v901 = vpop.f32.mrb[0].mxu0
        %902 = vmatprep.mubr.bf16.mxu0 0
        %903 = vmatmul.mubr.bf16.gmra.mrb[0].mxu0 %v734
        %v904 = vpop.f32.mrb[0].mxu0
        %v905 = vadd.f32 %v764, %v904
        %v906 = vpop.f32.mrb[0].mxu0
        %v907 = vpop.f32.mrb[0].mxu0
        %v908 = vadd.f32 %v764, %v907
        %v909 = vpop.f32.mrb[0].mxu0
        %910 = vmatprep.mubr.bf16.mxu0 0
        %911 = vmatmul.mubr.bf16.gmra.mrb[0].mxu0 %v735
        %v912 = vpop.f32.mrb[0].mxu0
        %v913 = vadd.f32 %v764, %v912
        %v914 = vpop.f32.mrb[0].mxu0
        %v915 = vpop.f32.mrb[0].mxu0
        %v916 = vadd.f32 %v764, %v915
        %v917 = vpop.f32.mrb[0].mxu0
        %918 = vmatprep.mubr.bf16.mxu0 0
        %919 = vmatmul.mubr.bf16.gmra.mrb[0].mxu0 %v736
        %v920 = vpop.f32.mrb[0].mxu0
        %v921 = vadd.f32 %v764, %v920
        %v922 = vpop.f32.mrb[0].mxu0
        %v923 = vpop.f32.mrb[0].mxu0
        %v924 = vadd.f32 %v764, %v923
        %v925 = vpop.f32.mrb[0].mxu0
        %926 = vmatprep.mubr.bf16.mxu0 0
        %927 = vmatmul.mubr.bf16.gmra.mrb[0].mxu0 %v737
        %v928 = vpop.f32.mrb[0].mxu0
        %v929 = vadd.f32 %v764, %v928
        %v930 = vpop.f32.mrb[0].mxu0
        %v931 = vpop.f32.mrb[0].mxu0
        %v932 = vadd.f32 %v764, %v931
        %v933 = vpop.f32.mrb[0].mxu0
        %934 = vmatprep.mubr.bf16.mxu0 0
        %935 = vmatmul.mubr.bf16.gmra.mrb[0].mxu0 %v738
        %v936 = vpop.f32.mrb[0].mxu0
        %v937 = vadd.f32 %v764, %v936
        %v938 = vpop.f32.mrb[0].mxu0
        %v939 = vpop.f32.mrb[0].mxu0
        %v940 = vadd.f32 %v764, %v939
        %v941 = vpop.f32.mrb[0].mxu0
        %942 = vmatprep.mubr.bf16.mxu0 0
        %943 = vmatmul.mubr.bf16.gmra.mrb[0].mxu0 %v739
        %v944 = vpop.f32.mrb[0].mxu0
        %v945 = vadd.f32 %v764, %v944
        %v946 = vpop.f32.mrb[0].mxu0
        %v947 = vpop.f32.mrb[0].mxu0
        %v948 = vadd.f32 %v764, %v947
        %v949 = vpop.f32.mrb[0].mxu0
        %950 = vmatprep.mubr.bf16.mxu0 0
        %951 = vmatmul.mubr.bf16.gmra.mrb[0].mxu0 %v740
        %v952 = vpop.f32.mrb[0].mxu0
        %v953 = vadd.f32 %v764, %v952
        %v954 = vpop.f32.mrb[0].mxu0
        %v955 = vpop.f32.mrb[0].mxu0
        %v956 = vadd.f32 %v764, %v955
        %v957 = vpop.f32.mrb[0].mxu0
        %958 = vmatprep.mubr.bf16.mxu0 0
        %959 = vmatmul.mubr.bf16.gmra.mrb[0].mxu0 %v741
        %v960 = vpop.f32.mrb[0].mxu0
        %v961 = vadd.f32 %v764, %v960
        %v962 = vpop.f32.mrb[0].mxu0
        %v963 = vpop.f32.mrb[0].mxu0
        %v964 = vadd.f32 %v764, %v963
        %v965 = vpop.f32.mrb[0].mxu0
        %966 = vmatprep.mubr.bf16.mxu0 0
        %967 = vmatmul.mubr.bf16.gmra.mrb[0].mxu0 %v742
        %v968 = vpop.f32.mrb[0].mxu0
        %v969 = vadd.f32 %v764, %v968
        %v970 = vpop.f32.mrb[0].mxu0
        %v971 = vpop.f32.mrb[0].mxu0
        %v972 = vadd.f32 %v764, %v971
        %v973 = vpop.f32.mrb[0].mxu0
        %974 = vdwg.mxu0
        %v975 = vmul.f32 %v849, 0.25
        %v976 = vmul.f32 %v852, 0.25
        %v977 = vmul.f32 %v857, 0.25
        %v978 = vmul.f32 %v860, 0.25
        %v979 = vmul.f32 %v865, 0.25
        %v980 = vmul.f32 %v868, 0.25
        %v981 = vmul.f32 %v873, 0.25
        %v982 = vmul.f32 %v876, 0.25
        %v983 = vmul.f32 %v881, 0.25
        %v984 = vmul.f32 %v884, 0.25
        %v985 = vmul.f32 %v889, 0.25
        %v986 = vmul.f32 %v892, 0.25
        %v987 = vmul.f32 %v897, 0.25
        %v988 = vmul.f32 %v900, 0.25
        %v989 = vmul.f32 %v905, 0.25
        %v990 = vmul.f32 %v908, 0.25
        %v991 = vmul.f32 %v913, 0.25
        %v992 = vmul.f32 %v916, 0.25
        %v993 = vmul.f32 %v921, 0.25
        %v994 = vmul.f32 %v924, 0.25
        %v995 = vmul.f32 %v929, 0.25
        %v996 = vmul.f32 %v932, 0.25
        %v997 = vmul.f32 %v937, 0.25
        %v998 = vmul.f32 %v940, 0.25
        %v999 = vmul.f32 %v945, 0.25
        %v1000 = vmul.f32 %v948, 0.25
        %v1001 = vmul.f32 %v953, 0.25
        %v1002 = vmul.f32 %v956, 0.25
        %v1003 = vmul.f32 %v961, 0.25
        %v1004 = vmul.f32 %v964, 0.25
        %v1005 = vmul.f32 %v969, 0.25
        %v1006 = vmul.f32 %v972, 0.25
        %vm1007 = vcmask 293888
        %1008 = vst.msk [vmem:[%s220] sm:$0xff] %vm1007, %v975
        %1009 = vst.msk [vmem:[%s220 + $0x8] sm:$0xff] %vm1007, %v976
        %1010 = vst.msk [vmem:[%s220 + $0x10] sm:$0xff] %vm1007, %v977
        %1011 = vst.msk [vmem:[%s220 + $0x18] sm:$0xff] %vm1007, %v978
        %1012 = vst.msk [vmem:[%s220 + $0x20] sm:$0xff] %vm1007, %v979
        %1013 = vst.msk [vmem:[%s220 + $0x28] sm:$0xff] %vm1007, %v980
        %1014 = vst.msk [vmem:[%s220 + $0x30] sm:$0xff] %vm1007, %v981
        %1015 = vst.msk [vmem:[%s220 + $0x38] sm:$0xff] %vm1007, %v982
        %1016 = vst.msk [vmem:[%s220 + $0x40] sm:$0xff] %vm1007, %v983
        %1017 = vst.msk [vmem:[%s220 + $0x48] sm:$0xff] %vm1007, %v984
        %1018 = vst.msk [vmem:[%s220 + $0x50] sm:$0xff] %vm1007, %v985
        %1019 = vst.msk [vmem:[%s220 + $0x58] sm:$0xff] %vm1007, %v986
        %1020 = vst.msk [vmem:[%s220 + $0x60] sm:$0xff] %vm1007, %v987
        %1021 = vst.msk [vmem:[%s220 + $0x68] sm:$0xff] %vm1007, %v988
        %1022 = vst.msk [vmem:[%s220 + $0x70] sm:$0xff] %vm1007, %v989
        %1023 = vst.msk [vmem:[%s220 + $0x78] sm:$0xff] %vm1007, %v990
        %1024 = vst.msk [vmem:[%s220 + $0x80] sm:$0xff] %vm1007, %v991
        %1025 = vst.msk [vmem:[%s220 + $0x88] sm:$0xff] %vm1007, %v992
        %1026 = vst.msk [vmem:[%s220 + $0x90] sm:$0xff] %vm1007, %v993
        %1027 = vst.msk [vmem:[%s220 + $0x98] sm:$0xff] %vm1007, %v994
        %1028 = vst.msk [vmem:[%s220 + $0xa0] sm:$0xff] %vm1007, %v995
        %1029 = vst.msk [vmem:[%s220 + $0xa8] sm:$0xff] %vm1007, %v996
        %1030 = vst.msk [vmem:[%s220 + $0xb0] sm:$0xff] %vm1007, %v997
        %1031 = vst.msk [vmem:[%s220 + $0xb8] sm:$0xff] %vm1007, %v998
        %1032 = vst.msk [vmem:[%s220 + $0xc0] sm:$0xff] %vm1007, %v999
        %1033 = vst.msk [vmem:[%s220 + $0xc8] sm:$0xff] %vm1007, %v1000
        %1034 = vst.msk [vmem:[%s220 + $0xd0] sm:$0xff] %vm1007, %v1001
        %1035 = vst.msk [vmem:[%s220 + $0xd8] sm:$0xff] %vm1007, %v1002
        %1036 = vst.msk [vmem:[%s220 + $0xe0] sm:$0xff] %vm1007, %v1003
        %1037 = vst.msk [vmem:[%s220 + $0xe8] sm:$0xff] %vm1007, %v1004
        %1038 = vst.msk [vmem:[%s220 + $0xf0] sm:$0xff] %vm1007, %v1005
        %1039 = vst.msk [vmem:[%s220 + $0xf8] sm:$0xff] %vm1007, %v1006
        %s1040 = sand.u32 %s137, 1
        %s1041 = scalar_lea.sflag [#allocation3], %s1040
        %s1042 = sand.u32 %s137, 1
        %s1043 = smul.addr %s1042, 256
        %s1044 = scalar_lea.vmem [#allocation2], %s1043
        // Predicated region
        $region41: #{basic_multi_update_block.17} parent=39 // pred_check
          %p1045 = pneg %p147
        $region42: #{basic_multi_update_block.17} parent=39 // pred_check_branch
          %1047 = sbr.rel (%p1045) target = $region44
        $region43: #{basic_multi_update_block.17} parent=39 // pred_region
          %s1048 = smul.u32 32, %s19
          %s1050 = ssub.s32 4096, 4096
          %1051 = vsyncadd %s1041, %s1050
          %s1052 = smul.addr %s1048, 128
          %s1053 = scalar_lea.hbm %s5, %s1052
          %s1054 = sshll.u32 %s1044, 4
          %s1055 = int_to_ptr.vmem [resolvable:$true] %s1054
          %1060 = dma.vmem_to_hbm [thread:$0]  %s1055, 4096, %s1053, %s1041, 128, 128, 8
        $region44: #{basic_multi_update_block.17} parent=39 // pred_fallthru
          _
      $region40: #{basic_multi_update_block.17} parent=5 // pred_fallthru
        _
      %p1061 = scmp.le.s32.totalorder 2, %s14
      // Predicated region
      $region45: #{basic_multi_update_block.17} parent=5 // pred_check
        %p1062 = pneg %p1061
      $region46: #{basic_multi_update_block.17} parent=5 // pred_check_branch
        %1064 = sbr.rel (%p1062) target = $region48
      $region47: #{basic_multi_update_block.17} parent=5 // pred_region
        %s1065 = ssub.s32 %s14, 2
        // Predicated region
        $region49: #{basic_multi_update_block.17} parent=47 // pred_check
          %p1066 = pneg %p153
        $region50: #{basic_multi_update_block.17} parent=47 // pred_check_branch
          %1068 = sbr.rel (%p1066) target = $region52
        $region51: #{basic_multi_update_block.17} parent=47 // pred_region
          %s1069 = sand.u32 %s138, 1
          %s1070 = scalar_lea.sflag [#allocation3], %s1069
          %s1071 = sand.u32 %s138, 1
          %s1072 = smul.addr %s1071, 256
          %s1073 = scalar_lea.vmem [#allocation2], %s1072
          %1074 = dma.done %s1070, 4096
        $region52: #{basic_multi_update_block.17} parent=47 // pred_fallthru
          _
      $region48: #{basic_multi_update_block.17} parent=5 // pred_fallthru
        _
    $region6: #{basic_multi_update_block.17} parent=1 // loop_footer
      %s18 = sadd.s32 1, %s14
    $region7: #{basic_multi_update_block.17} parent=1 // loop_footer_branch
      %13 = sbr.rel target = $region3
    $region8: #{basic_multi_update_block.17} parent=1 // loop_exit
      _
    %1075 = vsyncpa [#allocation3], 1
    %s1076 = scalar_lea.sflag [#allocation3], 1
    %1077 = vsyncpa %s1076, 1

</llo_original>
